<compile_context>
chip_gen: v6e
topology: v6e:2x2x1
jax: 0.10.0
libtpu: 0.0.40
codegen_flags: <defaults>
</compile_context>

<pallas_src>
import functools

import jax
import jax.numpy as jnp
from jax.experimental import pallas as pl
from jax.experimental.pallas import tpu as pltpu


LANE = 128  # pad every channel / class dimension to the TPU lane width


def _fused_maml_kernel(x_ref, w1_ref, b1_ref, w2_ref, b2_ref, w3_ref, b3_ref,
                       o_ref, acc1_ref, p1_ref, *, H, W):
    """One image: conv3x3+ReLU+pool -> conv3x3+ReLU+pool -> linear head.

    x_ref : (H+2, W+2, LANE) f32  spatially zero-padded, channel-padded input
    w1_ref: (9, LANE, LANE)  bf16    b1_ref: (1, LANE) f32
    w2_ref: (9, LANE, LANE)  bf16    b2_ref: (1, LANE) f32
    w3_ref: ((H//4)*(W//4), LANE, LANE) bf16    b3_ref: (1, LANE) f32
    o_ref : (1, LANE) f32 logits (classes padded to LANE)
    acc1_ref: VMEM (H*W, LANE) f32 scratch (conv1 accumulator)
    p1_ref  : VMEM (H//2+2, W//2+2, LANE) f32 scratch (padded pooled act 1)
    """
    H2, W2 = H // 2, W // 2
    H4, W4 = H // 4, W // 4

    # ---- block 1: conv3x3 as 9 shifted matmuls, + bias + ReLU + 2x2 maxpool
    for t in range(9):
        dh, dw = t // 3, t % 3
        lhs = x_ref[dh:dh + H, dw:dw + W, :].reshape(H * W, LANE)
        part = jnp.dot(lhs.astype(jnp.bfloat16), w1_ref[t],
                       preferred_element_type=jnp.float32)
        if t == 0:
            acc1_ref[...] = part
        else:
            acc1_ref[...] += part
    a1 = jnp.maximum(acc1_ref[...] + b1_ref[...], 0.0)        # (H*W, LANE) f32
    a1 = jnp.max(a1.reshape(H * W // 2, 2, LANE), axis=1)      # pool along w
    y1 = jnp.max(a1.reshape(H2, 2, W2, LANE), axis=1)          # pool along h

    # stage pooled activation, spatially zero-padded, in VMEM for conv2 taps
    p1_ref[...] = jnp.zeros_like(p1_ref)
    p1_ref[1:1 + H2, 1:1 + W2, :] = y1

    # ---- block 2: conv3x3 + bias + ReLU + 2x2 maxpool
    acc2 = jnp.zeros((H2 * W2, LANE), jnp.float32)
    for t in range(9):
        dh, dw = t // 3, t % 3
        lhs = p1_ref[dh:dh + H2, dw:dw + W2, :].reshape(H2 * W2, LANE)
        acc2 = acc2 + jnp.dot(lhs.astype(jnp.bfloat16), w2_ref[t],
                              preferred_element_type=jnp.float32)
    a2 = jnp.maximum(acc2 + b2_ref[...], 0.0)                  # (H2*W2, LANE)
    a2 = jnp.max(a2.reshape(H2 * W2 // 2, 2, LANE), axis=1)    # pool along w
    y2 = jnp.max(a2.reshape(H4, 2, W4, LANE), axis=1)          # pool along h
    y2 = y2.reshape(H4 * W4, LANE)                             # (spatial, C)

    # ---- linear head: logits[n] = sum_{k,c} y2[k,c] * w3[k,c,n] + b3[n]
    # (per-spatial-position matmuls avoid a lane-crossing flatten reshape)
    z = jnp.zeros((1, LANE), jnp.float32)
    for k in range(H4 * W4):
        row = y2[k:k + 1, :].astype(jnp.bfloat16)              # (1, LANE)
        z = z + jnp.dot(row, w3_ref[k], preferred_element_type=jnp.float32)
    o_ref[...] = z + b3_ref[...]


def _maml_forward(x_nchw, w1, b1, w2, b2, w3, b3):
    B, Cin, H, W = x_nchw.shape
    # NCHW -> NHWC, spatial 'same' pad (1 each side), channel pad to LANE (glue)
    x = jnp.transpose(x_nchw, (0, 2, 3, 1)).astype(jnp.float32)
    xp = jnp.pad(x, ((0, 0), (1, 1), (1, 1), (0, LANE - Cin)))

    H2, W2 = H // 2, W // 2
    H4, W4 = H // 4, W // 4
    kern = functools.partial(_fused_maml_kernel, H=H, W=W)

    out = pl.pallas_call(
        kern,
        out_shape=jax.ShapeDtypeStruct((B, 1, LANE), jnp.float32),
        grid=(B,),
        in_specs=[
            pl.BlockSpec((None, H + 2, W + 2, LANE), lambda b: (b, 0, 0, 0)),
            pl.BlockSpec((9, LANE, LANE), lambda b: (0, 0, 0)),
            pl.BlockSpec((1, LANE), lambda b: (0, 0)),
            pl.BlockSpec((9, LANE, LANE), lambda b: (0, 0, 0)),
            pl.BlockSpec((1, LANE), lambda b: (0, 0)),
            pl.BlockSpec((H4 * W4, LANE, LANE), lambda b: (0, 0, 0)),
            pl.BlockSpec((1, LANE), lambda b: (0, 0)),
        ],
        out_specs=pl.BlockSpec((None, 1, LANE), lambda b: (b, 0, 0)),
        scratch_shapes=[
            pltpu.VMEM((H * W, LANE), jnp.float32),          # conv1 accumulator
            pltpu.VMEM((H2 + 2, W2 + 2, LANE), jnp.float32), # padded pooled act
        ],
        compiler_params=pltpu.CompilerParams(
            dimension_semantics=("parallel",)),
    )(xp, w1, b1, w2, b2, w3, b3)
    return out[:, 0, :]


_maml_forward_jit = jax.jit(_maml_forward)


class MAMLPallas:
    """MAML wrapper around an Omniglot-style CNN; forward = one Pallas kernel."""

    def __init__(self, key, in_ch=1, hidden=8, spatial=16, num_classes=5,
                 num_task=1):
        assert spatial % 4 == 0
        self.num_task = num_task
        self.hidden = hidden
        self.num_classes = num_classes
        k1, k2, k3, k4, k5, k6 = jax.random.split(key, 6)
        ksp = (spatial // 4) ** 2

        def padw(raw, shape):
            w = jnp.zeros(shape, jnp.float32)
            return w.at[tuple(slice(0, s) for s in raw.shape)].set(raw)

        # Conv weights: (tap, Cin_pad, Cout_pad). Padded lanes are exactly zero
        # so they contribute nothing downstream; logits slice stays exact.
        self.w1 = padw(0.1 * jax.random.normal(k1, (9, in_ch, hidden)),
                       (9, LANE, LANE)).astype(jnp.bfloat16)
        self.b1 = padw(0.1 * jax.random.normal(k2, (1, hidden)), (1, LANE))
        self.w2 = padw(0.1 * jax.random.normal(k3, (9, hidden, hidden)),
                       (9, LANE, LANE)).astype(jnp.bfloat16)
        self.b2 = padw(0.1 * jax.random.normal(k4, (1, hidden)), (1, LANE))
        # Classifier stored as (spatial_pos, C_pad, classes_pad); NHWC flatten
        # order (weights are randomly initialized, so ordering vs PyTorch's
        # NCHW flatten is immaterial here).
        self.w3 = padw(0.1 * jax.random.normal(k5, (ksp, hidden, num_classes)),
                       (ksp, LANE, LANE)).astype(jnp.bfloat16)
        self.b3 = padw(0.1 * jax.random.normal(k6, (1, num_classes)), (1, LANE))

    def __call__(self, x_nchw):
        logits = _maml_forward_jit(x_nchw, self.w1, self.b1, self.w2, self.b2,
                                   self.w3, self.b3)
        return logits[:, :self.num_classes]


if __name__ == "__main__":
    key = jax.random.PRNGKey(0)
    kx, kp = jax.random.split(key)

    B, Cin, S = 2, 1, 16          # small Omniglot-like grayscale input
    x = jax.random.normal(kx, (B, Cin, S, S), jnp.float32)

    maml = MAMLPallas(kp, in_ch=Cin, hidden=8, spatial=S, num_classes=5)
    out = maml(x)
    out = jax.block_until_ready(out)
    assert out.shape == (B, 5) and out.dtype == jnp.float32
    print("KERNEL_OK")
</pallas_src>

<mosaic_0001>
module attributes {stable_mosaic.version = 11 : i64} {
  func.func @_fused_maml_kernel(%arg0: i32, %arg1: memref<1x18x18x128xf32, #tpu.memory_space<vmem>>, %arg2: memref<9x128x128xbf16, #tpu.memory_space<vmem>>, %arg3: memref<1x128xf32, #tpu.memory_space<vmem>>, %arg4: memref<9x128x128xbf16, #tpu.memory_space<vmem>>, %arg5: memref<1x128xf32, #tpu.memory_space<vmem>>, %arg6: memref<16x128x128xbf16, #tpu.memory_space<vmem>>, %arg7: memref<1x128xf32, #tpu.memory_space<vmem>>, %arg8: memref<1x1x128xf32, #tpu.memory_space<vmem>>, %arg9: memref<256x128xf32, #tpu.memory_space<vmem>>, %arg10: memref<10x10x128xf32, #tpu.memory_space<vmem>>) attributes {dimension_semantics = [#tpu.dimension_semantics<parallel>], iteration_bounds = array<i64: 2>, scalar_prefetch = 0 : i64, scratch_operands = 2 : i64, tpu.core_type = #tpu.core_type<tc>, window_params = [{transform_indices = @transform_0, window_bounds = array<i64: 1, 18, 18, 128>}, {pipeline_mode = #tpu.pipeline_mode<synchronous>, transform_indices = @transform_1, window_bounds = array<i64: 9, 128, 128>}, {pipeline_mode = #tpu.pipeline_mode<synchronous>, transform_indices = @transform_2, window_bounds = array<i64: 1, 128>}, {pipeline_mode = #tpu.pipeline_mode<synchronous>, transform_indices = @transform_3, window_bounds = array<i64: 9, 128, 128>}, {pipeline_mode = #tpu.pipeline_mode<synchronous>, transform_indices = @transform_4, window_bounds = array<i64: 1, 128>}, {pipeline_mode = #tpu.pipeline_mode<synchronous>, transform_indices = @transform_5, window_bounds = array<i64: 16, 128, 128>}, {pipeline_mode = #tpu.pipeline_mode<synchronous>, transform_indices = @transform_6, window_bounds = array<i64: 1, 128>}, {transform_indices = @transform_7, window_bounds = array<i64: 1, 1, 128>}]} {
    %c0 = arith.constant 0 : index
    %c0_0 = arith.constant 0 : index
    %c0_1 = arith.constant 0 : index
    %c0_2 = arith.constant 0 : index
    %0 = vector.load %arg1[%c0, %c0_0, %c0_1, %c0_2] : memref<1x18x18x128xf32, #tpu.memory_space<vmem>>, vector<1x16x16x128xf32>
    %1 = vector.shape_cast %0 : vector<1x16x16x128xf32> to vector<16x16x128xf32>
    %2 = vector.shape_cast %1 : vector<16x16x128xf32> to vector<256x128xf32>
    %3 = arith.truncf %2 : vector<256x128xf32> to vector<256x128xbf16>
    %c0_3 = arith.constant 0 : index
    %c0_4 = arith.constant 0 : index
    %c0_5 = arith.constant 0 : index
    %4 = vector.load %arg2[%c0_3, %c0_4, %c0_5] : memref<9x128x128xbf16, #tpu.memory_space<vmem>>, vector<1x128x128xbf16>
    %5 = vector.shape_cast %4 : vector<1x128x128xbf16> to vector<128x128xbf16>
    %cst = arith.constant dense<0.000000e+00> : vector<256x128xf32>
    %6 = tpu.matmul %3, %5, %cst {dimension_numbers = #tpu.dot_dimension_numbers<[1], [0], [0], [1], [0, 0, 1, 1], [], []>} : vector<256x128xbf16>, vector<128x128xbf16>, vector<256x128xf32> -> vector<256x128xf32>
    %c0_6 = arith.constant 0 : index
    %c0_7 = arith.constant 0 : index
    %7 = vector.load %arg9[%c0_6, %c0_7] : memref<256x128xf32, #tpu.memory_space<vmem>>, vector<256x128xf32>
    tpu.vector_store %arg9[%c0_6, %c0_7], %6 {strides = array<i32>} : memref<256x128xf32, #tpu.memory_space<vmem>>, vector<256x128xf32>,
    %c0_8 = arith.constant 0 : index
    %c0_9 = arith.constant 0 : index
    %c1 = arith.constant 1 : index
    %c0_10 = arith.constant 0 : index
    %8 = vector.load %arg1[%c0_8, %c0_9, %c1, %c0_10] : memref<1x18x18x128xf32, #tpu.memory_space<vmem>>, vector<1x16x16x128xf32>
    %9 = vector.shape_cast %8 : vector<1x16x16x128xf32> to vector<16x16x128xf32>
    %10 = vector.shape_cast %9 : vector<16x16x128xf32> to vector<256x128xf32>
    %11 = arith.truncf %10 : vector<256x128xf32> to vector<256x128xbf16>
    %c1_11 = arith.constant 1 : index
    %c0_12 = arith.constant 0 : index
    %c0_13 = arith.constant 0 : index
    %12 = vector.load %arg2[%c1_11, %c0_12, %c0_13] : memref<9x128x128xbf16, #tpu.memory_space<vmem>>, vector<1x128x128xbf16>
    %13 = vector.shape_cast %12 : vector<1x128x128xbf16> to vector<128x128xbf16>
    %cst_14 = arith.constant dense<0.000000e+00> : vector<256x128xf32>
    %14 = tpu.matmul %11, %13, %cst_14 {dimension_numbers = #tpu.dot_dimension_numbers<[1], [0], [0], [1], [0, 0, 1, 1], [], []>} : vector<256x128xbf16>, vector<128x128xbf16>, vector<256x128xf32> -> vector<256x128xf32>
    %c0_15 = arith.constant 0 : index
    %c0_16 = arith.constant 0 : index
    %15 = vector.load %arg9[%c0_15, %c0_16] : memref<256x128xf32, #tpu.memory_space<vmem>>, vector<256x128xf32>
    %16 = arith.addf %15, %14 : vector<256x128xf32>
    %c0_17 = arith.constant 0 : index
    %c0_18 = arith.constant 0 : index
    %17 = vector.load %arg9[%c0_17, %c0_18] : memref<256x128xf32, #tpu.memory_space<vmem>>, vector<256x128xf32>
    tpu.vector_store %arg9[%c0_17, %c0_18], %16 {strides = array<i32>} : memref<256x128xf32, #tpu.memory_space<vmem>>, vector<256x128xf32>,
    %c0_19 = arith.constant 0 : index
    %c0_20 = arith.constant 0 : index
    %c2 = arith.constant 2 : index
    %c0_21 = arith.constant 0 : index
    %18 = vector.load %arg1[%c0_19, %c0_20, %c2, %c0_21] : memref<1x18x18x128xf32, #tpu.memory_space<vmem>>, vector<1x16x16x128xf32>
    %19 = vector.shape_cast %18 : vector<1x16x16x128xf32> to vector<16x16x128xf32>
    %20 = vector.shape_cast %19 : vector<16x16x128xf32> to vector<256x128xf32>
    %21 = arith.truncf %20 : vector<256x128xf32> to vector<256x128xbf16>
    %c2_22 = arith.constant 2 : index
    %c0_23 = arith.constant 0 : index
    %c0_24 = arith.constant 0 : index
    %22 = vector.load %arg2[%c2_22, %c0_23, %c0_24] : memref<9x128x128xbf16, #tpu.memory_space<vmem>>, vector<1x128x128xbf16>
    %23 = vector.shape_cast %22 : vector<1x128x128xbf16> to vector<128x128xbf16>
    %cst_25 = arith.constant dense<0.000000e+00> : vector<256x128xf32>
    %24 = tpu.matmul %21, %23, %cst_25 {dimension_numbers = #tpu.dot_dimension_numbers<[1], [0], [0], [1], [0, 0, 1, 1], [], []>} : vector<256x128xbf16>, vector<128x128xbf16>, vector<256x128xf32> -> vector<256x128xf32>
    %c0_26 = arith.constant 0 : index
    %c0_27 = arith.constant 0 : index
    %25 = vector.load %arg9[%c0_26, %c0_27] : memref<256x128xf32, #tpu.memory_space<vmem>>, vector<256x128xf32>
    %26 = arith.addf %25, %24 : vector<256x128xf32>
    %c0_28 = arith.constant 0 : index
    %c0_29 = arith.constant 0 : index
    %27 = vector.load %arg9[%c0_28, %c0_29] : memref<256x128xf32, #tpu.memory_space<vmem>>, vector<256x128xf32>
    tpu.vector_store %arg9[%c0_28, %c0_29], %26 {strides = array<i32>} : memref<256x128xf32, #tpu.memory_space<vmem>>, vector<256x128xf32>,
    %c0_30 = arith.constant 0 : index
    %c1_31 = arith.constant 1 : index
    %c0_32 = arith.constant 0 : index
    %c0_33 = arith.constant 0 : index
    %28 = vector.load %arg1[%c0_30, %c1_31, %c0_32, %c0_33] : memref<1x18x18x128xf32, #tpu.memory_space<vmem>>, vector<1x16x16x128xf32>
    %29 = vector.shape_cast %28 : vector<1x16x16x128xf32> to vector<16x16x128xf32>
    %30 = vector.shape_cast %29 : vector<16x16x128xf32> to vector<256x128xf32>
    %31 = arith.truncf %30 : vector<256x128xf32> to vector<256x128xbf16>
    %c3 = arith.constant 3 : index
    %c0_34 = arith.constant 0 : index
    %c0_35 = arith.constant 0 : index
    %32 = vector.load %arg2[%c3, %c0_34, %c0_35] : memref<9x128x128xbf16, #tpu.memory_space<vmem>>, vector<1x128x128xbf16>
    %33 = vector.shape_cast %32 : vector<1x128x128xbf16> to vector<128x128xbf16>
    %cst_36 = arith.constant dense<0.000000e+00> : vector<256x128xf32>
    %34 = tpu.matmul %31, %33, %cst_36 {dimension_numbers = #tpu.dot_dimension_numbers<[1], [0], [0], [1], [0, 0, 1, 1], [], []>} : vector<256x128xbf16>, vector<128x128xbf16>, vector<256x128xf32> -> vector<256x128xf32>
    %c0_37 = arith.constant 0 : index
    %c0_38 = arith.constant 0 : index
    %35 = vector.load %arg9[%c0_37, %c0_38] : memref<256x128xf32, #tpu.memory_space<vmem>>, vector<256x128xf32>
    %36 = arith.addf %35, %34 : vector<256x128xf32>
    %c0_39 = arith.constant 0 : index
    %c0_40 = arith.constant 0 : index
    %37 = vector.load %arg9[%c0_39, %c0_40] : memref<256x128xf32, #tpu.memory_space<vmem>>, vector<256x128xf32>
    tpu.vector_store %arg9[%c0_39, %c0_40], %36 {strides = array<i32>} : memref<256x128xf32, #tpu.memory_space<vmem>>, vector<256x128xf32>,
    %c0_41 = arith.constant 0 : index
    %c1_42 = arith.constant 1 : index
    %c1_43 = arith.constant 1 : index
    %c0_44 = arith.constant 0 : index
    %38 = vector.load %arg1[%c0_41, %c1_42, %c1_43, %c0_44] : memref<1x18x18x128xf32, #tpu.memory_space<vmem>>, vector<1x16x16x128xf32>
    %39 = vector.shape_cast %38 : vector<1x16x16x128xf32> to vector<16x16x128xf32>
    %40 = vector.shape_cast %39 : vector<16x16x128xf32> to vector<256x128xf32>
    %41 = arith.truncf %40 : vector<256x128xf32> to vector<256x128xbf16>
    %c4 = arith.constant 4 : index
    %c0_45 = arith.constant 0 : index
    %c0_46 = arith.constant 0 : index
    %42 = vector.load %arg2[%c4, %c0_45, %c0_46] : memref<9x128x128xbf16, #tpu.memory_space<vmem>>, vector<1x128x128xbf16>
    %43 = vector.shape_cast %42 : vector<1x128x128xbf16> to vector<128x128xbf16>
    %cst_47 = arith.constant dense<0.000000e+00> : vector<256x128xf32>
    %44 = tpu.matmul %41, %43, %cst_47 {dimension_numbers = #tpu.dot_dimension_numbers<[1], [0], [0], [1], [0, 0, 1, 1], [], []>} : vector<256x128xbf16>, vector<128x128xbf16>, vector<256x128xf32> -> vector<256x128xf32>
    %c0_48 = arith.constant 0 : index
    %c0_49 = arith.constant 0 : index
    %45 = vector.load %arg9[%c0_48, %c0_49] : memref<256x128xf32, #tpu.memory_space<vmem>>, vector<256x128xf32>
    %46 = arith.addf %45, %44 : vector<256x128xf32>
    %c0_50 = arith.constant 0 : index
    %c0_51 = arith.constant 0 : index
    %47 = vector.load %arg9[%c0_50, %c0_51] : memref<256x128xf32, #tpu.memory_space<vmem>>, vector<256x128xf32>
    tpu.vector_store %arg9[%c0_50, %c0_51], %46 {strides = array<i32>} : memref<256x128xf32, #tpu.memory_space<vmem>>, vector<256x128xf32>,
    %c0_52 = arith.constant 0 : index
    %c1_53 = arith.constant 1 : index
    %c2_54 = arith.constant 2 : index
    %c0_55 = arith.constant 0 : index
    %48 = vector.load %arg1[%c0_52, %c1_53, %c2_54, %c0_55] : memref<1x18x18x128xf32, #tpu.memory_space<vmem>>, vector<1x16x16x128xf32>
    %49 = vector.shape_cast %48 : vector<1x16x16x128xf32> to vector<16x16x128xf32>
    %50 = vector.shape_cast %49 : vector<16x16x128xf32> to vector<256x128xf32>
    %51 = arith.truncf %50 : vector<256x128xf32> to vector<256x128xbf16>
    %c5 = arith.constant 5 : index
    %c0_56 = arith.constant 0 : index
    %c0_57 = arith.constant 0 : index
    %52 = vector.load %arg2[%c5, %c0_56, %c0_57] : memref<9x128x128xbf16, #tpu.memory_space<vmem>>, vector<1x128x128xbf16>
    %53 = vector.shape_cast %52 : vector<1x128x128xbf16> to vector<128x128xbf16>
    %cst_58 = arith.constant dense<0.000000e+00> : vector<256x128xf32>
    %54 = tpu.matmul %51, %53, %cst_58 {dimension_numbers = #tpu.dot_dimension_numbers<[1], [0], [0], [1], [0, 0, 1, 1], [], []>} : vector<256x128xbf16>, vector<128x128xbf16>, vector<256x128xf32> -> vector<256x128xf32>
    %c0_59 = arith.constant 0 : index
    %c0_60 = arith.constant 0 : index
    %55 = vector.load %arg9[%c0_59, %c0_60] : memref<256x128xf32, #tpu.memory_space<vmem>>, vector<256x128xf32>
    %56 = arith.addf %55, %54 : vector<256x128xf32>
    %c0_61 = arith.constant 0 : index
    %c0_62 = arith.constant 0 : index
    %57 = vector.load %arg9[%c0_61, %c0_62] : memref<256x128xf32, #tpu.memory_space<vmem>>, vector<256x128xf32>
    tpu.vector_store %arg9[%c0_61, %c0_62], %56 {strides = array<i32>} : memref<256x128xf32, #tpu.memory_space<vmem>>, vector<256x128xf32>,
    %c0_63 = arith.constant 0 : index
    %c2_64 = arith.constant 2 : index
    %c0_65 = arith.constant 0 : index
    %c0_66 = arith.constant 0 : index
    %58 = vector.load %arg1[%c0_63, %c2_64, %c0_65, %c0_66] : memref<1x18x18x128xf32, #tpu.memory_space<vmem>>, vector<1x16x16x128xf32>
    %59 = vector.shape_cast %58 : vector<1x16x16x128xf32> to vector<16x16x128xf32>
    %60 = vector.shape_cast %59 : vector<16x16x128xf32> to vector<256x128xf32>
    %61 = arith.truncf %60 : vector<256x128xf32> to vector<256x128xbf16>
    %c6 = arith.constant 6 : index
    %c0_67 = arith.constant 0 : index
    %c0_68 = arith.constant 0 : index
    %62 = vector.load %arg2[%c6, %c0_67, %c0_68] : memref<9x128x128xbf16, #tpu.memory_space<vmem>>, vector<1x128x128xbf16>
    %63 = vector.shape_cast %62 : vector<1x128x128xbf16> to vector<128x128xbf16>
    %cst_69 = arith.constant dense<0.000000e+00> : vector<256x128xf32>
    %64 = tpu.matmul %61, %63, %cst_69 {dimension_numbers = #tpu.dot_dimension_numbers<[1], [0], [0], [1], [0, 0, 1, 1], [], []>} : vector<256x128xbf16>, vector<128x128xbf16>, vector<256x128xf32> -> vector<256x128xf32>
    %c0_70 = arith.constant 0 : index
    %c0_71 = arith.constant 0 : index
    %65 = vector.load %arg9[%c0_70, %c0_71] : memref<256x128xf32, #tpu.memory_space<vmem>>, vector<256x128xf32>
    %66 = arith.addf %65, %64 : vector<256x128xf32>
    %c0_72 = arith.constant 0 : index
    %c0_73 = arith.constant 0 : index
    %67 = vector.load %arg9[%c0_72, %c0_73] : memref<256x128xf32, #tpu.memory_space<vmem>>, vector<256x128xf32>
    tpu.vector_store %arg9[%c0_72, %c0_73], %66 {strides = array<i32>} : memref<256x128xf32, #tpu.memory_space<vmem>>, vector<256x128xf32>,
    %c0_74 = arith.constant 0 : index
    %c2_75 = arith.constant 2 : index
    %c1_76 = arith.constant 1 : index
    %c0_77 = arith.constant 0 : index
    %68 = vector.load %arg1[%c0_74, %c2_75, %c1_76, %c0_77] : memref<1x18x18x128xf32, #tpu.memory_space<vmem>>, vector<1x16x16x128xf32>
    %69 = vector.shape_cast %68 : vector<1x16x16x128xf32> to vector<16x16x128xf32>
    %70 = vector.shape_cast %69 : vector<16x16x128xf32> to vector<256x128xf32>
    %71 = arith.truncf %70 : vector<256x128xf32> to vector<256x128xbf16>
    %c7 = arith.constant 7 : index
    %c0_78 = arith.constant 0 : index
    %c0_79 = arith.constant 0 : index
    %72 = vector.load %arg2[%c7, %c0_78, %c0_79] : memref<9x128x128xbf16, #tpu.memory_space<vmem>>, vector<1x128x128xbf16>
    %73 = vector.shape_cast %72 : vector<1x128x128xbf16> to vector<128x128xbf16>
    %cst_80 = arith.constant dense<0.000000e+00> : vector<256x128xf32>
    %74 = tpu.matmul %71, %73, %cst_80 {dimension_numbers = #tpu.dot_dimension_numbers<[1], [0], [0], [1], [0, 0, 1, 1], [], []>} : vector<256x128xbf16>, vector<128x128xbf16>, vector<256x128xf32> -> vector<256x128xf32>
    %c0_81 = arith.constant 0 : index
    %c0_82 = arith.constant 0 : index
    %75 = vector.load %arg9[%c0_81, %c0_82] : memref<256x128xf32, #tpu.memory_space<vmem>>, vector<256x128xf32>
    %76 = arith.addf %75, %74 : vector<256x128xf32>
    %c0_83 = arith.constant 0 : index
    %c0_84 = arith.constant 0 : index
    %77 = vector.load %arg9[%c0_83, %c0_84] : memref<256x128xf32, #tpu.memory_space<vmem>>, vector<256x128xf32>
    tpu.vector_store %arg9[%c0_83, %c0_84], %76 {strides = array<i32>} : memref<256x128xf32, #tpu.memory_space<vmem>>, vector<256x128xf32>,
    %c0_85 = arith.constant 0 : index
    %c2_86 = arith.constant 2 : index
    %c2_87 = arith.constant 2 : index
    %c0_88 = arith.constant 0 : index
    %78 = vector.load %arg1[%c0_85, %c2_86, %c2_87, %c0_88] : memref<1x18x18x128xf32, #tpu.memory_space<vmem>>, vector<1x16x16x128xf32>
    %79 = vector.shape_cast %78 : vector<1x16x16x128xf32> to vector<16x16x128xf32>
    %80 = vector.shape_cast %79 : vector<16x16x128xf32> to vector<256x128xf32>
    %81 = arith.truncf %80 : vector<256x128xf32> to vector<256x128xbf16>
    %c8 = arith.constant 8 : index
    %c0_89 = arith.constant 0 : index
    %c0_90 = arith.constant 0 : index
    %82 = vector.load %arg2[%c8, %c0_89, %c0_90] : memref<9x128x128xbf16, #tpu.memory_space<vmem>>, vector<1x128x128xbf16>
    %83 = vector.shape_cast %82 : vector<1x128x128xbf16> to vector<128x128xbf16>
    %cst_91 = arith.constant dense<0.000000e+00> : vector<256x128xf32>
    %84 = tpu.matmul %81, %83, %cst_91 {dimension_numbers = #tpu.dot_dimension_numbers<[1], [0], [0], [1], [0, 0, 1, 1], [], []>} : vector<256x128xbf16>, vector<128x128xbf16>, vector<256x128xf32> -> vector<256x128xf32>
    %c0_92 = arith.constant 0 : index
    %c0_93 = arith.constant 0 : index
    %85 = vector.load %arg9[%c0_92, %c0_93] : memref<256x128xf32, #tpu.memory_space<vmem>>, vector<256x128xf32>
    %86 = arith.addf %85, %84 : vector<256x128xf32>
    %c0_94 = arith.constant 0 : index
    %c0_95 = arith.constant 0 : index
    %87 = vector.load %arg9[%c0_94, %c0_95] : memref<256x128xf32, #tpu.memory_space<vmem>>, vector<256x128xf32>
    tpu.vector_store %arg9[%c0_94, %c0_95], %86 {strides = array<i32>} : memref<256x128xf32, #tpu.memory_space<vmem>>, vector<256x128xf32>,
    %c0_96 = arith.constant 0 : index
    %c0_97 = arith.constant 0 : index
    %88 = vector.load %arg9[%c0_96, %c0_97] : memref<256x128xf32, #tpu.memory_space<vmem>>, vector<256x128xf32>
    %c0_98 = arith.constant 0 : index
    %c0_99 = arith.constant 0 : index
    %89 = vector.load %arg3[%c0_98, %c0_99] : memref<1x128xf32, #tpu.memory_space<vmem>>, vector<1x128xf32>
    %90 = vector.broadcast %89 : vector<1x128xf32> to vector<256x128xf32>
    %91 = arith.addf %88, %90 : vector<256x128xf32>
    %cst_100 = arith.constant 0.000000e+00 : f32
    %92 = vector.broadcast %cst_100 : f32 to vector<256x128xf32>
    %93 = arith.maximumf %91, %92 : vector<256x128xf32>
    %94 = vector.shape_cast %93 : vector<256x128xf32> to vector<128x2x128xf32>
    %cst_101 = arith.constant dense<0xFF800000> : vector<128x128xf32>
    %95 = vector.multi_reduction <maximumf>, %94, %cst_101 [1] : vector<128x2x128xf32> to vector<128x128xf32>
    %96 = vector.shape_cast %95 : vector<128x128xf32> to vector<8x2x8x128xf32>
    %cst_102 = arith.constant dense<0xFF800000> : vector<8x8x128xf32>
    %97 = vector.multi_reduction <maximumf>, %96, %cst_102 [1] : vector<8x2x8x128xf32> to vector<8x8x128xf32>
    %cst_103 = arith.constant 0.000000e+00 : f32
    %98 = vector.broadcast %cst_103 : f32 to vector<10x10x128xf32>
    %c0_104 = arith.constant 0 : index
    %c0_105 = arith.constant 0 : index
    %c0_106 = arith.constant 0 : index
    %99 = vector.load %arg10[%c0_104, %c0_105, %c0_106] : memref<10x10x128xf32, #tpu.memory_space<vmem>>, vector<10x10x128xf32>
    tpu.vector_store %arg10[%c0_104, %c0_105, %c0_106], %98 {strides = array<i32>} : memref<10x10x128xf32, #tpu.memory_space<vmem>>, vector<10x10x128xf32>,
    %c1_107 = arith.constant 1 : index
    %c1_108 = arith.constant 1 : index
    %c0_109 = arith.constant 0 : index
    %100 = vector.load %arg10[%c1_107, %c1_108, %c0_109] : memref<10x10x128xf32, #tpu.memory_space<vmem>>, vector<8x8x128xf32>
    tpu.vector_store %arg10[%c1_107, %c1_108, %c0_109], %97 {strides = array<i32>} : memref<10x10x128xf32, #tpu.memory_space<vmem>>, vector<8x8x128xf32>,
    %cst_110 = arith.constant 0.000000e+00 : f32
    %101 = vector.broadcast %cst_110 : f32 to vector<64x128xf32>
    %c0_111 = arith.constant 0 : index
    %c0_112 = arith.constant 0 : index
    %c0_113 = arith.constant 0 : index
    %102 = vector.load %arg10[%c0_111, %c0_112, %c0_113] : memref<10x10x128xf32, #tpu.memory_space<vmem>>, vector<8x8x128xf32>
    %103 = vector.shape_cast %102 : vector<8x8x128xf32> to vector<64x128xf32>
    %104 = arith.truncf %103 : vector<64x128xf32> to vector<64x128xbf16>
    %c0_114 = arith.constant 0 : index
    %c0_115 = arith.constant 0 : index
    %c0_116 = arith.constant 0 : index
    %105 = vector.load %arg4[%c0_114, %c0_115, %c0_116] : memref<9x128x128xbf16, #tpu.memory_space<vmem>>, vector<1x128x128xbf16>
    %106 = vector.shape_cast %105 : vector<1x128x128xbf16> to vector<128x128xbf16>
    %cst_117 = arith.constant dense<0.000000e+00> : vector<64x128xf32>
    %107 = tpu.matmul %104, %106, %cst_117 {dimension_numbers = #tpu.dot_dimension_numbers<[1], [0], [0], [1], [0, 0, 1, 1], [], []>} : vector<64x128xbf16>, vector<128x128xbf16>, vector<64x128xf32> -> vector<64x128xf32>
    %108 = arith.addf %101, %107 : vector<64x128xf32>
    %c0_118 = arith.constant 0 : index
    %c1_119 = arith.constant 1 : index
    %c0_120 = arith.constant 0 : index
    %109 = vector.load %arg10[%c0_118, %c1_119, %c0_120] : memref<10x10x128xf32, #tpu.memory_space<vmem>>, vector<8x8x128xf32>
    %110 = vector.shape_cast %109 : vector<8x8x128xf32> to vector<64x128xf32>
    %111 = arith.truncf %110 : vector<64x128xf32> to vector<64x128xbf16>
    %c1_121 = arith.constant 1 : index
    %c0_122 = arith.constant 0 : index
    %c0_123 = arith.constant 0 : index
    %112 = vector.load %arg4[%c1_121, %c0_122, %c0_123] : memref<9x128x128xbf16, #tpu.memory_space<vmem>>, vector<1x128x128xbf16>
    %113 = vector.shape_cast %112 : vector<1x128x128xbf16> to vector<128x128xbf16>
    %cst_124 = arith.constant dense<0.000000e+00> : vector<64x128xf32>
    %114 = tpu.matmul %111, %113, %cst_124 {dimension_numbers = #tpu.dot_dimension_numbers<[1], [0], [0], [1], [0, 0, 1, 1], [], []>} : vector<64x128xbf16>, vector<128x128xbf16>, vector<64x128xf32> -> vector<64x128xf32>
    %115 = arith.addf %108, %114 : vector<64x128xf32>
    %c0_125 = arith.constant 0 : index
    %c2_126 = arith.constant 2 : index
    %c0_127 = arith.constant 0 : index
    %116 = vector.load %arg10[%c0_125, %c2_126, %c0_127] : memref<10x10x128xf32, #tpu.memory_space<vmem>>, vector<8x8x128xf32>
    %117 = vector.shape_cast %116 : vector<8x8x128xf32> to vector<64x128xf32>
    %118 = arith.truncf %117 : vector<64x128xf32> to vector<64x128xbf16>
    %c2_128 = arith.constant 2 : index
    %c0_129 = arith.constant 0 : index
    %c0_130 = arith.constant 0 : index
    %119 = vector.load %arg4[%c2_128, %c0_129, %c0_130] : memref<9x128x128xbf16, #tpu.memory_space<vmem>>, vector<1x128x128xbf16>
    %120 = vector.shape_cast %119 : vector<1x128x128xbf16> to vector<128x128xbf16>
    %cst_131 = arith.constant dense<0.000000e+00> : vector<64x128xf32>
    %121 = tpu.matmul %118, %120, %cst_131 {dimension_numbers = #tpu.dot_dimension_numbers<[1], [0], [0], [1], [0, 0, 1, 1], [], []>} : vector<64x128xbf16>, vector<128x128xbf16>, vector<64x128xf32> -> vector<64x128xf32>
    %122 = arith.addf %115, %121 : vector<64x128xf32>
    %c1_132 = arith.constant 1 : index
    %c0_133 = arith.constant 0 : index
    %c0_134 = arith.constant 0 : index
    %123 = vector.load %arg10[%c1_132, %c0_133, %c0_134] : memref<10x10x128xf32, #tpu.memory_space<vmem>>, vector<8x8x128xf32>
    %124 = vector.shape_cast %123 : vector<8x8x128xf32> to vector<64x128xf32>
    %125 = arith.truncf %124 : vector<64x128xf32> to vector<64x128xbf16>
    %c3_135 = arith.constant 3 : index
    %c0_136 = arith.constant 0 : index
    %c0_137 = arith.constant 0 : index
    %126 = vector.load %arg4[%c3_135, %c0_136, %c0_137] : memref<9x128x128xbf16, #tpu.memory_space<vmem>>, vector<1x128x128xbf16>
    %127 = vector.shape_cast %126 : vector<1x128x128xbf16> to vector<128x128xbf16>
    %cst_138 = arith.constant dense<0.000000e+00> : vector<64x128xf32>
    %128 = tpu.matmul %125, %127, %cst_138 {dimension_numbers = #tpu.dot_dimension_numbers<[1], [0], [0], [1], [0, 0, 1, 1], [], []>} : vector<64x128xbf16>, vector<128x128xbf16>, vector<64x128xf32> -> vector<64x128xf32>
    %129 = arith.addf %122, %128 : vector<64x128xf32>
    %c1_139 = arith.constant 1 : index
    %c1_140 = arith.constant 1 : index
    %c0_141 = arith.constant 0 : index
    %130 = vector.load %arg10[%c1_139, %c1_140, %c0_141] : memref<10x10x128xf32, #tpu.memory_space<vmem>>, vector<8x8x128xf32>
    %131 = vector.shape_cast %130 : vector<8x8x128xf32> to vector<64x128xf32>
    %132 = arith.truncf %131 : vector<64x128xf32> to vector<64x128xbf16>
    %c4_142 = arith.constant 4 : index
    %c0_143 = arith.constant 0 : index
    %c0_144 = arith.constant 0 : index
    %133 = vector.load %arg4[%c4_142, %c0_143, %c0_144] : memref<9x128x128xbf16, #tpu.memory_space<vmem>>, vector<1x128x128xbf16>
    %134 = vector.shape_cast %133 : vector<1x128x128xbf16> to vector<128x128xbf16>
    %cst_145 = arith.constant dense<0.000000e+00> : vector<64x128xf32>
    %135 = tpu.matmul %132, %134, %cst_145 {dimension_numbers = #tpu.dot_dimension_numbers<[1], [0], [0], [1], [0, 0, 1, 1], [], []>} : vector<64x128xbf16>, vector<128x128xbf16>, vector<64x128xf32> -> vector<64x128xf32>
    %136 = arith.addf %129, %135 : vector<64x128xf32>
    %c1_146 = arith.constant 1 : index
    %c2_147 = arith.constant 2 : index
    %c0_148 = arith.constant 0 : index
    %137 = vector.load %arg10[%c1_146, %c2_147, %c0_148] : memref<10x10x128xf32, #tpu.memory_space<vmem>>, vector<8x8x128xf32>
    %138 = vector.shape_cast %137 : vector<8x8x128xf32> to vector<64x128xf32>
    %139 = arith.truncf %138 : vector<64x128xf32> to vector<64x128xbf16>
    %c5_149 = arith.constant 5 : index
    %c0_150 = arith.constant 0 : index
    %c0_151 = arith.constant 0 : index
    %140 = vector.load %arg4[%c5_149, %c0_150, %c0_151] : memref<9x128x128xbf16, #tpu.memory_space<vmem>>, vector<1x128x128xbf16>
    %141 = vector.shape_cast %140 : vector<1x128x128xbf16> to vector<128x128xbf16>
    %cst_152 = arith.constant dense<0.000000e+00> : vector<64x128xf32>
    %142 = tpu.matmul %139, %141, %cst_152 {dimension_numbers = #tpu.dot_dimension_numbers<[1], [0], [0], [1], [0, 0, 1, 1], [], []>} : vector<64x128xbf16>, vector<128x128xbf16>, vector<64x128xf32> -> vector<64x128xf32>
    %143 = arith.addf %136, %142 : vector<64x128xf32>
    %c2_153 = arith.constant 2 : index
    %c0_154 = arith.constant 0 : index
    %c0_155 = arith.constant 0 : index
    %144 = vector.load %arg10[%c2_153, %c0_154, %c0_155] : memref<10x10x128xf32, #tpu.memory_space<vmem>>, vector<8x8x128xf32>
    %145 = vector.shape_cast %144 : vector<8x8x128xf32> to vector<64x128xf32>
    %146 = arith.truncf %145 : vector<64x128xf32> to vector<64x128xbf16>
    %c6_156 = arith.constant 6 : index
    %c0_157 = arith.constant 0 : index
    %c0_158 = arith.constant 0 : index
    %147 = vector.load %arg4[%c6_156, %c0_157, %c0_158] : memref<9x128x128xbf16, #tpu.memory_space<vmem>>, vector<1x128x128xbf16>
    %148 = vector.shape_cast %147 : vector<1x128x128xbf16> to vector<128x128xbf16>
    %cst_159 = arith.constant dense<0.000000e+00> : vector<64x128xf32>
    %149 = tpu.matmul %146, %148, %cst_159 {dimension_numbers = #tpu.dot_dimension_numbers<[1], [0], [0], [1], [0, 0, 1, 1], [], []>} : vector<64x128xbf16>, vector<128x128xbf16>, vector<64x128xf32> -> vector<64x128xf32>
    %150 = arith.addf %143, %149 : vector<64x128xf32>
    %c2_160 = arith.constant 2 : index
    %c1_161 = arith.constant 1 : index
    %c0_162 = arith.constant 0 : index
    %151 = vector.load %arg10[%c2_160, %c1_161, %c0_162] : memref<10x10x128xf32, #tpu.memory_space<vmem>>, vector<8x8x128xf32>
    %152 = vector.shape_cast %151 : vector<8x8x128xf32> to vector<64x128xf32>
    %153 = arith.truncf %152 : vector<64x128xf32> to vector<64x128xbf16>
    %c7_163 = arith.constant 7 : index
    %c0_164 = arith.constant 0 : index
    %c0_165 = arith.constant 0 : index
    %154 = vector.load %arg4[%c7_163, %c0_164, %c0_165] : memref<9x128x128xbf16, #tpu.memory_space<vmem>>, vector<1x128x128xbf16>
    %155 = vector.shape_cast %154 : vector<1x128x128xbf16> to vector<128x128xbf16>
    %cst_166 = arith.constant dense<0.000000e+00> : vector<64x128xf32>
    %156 = tpu.matmul %153, %155, %cst_166 {dimension_numbers = #tpu.dot_dimension_numbers<[1], [0], [0], [1], [0, 0, 1, 1], [], []>} : vector<64x128xbf16>, vector<128x128xbf16>, vector<64x128xf32> -> vector<64x128xf32>
    %157 = arith.addf %150, %156 : vector<64x128xf32>
    %c2_167 = arith.constant 2 : index
    %c2_168 = arith.constant 2 : index
    %c0_169 = arith.constant 0 : index
    %158 = vector.load %arg10[%c2_167, %c2_168, %c0_169] : memref<10x10x128xf32, #tpu.memory_space<vmem>>, vector<8x8x128xf32>
    %159 = vector.shape_cast %158 : vector<8x8x128xf32> to vector<64x128xf32>
    %160 = arith.truncf %159 : vector<64x128xf32> to vector<64x128xbf16>
    %c8_170 = arith.constant 8 : index
    %c0_171 = arith.constant 0 : index
    %c0_172 = arith.constant 0 : index
    %161 = vector.load %arg4[%c8_170, %c0_171, %c0_172] : memref<9x128x128xbf16, #tpu.memory_space<vmem>>, vector<1x128x128xbf16>
    %162 = vector.shape_cast %161 : vector<1x128x128xbf16> to vector<128x128xbf16>
    %cst_173 = arith.constant dense<0.000000e+00> : vector<64x128xf32>
    %163 = tpu.matmul %160, %162, %cst_173 {dimension_numbers = #tpu.dot_dimension_numbers<[1], [0], [0], [1], [0, 0, 1, 1], [], []>} : vector<64x128xbf16>, vector<128x128xbf16>, vector<64x128xf32> -> vector<64x128xf32>
    %164 = arith.addf %157, %163 : vector<64x128xf32>
    %c0_174 = arith.constant 0 : index
    %c0_175 = arith.constant 0 : index
    %165 = vector.load %arg5[%c0_174, %c0_175] : memref<1x128xf32, #tpu.memory_space<vmem>>, vector<1x128xf32>
    %166 = vector.broadcast %165 : vector<1x128xf32> to vector<64x128xf32>
    %167 = arith.addf %164, %166 : vector<64x128xf32>
    %cst_176 = arith.constant 0.000000e+00 : f32
    %168 = vector.broadcast %cst_176 : f32 to vector<64x128xf32>
    %169 = arith.maximumf %167, %168 : vector<64x128xf32>
    %170 = vector.shape_cast %169 : vector<64x128xf32> to vector<32x2x128xf32>
    %cst_177 = arith.constant dense<0xFF800000> : vector<32x128xf32>
    %171 = vector.multi_reduction <maximumf>, %170, %cst_177 [1] : vector<32x2x128xf32> to vector<32x128xf32>
    %172 = vector.shape_cast %171 : vector<32x128xf32> to vector<4x2x4x128xf32>
    %cst_178 = arith.constant dense<0xFF800000> : vector<4x4x128xf32>
    %173 = vector.multi_reduction <maximumf>, %172, %cst_178 [1] : vector<4x2x4x128xf32> to vector<4x4x128xf32>
    %174 = vector.shape_cast %173 : vector<4x4x128xf32> to vector<16x128xf32>
    %cst_179 = arith.constant 0.000000e+00 : f32
    %175 = vector.broadcast %cst_179 : f32 to vector<1x128xf32>
    %176 = vector.extract_strided_slice %174 {offsets = [0, 0], sizes = [1, 128], strides = [1, 1]} : vector<16x128xf32> to vector<1x128xf32>
    %177 = arith.truncf %176 : vector<1x128xf32> to vector<1x128xbf16>
    %c0_180 = arith.constant 0 : index
    %c0_181 = arith.constant 0 : index
    %c0_182 = arith.constant 0 : index
    %178 = vector.load %arg6[%c0_180, %c0_181, %c0_182] : memref<16x128x128xbf16, #tpu.memory_space<vmem>>, vector<1x128x128xbf16>
    %179 = vector.shape_cast %178 : vector<1x128x128xbf16> to vector<128x128xbf16>
    %cst_183 = arith.constant dense<0.000000e+00> : vector<1x128xf32>
    %180 = tpu.matmul %177, %179, %cst_183 {dimension_numbers = #tpu.dot_dimension_numbers<[1], [0], [0], [1], [0, 0, 1, 1], [], []>} : vector<1x128xbf16>, vector<128x128xbf16>, vector<1x128xf32> -> vector<1x128xf32>
    %181 = arith.addf %175, %180 : vector<1x128xf32>
    %182 = vector.extract_strided_slice %174 {offsets = [1, 0], sizes = [1, 128], strides = [1, 1]} : vector<16x128xf32> to vector<1x128xf32>
    %183 = arith.truncf %182 : vector<1x128xf32> to vector<1x128xbf16>
    %c1_184 = arith.constant 1 : index
    %c0_185 = arith.constant 0 : index
    %c0_186 = arith.constant 0 : index
    %184 = vector.load %arg6[%c1_184, %c0_185, %c0_186] : memref<16x128x128xbf16, #tpu.memory_space<vmem>>, vector<1x128x128xbf16>
    %185 = vector.shape_cast %184 : vector<1x128x128xbf16> to vector<128x128xbf16>
    %cst_187 = arith.constant dense<0.000000e+00> : vector<1x128xf32>
    %186 = tpu.matmul %183, %185, %cst_187 {dimension_numbers = #tpu.dot_dimension_numbers<[1], [0], [0], [1], [0, 0, 1, 1], [], []>} : vector<1x128xbf16>, vector<128x128xbf16>, vector<1x128xf32> -> vector<1x128xf32>
    %187 = arith.addf %181, %186 : vector<1x128xf32>
    %188 = vector.extract_strided_slice %174 {offsets = [2, 0], sizes = [1, 128], strides = [1, 1]} : vector<16x128xf32> to vector<1x128xf32>
    %189 = arith.truncf %188 : vector<1x128xf32> to vector<1x128xbf16>
    %c2_188 = arith.constant 2 : index
    %c0_189 = arith.constant 0 : index
    %c0_190 = arith.constant 0 : index
    %190 = vector.load %arg6[%c2_188, %c0_189, %c0_190] : memref<16x128x128xbf16, #tpu.memory_space<vmem>>, vector<1x128x128xbf16>
    %191 = vector.shape_cast %190 : vector<1x128x128xbf16> to vector<128x128xbf16>
    %cst_191 = arith.constant dense<0.000000e+00> : vector<1x128xf32>
    %192 = tpu.matmul %189, %191, %cst_191 {dimension_numbers = #tpu.dot_dimension_numbers<[1], [0], [0], [1], [0, 0, 1, 1], [], []>} : vector<1x128xbf16>, vector<128x128xbf16>, vector<1x128xf32> -> vector<1x128xf32>
    %193 = arith.addf %187, %192 : vector<1x128xf32>
    %194 = vector.extract_strided_slice %174 {offsets = [3, 0], sizes = [1, 128], strides = [1, 1]} : vector<16x128xf32> to vector<1x128xf32>
    %195 = arith.truncf %194 : vector<1x128xf32> to vector<1x128xbf16>
    %c3_192 = arith.constant 3 : index
    %c0_193 = arith.constant 0 : index
    %c0_194 = arith.constant 0 : index
    %196 = vector.load %arg6[%c3_192, %c0_193, %c0_194] : memref<16x128x128xbf16, #tpu.memory_space<vmem>>, vector<1x128x128xbf16>
    %197 = vector.shape_cast %196 : vector<1x128x128xbf16> to vector<128x128xbf16>
    %cst_195 = arith.constant dense<0.000000e+00> : vector<1x128xf32>
    %198 = tpu.matmul %195, %197, %cst_195 {dimension_numbers = #tpu.dot_dimension_numbers<[1], [0], [0], [1], [0, 0, 1, 1], [], []>} : vector<1x128xbf16>, vector<128x128xbf16>, vector<1x128xf32> -> vector<1x128xf32>
    %199 = arith.addf %193, %198 : vector<1x128xf32>
    %200 = vector.extract_strided_slice %174 {offsets = [4, 0], sizes = [1, 128], strides = [1, 1]} : vector<16x128xf32> to vector<1x128xf32>
    %201 = arith.truncf %200 : vector<1x128xf32> to vector<1x128xbf16>
    %c4_196 = arith.constant 4 : index
    %c0_197 = arith.constant 0 : index
    %c0_198 = arith.constant 0 : index
    %202 = vector.load %arg6[%c4_196, %c0_197, %c0_198] : memref<16x128x128xbf16, #tpu.memory_space<vmem>>, vector<1x128x128xbf16>
    %203 = vector.shape_cast %202 : vector<1x128x128xbf16> to vector<128x128xbf16>
    %cst_199 = arith.constant dense<0.000000e+00> : vector<1x128xf32>
    %204 = tpu.matmul %201, %203, %cst_199 {dimension_numbers = #tpu.dot_dimension_numbers<[1], [0], [0], [1], [0, 0, 1, 1], [], []>} : vector<1x128xbf16>, vector<128x128xbf16>, vector<1x128xf32> -> vector<1x128xf32>
    %205 = arith.addf %199, %204 : vector<1x128xf32>
    %206 = vector.extract_strided_slice %174 {offsets = [5, 0], sizes = [1, 128], strides = [1, 1]} : vector<16x128xf32> to vector<1x128xf32>
    %207 = arith.truncf %206 : vector<1x128xf32> to vector<1x128xbf16>
    %c5_200 = arith.constant 5 : index
    %c0_201 = arith.constant 0 : index
    %c0_202 = arith.constant 0 : index
    %208 = vector.load %arg6[%c5_200, %c0_201, %c0_202] : memref<16x128x128xbf16, #tpu.memory_space<vmem>>, vector<1x128x128xbf16>
    %209 = vector.shape_cast %208 : vector<1x128x128xbf16> to vector<128x128xbf16>
    %cst_203 = arith.constant dense<0.000000e+00> : vector<1x128xf32>
    %210 = tpu.matmul %207, %209, %cst_203 {dimension_numbers = #tpu.dot_dimension_numbers<[1], [0], [0], [1], [0, 0, 1, 1], [], []>} : vector<1x128xbf16>, vector<128x128xbf16>, vector<1x128xf32> -> vector<1x128xf32>
    %211 = arith.addf %205, %210 : vector<1x128xf32>
    %212 = vector.extract_strided_slice %174 {offsets = [6, 0], sizes = [1, 128], strides = [1, 1]} : vector<16x128xf32> to vector<1x128xf32>
    %213 = arith.truncf %212 : vector<1x128xf32> to vector<1x128xbf16>
    %c6_204 = arith.constant 6 : index
    %c0_205 = arith.constant 0 : index
    %c0_206 = arith.constant 0 : index
    %214 = vector.load %arg6[%c6_204, %c0_205, %c0_206] : memref<16x128x128xbf16, #tpu.memory_space<vmem>>, vector<1x128x128xbf16>
    %215 = vector.shape_cast %214 : vector<1x128x128xbf16> to vector<128x128xbf16>
    %cst_207 = arith.constant dense<0.000000e+00> : vector<1x128xf32>
    %216 = tpu.matmul %213, %215, %cst_207 {dimension_numbers = #tpu.dot_dimension_numbers<[1], [0], [0], [1], [0, 0, 1, 1], [], []>} : vector<1x128xbf16>, vector<128x128xbf16>, vector<1x128xf32> -> vector<1x128xf32>
    %217 = arith.addf %211, %216 : vector<1x128xf32>
    %218 = vector.extract_strided_slice %174 {offsets = [7, 0], sizes = [1, 128], strides = [1, 1]} : vector<16x128xf32> to vector<1x128xf32>
    %219 = arith.truncf %218 : vector<1x128xf32> to vector<1x128xbf16>
    %c7_208 = arith.constant 7 : index
    %c0_209 = arith.constant 0 : index
    %c0_210 = arith.constant 0 : index
    %220 = vector.load %arg6[%c7_208, %c0_209, %c0_210] : memref<16x128x128xbf16, #tpu.memory_space<vmem>>, vector<1x128x128xbf16>
    %221 = vector.shape_cast %220 : vector<1x128x128xbf16> to vector<128x128xbf16>
    %cst_211 = arith.constant dense<0.000000e+00> : vector<1x128xf32>
    %222 = tpu.matmul %219, %221, %cst_211 {dimension_numbers = #tpu.dot_dimension_numbers<[1], [0], [0], [1], [0, 0, 1, 1], [], []>} : vector<1x128xbf16>, vector<128x128xbf16>, vector<1x128xf32> -> vector<1x128xf32>
    %223 = arith.addf %217, %222 : vector<1x128xf32>
    %224 = vector.extract_strided_slice %174 {offsets = [8, 0], sizes = [1, 128], strides = [1, 1]} : vector<16x128xf32> to vector<1x128xf32>
    %225 = arith.truncf %224 : vector<1x128xf32> to vector<1x128xbf16>
    %c8_212 = arith.constant 8 : index
    %c0_213 = arith.constant 0 : index
    %c0_214 = arith.constant 0 : index
    %226 = vector.load %arg6[%c8_212, %c0_213, %c0_214] : memref<16x128x128xbf16, #tpu.memory_space<vmem>>, vector<1x128x128xbf16>
    %227 = vector.shape_cast %226 : vector<1x128x128xbf16> to vector<128x128xbf16>
    %cst_215 = arith.constant dense<0.000000e+00> : vector<1x128xf32>
    %228 = tpu.matmul %225, %227, %cst_215 {dimension_numbers = #tpu.dot_dimension_numbers<[1], [0], [0], [1], [0, 0, 1, 1], [], []>} : vector<1x128xbf16>, vector<128x128xbf16>, vector<1x128xf32> -> vector<1x128xf32>
    %229 = arith.addf %223, %228 : vector<1x128xf32>
    %230 = vector.extract_strided_slice %174 {offsets = [9, 0], sizes = [1, 128], strides = [1, 1]} : vector<16x128xf32> to vector<1x128xf32>
    %231 = arith.truncf %230 : vector<1x128xf32> to vector<1x128xbf16>
    %c9 = arith.constant 9 : index
    %c0_216 = arith.constant 0 : index
    %c0_217 = arith.constant 0 : index
    %232 = vector.load %arg6[%c9, %c0_216, %c0_217] : memref<16x128x128xbf16, #tpu.memory_space<vmem>>, vector<1x128x128xbf16>
    %233 = vector.shape_cast %232 : vector<1x128x128xbf16> to vector<128x128xbf16>
    %cst_218 = arith.constant dense<0.000000e+00> : vector<1x128xf32>
    %234 = tpu.matmul %231, %233, %cst_218 {dimension_numbers = #tpu.dot_dimension_numbers<[1], [0], [0], [1], [0, 0, 1, 1], [], []>} : vector<1x128xbf16>, vector<128x128xbf16>, vector<1x128xf32> -> vector<1x128xf32>
    %235 = arith.addf %229, %234 : vector<1x128xf32>
    %236 = vector.extract_strided_slice %174 {offsets = [10, 0], sizes = [1, 128], strides = [1, 1]} : vector<16x128xf32> to vector<1x128xf32>
    %237 = arith.truncf %236 : vector<1x128xf32> to vector<1x128xbf16>
    %c10 = arith.constant 10 : index
    %c0_219 = arith.constant 0 : index
    %c0_220 = arith.constant 0 : index
    %238 = vector.load %arg6[%c10, %c0_219, %c0_220] : memref<16x128x128xbf16, #tpu.memory_space<vmem>>, vector<1x128x128xbf16>
    %239 = vector.shape_cast %238 : vector<1x128x128xbf16> to vector<128x128xbf16>
    %cst_221 = arith.constant dense<0.000000e+00> : vector<1x128xf32>
    %240 = tpu.matmul %237, %239, %cst_221 {dimension_numbers = #tpu.dot_dimension_numbers<[1], [0], [0], [1], [0, 0, 1, 1], [], []>} : vector<1x128xbf16>, vector<128x128xbf16>, vector<1x128xf32> -> vector<1x128xf32>
    %241 = arith.addf %235, %240 : vector<1x128xf32>
    %242 = vector.extract_strided_slice %174 {offsets = [11, 0], sizes = [1, 128], strides = [1, 1]} : vector<16x128xf32> to vector<1x128xf32>
    %243 = arith.truncf %242 : vector<1x128xf32> to vector<1x128xbf16>
    %c11 = arith.constant 11 : index
    %c0_222 = arith.constant 0 : index
    %c0_223 = arith.constant 0 : index
    %244 = vector.load %arg6[%c11, %c0_222, %c0_223] : memref<16x128x128xbf16, #tpu.memory_space<vmem>>, vector<1x128x128xbf16>
    %245 = vector.shape_cast %244 : vector<1x128x128xbf16> to vector<128x128xbf16>
    %cst_224 = arith.constant dense<0.000000e+00> : vector<1x128xf32>
    %246 = tpu.matmul %243, %245, %cst_224 {dimension_numbers = #tpu.dot_dimension_numbers<[1], [0], [0], [1], [0, 0, 1, 1], [], []>} : vector<1x128xbf16>, vector<128x128xbf16>, vector<1x128xf32> -> vector<1x128xf32>
    %247 = arith.addf %241, %246 : vector<1x128xf32>
    %248 = vector.extract_strided_slice %174 {offsets = [12, 0], sizes = [1, 128], strides = [1, 1]} : vector<16x128xf32> to vector<1x128xf32>
    %249 = arith.truncf %248 : vector<1x128xf32> to vector<1x128xbf16>
    %c12 = arith.constant 12 : index
    %c0_225 = arith.constant 0 : index
    %c0_226 = arith.constant 0 : index
    %250 = vector.load %arg6[%c12, %c0_225, %c0_226] : memref<16x128x128xbf16, #tpu.memory_space<vmem>>, vector<1x128x128xbf16>
    %251 = vector.shape_cast %250 : vector<1x128x128xbf16> to vector<128x128xbf16>
    %cst_227 = arith.constant dense<0.000000e+00> : vector<1x128xf32>
    %252 = tpu.matmul %249, %251, %cst_227 {dimension_numbers = #tpu.dot_dimension_numbers<[1], [0], [0], [1], [0, 0, 1, 1], [], []>} : vector<1x128xbf16>, vector<128x128xbf16>, vector<1x128xf32> -> vector<1x128xf32>
    %253 = arith.addf %247, %252 : vector<1x128xf32>
    %254 = vector.extract_strided_slice %174 {offsets = [13, 0], sizes = [1, 128], strides = [1, 1]} : vector<16x128xf32> to vector<1x128xf32>
    %255 = arith.truncf %254 : vector<1x128xf32> to vector<1x128xbf16>
    %c13 = arith.constant 13 : index
    %c0_228 = arith.constant 0 : index
    %c0_229 = arith.constant 0 : index
    %256 = vector.load %arg6[%c13, %c0_228, %c0_229] : memref<16x128x128xbf16, #tpu.memory_space<vmem>>, vector<1x128x128xbf16>
    %257 = vector.shape_cast %256 : vector<1x128x128xbf16> to vector<128x128xbf16>
    %cst_230 = arith.constant dense<0.000000e+00> : vector<1x128xf32>
    %258 = tpu.matmul %255, %257, %cst_230 {dimension_numbers = #tpu.dot_dimension_numbers<[1], [0], [0], [1], [0, 0, 1, 1], [], []>} : vector<1x128xbf16>, vector<128x128xbf16>, vector<1x128xf32> -> vector<1x128xf32>
    %259 = arith.addf %253, %258 : vector<1x128xf32>
    %260 = vector.extract_strided_slice %174 {offsets = [14, 0], sizes = [1, 128], strides = [1, 1]} : vector<16x128xf32> to vector<1x128xf32>
    %261 = arith.truncf %260 : vector<1x128xf32> to vector<1x128xbf16>
    %c14 = arith.constant 14 : index
    %c0_231 = arith.constant 0 : index
    %c0_232 = arith.constant 0 : index
    %262 = vector.load %arg6[%c14, %c0_231, %c0_232] : memref<16x128x128xbf16, #tpu.memory_space<vmem>>, vector<1x128x128xbf16>
    %263 = vector.shape_cast %262 : vector<1x128x128xbf16> to vector<128x128xbf16>
    %cst_233 = arith.constant dense<0.000000e+00> : vector<1x128xf32>
    %264 = tpu.matmul %261, %263, %cst_233 {dimension_numbers = #tpu.dot_dimension_numbers<[1], [0], [0], [1], [0, 0, 1, 1], [], []>} : vector<1x128xbf16>, vector<128x128xbf16>, vector<1x128xf32> -> vector<1x128xf32>
    %265 = arith.addf %259, %264 : vector<1x128xf32>
    %266 = vector.extract_strided_slice %174 {offsets = [15, 0], sizes = [1, 128], strides = [1, 1]} : vector<16x128xf32> to vector<1x128xf32>
    %267 = arith.truncf %266 : vector<1x128xf32> to vector<1x128xbf16>
    %c15 = arith.constant 15 : index
    %c0_234 = arith.constant 0 : index
    %c0_235 = arith.constant 0 : index
    %268 = vector.load %arg6[%c15, %c0_234, %c0_235] : memref<16x128x128xbf16, #tpu.memory_space<vmem>>, vector<1x128x128xbf16>
    %269 = vector.shape_cast %268 : vector<1x128x128xbf16> to vector<128x128xbf16>
    %cst_236 = arith.constant dense<0.000000e+00> : vector<1x128xf32>
    %270 = tpu.matmul %267, %269, %cst_236 {dimension_numbers = #tpu.dot_dimension_numbers<[1], [0], [0], [1], [0, 0, 1, 1], [], []>} : vector<1x128xbf16>, vector<128x128xbf16>, vector<1x128xf32> -> vector<1x128xf32>
    %271 = arith.addf %265, %270 : vector<1x128xf32>
    %c0_237 = arith.constant 0 : index
    %c0_238 = arith.constant 0 : index
    %272 = vector.load %arg7[%c0_237, %c0_238] : memref<1x128xf32, #tpu.memory_space<vmem>>, vector<1x128xf32>
    %273 = arith.addf %271, %272 : vector<1x128xf32>
    %c0_239 = arith.constant 0 : index
    %c0_240 = arith.constant 0 : index
    %c0_241 = arith.constant 0 : index
    %274 = vector.load %arg8[%c0_239, %c0_240, %c0_241] : memref<1x1x128xf32, #tpu.memory_space<vmem>>, vector<1x1x128xf32>
    %275 = vector.shape_cast %274 : vector<1x1x128xf32> to vector<1x128xf32>
    %276 = vector.shape_cast %273 : vector<1x128xf32> to vector<1x1x128xf32>
    tpu.vector_store %arg8[%c0_239, %c0_240, %c0_241], %276 {strides = array<i32>} : memref<1x1x128xf32, #tpu.memory_space<vmem>>, vector<1x1x128xf32>,
    return
  }
  func.func @transform_0(%arg0: i32) -> (i32, i32, i32, i32) {
    %c0_i32 = arith.constant 0 : i32
    %c0_i32_0 = arith.constant 0 : i32
    %c0_i32_1 = arith.constant 0 : i32
    %c0_i32_2 = arith.constant 0 : i32
    return %arg0, %c0_i32, %c0_i32_0, %c0_i32_1 : i32, i32, i32, i32
  }
  func.func @transform_1(%arg0: i32) -> (i32, i32, i32) {
    %c0_i32 = arith.constant 0 : i32
    %c0_i32_0 = arith.constant 0 : i32
    %c0_i32_1 = arith.constant 0 : i32
    %c0_i32_2 = arith.constant 0 : i32
    return %c0_i32, %c0_i32_0, %c0_i32_1 : i32, i32, i32
  }
  func.func @transform_2(%arg0: i32) -> (i32, i32) {
    %c0_i32 = arith.constant 0 : i32
    %c0_i32_0 = arith.constant 0 : i32
    %c0_i32_1 = arith.constant 0 : i32
    return %c0_i32, %c0_i32_0 : i32, i32
  }
  func.func @transform_3(%arg0: i32) -> (i32, i32, i32) {
    %c0_i32 = arith.constant 0 : i32
    %c0_i32_0 = arith.constant 0 : i32
    %c0_i32_1 = arith.constant 0 : i32
    %c0_i32_2 = arith.constant 0 : i32
    return %c0_i32, %c0_i32_0, %c0_i32_1 : i32, i32, i32
  }
  func.func @transform_4(%arg0: i32) -> (i32, i32) {
    %c0_i32 = arith.constant 0 : i32
    %c0_i32_0 = arith.constant 0 : i32
    %c0_i32_1 = arith.constant 0 : i32
    return %c0_i32, %c0_i32_0 : i32, i32
  }
  func.func @transform_5(%arg0: i32) -> (i32, i32, i32) {
    %c0_i32 = arith.constant 0 : i32
    %c0_i32_0 = arith.constant 0 : i32
    %c0_i32_1 = arith.constant 0 : i32
    %c0_i32_2 = arith.constant 0 : i32
    return %c0_i32, %c0_i32_0, %c0_i32_1 : i32, i32, i32
  }
  func.func @transform_6(%arg0: i32) -> (i32, i32) {
    %c0_i32 = arith.constant 0 : i32
    %c0_i32_0 = arith.constant 0 : i32
    %c0_i32_1 = arith.constant 0 : i32
    return %c0_i32, %c0_i32_0 : i32, i32
  }
  func.func @transform_7(%arg0: i32) -> (i32, i32, i32) {
    %c0_i32 = arith.constant 0 : i32
    %c0_i32_0 = arith.constant 0 : i32
    %c0_i32_1 = arith.constant 0 : i32
    return %arg0, %c0_i32, %c0_i32_0 : i32, i32, i32
  }
}

</mosaic_0001>

<llo_original>
// kernel: _maml_forward.1
$region0: #{_maml_forward.1}
  #allocation0 [shape = 'u32[]', space=smem, size = 0x4, offset = 0x4, fixed_abs, tag = 'smem constant byte address 0x4 - core index']
  #allocation1 [shape = 'u32[144,128]{1,0:T(1,128)}', space=vmem, size = 0x12000, scoped, tag = 'internal scratch']
  #allocation2 [shape = 'f32[256,128]{1,0:T(8,128)}', space=vmem, size = 0x20000, scoped, tag = 'scratch operand']
  #allocation3 [shape = 'f32[10,10,128]{2,1,0:T(8,128)}', space=vmem, size = 0x14000, scoped, tag = 'scratch operand']
  %s0 = inlined_call_operand.vmem [shape: f32[2,18,18,128], index: 0, kind: input, shape index: {}]
  %s1 = inlined_call_operand.vmem [shape: bf16[9,128,128], index: 1, kind: input, shape index: {}]
  %s2 = inlined_call_operand.vmem [shape: f32[1,128], index: 2, kind: input, shape index: {}]
  %s3 = inlined_call_operand.hbm [shape: bf16[9,128,128], index: 3, kind: input, shape index: {}]
  %s4 = inlined_call_operand.vmem [shape: f32[1,128], index: 4, kind: input, shape index: {}]
  %s5 = inlined_call_operand.vmem [shape: bf16[16,128,128], index: 5, kind: input, shape index: {}]
  %s6 = inlined_call_operand.vmem [shape: f32[1,128], index: 6, kind: input, shape index: {}]
  %s7 = inlined_call_operand.hbm [shape: f32[2,1,128], index: 7, kind: output, shape index: {}]
  %s8 = sld [smem:[#allocation0]]
  $region65: #{_maml_forward.1} parent=0
    _
  %s10 = ssub.s32 1, %s8
  %s11 = scalar_select 0, %s10, %s8
  $region1: #{_maml_forward.1} parent=0
    #allocation4 [shape = 'u8[294912]{0}', space=vmem, size = 0x48000, scoped, tag = 'input window, operand 3, single buffered']
    #allocation5 [shape = 's32[2]{0}', space=sflag, size = 0x8, scoped, tag = 'scoped memory for _maml_forward.1']
    #allocation6 [shape = 's32[2]{0}', space=sflag, size = 0x8, scoped, tag = 'scoped memory for _maml_forward.1']
    #allocation7 [shape = 'u8[1024]{0}', space=vmem, size = 0x400, scoped, tag = 'output window, operand 0']
    %12 = vsyncpa [#allocation5], 0
    %13 = vsyncpa [#allocation6], 0
    %s14 = scalar_lea.sflag [#allocation6], 1
    %15 = vsyncpa %s14, 0
    loop: start=0, step=1, limit=4
    $region2: #{_maml_forward.1} parent=1 // loop_pre_header
      _
    $region3: #{_maml_forward.1} parent=1 // loop_header
      %s17 = sphi 0, %s21
      %p18 = scmp.ge.s32.totalorder %s17, 4
      %s27 = sphi 0, %s29
      %s30 = sphi 0, %s27
      %s31 = sphi 0, %s30
      %s47 = sphi 0, %s31
      %s51 = sphi 0, %s51
      %s53 = sphi 0, %s51
      %s54 = sphi 0, %s53
      %s68 = sphi 0, %s54
      %s72 = sphi 0, %s72
      %s74 = sphi 0, %s72
      %s75 = sphi 0, %s74
      %s89 = sphi 0, %s75
      %s93 = sphi 0, %s93
      %s95 = sphi 0, %s93
      %s96 = sphi 0, %s95
      %s110 = sphi 0, %s96
      %s114 = sphi 0, %s114
      %s116 = sphi 0, %s114
      %s117 = sphi 0, %s116
      %s131 = sphi 0, %s117
      %s135 = sphi 0, %s135
      %s137 = sphi 0, %s135
      %s138 = sphi 0, %s137
      %s152 = sphi 0, %s138
      %s156 = sphi 0, %s156
      %s158 = sphi 0, %s156
      %s159 = sphi 0, %s158
      %s173 = sphi 0, %s159
      %s179 = sphi 0, %s181
      %s182 = sphi 0, %s179
      %s183 = sphi 0, %s182
      %s199 = sphi 0, %s183
    $region4: #{_maml_forward.1} parent=1 // loop_header_branch
      %20 = sbr.rel (%p18) target = $region8
    $region5: #{_maml_forward.1} parent=1 // loop_body
      %s22 = ssub.s32 %s17, 1
      %s23 = ssub.s32 %s17, 2
      %s24 = sadd.s32 %s17, 1
      %s25 = ssub.s32 %s17, %s24
      %p26 = scmp.eq.s32.totalorder %s25, 0
      %s28 = sadd.s32 %s27, 1
      %s29 = scalar_select %p26, %s27, %s28
      %p32 = pneg %p26
      %p33 = scmp.eq.s32.totalorder %s17, 1
      %p34 = por %p32, %p33
      %p35 = scmp.ne.s32.totalorder %s27, %s30
      %p36 = scmp.eq.s32.totalorder %s17, 0
      %p37 = por %p35, %p36
      %p38 = scmp.ne.s32.totalorder %s27, %s30
      %p39 = scmp.eq.s32.totalorder %s22, 1
      %p40 = por %p38, %p39
      %p41 = scmp.ne.s32.totalorder %s30, %s31
      %p42 = scmp.eq.s32.totalorder %s22, 0
      %p43 = por %p41, %p42
      %p44 = scmp.ne.s32.totalorder %s30, %s31
      %p45 = scmp.eq.s32.totalorder %s23, 1
      %p46 = por %p44, %p45
      %p48 = scmp.ne.s32.totalorder %s31, %s47
      %p49 = scmp.eq.s32.totalorder %s23, 0
      %p50 = por %p48, %p49
      %s52 = sadd.s32 %s51, 1
      %p55 = scmp.eq.s32.totalorder %s17, 1
      %p56 = scmp.ne.s32.totalorder %s51, %s53
      %p57 = scmp.eq.s32.totalorder %s17, 0
      %p58 = por %p56, %p57
      %p59 = scmp.ne.s32.totalorder %s51, %s53
      %p60 = scmp.eq.s32.totalorder %s22, 1
      %p61 = por %p59, %p60
      %p62 = scmp.ne.s32.totalorder %s53, %s54
      %p63 = scmp.eq.s32.totalorder %s22, 0
      %p64 = por %p62, %p63
      %p65 = scmp.ne.s32.totalorder %s53, %s54
      %p66 = scmp.eq.s32.totalorder %s23, 1
      %p67 = por %p65, %p66
      %p69 = scmp.ne.s32.totalorder %s54, %s68
      %p70 = scmp.eq.s32.totalorder %s23, 0
      %p71 = por %p69, %p70
      %s73 = sadd.s32 %s72, 1
      %p76 = scmp.eq.s32.totalorder %s17, 1
      %p77 = scmp.ne.s32.totalorder %s72, %s74
      %p78 = scmp.eq.s32.totalorder %s17, 0
      %p79 = por %p77, %p78
      %p80 = scmp.ne.s32.totalorder %s72, %s74
      %p81 = scmp.eq.s32.totalorder %s22, 1
      %p82 = por %p80, %p81
      %p83 = scmp.ne.s32.totalorder %s74, %s75
      %p84 = scmp.eq.s32.totalorder %s22, 0
      %p85 = por %p83, %p84
      %p86 = scmp.ne.s32.totalorder %s74, %s75
      %p87 = scmp.eq.s32.totalorder %s23, 1
      %p88 = por %p86, %p87
      %p90 = scmp.ne.s32.totalorder %s75, %s89
      %p91 = scmp.eq.s32.totalorder %s23, 0
      %p92 = por %p90, %p91
      %s94 = sadd.s32 %s93, 1
      %p97 = scmp.eq.s32.totalorder %s17, 1
      %p98 = scmp.ne.s32.totalorder %s93, %s95
      %p99 = scmp.eq.s32.totalorder %s17, 0
      %p100 = por %p98, %p99
      %p101 = scmp.ne.s32.totalorder %s93, %s95
      %p102 = scmp.eq.s32.totalorder %s22, 1
      %p103 = por %p101, %p102
      %p104 = scmp.ne.s32.totalorder %s95, %s96
      %p105 = scmp.eq.s32.totalorder %s22, 0
      %p106 = por %p104, %p105
      %p107 = scmp.ne.s32.totalorder %s95, %s96
      %p108 = scmp.eq.s32.totalorder %s23, 1
      %p109 = por %p107, %p108
      %p111 = scmp.ne.s32.totalorder %s96, %s110
      %p112 = scmp.eq.s32.totalorder %s23, 0
      %p113 = por %p111, %p112
      %s115 = sadd.s32 %s114, 1
      %p118 = scmp.eq.s32.totalorder %s17, 1
      %p119 = scmp.ne.s32.totalorder %s114, %s116
      %p120 = scmp.eq.s32.totalorder %s17, 0
      %p121 = por %p119, %p120
      %p122 = scmp.ne.s32.totalorder %s114, %s116
      %p123 = scmp.eq.s32.totalorder %s22, 1
      %p124 = por %p122, %p123
      %p125 = scmp.ne.s32.totalorder %s116, %s117
      %p126 = scmp.eq.s32.totalorder %s22, 0
      %p127 = por %p125, %p126
      %p128 = scmp.ne.s32.totalorder %s116, %s117
      %p129 = scmp.eq.s32.totalorder %s23, 1
      %p130 = por %p128, %p129
      %p132 = scmp.ne.s32.totalorder %s117, %s131
      %p133 = scmp.eq.s32.totalorder %s23, 0
      %p134 = por %p132, %p133
      %s136 = sadd.s32 %s135, 1
      %p139 = scmp.eq.s32.totalorder %s17, 1
      %p140 = scmp.ne.s32.totalorder %s135, %s137
      %p141 = scmp.eq.s32.totalorder %s17, 0
      %p142 = por %p140, %p141
      %p143 = scmp.ne.s32.totalorder %s135, %s137
      %p144 = scmp.eq.s32.totalorder %s22, 1
      %p145 = por %p143, %p144
      %p146 = scmp.ne.s32.totalorder %s137, %s138
      %p147 = scmp.eq.s32.totalorder %s22, 0
      %p148 = por %p146, %p147
      %p149 = scmp.ne.s32.totalorder %s137, %s138
      %p150 = scmp.eq.s32.totalorder %s23, 1
      %p151 = por %p149, %p150
      %p153 = scmp.ne.s32.totalorder %s138, %s152
      %p154 = scmp.eq.s32.totalorder %s23, 0
      %p155 = por %p153, %p154
      %s157 = sadd.s32 %s156, 1
      %p160 = scmp.eq.s32.totalorder %s17, 1
      %p161 = scmp.ne.s32.totalorder %s156, %s158
      %p162 = scmp.eq.s32.totalorder %s17, 0
      %p163 = por %p161, %p162
      %p164 = scmp.ne.s32.totalorder %s156, %s158
      %p165 = scmp.eq.s32.totalorder %s22, 1
      %p166 = por %p164, %p165
      %p167 = scmp.ne.s32.totalorder %s158, %s159
      %p168 = scmp.eq.s32.totalorder %s22, 0
      %p169 = por %p167, %p168
      %p170 = scmp.ne.s32.totalorder %s158, %s159
      %p171 = scmp.eq.s32.totalorder %s23, 1
      %p172 = por %p170, %p171
      %p174 = scmp.ne.s32.totalorder %s159, %s173
      %p175 = scmp.eq.s32.totalorder %s23, 0
      %p176 = por %p174, %p175
      %s177 = ssub.s32 %s17, %s24
      %p178 = scmp.eq.s32.totalorder %s177, 0
      %s180 = sadd.s32 %s179, 1
      %s181 = scalar_select %p178, %s179, %s180
      %p184 = pneg %p178
      %p185 = scmp.eq.s32.totalorder %s17, 1
      %p186 = por %p184, %p185
      %p187 = scmp.ne.s32.totalorder %s179, %s182
      %p188 = scmp.eq.s32.totalorder %s17, 0
      %p189 = por %p187, %p188
      %p190 = scmp.ne.s32.totalorder %s179, %s182
      %p191 = scmp.eq.s32.totalorder %s22, 1
      %p192 = por %p190, %p191
      %p193 = scmp.ne.s32.totalorder %s182, %s183
      %p194 = scmp.eq.s32.totalorder %s22, 0
      %p195 = por %p193, %p194
      %p196 = scmp.ne.s32.totalorder %s182, %s183
      %p197 = scmp.eq.s32.totalorder %s23, 1
      %p198 = por %p196, %p197
      %p200 = scmp.ne.s32.totalorder %s183, %s199
      %p201 = scmp.eq.s32.totalorder %s23, 0
      %p202 = por %p200, %p201
      %p203 = scmp.le.s32.totalorder 1, %s17
      %p204 = scmp.lt.s32.totalorder %s17, 3
      %p205 = pnand %p203, %p204
      %p206 = pneg %p205
      // Predicated region
      $region9: #{_maml_forward.1} parent=5 // pred_check
        _
      $region10: #{_maml_forward.1} parent=5 // pred_check_branch
        %208 = sbr.rel (%p205) target = $region12
      $region11: #{_maml_forward.1} parent=5 // pred_region
        %s209 = ssub.s32 %s17, 1
        // Predicated region
        $region13: #{_maml_forward.1} parent=11 // pred_check
          %p210 = pneg %p64
        $region14: #{_maml_forward.1} parent=11 // pred_check_branch
          %212 = sbr.rel (%p210) target = $region16
        $region15: #{_maml_forward.1} parent=11 // pred_region
          _
        $region16: #{_maml_forward.1} parent=11 // pred_fallthru
          _
        // Predicated region
        $region17: #{_maml_forward.1} parent=11 // pred_check
          %p213 = pneg %p85
        $region18: #{_maml_forward.1} parent=11 // pred_check_branch
          %215 = sbr.rel (%p213) target = $region20
        $region19: #{_maml_forward.1} parent=11 // pred_region
          _
        $region20: #{_maml_forward.1} parent=11 // pred_fallthru
          _
        // Predicated region
        $region21: #{_maml_forward.1} parent=11 // pred_check
          %p216 = pneg %p106
        $region22: #{_maml_forward.1} parent=11 // pred_check_branch
          %218 = sbr.rel (%p216) target = $region24
        $region23: #{_maml_forward.1} parent=11 // pred_region
          %s220 = ssub.s32 9216, 9216
          %221 = vsyncadd [#allocation5], %s220
          %s222 = sshll.u32 [#allocation4], 4
          %s223 = int_to_ptr.vmem [resolvable:$true] %s222
          %228 = dma.hbm_to_vmem [thread:$0]  %s3, 9216, %s223, [#allocation5], 64, 64, 4
        $region24: #{_maml_forward.1} parent=11 // pred_fallthru
          _
        // Predicated region
        $region25: #{_maml_forward.1} parent=11 // pred_check
          %p229 = pneg %p127
        $region26: #{_maml_forward.1} parent=11 // pred_check_branch
          %231 = sbr.rel (%p229) target = $region28
        $region27: #{_maml_forward.1} parent=11 // pred_region
          _
        $region28: #{_maml_forward.1} parent=11 // pred_fallthru
          _
        // Predicated region
        $region29: #{_maml_forward.1} parent=11 // pred_check
          %p232 = pneg %p148
        $region30: #{_maml_forward.1} parent=11 // pred_check_branch
          %234 = sbr.rel (%p232) target = $region32
        $region31: #{_maml_forward.1} parent=11 // pred_region
          _
        $region32: #{_maml_forward.1} parent=11 // pred_fallthru
          _
        // Predicated region
        $region33: #{_maml_forward.1} parent=11 // pred_check
          %p235 = pneg %p169
        $region34: #{_maml_forward.1} parent=11 // pred_check_branch
          %237 = sbr.rel (%p235) target = $region36
        $region35: #{_maml_forward.1} parent=11 // pred_region
          _
        $region36: #{_maml_forward.1} parent=11 // pred_fallthru
          _
      $region12: #{_maml_forward.1} parent=5 // pred_fallthru
        _
      %p238 = scmp.lt.s32.totalorder %s17, 2
      // Predicated region
      $region37: #{_maml_forward.1} parent=5 // pred_check
        %p239 = pneg %p238
      $region38: #{_maml_forward.1} parent=5 // pred_check_branch
        %241 = sbr.rel (%p239) target = $region40
      $region39: #{_maml_forward.1} parent=5 // pred_region
        // Predicated region
        $region41: #{_maml_forward.1} parent=39 // pred_check
          %p242 = pneg %p37
        $region42: #{_maml_forward.1} parent=39 // pred_check_branch
          %244 = sbr.rel (%p242) target = $region44
        $region43: #{_maml_forward.1} parent=39 // pred_region
          %p245 = scmp.lt.s32.totalorder %s17, 1
          %s246 = scalar_select %p245, %s17, 1
          %s247 = smul.addr %s246, 54
          %s248 = smul.addr %s247, 8
          %s249 = scalar_lea.vmem %s0, %s248
        $region44: #{_maml_forward.1} parent=39 // pred_fallthru
          _
      $region40: #{_maml_forward.1} parent=5 // pred_fallthru
        _
      %p250 = scmp.le.s32.totalorder 1, %s17
      %p251 = scmp.lt.s32.totalorder %s17, 3
      %p252 = pnand %p250, %p251
      %p253 = pneg %p252
      // Predicated region
      $region45: #{_maml_forward.1} parent=5 // pred_check
        _
      $region46: #{_maml_forward.1} parent=5 // pred_check_branch
        %255 = sbr.rel (%p252) target = $region48
      $region47: #{_maml_forward.1} parent=5 // pred_region
        %s256 = ssub.s32 %s17, 1
        // Predicated region
        $region49: #{_maml_forward.1} parent=47 // pred_check
          %p257 = pneg %p106
        $region50: #{_maml_forward.1} parent=47 // pred_check_branch
          %259 = sbr.rel (%p257) target = $region52
        $region51: #{_maml_forward.1} parent=47 // pred_region
          %260 = dma.done [#allocation5], 9216
        $region52: #{_maml_forward.1} parent=47 // pred_fallthru
          _
        %p261 = scmp.lt.s32.totalorder %s22, 1
        %s262 = scalar_select %p261, %s22, 1
        %s263 = smul.addr %s262, 54
        %s264 = smul.addr %s263, 8
        %s265 = scalar_lea.vmem %s0, %s264
        %p266 = pneg %p43
        %p267 = pneg %p40
        %p268 = pneg %p64
        %p269 = pneg %p61
        %p270 = pneg %p85
        %p271 = pneg %p82
        %p272 = pneg %p106
        %p273 = pneg %p103
        %p274 = pneg %p127
        %p275 = pneg %p124
        %p276 = pneg %p148
        %p277 = pneg %p145
        %p278 = pneg %p169
        %p279 = pneg %p166
        %p280 = pneg %p195
        %p281 = pneg %p192
        %s282 = sand.u32 %s182, 1
        %s283 = scalar_lea.sflag [#allocation6], %s282
        %s284 = sand.u32 %s182, 1
        %s285 = scalar_lea.vmem [#allocation7], %s284
        %p286 = scmp.lt.s32.totalorder %s22, 1
        %s287 = scalar_select %p286, %s22, 1
        %s288 = smul.addr %s287, 54
        %s289 = smul.addr %s288, 8
        %s290 = scalar_lea.vmem %s0, %s289
        %v292 = vld [vmem:[%s290] sm:$0xff]
        %v293 = vld [vmem:[%s290 + $0x8] sm:$0xff]
        %v294 = vld [vmem:[%s290 + $0x18] sm:$0xff]
        %v295 = vld [vmem:[%s290 + $0x20] sm:$0xff]
        %v296 = vld [vmem:[%s290 + $0x30] sm:$0xff]
        %v297 = vld [vmem:[%s290 + $0x38] sm:$0xff]
        %v298 = vld [vmem:[%s290 + $0x48] sm:$0xff]
        %v299 = vld [vmem:[%s290 + $0x50] sm:$0xff]
        %v300 = vld [vmem:[%s290 + $0x60] sm:$0xff]
        %v301 = vld [vmem:[%s290 + $0x68] sm:$0xff]
        %v302 = vld [vmem:[%s290 + $0x78] sm:$0xff]
        %v303 = vld [vmem:[%s290 + $0x80] sm:$0xff]
        %v304 = vld [vmem:[%s290 + $0x90] sm:$0xff]
        %v305 = vld [vmem:[%s290 + $0x98] sm:$0xff]
        %v306 = vld [vmem:[%s290 + $0xa8] sm:$0xff]
        %v307 = vld [vmem:[%s290 + $0xb0] sm:$0xff]
        %v308 = vld [vmem:[%s290 + $0xc0] sm:$0xff]
        %v309 = vld [vmem:[%s290 + $0xc8] sm:$0xff]
        %v310 = vld [vmem:[%s290 + $0xd8] sm:$0xff]
        %v311 = vld [vmem:[%s290 + $0xe0] sm:$0xff]
        %v312 = vld [vmem:[%s290 + $0xf0] sm:$0xff]
        %v313 = vld [vmem:[%s290 + $0xf8] sm:$0xff]
        %v314 = vld [vmem:[%s290 + $0x108] sm:$0xff]
        %v315 = vld [vmem:[%s290 + $0x110] sm:$0xff]
        %v316 = vld [vmem:[%s290 + $0x120] sm:$0xff]
        %v317 = vld [vmem:[%s290 + $0x128] sm:$0xff]
        %v318 = vld [vmem:[%s290 + $0x138] sm:$0xff]
        %v319 = vld [vmem:[%s290 + $0x140] sm:$0xff]
        %v320 = vld [vmem:[%s290 + $0x150] sm:$0xff]
        %v321 = vld [vmem:[%s290 + $0x158] sm:$0xff]
        %v322 = vld [vmem:[%s290 + $0x168] sm:$0xff]
        %v323 = vld [vmem:[%s290 + $0x170] sm:$0xff]
        %v324 = vpack.c.bf16 %v293, %v292
        %v325 = vpack.c.bf16 %v295, %v294
        %v326 = vpack.c.bf16 %v297, %v296
        %v327 = vpack.c.bf16 %v299, %v298
        %v328 = vpack.c.bf16 %v301, %v300
        %v329 = vpack.c.bf16 %v303, %v302
        %v330 = vpack.c.bf16 %v305, %v304
        %v331 = vpack.c.bf16 %v307, %v306
        %v332 = vpack.c.bf16 %v309, %v308
        %v333 = vpack.c.bf16 %v311, %v310
        %v334 = vpack.c.bf16 %v313, %v312
        %v335 = vpack.c.bf16 %v315, %v314
        %v336 = vpack.c.bf16 %v317, %v316
        %v337 = vpack.c.bf16 %v319, %v318
        %v338 = vpack.c.bf16 %v321, %v320
        %v339 = vpack.c.bf16 %v323, %v322
        %v340 = vld [vmem:[%s1] sm:$0xf]
        %v341 = vld [vmem:[%s1 + $0x4] sm:$0xf]
        %v342 = vld [vmem:[%s1 + $0x8] sm:$0xf]
        %v343 = vld [vmem:[%s1 + $0xc] sm:$0xf]
        %v344 = vld [vmem:[%s1 + $0x10] sm:$0xf]
        %v345 = vld [vmem:[%s1 + $0x14] sm:$0xf]
        %v346 = vld [vmem:[%s1 + $0x18] sm:$0xf]
        %v347 = vld [vmem:[%s1 + $0x1c] sm:$0xf]
        %v348 = vld [vmem:[%s1 + $0x20] sm:$0xf]
        %v349 = vld [vmem:[%s1 + $0x24] sm:$0xf]
        %v350 = vld [vmem:[%s1 + $0x28] sm:$0xf]
        %v351 = vld [vmem:[%s1 + $0x2c] sm:$0xf]
        %v352 = vld [vmem:[%s1 + $0x30] sm:$0xf]
        %v353 = vld [vmem:[%s1 + $0x34] sm:$0xf]
        %v354 = vld [vmem:[%s1 + $0x38] sm:$0xf]
        %v355 = vld [vmem:[%s1 + $0x3c] sm:$0xf]
        %v372 = vunpack.c.l.b16 %v340
        %v373 = vunpack.c.l.b16 %v341
        %v374 = vunpack.c.l.b16 %v342
        %v375 = vunpack.c.l.b16 %v343
        %v376 = vunpack.c.l.b16 %v344
        %v377 = vunpack.c.l.b16 %v345
        %v378 = vunpack.c.l.b16 %v346
        %v379 = vunpack.c.l.b16 %v347
        %v380 = vunpack.c.l.b16 %v348
        %v381 = vunpack.c.l.b16 %v349
        %v382 = vunpack.c.l.b16 %v350
        %v383 = vunpack.c.l.b16 %v351
        %v384 = vunpack.c.l.b16 %v352
        %v385 = vunpack.c.l.b16 %v353
        %v386 = vunpack.c.l.b16 %v354
        %v387 = vunpack.c.l.b16 %v355
        %v388 = vpack.c.b16 %v373, %v372
        %v389 = vpack.c.b16 %v375, %v374
        %v390 = vpack.c.b16 %v377, %v376
        %v391 = vpack.c.b16 %v379, %v378
        %v392 = vpack.c.b16 %v381, %v380
        %v393 = vpack.c.b16 %v383, %v382
        %v394 = vpack.c.b16 %v385, %v384
        %v395 = vpack.c.b16 %v387, %v386
        %404 = vmatprep.subr.bf16.mxu0 0
        %405 = vmatpush1.bf16.msra.mxu0 %v395
        %406 = vmatprep.subr.bf16.mxu0 0
        %407 = vmatpush1.bf16.msra.mxu0 %v394
        %408 = vmatprep.subr.bf16.mxu0 0
        %409 = vmatpush1.bf16.msra.mxu0 %v393
        %410 = vmatprep.subr.bf16.mxu0 0
        %411 = vmatpush1.bf16.msra.mxu0 %v392
        %412 = vmatprep.subr.bf16.mxu0 0
        %413 = vmatpush1.bf16.msra.mxu0 %v391
        %414 = vmatprep.subr.bf16.mxu0 0
        %415 = vmatpush1.bf16.msra.mxu0 %v390
        %416 = vmatprep.subr.bf16.mxu0 0
        %417 = vmatpush1.bf16.msra.mxu0 %v389
        %418 = vmatprep.subr.bf16.mxu0 0
        %419 = vmatpush1.bf16.msra.mxu0 %v388
        %420 = vmatprep.subr.bf16.mxu0 0
        %421 = vmatpush2.bf16.msra.mxu0 0
        %422 = vmatprep.subr.bf16.mxu0 0
        %423 = vmatpush2.bf16.msra.mxu0 0
        %424 = vmatprep.subr.bf16.mxu0 0
        %425 = vmatpush2.bf16.msra.mxu0 0
        %426 = vmatprep.subr.bf16.mxu0 0
        %427 = vmatpush2.bf16.msra.mxu0 0
        %428 = vmatprep.subr.bf16.mxu0 0
        %429 = vmatpush2.bf16.msra.mxu0 0
        %430 = vmatprep.subr.bf16.mxu0 0
        %431 = vmatpush2.bf16.msra.mxu0 0
        %432 = vmatprep.subr.bf16.mxu0 0
        %433 = vmatpush2.bf16.msra.mxu0 0
        %434 = vmatprep.subr.bf16.mxu0 0
        %435 = vmatpush2.bf16.msra.mxu0 0
        %436 = vmatprep.mubr.bf16.mxu0 0
        %437 = vmatmul.mubr.bf16.gmra.mxu0 %v324
        %v438 = vpop.f32.mrf.mxu0
        %v439 = vadd.f32 0.0, %v438
        %v440 = vpop.f32.mrf.mxu0
        %v441 = vpop.f32.mrf.mxu0
        %v442 = vadd.f32 0.0, %v441
        %v443 = vpop.f32.mrf.mxu0
        %444 = vmatprep.mubr.bf16.mxu0 0
        %445 = vmatmul.mubr.bf16.gmra.mxu0 %v325
        %v446 = vpop.f32.mrf.mxu0
        %v447 = vadd.f32 0.0, %v446
        %v448 = vpop.f32.mrf.mxu0
        %v449 = vpop.f32.mrf.mxu0
        %v450 = vadd.f32 0.0, %v449
        %v451 = vpop.f32.mrf.mxu0
        %452 = vmatprep.mubr.bf16.mxu0 0
        %453 = vmatmul.mubr.bf16.gmra.mxu0 %v326
        %v454 = vpop.f32.mrf.mxu0
        %v455 = vadd.f32 0.0, %v454
        %v456 = vpop.f32.mrf.mxu0
        %v457 = vpop.f32.mrf.mxu0
        %v458 = vadd.f32 0.0, %v457
        %v459 = vpop.f32.mrf.mxu0
        %460 = vmatprep.mubr.bf16.mxu0 0
        %461 = vmatmul.mubr.bf16.gmra.mxu0 %v327
        %v462 = vpop.f32.mrf.mxu0
        %v463 = vadd.f32 0.0, %v462
        %v464 = vpop.f32.mrf.mxu0
        %v465 = vpop.f32.mrf.mxu0
        %v466 = vadd.f32 0.0, %v465
        %v467 = vpop.f32.mrf.mxu0
        %468 = vmatprep.mubr.bf16.mxu0 0
        %469 = vmatmul.mubr.bf16.gmra.mxu0 %v328
        %v470 = vpop.f32.mrf.mxu0
        %v471 = vadd.f32 0.0, %v470
        %v472 = vpop.f32.mrf.mxu0
        %v473 = vpop.f32.mrf.mxu0
        %v474 = vadd.f32 0.0, %v473
        %v475 = vpop.f32.mrf.mxu0
        %476 = vmatprep.mubr.bf16.mxu0 0
        %477 = vmatmul.mubr.bf16.gmra.mxu0 %v329
        %v478 = vpop.f32.mrf.mxu0
        %v479 = vadd.f32 0.0, %v478
        %v480 = vpop.f32.mrf.mxu0
        %v481 = vpop.f32.mrf.mxu0
        %v482 = vadd.f32 0.0, %v481
        %v483 = vpop.f32.mrf.mxu0
        %484 = vmatprep.mubr.bf16.mxu0 0
        %485 = vmatmul.mubr.bf16.gmra.mxu0 %v330
        %v486 = vpop.f32.mrf.mxu0
        %v487 = vadd.f32 0.0, %v486
        %v488 = vpop.f32.mrf.mxu0
        %v489 = vpop.f32.mrf.mxu0
        %v490 = vadd.f32 0.0, %v489
        %v491 = vpop.f32.mrf.mxu0
        %492 = vmatprep.mubr.bf16.mxu0 0
        %493 = vmatmul.mubr.bf16.gmra.mxu0 %v331
        %v494 = vpop.f32.mrf.mxu0
        %v495 = vadd.f32 0.0, %v494
        %v496 = vpop.f32.mrf.mxu0
        %v497 = vpop.f32.mrf.mxu0
        %v498 = vadd.f32 0.0, %v497
        %v499 = vpop.f32.mrf.mxu0
        %500 = vmatprep.mubr.bf16.mxu0 0
        %501 = vmatmul.mubr.bf16.gmra.mxu0 %v332
        %v502 = vpop.f32.mrf.mxu0
        %v503 = vadd.f32 0.0, %v502
        %v504 = vpop.f32.mrf.mxu0
        %v505 = vpop.f32.mrf.mxu0
        %v506 = vadd.f32 0.0, %v505
        %v507 = vpop.f32.mrf.mxu0
        %508 = vmatprep.mubr.bf16.mxu0 0
        %509 = vmatmul.mubr.bf16.gmra.mxu0 %v333
        %v510 = vpop.f32.mrf.mxu0
        %v511 = vadd.f32 0.0, %v510
        %v512 = vpop.f32.mrf.mxu0
        %v513 = vpop.f32.mrf.mxu0
        %v514 = vadd.f32 0.0, %v513
        %v515 = vpop.f32.mrf.mxu0
        %516 = vmatprep.mubr.bf16.mxu0 0
        %517 = vmatmul.mubr.bf16.gmra.mxu0 %v334
        %v518 = vpop.f32.mrf.mxu0
        %v519 = vadd.f32 0.0, %v518
        %v520 = vpop.f32.mrf.mxu0
        %v521 = vpop.f32.mrf.mxu0
        %v522 = vadd.f32 0.0, %v521
        %v523 = vpop.f32.mrf.mxu0
        %524 = vmatprep.mubr.bf16.mxu0 0
        %525 = vmatmul.mubr.bf16.gmra.mxu0 %v335
        %v526 = vpop.f32.mrf.mxu0
        %v527 = vadd.f32 0.0, %v526
        %v528 = vpop.f32.mrf.mxu0
        %v529 = vpop.f32.mrf.mxu0
        %v530 = vadd.f32 0.0, %v529
        %v531 = vpop.f32.mrf.mxu0
        %532 = vmatprep.mubr.bf16.mxu0 0
        %533 = vmatmul.mubr.bf16.gmra.mxu0 %v336
        %v534 = vpop.f32.mrf.mxu0
        %v535 = vadd.f32 0.0, %v534
        %v536 = vpop.f32.mrf.mxu0
        %v537 = vpop.f32.mrf.mxu0
        %v538 = vadd.f32 0.0, %v537
        %v539 = vpop.f32.mrf.mxu0
        %540 = vmatprep.mubr.bf16.mxu0 0
        %541 = vmatmul.mubr.bf16.gmra.mxu0 %v337
        %v542 = vpop.f32.mrf.mxu0
        %v543 = vadd.f32 0.0, %v542
        %v544 = vpop.f32.mrf.mxu0
        %v545 = vpop.f32.mrf.mxu0
        %v546 = vadd.f32 0.0, %v545
        %v547 = vpop.f32.mrf.mxu0
        %548 = vmatprep.mubr.bf16.mxu0 0
        %549 = vmatmul.mubr.bf16.gmra.mxu0 %v338
        %v550 = vpop.f32.mrf.mxu0
        %v551 = vadd.f32 0.0, %v550
        %v552 = vpop.f32.mrf.mxu0
        %v553 = vpop.f32.mrf.mxu0
        %v554 = vadd.f32 0.0, %v553
        %v555 = vpop.f32.mrf.mxu0
        %556 = vmatprep.mubr.bf16.mxu0 0
        %557 = vmatmul.mubr.bf16.gmra.mxu0 %v339
        %v558 = vpop.f32.mrf.mxu0
        %v559 = vadd.f32 0.0, %v558
        %v560 = vpop.f32.mrf.mxu0
        %v561 = vpop.f32.mrf.mxu0
        %v562 = vadd.f32 0.0, %v561
        %v563 = vpop.f32.mrf.mxu0
        %564 = vdwg.mxu0
        %565 = vst [vmem:[#allocation2] sm:$0xff] %v439
        %566 = vst [vmem:[#allocation2 + $0x8] sm:$0xff] %v442
        %567 = vst [vmem:[#allocation2 + $0x10] sm:$0xff] %v447
        %568 = vst [vmem:[#allocation2 + $0x18] sm:$0xff] %v450
        %569 = vst [vmem:[#allocation2 + $0x20] sm:$0xff] %v455
        %570 = vst [vmem:[#allocation2 + $0x28] sm:$0xff] %v458
        %571 = vst [vmem:[#allocation2 + $0x30] sm:$0xff] %v463
        %572 = vst [vmem:[#allocation2 + $0x38] sm:$0xff] %v466
        %573 = vst [vmem:[#allocation2 + $0x40] sm:$0xff] %v471
        %574 = vst [vmem:[#allocation2 + $0x48] sm:$0xff] %v474
        %575 = vst [vmem:[#allocation2 + $0x50] sm:$0xff] %v479
        %576 = vst [vmem:[#allocation2 + $0x58] sm:$0xff] %v482
        %577 = vst [vmem:[#allocation2 + $0x60] sm:$0xff] %v487
        %578 = vst [vmem:[#allocation2 + $0x68] sm:$0xff] %v490
        %579 = vst [vmem:[#allocation2 + $0x70] sm:$0xff] %v495
        %580 = vst [vmem:[#allocation2 + $0x78] sm:$0xff] %v498
        %581 = vst [vmem:[#allocation2 + $0x80] sm:$0xff] %v503
        %582 = vst [vmem:[#allocation2 + $0x88] sm:$0xff] %v506
        %583 = vst [vmem:[#allocation2 + $0x90] sm:$0xff] %v511
        %584 = vst [vmem:[#allocation2 + $0x98] sm:$0xff] %v514
        %585 = vst [vmem:[#allocation2 + $0xa0] sm:$0xff] %v519
        %586 = vst [vmem:[#allocation2 + $0xa8] sm:$0xff] %v522
        %587 = vst [vmem:[#allocation2 + $0xb0] sm:$0xff] %v527
        %588 = vst [vmem:[#allocation2 + $0xb8] sm:$0xff] %v530
        %589 = vst [vmem:[#allocation2 + $0xc0] sm:$0xff] %v535
        %590 = vst [vmem:[#allocation2 + $0xc8] sm:$0xff] %v538
        %591 = vst [vmem:[#allocation2 + $0xd0] sm:$0xff] %v543
        %592 = vst [vmem:[#allocation2 + $0xd8] sm:$0xff] %v546
        %593 = vst [vmem:[#allocation2 + $0xe0] sm:$0xff] %v551
        %594 = vst [vmem:[#allocation2 + $0xe8] sm:$0xff] %v554
        %595 = vst [vmem:[#allocation2 + $0xf0] sm:$0xff] %v559
        %596 = vst [vmem:[#allocation2 + $0xf8] sm:$0xff] %v562
        %v597 = vld [vmem:[%s290 + $0x1] sm:$0xff]
        %v598 = vld [vmem:[%s290 + $0x9] sm:$0xff]
        %v599 = vld [vmem:[%s290 + $0x19] sm:$0xff]
        %v600 = vld [vmem:[%s290 + $0x21] sm:$0xff]
        %v601 = vld [vmem:[%s290 + $0x31] sm:$0xff]
        %v602 = vld [vmem:[%s290 + $0x39] sm:$0xff]
        %v603 = vld [vmem:[%s290 + $0x49] sm:$0xff]
        %v604 = vld [vmem:[%s290 + $0x51] sm:$0xff]
        %v605 = vld [vmem:[%s290 + $0x61] sm:$0xff]
        %v606 = vld [vmem:[%s290 + $0x69] sm:$0xff]
        %v607 = vld [vmem:[%s290 + $0x79] sm:$0xff]
        %v608 = vld [vmem:[%s290 + $0x81] sm:$0xff]
        %v609 = vld [vmem:[%s290 + $0x91] sm:$0xff]
        %v610 = vld [vmem:[%s290 + $0x99] sm:$0xff]
        %v611 = vld [vmem:[%s290 + $0xa9] sm:$0xff]
        %v612 = vld [vmem:[%s290 + $0xb1] sm:$0xff]
        %v613 = vld [vmem:[%s290 + $0xc1] sm:$0xff]
        %v614 = vld [vmem:[%s290 + $0xc9] sm:$0xff]
        %v615 = vld [vmem:[%s290 + $0xd9] sm:$0xff]
        %v616 = vld [vmem:[%s290 + $0xe1] sm:$0xff]
        %v617 = vld [vmem:[%s290 + $0xf1] sm:$0xff]
        %v618 = vld [vmem:[%s290 + $0xf9] sm:$0xff]
        %v619 = vld [vmem:[%s290 + $0x109] sm:$0xff]
        %v620 = vld [vmem:[%s290 + $0x111] sm:$0xff]
        %v621 = vld [vmem:[%s290 + $0x121] sm:$0xff]
        %v622 = vld [vmem:[%s290 + $0x129] sm:$0xff]
        %v623 = vld [vmem:[%s290 + $0x139] sm:$0xff]
        %v624 = vld [vmem:[%s290 + $0x141] sm:$0xff]
        %v625 = vld [vmem:[%s290 + $0x151] sm:$0xff]
        %v626 = vld [vmem:[%s290 + $0x159] sm:$0xff]
        %v627 = vld [vmem:[%s290 + $0x169] sm:$0xff]
        %v628 = vld [vmem:[%s290 + $0x171] sm:$0xff]
        %v629 = vpack.c.bf16 %v598, %v597
        %v630 = vpack.c.bf16 %v600, %v599
        %v631 = vpack.c.bf16 %v602, %v601
        %v632 = vpack.c.bf16 %v604, %v603
        %v633 = vpack.c.bf16 %v606, %v605
        %v634 = vpack.c.bf16 %v608, %v607
        %v635 = vpack.c.bf16 %v610, %v609
        %v636 = vpack.c.bf16 %v612, %v611
        %v637 = vpack.c.bf16 %v614, %v613
        %v638 = vpack.c.bf16 %v616, %v615
        %v639 = vpack.c.bf16 %v618, %v617
        %v640 = vpack.c.bf16 %v620, %v619
        %v641 = vpack.c.bf16 %v622, %v621
        %v642 = vpack.c.bf16 %v624, %v623
        %v643 = vpack.c.bf16 %v626, %v625
        %v644 = vpack.c.bf16 %v628, %v627
        %s645 = scalar_lea.vmem %s1, 64
        %v646 = vld [vmem:[%s645] sm:$0xf]
        %v647 = vld [vmem:[%s645 + $0x4] sm:$0xf]
        %v648 = vld [vmem:[%s645 + $0x8] sm:$0xf]
        %v649 = vld [vmem:[%s645 + $0xc] sm:$0xf]
        %v650 = vld [vmem:[%s645 + $0x10] sm:$0xf]
        %v651 = vld [vmem:[%s645 + $0x14] sm:$0xf]
        %v652 = vld [vmem:[%s645 + $0x18] sm:$0xf]
        %v653 = vld [vmem:[%s645 + $0x1c] sm:$0xf]
        %v654 = vld [vmem:[%s645 + $0x20] sm:$0xf]
        %v655 = vld [vmem:[%s645 + $0x24] sm:$0xf]
        %v656 = vld [vmem:[%s645 + $0x28] sm:$0xf]
        %v657 = vld [vmem:[%s645 + $0x2c] sm:$0xf]
        %v658 = vld [vmem:[%s645 + $0x30] sm:$0xf]
        %v659 = vld [vmem:[%s645 + $0x34] sm:$0xf]
        %v660 = vld [vmem:[%s645 + $0x38] sm:$0xf]
        %v661 = vld [vmem:[%s645 + $0x3c] sm:$0xf]
        %v678 = vunpack.c.l.b16 %v646
        %v679 = vunpack.c.l.b16 %v647
        %v680 = vunpack.c.l.b16 %v648
        %v681 = vunpack.c.l.b16 %v649
        %v682 = vunpack.c.l.b16 %v650
        %v683 = vunpack.c.l.b16 %v651
        %v684 = vunpack.c.l.b16 %v652
        %v685 = vunpack.c.l.b16 %v653
        %v686 = vunpack.c.l.b16 %v654
        %v687 = vunpack.c.l.b16 %v655
        %v688 = vunpack.c.l.b16 %v656
        %v689 = vunpack.c.l.b16 %v657
        %v690 = vunpack.c.l.b16 %v658
        %v691 = vunpack.c.l.b16 %v659
        %v692 = vunpack.c.l.b16 %v660
        %v693 = vunpack.c.l.b16 %v661
        %v694 = vpack.c.b16 %v679, %v678
        %v695 = vpack.c.b16 %v681, %v680
        %v696 = vpack.c.b16 %v683, %v682
        %v697 = vpack.c.b16 %v685, %v684
        %v698 = vpack.c.b16 %v687, %v686
        %v699 = vpack.c.b16 %v689, %v688
        %v700 = vpack.c.b16 %v691, %v690
        %v701 = vpack.c.b16 %v693, %v692
        %710 = vmatprep.subr.bf16.mxu0 0
        %711 = vmatpush1.bf16.msra.mxu0 %v701
        %712 = vmatprep.subr.bf16.mxu0 0
        %713 = vmatpush1.bf16.msra.mxu0 %v700
        %714 = vmatprep.subr.bf16.mxu0 0
        %715 = vmatpush1.bf16.msra.mxu0 %v699
        %716 = vmatprep.subr.bf16.mxu0 0
        %717 = vmatpush1.bf16.msra.mxu0 %v698
        %718 = vmatprep.subr.bf16.mxu0 0
        %719 = vmatpush1.bf16.msra.mxu0 %v697
        %720 = vmatprep.subr.bf16.mxu0 0
        %721 = vmatpush1.bf16.msra.mxu0 %v696
        %722 = vmatprep.subr.bf16.mxu0 0
        %723 = vmatpush1.bf16.msra.mxu0 %v695
        %724 = vmatprep.subr.bf16.mxu0 0
        %725 = vmatpush1.bf16.msra.mxu0 %v694
        %726 = vmatprep.subr.bf16.mxu0 0
        %727 = vmatpush2.bf16.msra.mxu0 0
        %728 = vmatprep.subr.bf16.mxu0 0
        %729 = vmatpush2.bf16.msra.mxu0 0
        %730 = vmatprep.subr.bf16.mxu0 0
        %731 = vmatpush2.bf16.msra.mxu0 0
        %732 = vmatprep.subr.bf16.mxu0 0
        %733 = vmatpush2.bf16.msra.mxu0 0
        %734 = vmatprep.subr.bf16.mxu0 0
        %735 = vmatpush2.bf16.msra.mxu0 0
        %736 = vmatprep.subr.bf16.mxu0 0
        %737 = vmatpush2.bf16.msra.mxu0 0
        %738 = vmatprep.subr.bf16.mxu0 0
        %739 = vmatpush2.bf16.msra.mxu0 0
        %740 = vmatprep.subr.bf16.mxu0 0
        %741 = vmatpush2.bf16.msra.mxu0 0
        %742 = vmatprep.mubr.bf16.mxu0 0
        %743 = vmatmul.mubr.bf16.gmra.mxu0 %v629
        %v744 = vpop.f32.mrf.mxu0
        %v745 = vadd.f32 0.0, %v744
        %v746 = vpop.f32.mrf.mxu0
        %v747 = vpop.f32.mrf.mxu0
        %v748 = vadd.f32 0.0, %v747
        %v749 = vpop.f32.mrf.mxu0
        %750 = vmatprep.mubr.bf16.mxu0 0
        %751 = vmatmul.mubr.bf16.gmra.mxu0 %v630
        %v752 = vpop.f32.mrf.mxu0
        %v753 = vadd.f32 0.0, %v752
        %v754 = vpop.f32.mrf.mxu0
        %v755 = vpop.f32.mrf.mxu0
        %v756 = vadd.f32 0.0, %v755
        %v757 = vpop.f32.mrf.mxu0
        %758 = vmatprep.mubr.bf16.mxu0 0
        %759 = vmatmul.mubr.bf16.gmra.mxu0 %v631
        %v760 = vpop.f32.mrf.mxu0
        %v761 = vadd.f32 0.0, %v760
        %v762 = vpop.f32.mrf.mxu0
        %v763 = vpop.f32.mrf.mxu0
        %v764 = vadd.f32 0.0, %v763
        %v765 = vpop.f32.mrf.mxu0
        %766 = vmatprep.mubr.bf16.mxu0 0
        %767 = vmatmul.mubr.bf16.gmra.mxu0 %v632
        %v768 = vpop.f32.mrf.mxu0
        %v769 = vadd.f32 0.0, %v768
        %v770 = vpop.f32.mrf.mxu0
        %v771 = vpop.f32.mrf.mxu0
        %v772 = vadd.f32 0.0, %v771
        %v773 = vpop.f32.mrf.mxu0
        %774 = vmatprep.mubr.bf16.mxu0 0
        %775 = vmatmul.mubr.bf16.gmra.mxu0 %v633
        %v776 = vpop.f32.mrf.mxu0
        %v777 = vadd.f32 0.0, %v776
        %v778 = vpop.f32.mrf.mxu0
        %v779 = vpop.f32.mrf.mxu0
        %v780 = vadd.f32 0.0, %v779
        %v781 = vpop.f32.mrf.mxu0
        %782 = vmatprep.mubr.bf16.mxu0 0
        %783 = vmatmul.mubr.bf16.gmra.mxu0 %v634
        %v784 = vpop.f32.mrf.mxu0
        %v785 = vadd.f32 0.0, %v784
        %v786 = vpop.f32.mrf.mxu0
        %v787 = vpop.f32.mrf.mxu0
        %v788 = vadd.f32 0.0, %v787
        %v789 = vpop.f32.mrf.mxu0
        %790 = vmatprep.mubr.bf16.mxu0 0
        %791 = vmatmul.mubr.bf16.gmra.mxu0 %v635
        %v792 = vpop.f32.mrf.mxu0
        %v793 = vadd.f32 0.0, %v792
        %v794 = vpop.f32.mrf.mxu0
        %v795 = vpop.f32.mrf.mxu0
        %v796 = vadd.f32 0.0, %v795
        %v797 = vpop.f32.mrf.mxu0
        %798 = vmatprep.mubr.bf16.mxu0 0
        %799 = vmatmul.mubr.bf16.gmra.mxu0 %v636
        %v800 = vpop.f32.mrf.mxu0
        %v801 = vadd.f32 0.0, %v800
        %v802 = vpop.f32.mrf.mxu0
        %v803 = vpop.f32.mrf.mxu0
        %v804 = vadd.f32 0.0, %v803
        %v805 = vpop.f32.mrf.mxu0
        %806 = vmatprep.mubr.bf16.mxu0 0
        %807 = vmatmul.mubr.bf16.gmra.mxu0 %v637
        %v808 = vpop.f32.mrf.mxu0
        %v809 = vadd.f32 0.0, %v808
        %v810 = vpop.f32.mrf.mxu0
        %v811 = vpop.f32.mrf.mxu0
        %v812 = vadd.f32 0.0, %v811
        %v813 = vpop.f32.mrf.mxu0
        %814 = vmatprep.mubr.bf16.mxu0 0
        %815 = vmatmul.mubr.bf16.gmra.mxu0 %v638
        %v816 = vpop.f32.mrf.mxu0
        %v817 = vadd.f32 0.0, %v816
        %v818 = vpop.f32.mrf.mxu0
        %v819 = vpop.f32.mrf.mxu0
        %v820 = vadd.f32 0.0, %v819
        %v821 = vpop.f32.mrf.mxu0
        %822 = vmatprep.mubr.bf16.mxu0 0
        %823 = vmatmul.mubr.bf16.gmra.mxu0 %v639
        %v824 = vpop.f32.mrf.mxu0
        %v825 = vadd.f32 0.0, %v824
        %v826 = vpop.f32.mrf.mxu0
        %v827 = vpop.f32.mrf.mxu0
        %v828 = vadd.f32 0.0, %v827
        %v829 = vpop.f32.mrf.mxu0
        %830 = vmatprep.mubr.bf16.mxu0 0
        %831 = vmatmul.mubr.bf16.gmra.mxu0 %v640
        %v832 = vpop.f32.mrf.mxu0
        %v833 = vadd.f32 0.0, %v832
        %v834 = vpop.f32.mrf.mxu0
        %v835 = vpop.f32.mrf.mxu0
        %v836 = vadd.f32 0.0, %v835
        %v837 = vpop.f32.mrf.mxu0
        %838 = vmatprep.mubr.bf16.mxu0 0
        %839 = vmatmul.mubr.bf16.gmra.mxu0 %v641
        %v840 = vpop.f32.mrf.mxu0
        %v841 = vadd.f32 0.0, %v840
        %v842 = vpop.f32.mrf.mxu0
        %v843 = vpop.f32.mrf.mxu0
        %v844 = vadd.f32 0.0, %v843
        %v845 = vpop.f32.mrf.mxu0
        %846 = vmatprep.mubr.bf16.mxu0 0
        %847 = vmatmul.mubr.bf16.gmra.mxu0 %v642
        %v848 = vpop.f32.mrf.mxu0
        %v849 = vadd.f32 0.0, %v848
        %v850 = vpop.f32.mrf.mxu0
        %v851 = vpop.f32.mrf.mxu0
        %v852 = vadd.f32 0.0, %v851
        %v853 = vpop.f32.mrf.mxu0
        %854 = vmatprep.mubr.bf16.mxu0 0
        %855 = vmatmul.mubr.bf16.gmra.mxu0 %v643
        %v856 = vpop.f32.mrf.mxu0
        %v857 = vadd.f32 0.0, %v856
        %v858 = vpop.f32.mrf.mxu0
        %v859 = vpop.f32.mrf.mxu0
        %v860 = vadd.f32 0.0, %v859
        %v861 = vpop.f32.mrf.mxu0
        %862 = vmatprep.mubr.bf16.mxu0 0
        %863 = vmatmul.mubr.bf16.gmra.mxu0 %v644
        %v864 = vpop.f32.mrf.mxu0
        %v865 = vadd.f32 0.0, %v864
        %v866 = vpop.f32.mrf.mxu0
        %v867 = vpop.f32.mrf.mxu0
        %v868 = vadd.f32 0.0, %v867
        %v869 = vpop.f32.mrf.mxu0
        %870 = vdwg.mxu0
        %v871 = vld [vmem:[#allocation2] sm:$0xff]
        %v872 = vld [vmem:[#allocation2 + $0x8] sm:$0xff]
        %v873 = vld [vmem:[#allocation2 + $0x10] sm:$0xff]
        %v874 = vld [vmem:[#allocation2 + $0x18] sm:$0xff]
        %v875 = vld [vmem:[#allocation2 + $0x20] sm:$0xff]
        %v876 = vld [vmem:[#allocation2 + $0x28] sm:$0xff]
        %v877 = vld [vmem:[#allocation2 + $0x30] sm:$0xff]
        %v878 = vld [vmem:[#allocation2 + $0x38] sm:$0xff]
        %v879 = vld [vmem:[#allocation2 + $0x40] sm:$0xff]
        %v880 = vld [vmem:[#allocation2 + $0x48] sm:$0xff]
        %v881 = vld [vmem:[#allocation2 + $0x50] sm:$0xff]
        %v882 = vld [vmem:[#allocation2 + $0x58] sm:$0xff]
        %v883 = vld [vmem:[#allocation2 + $0x60] sm:$0xff]
        %v884 = vld [vmem:[#allocation2 + $0x68] sm:$0xff]
        %v885 = vld [vmem:[#allocation2 + $0x70] sm:$0xff]
        %v886 = vld [vmem:[#allocation2 + $0x78] sm:$0xff]
        %v887 = vld [vmem:[#allocation2 + $0x80] sm:$0xff]
        %v888 = vld [vmem:[#allocation2 + $0x88] sm:$0xff]
        %v889 = vld [vmem:[#allocation2 + $0x90] sm:$0xff]
        %v890 = vld [vmem:[#allocation2 + $0x98] sm:$0xff]
        %v891 = vld [vmem:[#allocation2 + $0xa0] sm:$0xff]
        %v892 = vld [vmem:[#allocation2 + $0xa8] sm:$0xff]
        %v893 = vld [vmem:[#allocation2 + $0xb0] sm:$0xff]
        %v894 = vld [vmem:[#allocation2 + $0xb8] sm:$0xff]
        %v895 = vld [vmem:[#allocation2 + $0xc0] sm:$0xff]
        %v896 = vld [vmem:[#allocation2 + $0xc8] sm:$0xff]
        %v897 = vld [vmem:[#allocation2 + $0xd0] sm:$0xff]
        %v898 = vld [vmem:[#allocation2 + $0xd8] sm:$0xff]
        %v899 = vld [vmem:[#allocation2 + $0xe0] sm:$0xff]
        %v900 = vld [vmem:[#allocation2 + $0xe8] sm:$0xff]
        %v901 = vld [vmem:[#allocation2 + $0xf0] sm:$0xff]
        %v902 = vld [vmem:[#allocation2 + $0xf8] sm:$0xff]
        %v903 = vadd.f32 %v871, %v745
        %v904 = vadd.f32 %v872, %v748
        %v905 = vadd.f32 %v873, %v753
        %v906 = vadd.f32 %v874, %v756
        %v907 = vadd.f32 %v875, %v761
        %v908 = vadd.f32 %v876, %v764
        %v909 = vadd.f32 %v877, %v769
        %v910 = vadd.f32 %v878, %v772
        %v911 = vadd.f32 %v879, %v777
        %v912 = vadd.f32 %v880, %v780
        %v913 = vadd.f32 %v881, %v785
        %v914 = vadd.f32 %v882, %v788
        %v915 = vadd.f32 %v883, %v793
        %v916 = vadd.f32 %v884, %v796
        %v917 = vadd.f32 %v885, %v801
        %v918 = vadd.f32 %v886, %v804
        %v919 = vadd.f32 %v887, %v809
        %v920 = vadd.f32 %v888, %v812
        %v921 = vadd.f32 %v889, %v817
        %v922 = vadd.f32 %v890, %v820
        %v923 = vadd.f32 %v891, %v825
        %v924 = vadd.f32 %v892, %v828
        %v925 = vadd.f32 %v893, %v833
        %v926 = vadd.f32 %v894, %v836
        %v927 = vadd.f32 %v895, %v841
        %v928 = vadd.f32 %v896, %v844
        %v929 = vadd.f32 %v897, %v849
        %v930 = vadd.f32 %v898, %v852
        %v931 = vadd.f32 %v899, %v857
        %v932 = vadd.f32 %v900, %v860
        %v933 = vadd.f32 %v901, %v865
        %v934 = vadd.f32 %v902, %v868
        %935 = vst [vmem:[#allocation2] sm:$0xff] %v903
        %936 = vst [vmem:[#allocation2 + $0x8] sm:$0xff] %v904
        %937 = vst [vmem:[#allocation2 + $0x10] sm:$0xff] %v905
        %938 = vst [vmem:[#allocation2 + $0x18] sm:$0xff] %v906
        %939 = vst [vmem:[#allocation2 + $0x20] sm:$0xff] %v907
        %940 = vst [vmem:[#allocation2 + $0x28] sm:$0xff] %v908
        %941 = vst [vmem:[#allocation2 + $0x30] sm:$0xff] %v909
        %942 = vst [vmem:[#allocation2 + $0x38] sm:$0xff] %v910
        %943 = vst [vmem:[#allocation2 + $0x40] sm:$0xff] %v911
        %944 = vst [vmem:[#allocation2 + $0x48] sm:$0xff] %v912
        %945 = vst [vmem:[#allocation2 + $0x50] sm:$0xff] %v913
        %946 = vst [vmem:[#allocation2 + $0x58] sm:$0xff] %v914
        %947 = vst [vmem:[#allocation2 + $0x60] sm:$0xff] %v915
        %948 = vst [vmem:[#allocation2 + $0x68] sm:$0xff] %v916
        %949 = vst [vmem:[#allocation2 + $0x70] sm:$0xff] %v917
        %950 = vst [vmem:[#allocation2 + $0x78] sm:$0xff] %v918
        %951 = vst [vmem:[#allocation2 + $0x80] sm:$0xff] %v919
        %952 = vst [vmem:[#allocation2 + $0x88] sm:$0xff] %v920
        %953 = vst [vmem:[#allocation2 + $0x90] sm:$0xff] %v921
        %954 = vst [vmem:[#allocation2 + $0x98] sm:$0xff] %v922
        %955 = vst [vmem:[#allocation2 + $0xa0] sm:$0xff] %v923
        %956 = vst [vmem:[#allocation2 + $0xa8] sm:$0xff] %v924
        %957 = vst [vmem:[#allocation2 + $0xb0] sm:$0xff] %v925
        %958 = vst [vmem:[#allocation2 + $0xb8] sm:$0xff] %v926
        %959 = vst [vmem:[#allocation2 + $0xc0] sm:$0xff] %v927
        %960 = vst [vmem:[#allocation2 + $0xc8] sm:$0xff] %v928
        %961 = vst [vmem:[#allocation2 + $0xd0] sm:$0xff] %v929
        %962 = vst [vmem:[#allocation2 + $0xd8] sm:$0xff] %v930
        %963 = vst [vmem:[#allocation2 + $0xe0] sm:$0xff] %v931
        %964 = vst [vmem:[#allocation2 + $0xe8] sm:$0xff] %v932
        %965 = vst [vmem:[#allocation2 + $0xf0] sm:$0xff] %v933
        %966 = vst [vmem:[#allocation2 + $0xf8] sm:$0xff] %v934
        %v967 = vld [vmem:[%s290 + $0x2] sm:$0xff]
        %v968 = vld [vmem:[%s290 + $0xa] sm:$0xff]
        %v969 = vld [vmem:[%s290 + $0x1a] sm:$0xff]
        %v970 = vld [vmem:[%s290 + $0x22] sm:$0xff]
        %v971 = vld [vmem:[%s290 + $0x32] sm:$0xff]
        %v972 = vld [vmem:[%s290 + $0x3a] sm:$0xff]
        %v973 = vld [vmem:[%s290 + $0x4a] sm:$0xff]
        %v974 = vld [vmem:[%s290 + $0x52] sm:$0xff]
        %v975 = vld [vmem:[%s290 + $0x62] sm:$0xff]
        %v976 = vld [vmem:[%s290 + $0x6a] sm:$0xff]
        %v977 = vld [vmem:[%s290 + $0x7a] sm:$0xff]
        %v978 = vld [vmem:[%s290 + $0x82] sm:$0xff]
        %v979 = vld [vmem:[%s290 + $0x92] sm:$0xff]
        %v980 = vld [vmem:[%s290 + $0x9a] sm:$0xff]
        %v981 = vld [vmem:[%s290 + $0xaa] sm:$0xff]
        %v982 = vld [vmem:[%s290 + $0xb2] sm:$0xff]
        %v983 = vld [vmem:[%s290 + $0xc2] sm:$0xff]
        %v984 = vld [vmem:[%s290 + $0xca] sm:$0xff]
        %v985 = vld [vmem:[%s290 + $0xda] sm:$0xff]
        %v986 = vld [vmem:[%s290 + $0xe2] sm:$0xff]
        %v987 = vld [vmem:[%s290 + $0xf2] sm:$0xff]
        %v988 = vld [vmem:[%s290 + $0xfa] sm:$0xff]
        %v989 = vld [vmem:[%s290 + $0x10a] sm:$0xff]
        %v990 = vld [vmem:[%s290 + $0x112] sm:$0xff]
        %v991 = vld [vmem:[%s290 + $0x122] sm:$0xff]
        %v992 = vld [vmem:[%s290 + $0x12a] sm:$0xff]
        %v993 = vld [vmem:[%s290 + $0x13a] sm:$0xff]
        %v994 = vld [vmem:[%s290 + $0x142] sm:$0xff]
        %v995 = vld [vmem:[%s290 + $0x152] sm:$0xff]
        %v996 = vld [vmem:[%s290 + $0x15a] sm:$0xff]
        %v997 = vld [vmem:[%s290 + $0x16a] sm:$0xff]
        %v998 = vld [vmem:[%s290 + $0x172] sm:$0xff]
        %v999 = vpack.c.bf16 %v968, %v967
        %v1000 = vpack.c.bf16 %v970, %v969
        %v1001 = vpack.c.bf16 %v972, %v971
        %v1002 = vpack.c.bf16 %v974, %v973
        %v1003 = vpack.c.bf16 %v976, %v975
        %v1004 = vpack.c.bf16 %v978, %v977
        %v1005 = vpack.c.bf16 %v980, %v979
        %v1006 = vpack.c.bf16 %v982, %v981
        %v1007 = vpack.c.bf16 %v984, %v983
        %v1008 = vpack.c.bf16 %v986, %v985
        %v1009 = vpack.c.bf16 %v988, %v987
        %v1010 = vpack.c.bf16 %v990, %v989
        %v1011 = vpack.c.bf16 %v992, %v991
        %v1012 = vpack.c.bf16 %v994, %v993
        %v1013 = vpack.c.bf16 %v996, %v995
        %v1014 = vpack.c.bf16 %v998, %v997
        %s1015 = scalar_lea.vmem %s1, 128
        %v1016 = vld [vmem:[%s1015] sm:$0xf]
        %v1017 = vld [vmem:[%s1015 + $0x4] sm:$0xf]
        %v1018 = vld [vmem:[%s1015 + $0x8] sm:$0xf]
        %v1019 = vld [vmem:[%s1015 + $0xc] sm:$0xf]
        %v1020 = vld [vmem:[%s1015 + $0x10] sm:$0xf]
        %v1021 = vld [vmem:[%s1015 + $0x14] sm:$0xf]
        %v1022 = vld [vmem:[%s1015 + $0x18] sm:$0xf]
        %v1023 = vld [vmem:[%s1015 + $0x1c] sm:$0xf]
        %v1024 = vld [vmem:[%s1015 + $0x20] sm:$0xf]
        %v1025 = vld [vmem:[%s1015 + $0x24] sm:$0xf]
        %v1026 = vld [vmem:[%s1015 + $0x28] sm:$0xf]
        %v1027 = vld [vmem:[%s1015 + $0x2c] sm:$0xf]
        %v1028 = vld [vmem:[%s1015 + $0x30] sm:$0xf]
        %v1029 = vld [vmem:[%s1015 + $0x34] sm:$0xf]
        %v1030 = vld [vmem:[%s1015 + $0x38] sm:$0xf]
        %v1031 = vld [vmem:[%s1015 + $0x3c] sm:$0xf]
        %v1048 = vunpack.c.l.b16 %v1016
        %v1049 = vunpack.c.l.b16 %v1017
        %v1050 = vunpack.c.l.b16 %v1018
        %v1051 = vunpack.c.l.b16 %v1019
        %v1052 = vunpack.c.l.b16 %v1020
        %v1053 = vunpack.c.l.b16 %v1021
        %v1054 = vunpack.c.l.b16 %v1022
        %v1055 = vunpack.c.l.b16 %v1023
        %v1056 = vunpack.c.l.b16 %v1024
        %v1057 = vunpack.c.l.b16 %v1025
        %v1058 = vunpack.c.l.b16 %v1026
        %v1059 = vunpack.c.l.b16 %v1027
        %v1060 = vunpack.c.l.b16 %v1028
        %v1061 = vunpack.c.l.b16 %v1029
        %v1062 = vunpack.c.l.b16 %v1030
        %v1063 = vunpack.c.l.b16 %v1031
        %v1064 = vpack.c.b16 %v1049, %v1048
        %v1065 = vpack.c.b16 %v1051, %v1050
        %v1066 = vpack.c.b16 %v1053, %v1052
        %v1067 = vpack.c.b16 %v1055, %v1054
        %v1068 = vpack.c.b16 %v1057, %v1056
        %v1069 = vpack.c.b16 %v1059, %v1058
        %v1070 = vpack.c.b16 %v1061, %v1060
        %v1071 = vpack.c.b16 %v1063, %v1062
        %1080 = vmatprep.subr.bf16.mxu0 0
        %1081 = vmatpush1.bf16.msra.mxu0 %v1071
        %1082 = vmatprep.subr.bf16.mxu0 0
        %1083 = vmatpush1.bf16.msra.mxu0 %v1070
        %1084 = vmatprep.subr.bf16.mxu0 0
        %1085 = vmatpush1.bf16.msra.mxu0 %v1069
        %1086 = vmatprep.subr.bf16.mxu0 0
        %1087 = vmatpush1.bf16.msra.mxu0 %v1068
        %1088 = vmatprep.subr.bf16.mxu0 0
        %1089 = vmatpush1.bf16.msra.mxu0 %v1067
        %1090 = vmatprep.subr.bf16.mxu0 0
        %1091 = vmatpush1.bf16.msra.mxu0 %v1066
        %1092 = vmatprep.subr.bf16.mxu0 0
        %1093 = vmatpush1.bf16.msra.mxu0 %v1065
        %1094 = vmatprep.subr.bf16.mxu0 0
        %1095 = vmatpush1.bf16.msra.mxu0 %v1064
        %1096 = vmatprep.subr.bf16.mxu0 0
        %1097 = vmatpush2.bf16.msra.mxu0 0
        %1098 = vmatprep.subr.bf16.mxu0 0
        %1099 = vmatpush2.bf16.msra.mxu0 0
        %1100 = vmatprep.subr.bf16.mxu0 0
        %1101 = vmatpush2.bf16.msra.mxu0 0
        %1102 = vmatprep.subr.bf16.mxu0 0
        %1103 = vmatpush2.bf16.msra.mxu0 0
        %1104 = vmatprep.subr.bf16.mxu0 0
        %1105 = vmatpush2.bf16.msra.mxu0 0
        %1106 = vmatprep.subr.bf16.mxu0 0
        %1107 = vmatpush2.bf16.msra.mxu0 0
        %1108 = vmatprep.subr.bf16.mxu0 0
        %1109 = vmatpush2.bf16.msra.mxu0 0
        %1110 = vmatprep.subr.bf16.mxu0 0
        %1111 = vmatpush2.bf16.msra.mxu0 0
        %1112 = vmatprep.mubr.bf16.mxu0 0
        %1113 = vmatmul.mubr.bf16.gmra.mxu0 %v999
        %v1114 = vpop.f32.mrf.mxu0
        %v1115 = vadd.f32 0.0, %v1114
        %v1116 = vpop.f32.mrf.mxu0
        %v1117 = vpop.f32.mrf.mxu0
        %v1118 = vadd.f32 0.0, %v1117
        %v1119 = vpop.f32.mrf.mxu0
        %1120 = vmatprep.mubr.bf16.mxu0 0
        %1121 = vmatmul.mubr.bf16.gmra.mxu0 %v1000
        %v1122 = vpop.f32.mrf.mxu0
        %v1123 = vadd.f32 0.0, %v1122
        %v1124 = vpop.f32.mrf.mxu0
        %v1125 = vpop.f32.mrf.mxu0
        %v1126 = vadd.f32 0.0, %v1125
        %v1127 = vpop.f32.mrf.mxu0
        %1128 = vmatprep.mubr.bf16.mxu0 0
        %1129 = vmatmul.mubr.bf16.gmra.mxu0 %v1001
        %v1130 = vpop.f32.mrf.mxu0
        %v1131 = vadd.f32 0.0, %v1130
        %v1132 = vpop.f32.mrf.mxu0
        %v1133 = vpop.f32.mrf.mxu0
        %v1134 = vadd.f32 0.0, %v1133
        %v1135 = vpop.f32.mrf.mxu0
        %1136 = vmatprep.mubr.bf16.mxu0 0
        %1137 = vmatmul.mubr.bf16.gmra.mxu0 %v1002
        %v1138 = vpop.f32.mrf.mxu0
        %v1139 = vadd.f32 0.0, %v1138
        %v1140 = vpop.f32.mrf.mxu0
        %v1141 = vpop.f32.mrf.mxu0
        %v1142 = vadd.f32 0.0, %v1141
        %v1143 = vpop.f32.mrf.mxu0
        %1144 = vmatprep.mubr.bf16.mxu0 0
        %1145 = vmatmul.mubr.bf16.gmra.mxu0 %v1003
        %v1146 = vpop.f32.mrf.mxu0
        %v1147 = vadd.f32 0.0, %v1146
        %v1148 = vpop.f32.mrf.mxu0
        %v1149 = vpop.f32.mrf.mxu0
        %v1150 = vadd.f32 0.0, %v1149
        %v1151 = vpop.f32.mrf.mxu0
        %1152 = vmatprep.mubr.bf16.mxu0 0
        %1153 = vmatmul.mubr.bf16.gmra.mxu0 %v1004
        %v1154 = vpop.f32.mrf.mxu0
        %v1155 = vadd.f32 0.0, %v1154
        %v1156 = vpop.f32.mrf.mxu0
        %v1157 = vpop.f32.mrf.mxu0
        %v1158 = vadd.f32 0.0, %v1157
        %v1159 = vpop.f32.mrf.mxu0
        %1160 = vmatprep.mubr.bf16.mxu0 0
        %1161 = vmatmul.mubr.bf16.gmra.mxu0 %v1005
        %v1162 = vpop.f32.mrf.mxu0
        %v1163 = vadd.f32 0.0, %v1162
        %v1164 = vpop.f32.mrf.mxu0
        %v1165 = vpop.f32.mrf.mxu0
        %v1166 = vadd.f32 0.0, %v1165
        %v1167 = vpop.f32.mrf.mxu0
        %1168 = vmatprep.mubr.bf16.mxu0 0
        %1169 = vmatmul.mubr.bf16.gmra.mxu0 %v1006
        %v1170 = vpop.f32.mrf.mxu0
        %v1171 = vadd.f32 0.0, %v1170
        %v1172 = vpop.f32.mrf.mxu0
        %v1173 = vpop.f32.mrf.mxu0
        %v1174 = vadd.f32 0.0, %v1173
        %v1175 = vpop.f32.mrf.mxu0
        %1176 = vmatprep.mubr.bf16.mxu0 0
        %1177 = vmatmul.mubr.bf16.gmra.mxu0 %v1007
        %v1178 = vpop.f32.mrf.mxu0
        %v1179 = vadd.f32 0.0, %v1178
        %v1180 = vpop.f32.mrf.mxu0
        %v1181 = vpop.f32.mrf.mxu0
        %v1182 = vadd.f32 0.0, %v1181
        %v1183 = vpop.f32.mrf.mxu0
        %1184 = vmatprep.mubr.bf16.mxu0 0
        %1185 = vmatmul.mubr.bf16.gmra.mxu0 %v1008
        %v1186 = vpop.f32.mrf.mxu0
        %v1187 = vadd.f32 0.0, %v1186
        %v1188 = vpop.f32.mrf.mxu0
        %v1189 = vpop.f32.mrf.mxu0
        %v1190 = vadd.f32 0.0, %v1189
        %v1191 = vpop.f32.mrf.mxu0
        %1192 = vmatprep.mubr.bf16.mxu0 0
        %1193 = vmatmul.mubr.bf16.gmra.mxu0 %v1009
        %v1194 = vpop.f32.mrf.mxu0
        %v1195 = vadd.f32 0.0, %v1194
        %v1196 = vpop.f32.mrf.mxu0
        %v1197 = vpop.f32.mrf.mxu0
        %v1198 = vadd.f32 0.0, %v1197
        %v1199 = vpop.f32.mrf.mxu0
        %1200 = vmatprep.mubr.bf16.mxu0 0
        %1201 = vmatmul.mubr.bf16.gmra.mxu0 %v1010
        %v1202 = vpop.f32.mrf.mxu0
        %v1203 = vadd.f32 0.0, %v1202
        %v1204 = vpop.f32.mrf.mxu0
        %v1205 = vpop.f32.mrf.mxu0
        %v1206 = vadd.f32 0.0, %v1205
        %v1207 = vpop.f32.mrf.mxu0
        %1208 = vmatprep.mubr.bf16.mxu0 0
        %1209 = vmatmul.mubr.bf16.gmra.mxu0 %v1011
        %v1210 = vpop.f32.mrf.mxu0
        %v1211 = vadd.f32 0.0, %v1210
        %v1212 = vpop.f32.mrf.mxu0
        %v1213 = vpop.f32.mrf.mxu0
        %v1214 = vadd.f32 0.0, %v1213
        %v1215 = vpop.f32.mrf.mxu0
        %1216 = vmatprep.mubr.bf16.mxu0 0
        %1217 = vmatmul.mubr.bf16.gmra.mxu0 %v1012
        %v1218 = vpop.f32.mrf.mxu0
        %v1219 = vadd.f32 0.0, %v1218
        %v1220 = vpop.f32.mrf.mxu0
        %v1221 = vpop.f32.mrf.mxu0
        %v1222 = vadd.f32 0.0, %v1221
        %v1223 = vpop.f32.mrf.mxu0
        %1224 = vmatprep.mubr.bf16.mxu0 0
        %1225 = vmatmul.mubr.bf16.gmra.mxu0 %v1013
        %v1226 = vpop.f32.mrf.mxu0
        %v1227 = vadd.f32 0.0, %v1226
        %v1228 = vpop.f32.mrf.mxu0
        %v1229 = vpop.f32.mrf.mxu0
        %v1230 = vadd.f32 0.0, %v1229
        %v1231 = vpop.f32.mrf.mxu0
        %1232 = vmatprep.mubr.bf16.mxu0 0
        %1233 = vmatmul.mubr.bf16.gmra.mxu0 %v1014
        %v1234 = vpop.f32.mrf.mxu0
        %v1235 = vadd.f32 0.0, %v1234
        %v1236 = vpop.f32.mrf.mxu0
        %v1237 = vpop.f32.mrf.mxu0
        %v1238 = vadd.f32 0.0, %v1237
        %v1239 = vpop.f32.mrf.mxu0
        %1240 = vdwg.mxu0
        %v1241 = vld [vmem:[#allocation2] sm:$0xff]
        %v1242 = vld [vmem:[#allocation2 + $0x8] sm:$0xff]
        %v1243 = vld [vmem:[#allocation2 + $0x10] sm:$0xff]
        %v1244 = vld [vmem:[#allocation2 + $0x18] sm:$0xff]
        %v1245 = vld [vmem:[#allocation2 + $0x20] sm:$0xff]
        %v1246 = vld [vmem:[#allocation2 + $0x28] sm:$0xff]
        %v1247 = vld [vmem:[#allocation2 + $0x30] sm:$0xff]
        %v1248 = vld [vmem:[#allocation2 + $0x38] sm:$0xff]
        %v1249 = vld [vmem:[#allocation2 + $0x40] sm:$0xff]
        %v1250 = vld [vmem:[#allocation2 + $0x48] sm:$0xff]
        %v1251 = vld [vmem:[#allocation2 + $0x50] sm:$0xff]
        %v1252 = vld [vmem:[#allocation2 + $0x58] sm:$0xff]
        %v1253 = vld [vmem:[#allocation2 + $0x60] sm:$0xff]
        %v1254 = vld [vmem:[#allocation2 + $0x68] sm:$0xff]
        %v1255 = vld [vmem:[#allocation2 + $0x70] sm:$0xff]
        %v1256 = vld [vmem:[#allocation2 + $0x78] sm:$0xff]
        %v1257 = vld [vmem:[#allocation2 + $0x80] sm:$0xff]
        %v1258 = vld [vmem:[#allocation2 + $0x88] sm:$0xff]
        %v1259 = vld [vmem:[#allocation2 + $0x90] sm:$0xff]
        %v1260 = vld [vmem:[#allocation2 + $0x98] sm:$0xff]
        %v1261 = vld [vmem:[#allocation2 + $0xa0] sm:$0xff]
        %v1262 = vld [vmem:[#allocation2 + $0xa8] sm:$0xff]
        %v1263 = vld [vmem:[#allocation2 + $0xb0] sm:$0xff]
        %v1264 = vld [vmem:[#allocation2 + $0xb8] sm:$0xff]
        %v1265 = vld [vmem:[#allocation2 + $0xc0] sm:$0xff]
        %v1266 = vld [vmem:[#allocation2 + $0xc8] sm:$0xff]
        %v1267 = vld [vmem:[#allocation2 + $0xd0] sm:$0xff]
        %v1268 = vld [vmem:[#allocation2 + $0xd8] sm:$0xff]
        %v1269 = vld [vmem:[#allocation2 + $0xe0] sm:$0xff]
        %v1270 = vld [vmem:[#allocation2 + $0xe8] sm:$0xff]
        %v1271 = vld [vmem:[#allocation2 + $0xf0] sm:$0xff]
        %v1272 = vld [vmem:[#allocation2 + $0xf8] sm:$0xff]
        %v1273 = vadd.f32 %v1241, %v1115
        %v1274 = vadd.f32 %v1242, %v1118
        %v1275 = vadd.f32 %v1243, %v1123
        %v1276 = vadd.f32 %v1244, %v1126
        %v1277 = vadd.f32 %v1245, %v1131
        %v1278 = vadd.f32 %v1246, %v1134
        %v1279 = vadd.f32 %v1247, %v1139
        %v1280 = vadd.f32 %v1248, %v1142
        %v1281 = vadd.f32 %v1249, %v1147
        %v1282 = vadd.f32 %v1250, %v1150
        %v1283 = vadd.f32 %v1251, %v1155
        %v1284 = vadd.f32 %v1252, %v1158
        %v1285 = vadd.f32 %v1253, %v1163
        %v1286 = vadd.f32 %v1254, %v1166
        %v1287 = vadd.f32 %v1255, %v1171
        %v1288 = vadd.f32 %v1256, %v1174
        %v1289 = vadd.f32 %v1257, %v1179
        %v1290 = vadd.f32 %v1258, %v1182
        %v1291 = vadd.f32 %v1259, %v1187
        %v1292 = vadd.f32 %v1260, %v1190
        %v1293 = vadd.f32 %v1261, %v1195
        %v1294 = vadd.f32 %v1262, %v1198
        %v1295 = vadd.f32 %v1263, %v1203
        %v1296 = vadd.f32 %v1264, %v1206
        %v1297 = vadd.f32 %v1265, %v1211
        %v1298 = vadd.f32 %v1266, %v1214
        %v1299 = vadd.f32 %v1267, %v1219
        %v1300 = vadd.f32 %v1268, %v1222
        %v1301 = vadd.f32 %v1269, %v1227
        %v1302 = vadd.f32 %v1270, %v1230
        %v1303 = vadd.f32 %v1271, %v1235
        %v1304 = vadd.f32 %v1272, %v1238
        %1305 = vst [vmem:[#allocation2] sm:$0xff] %v1273
        %1306 = vst [vmem:[#allocation2 + $0x8] sm:$0xff] %v1274
        %1307 = vst [vmem:[#allocation2 + $0x10] sm:$0xff] %v1275
        %1308 = vst [vmem:[#allocation2 + $0x18] sm:$0xff] %v1276
        %1309 = vst [vmem:[#allocation2 + $0x20] sm:$0xff] %v1277
        %1310 = vst [vmem:[#allocation2 + $0x28] sm:$0xff] %v1278
        %1311 = vst [vmem:[#allocation2 + $0x30] sm:$0xff] %v1279
        %1312 = vst [vmem:[#allocation2 + $0x38] sm:$0xff] %v1280
        %1313 = vst [vmem:[#allocation2 + $0x40] sm:$0xff] %v1281
        %1314 = vst [vmem:[#allocation2 + $0x48] sm:$0xff] %v1282
        %1315 = vst [vmem:[#allocation2 + $0x50] sm:$0xff] %v1283
        %1316 = vst [vmem:[#allocation2 + $0x58] sm:$0xff] %v1284
        %1317 = vst [vmem:[#allocation2 + $0x60] sm:$0xff] %v1285
        %1318 = vst [vmem:[#allocation2 + $0x68] sm:$0xff] %v1286
        %1319 = vst [vmem:[#allocation2 + $0x70] sm:$0xff] %v1287
        %1320 = vst [vmem:[#allocation2 + $0x78] sm:$0xff] %v1288
        %1321 = vst [vmem:[#allocation2 + $0x80] sm:$0xff] %v1289
        %1322 = vst [vmem:[#allocation2 + $0x88] sm:$0xff] %v1290
        %1323 = vst [vmem:[#allocation2 + $0x90] sm:$0xff] %v1291
        %1324 = vst [vmem:[#allocation2 + $0x98] sm:$0xff] %v1292
        %1325 = vst [vmem:[#allocation2 + $0xa0] sm:$0xff] %v1293
        %1326 = vst [vmem:[#allocation2 + $0xa8] sm:$0xff] %v1294
        %1327 = vst [vmem:[#allocation2 + $0xb0] sm:$0xff] %v1295
        %1328 = vst [vmem:[#allocation2 + $0xb8] sm:$0xff] %v1296
        %1329 = vst [vmem:[#allocation2 + $0xc0] sm:$0xff] %v1297
        %1330 = vst [vmem:[#allocation2 + $0xc8] sm:$0xff] %v1298
        %1331 = vst [vmem:[#allocation2 + $0xd0] sm:$0xff] %v1299
        %1332 = vst [vmem:[#allocation2 + $0xd8] sm:$0xff] %v1300
        %1333 = vst [vmem:[#allocation2 + $0xe0] sm:$0xff] %v1301
        %1334 = vst [vmem:[#allocation2 + $0xe8] sm:$0xff] %v1302
        %1335 = vst [vmem:[#allocation2 + $0xf0] sm:$0xff] %v1303
        %1336 = vst [vmem:[#allocation2 + $0xf8] sm:$0xff] %v1304
        %s1337 = scalar_lea.vmem %s290, 24
        %v1338 = vld [vmem:[%s1337] sm:$0xff]
        %v1339 = vld [vmem:[%s1337 + $0x8] sm:$0xff]
        %v1340 = vld [vmem:[%s1337 + $0x18] sm:$0xff]
        %v1341 = vld [vmem:[%s1337 + $0x20] sm:$0xff]
        %v1342 = vld [vmem:[%s1337 + $0x30] sm:$0xff]
        %v1343 = vld [vmem:[%s1337 + $0x38] sm:$0xff]
        %v1344 = vld [vmem:[%s1337 + $0x48] sm:$0xff]
        %v1345 = vld [vmem:[%s1337 + $0x50] sm:$0xff]
        %v1346 = vld [vmem:[%s1337 + $0x60] sm:$0xff]
        %v1347 = vld [vmem:[%s1337 + $0x68] sm:$0xff]
        %v1348 = vld [vmem:[%s1337 + $0x78] sm:$0xff]
        %v1349 = vld [vmem:[%s1337 + $0x80] sm:$0xff]
        %v1350 = vld [vmem:[%s1337 + $0x90] sm:$0xff]
        %v1351 = vld [vmem:[%s1337 + $0x98] sm:$0xff]
        %v1352 = vld [vmem:[%s1337 + $0xa8] sm:$0xff]
        %v1353 = vld [vmem:[%s1337 + $0xb0] sm:$0xff]
        %v1354 = vld [vmem:[%s1337 + $0xc0] sm:$0xff]
        %v1355 = vld [vmem:[%s1337 + $0xc8] sm:$0xff]
        %v1356 = vld [vmem:[%s1337 + $0xd8] sm:$0xff]
        %v1357 = vld [vmem:[%s1337 + $0xe0] sm:$0xff]
        %v1358 = vld [vmem:[%s1337 + $0xf0] sm:$0xff]
        %v1359 = vld [vmem:[%s1337 + $0xf8] sm:$0xff]
        %v1360 = vld [vmem:[%s1337 + $0x108] sm:$0xff]
        %v1361 = vld [vmem:[%s1337 + $0x110] sm:$0xff]
        %v1362 = vld [vmem:[%s1337 + $0x120] sm:$0xff]
        %v1363 = vld [vmem:[%s1337 + $0x128] sm:$0xff]
        %v1364 = vld [vmem:[%s1337 + $0x138] sm:$0xff]
        %v1365 = vld [vmem:[%s1337 + $0x140] sm:$0xff]
        %v1366 = vld [vmem:[%s1337 + $0x150] sm:$0xff]
        %v1367 = vld [vmem:[%s1337 + $0x158] sm:$0xff]
        %v1368 = vld [vmem:[%s1337 + $0x168] sm:$0xff]
        %v1369 = vld [vmem:[%s1337 + $0x170] sm:$0xff]
        %v1370 = vpack.c.bf16 %v1339, %v1338
        %v1371 = vpack.c.bf16 %v1341, %v1340
        %v1372 = vpack.c.bf16 %v1343, %v1342
        %v1373 = vpack.c.bf16 %v1345, %v1344
        %v1374 = vpack.c.bf16 %v1347, %v1346
        %v1375 = vpack.c.bf16 %v1349, %v1348
        %v1376 = vpack.c.bf16 %v1351, %v1350
        %v1377 = vpack.c.bf16 %v1353, %v1352
        %v1378 = vpack.c.bf16 %v1355, %v1354
        %v1379 = vpack.c.bf16 %v1357, %v1356
        %v1380 = vpack.c.bf16 %v1359, %v1358
        %v1381 = vpack.c.bf16 %v1361, %v1360
        %v1382 = vpack.c.bf16 %v1363, %v1362
        %v1383 = vpack.c.bf16 %v1365, %v1364
        %v1384 = vpack.c.bf16 %v1367, %v1366
        %v1385 = vpack.c.bf16 %v1369, %v1368
        %s1386 = scalar_lea.vmem %s1, 192
        %v1387 = vld [vmem:[%s1386] sm:$0xf]
        %v1388 = vld [vmem:[%s1386 + $0x4] sm:$0xf]
        %v1389 = vld [vmem:[%s1386 + $0x8] sm:$0xf]
        %v1390 = vld [vmem:[%s1386 + $0xc] sm:$0xf]
        %v1391 = vld [vmem:[%s1386 + $0x10] sm:$0xf]
        %v1392 = vld [vmem:[%s1386 + $0x14] sm:$0xf]
        %v1393 = vld [vmem:[%s1386 + $0x18] sm:$0xf]
        %v1394 = vld [vmem:[%s1386 + $0x1c] sm:$0xf]
        %v1395 = vld [vmem:[%s1386 + $0x20] sm:$0xf]
        %v1396 = vld [vmem:[%s1386 + $0x24] sm:$0xf]
        %v1397 = vld [vmem:[%s1386 + $0x28] sm:$0xf]
        %v1398 = vld [vmem:[%s1386 + $0x2c] sm:$0xf]
        %v1399 = vld [vmem:[%s1386 + $0x30] sm:$0xf]
        %v1400 = vld [vmem:[%s1386 + $0x34] sm:$0xf]
        %v1401 = vld [vmem:[%s1386 + $0x38] sm:$0xf]
        %v1402 = vld [vmem:[%s1386 + $0x3c] sm:$0xf]
        %v1419 = vunpack.c.l.b16 %v1387
        %v1420 = vunpack.c.l.b16 %v1388
        %v1421 = vunpack.c.l.b16 %v1389
        %v1422 = vunpack.c.l.b16 %v1390
        %v1423 = vunpack.c.l.b16 %v1391
        %v1424 = vunpack.c.l.b16 %v1392
        %v1425 = vunpack.c.l.b16 %v1393
        %v1426 = vunpack.c.l.b16 %v1394
        %v1427 = vunpack.c.l.b16 %v1395
        %v1428 = vunpack.c.l.b16 %v1396
        %v1429 = vunpack.c.l.b16 %v1397
        %v1430 = vunpack.c.l.b16 %v1398
        %v1431 = vunpack.c.l.b16 %v1399
        %v1432 = vunpack.c.l.b16 %v1400
        %v1433 = vunpack.c.l.b16 %v1401
        %v1434 = vunpack.c.l.b16 %v1402
        %v1435 = vpack.c.b16 %v1420, %v1419
        %v1436 = vpack.c.b16 %v1422, %v1421
        %v1437 = vpack.c.b16 %v1424, %v1423
        %v1438 = vpack.c.b16 %v1426, %v1425
        %v1439 = vpack.c.b16 %v1428, %v1427
        %v1440 = vpack.c.b16 %v1430, %v1429
        %v1441 = vpack.c.b16 %v1432, %v1431
        %v1442 = vpack.c.b16 %v1434, %v1433
        %1451 = vmatprep.subr.bf16.mxu0 0
        %1452 = vmatpush1.bf16.msra.mxu0 %v1442
        %1453 = vmatprep.subr.bf16.mxu0 0
        %1454 = vmatpush1.bf16.msra.mxu0 %v1441
        %1455 = vmatprep.subr.bf16.mxu0 0
        %1456 = vmatpush1.bf16.msra.mxu0 %v1440
        %1457 = vmatprep.subr.bf16.mxu0 0
        %1458 = vmatpush1.bf16.msra.mxu0 %v1439
        %1459 = vmatprep.subr.bf16.mxu0 0
        %1460 = vmatpush1.bf16.msra.mxu0 %v1438
        %1461 = vmatprep.subr.bf16.mxu0 0
        %1462 = vmatpush1.bf16.msra.mxu0 %v1437
        %1463 = vmatprep.subr.bf16.mxu0 0
        %1464 = vmatpush1.bf16.msra.mxu0 %v1436
        %1465 = vmatprep.subr.bf16.mxu0 0
        %1466 = vmatpush1.bf16.msra.mxu0 %v1435
        %1467 = vmatprep.subr.bf16.mxu0 0
        %1468 = vmatpush2.bf16.msra.mxu0 0
        %1469 = vmatprep.subr.bf16.mxu0 0
        %1470 = vmatpush2.bf16.msra.mxu0 0
        %1471 = vmatprep.subr.bf16.mxu0 0
        %1472 = vmatpush2.bf16.msra.mxu0 0
        %1473 = vmatprep.subr.bf16.mxu0 0
        %1474 = vmatpush2.bf16.msra.mxu0 0
        %1475 = vmatprep.subr.bf16.mxu0 0
        %1476 = vmatpush2.bf16.msra.mxu0 0
        %1477 = vmatprep.subr.bf16.mxu0 0
        %1478 = vmatpush2.bf16.msra.mxu0 0
        %1479 = vmatprep.subr.bf16.mxu0 0
        %1480 = vmatpush2.bf16.msra.mxu0 0
        %1481 = vmatprep.subr.bf16.mxu0 0
        %1482 = vmatpush2.bf16.msra.mxu0 0
        %1483 = vmatprep.mubr.bf16.mxu0 0
        %1484 = vmatmul.mubr.bf16.gmra.mxu0 %v1370
        %v1485 = vpop.f32.mrf.mxu0
        %v1486 = vadd.f32 0.0, %v1485
        %v1487 = vpop.f32.mrf.mxu0
        %v1488 = vpop.f32.mrf.mxu0
        %v1489 = vadd.f32 0.0, %v1488
        %v1490 = vpop.f32.mrf.mxu0
        %1491 = vmatprep.mubr.bf16.mxu0 0
        %1492 = vmatmul.mubr.bf16.gmra.mxu0 %v1371
        %v1493 = vpop.f32.mrf.mxu0
        %v1494 = vadd.f32 0.0, %v1493
        %v1495 = vpop.f32.mrf.mxu0
        %v1496 = vpop.f32.mrf.mxu0
        %v1497 = vadd.f32 0.0, %v1496
        %v1498 = vpop.f32.mrf.mxu0
        %1499 = vmatprep.mubr.bf16.mxu0 0
        %1500 = vmatmul.mubr.bf16.gmra.mxu0 %v1372
        %v1501 = vpop.f32.mrf.mxu0
        %v1502 = vadd.f32 0.0, %v1501
        %v1503 = vpop.f32.mrf.mxu0
        %v1504 = vpop.f32.mrf.mxu0
        %v1505 = vadd.f32 0.0, %v1504
        %v1506 = vpop.f32.mrf.mxu0
        %1507 = vmatprep.mubr.bf16.mxu0 0
        %1508 = vmatmul.mubr.bf16.gmra.mxu0 %v1373
        %v1509 = vpop.f32.mrf.mxu0
        %v1510 = vadd.f32 0.0, %v1509
        %v1511 = vpop.f32.mrf.mxu0
        %v1512 = vpop.f32.mrf.mxu0
        %v1513 = vadd.f32 0.0, %v1512
        %v1514 = vpop.f32.mrf.mxu0
        %1515 = vmatprep.mubr.bf16.mxu0 0
        %1516 = vmatmul.mubr.bf16.gmra.mxu0 %v1374
        %v1517 = vpop.f32.mrf.mxu0
        %v1518 = vadd.f32 0.0, %v1517
        %v1519 = vpop.f32.mrf.mxu0
        %v1520 = vpop.f32.mrf.mxu0
        %v1521 = vadd.f32 0.0, %v1520
        %v1522 = vpop.f32.mrf.mxu0
        %1523 = vmatprep.mubr.bf16.mxu0 0
        %1524 = vmatmul.mubr.bf16.gmra.mxu0 %v1375
        %v1525 = vpop.f32.mrf.mxu0
        %v1526 = vadd.f32 0.0, %v1525
        %v1527 = vpop.f32.mrf.mxu0
        %v1528 = vpop.f32.mrf.mxu0
        %v1529 = vadd.f32 0.0, %v1528
        %v1530 = vpop.f32.mrf.mxu0
        %1531 = vmatprep.mubr.bf16.mxu0 0
        %1532 = vmatmul.mubr.bf16.gmra.mxu0 %v1376
        %v1533 = vpop.f32.mrf.mxu0
        %v1534 = vadd.f32 0.0, %v1533
        %v1535 = vpop.f32.mrf.mxu0
        %v1536 = vpop.f32.mrf.mxu0
        %v1537 = vadd.f32 0.0, %v1536
        %v1538 = vpop.f32.mrf.mxu0
        %1539 = vmatprep.mubr.bf16.mxu0 0
        %1540 = vmatmul.mubr.bf16.gmra.mxu0 %v1377
        %v1541 = vpop.f32.mrf.mxu0
        %v1542 = vadd.f32 0.0, %v1541
        %v1543 = vpop.f32.mrf.mxu0
        %v1544 = vpop.f32.mrf.mxu0
        %v1545 = vadd.f32 0.0, %v1544
        %v1546 = vpop.f32.mrf.mxu0
        %1547 = vmatprep.mubr.bf16.mxu0 0
        %1548 = vmatmul.mubr.bf16.gmra.mxu0 %v1378
        %v1549 = vpop.f32.mrf.mxu0
        %v1550 = vadd.f32 0.0, %v1549
        %v1551 = vpop.f32.mrf.mxu0
        %v1552 = vpop.f32.mrf.mxu0
        %v1553 = vadd.f32 0.0, %v1552
        %v1554 = vpop.f32.mrf.mxu0
        %1555 = vmatprep.mubr.bf16.mxu0 0
        %1556 = vmatmul.mubr.bf16.gmra.mxu0 %v1379
        %v1557 = vpop.f32.mrf.mxu0
        %v1558 = vadd.f32 0.0, %v1557
        %v1559 = vpop.f32.mrf.mxu0
        %v1560 = vpop.f32.mrf.mxu0
        %v1561 = vadd.f32 0.0, %v1560
        %v1562 = vpop.f32.mrf.mxu0
        %1563 = vmatprep.mubr.bf16.mxu0 0
        %1564 = vmatmul.mubr.bf16.gmra.mxu0 %v1380
        %v1565 = vpop.f32.mrf.mxu0
        %v1566 = vadd.f32 0.0, %v1565
        %v1567 = vpop.f32.mrf.mxu0
        %v1568 = vpop.f32.mrf.mxu0
        %v1569 = vadd.f32 0.0, %v1568
        %v1570 = vpop.f32.mrf.mxu0
        %1571 = vmatprep.mubr.bf16.mxu0 0
        %1572 = vmatmul.mubr.bf16.gmra.mxu0 %v1381
        %v1573 = vpop.f32.mrf.mxu0
        %v1574 = vadd.f32 0.0, %v1573
        %v1575 = vpop.f32.mrf.mxu0
        %v1576 = vpop.f32.mrf.mxu0
        %v1577 = vadd.f32 0.0, %v1576
        %v1578 = vpop.f32.mrf.mxu0
        %1579 = vmatprep.mubr.bf16.mxu0 0
        %1580 = vmatmul.mubr.bf16.gmra.mxu0 %v1382
        %v1581 = vpop.f32.mrf.mxu0
        %v1582 = vadd.f32 0.0, %v1581
        %v1583 = vpop.f32.mrf.mxu0
        %v1584 = vpop.f32.mrf.mxu0
        %v1585 = vadd.f32 0.0, %v1584
        %v1586 = vpop.f32.mrf.mxu0
        %1587 = vmatprep.mubr.bf16.mxu0 0
        %1588 = vmatmul.mubr.bf16.gmra.mxu0 %v1383
        %v1589 = vpop.f32.mrf.mxu0
        %v1590 = vadd.f32 0.0, %v1589
        %v1591 = vpop.f32.mrf.mxu0
        %v1592 = vpop.f32.mrf.mxu0
        %v1593 = vadd.f32 0.0, %v1592
        %v1594 = vpop.f32.mrf.mxu0
        %1595 = vmatprep.mubr.bf16.mxu0 0
        %1596 = vmatmul.mubr.bf16.gmra.mxu0 %v1384
        %v1597 = vpop.f32.mrf.mxu0
        %v1598 = vadd.f32 0.0, %v1597
        %v1599 = vpop.f32.mrf.mxu0
        %v1600 = vpop.f32.mrf.mxu0
        %v1601 = vadd.f32 0.0, %v1600
        %v1602 = vpop.f32.mrf.mxu0
        %1603 = vmatprep.mubr.bf16.mxu0 0
        %1604 = vmatmul.mubr.bf16.gmra.mxu0 %v1385
        %v1605 = vpop.f32.mrf.mxu0
        %v1606 = vadd.f32 0.0, %v1605
        %v1607 = vpop.f32.mrf.mxu0
        %v1608 = vpop.f32.mrf.mxu0
        %v1609 = vadd.f32 0.0, %v1608
        %v1610 = vpop.f32.mrf.mxu0
        %1611 = vdwg.mxu0
        %v1612 = vld [vmem:[#allocation2] sm:$0xff]
        %v1613 = vld [vmem:[#allocation2 + $0x8] sm:$0xff]
        %v1614 = vld [vmem:[#allocation2 + $0x10] sm:$0xff]
        %v1615 = vld [vmem:[#allocation2 + $0x18] sm:$0xff]
        %v1616 = vld [vmem:[#allocation2 + $0x20] sm:$0xff]
        %v1617 = vld [vmem:[#allocation2 + $0x28] sm:$0xff]
        %v1618 = vld [vmem:[#allocation2 + $0x30] sm:$0xff]
        %v1619 = vld [vmem:[#allocation2 + $0x38] sm:$0xff]
        %v1620 = vld [vmem:[#allocation2 + $0x40] sm:$0xff]
        %v1621 = vld [vmem:[#allocation2 + $0x48] sm:$0xff]
        %v1622 = vld [vmem:[#allocation2 + $0x50] sm:$0xff]
        %v1623 = vld [vmem:[#allocation2 + $0x58] sm:$0xff]
        %v1624 = vld [vmem:[#allocation2 + $0x60] sm:$0xff]
        %v1625 = vld [vmem:[#allocation2 + $0x68] sm:$0xff]
        %v1626 = vld [vmem:[#allocation2 + $0x70] sm:$0xff]
        %v1627 = vld [vmem:[#allocation2 + $0x78] sm:$0xff]
        %v1628 = vld [vmem:[#allocation2 + $0x80] sm:$0xff]
        %v1629 = vld [vmem:[#allocation2 + $0x88] sm:$0xff]
        %v1630 = vld [vmem:[#allocation2 + $0x90] sm:$0xff]
        %v1631 = vld [vmem:[#allocation2 + $0x98] sm:$0xff]
        %v1632 = vld [vmem:[#allocation2 + $0xa0] sm:$0xff]
        %v1633 = vld [vmem:[#allocation2 + $0xa8] sm:$0xff]
        %v1634 = vld [vmem:[#allocation2 + $0xb0] sm:$0xff]
        %v1635 = vld [vmem:[#allocation2 + $0xb8] sm:$0xff]
        %v1636 = vld [vmem:[#allocation2 + $0xc0] sm:$0xff]
        %v1637 = vld [vmem:[#allocation2 + $0xc8] sm:$0xff]
        %v1638 = vld [vmem:[#allocation2 + $0xd0] sm:$0xff]
        %v1639 = vld [vmem:[#allocation2 + $0xd8] sm:$0xff]
        %v1640 = vld [vmem:[#allocation2 + $0xe0] sm:$0xff]
        %v1641 = vld [vmem:[#allocation2 + $0xe8] sm:$0xff]
        %v1642 = vld [vmem:[#allocation2 + $0xf0] sm:$0xff]
        %v1643 = vld [vmem:[#allocation2 + $0xf8] sm:$0xff]
        %v1644 = vadd.f32 %v1612, %v1486
        %v1645 = vadd.f32 %v1613, %v1489
        %v1646 = vadd.f32 %v1614, %v1494
        %v1647 = vadd.f32 %v1615, %v1497
        %v1648 = vadd.f32 %v1616, %v1502
        %v1649 = vadd.f32 %v1617, %v1505
        %v1650 = vadd.f32 %v1618, %v1510
        %v1651 = vadd.f32 %v1619, %v1513
        %v1652 = vadd.f32 %v1620, %v1518
        %v1653 = vadd.f32 %v1621, %v1521
        %v1654 = vadd.f32 %v1622, %v1526
        %v1655 = vadd.f32 %v1623, %v1529
        %v1656 = vadd.f32 %v1624, %v1534
        %v1657 = vadd.f32 %v1625, %v1537
        %v1658 = vadd.f32 %v1626, %v1542
        %v1659 = vadd.f32 %v1627, %v1545
        %v1660 = vadd.f32 %v1628, %v1550
        %v1661 = vadd.f32 %v1629, %v1553
        %v1662 = vadd.f32 %v1630, %v1558
        %v1663 = vadd.f32 %v1631, %v1561
        %v1664 = vadd.f32 %v1632, %v1566
        %v1665 = vadd.f32 %v1633, %v1569
        %v1666 = vadd.f32 %v1634, %v1574
        %v1667 = vadd.f32 %v1635, %v1577
        %v1668 = vadd.f32 %v1636, %v1582
        %v1669 = vadd.f32 %v1637, %v1585
        %v1670 = vadd.f32 %v1638, %v1590
        %v1671 = vadd.f32 %v1639, %v1593
        %v1672 = vadd.f32 %v1640, %v1598
        %v1673 = vadd.f32 %v1641, %v1601
        %v1674 = vadd.f32 %v1642, %v1606
        %v1675 = vadd.f32 %v1643, %v1609
        %1676 = vst [vmem:[#allocation2] sm:$0xff] %v1644
        %1677 = vst [vmem:[#allocation2 + $0x8] sm:$0xff] %v1645
        %1678 = vst [vmem:[#allocation2 + $0x10] sm:$0xff] %v1646
        %1679 = vst [vmem:[#allocation2 + $0x18] sm:$0xff] %v1647
        %1680 = vst [vmem:[#allocation2 + $0x20] sm:$0xff] %v1648
        %1681 = vst [vmem:[#allocation2 + $0x28] sm:$0xff] %v1649
        %1682 = vst [vmem:[#allocation2 + $0x30] sm:$0xff] %v1650
        %1683 = vst [vmem:[#allocation2 + $0x38] sm:$0xff] %v1651
        %1684 = vst [vmem:[#allocation2 + $0x40] sm:$0xff] %v1652
        %1685 = vst [vmem:[#allocation2 + $0x48] sm:$0xff] %v1653
        %1686 = vst [vmem:[#allocation2 + $0x50] sm:$0xff] %v1654
        %1687 = vst [vmem:[#allocation2 + $0x58] sm:$0xff] %v1655
        %1688 = vst [vmem:[#allocation2 + $0x60] sm:$0xff] %v1656
        %1689 = vst [vmem:[#allocation2 + $0x68] sm:$0xff] %v1657
        %1690 = vst [vmem:[#allocation2 + $0x70] sm:$0xff] %v1658
        %1691 = vst [vmem:[#allocation2 + $0x78] sm:$0xff] %v1659
        %1692 = vst [vmem:[#allocation2 + $0x80] sm:$0xff] %v1660
        %1693 = vst [vmem:[#allocation2 + $0x88] sm:$0xff] %v1661
        %1694 = vst [vmem:[#allocation2 + $0x90] sm:$0xff] %v1662
        %1695 = vst [vmem:[#allocation2 + $0x98] sm:$0xff] %v1663
        %1696 = vst [vmem:[#allocation2 + $0xa0] sm:$0xff] %v1664
        %1697 = vst [vmem:[#allocation2 + $0xa8] sm:$0xff] %v1665
        %1698 = vst [vmem:[#allocation2 + $0xb0] sm:$0xff] %v1666
        %1699 = vst [vmem:[#allocation2 + $0xb8] sm:$0xff] %v1667
        %1700 = vst [vmem:[#allocation2 + $0xc0] sm:$0xff] %v1668
        %1701 = vst [vmem:[#allocation2 + $0xc8] sm:$0xff] %v1669
        %1702 = vst [vmem:[#allocation2 + $0xd0] sm:$0xff] %v1670
        %1703 = vst [vmem:[#allocation2 + $0xd8] sm:$0xff] %v1671
        %1704 = vst [vmem:[#allocation2 + $0xe0] sm:$0xff] %v1672
        %1705 = vst [vmem:[#allocation2 + $0xe8] sm:$0xff] %v1673
        %1706 = vst [vmem:[#allocation2 + $0xf0] sm:$0xff] %v1674
        %1707 = vst [vmem:[#allocation2 + $0xf8] sm:$0xff] %v1675
        %v1708 = vld [vmem:[%s1337 + $0x1] sm:$0xff]
        %v1709 = vld [vmem:[%s1337 + $0x9] sm:$0xff]
        %v1710 = vld [vmem:[%s1337 + $0x19] sm:$0xff]
        %v1711 = vld [vmem:[%s1337 + $0x21] sm:$0xff]
        %v1712 = vld [vmem:[%s1337 + $0x31] sm:$0xff]
        %v1713 = vld [vmem:[%s1337 + $0x39] sm:$0xff]
        %v1714 = vld [vmem:[%s1337 + $0x49] sm:$0xff]
        %v1715 = vld [vmem:[%s1337 + $0x51] sm:$0xff]
        %v1716 = vld [vmem:[%s1337 + $0x61] sm:$0xff]
        %v1717 = vld [vmem:[%s1337 + $0x69] sm:$0xff]
        %v1718 = vld [vmem:[%s1337 + $0x79] sm:$0xff]
        %v1719 = vld [vmem:[%s1337 + $0x81] sm:$0xff]
        %v1720 = vld [vmem:[%s1337 + $0x91] sm:$0xff]
        %v1721 = vld [vmem:[%s1337 + $0x99] sm:$0xff]
        %v1722 = vld [vmem:[%s1337 + $0xa9] sm:$0xff]
        %v1723 = vld [vmem:[%s1337 + $0xb1] sm:$0xff]
        %v1724 = vld [vmem:[%s1337 + $0xc1] sm:$0xff]
        %v1725 = vld [vmem:[%s1337 + $0xc9] sm:$0xff]
        %v1726 = vld [vmem:[%s1337 + $0xd9] sm:$0xff]
        %v1727 = vld [vmem:[%s1337 + $0xe1] sm:$0xff]
        %v1728 = vld [vmem:[%s1337 + $0xf1] sm:$0xff]
        %v1729 = vld [vmem:[%s1337 + $0xf9] sm:$0xff]
        %v1730 = vld [vmem:[%s1337 + $0x109] sm:$0xff]
        %v1731 = vld [vmem:[%s1337 + $0x111] sm:$0xff]
        %v1732 = vld [vmem:[%s1337 + $0x121] sm:$0xff]
        %v1733 = vld [vmem:[%s1337 + $0x129] sm:$0xff]
        %v1734 = vld [vmem:[%s1337 + $0x139] sm:$0xff]
        %v1735 = vld [vmem:[%s1337 + $0x141] sm:$0xff]
        %v1736 = vld [vmem:[%s1337 + $0x151] sm:$0xff]
        %v1737 = vld [vmem:[%s1337 + $0x159] sm:$0xff]
        %v1738 = vld [vmem:[%s1337 + $0x169] sm:$0xff]
        %v1739 = vld [vmem:[%s1337 + $0x171] sm:$0xff]
        %v1740 = vpack.c.bf16 %v1709, %v1708
        %v1741 = vpack.c.bf16 %v1711, %v1710
        %v1742 = vpack.c.bf16 %v1713, %v1712
        %v1743 = vpack.c.bf16 %v1715, %v1714
        %v1744 = vpack.c.bf16 %v1717, %v1716
        %v1745 = vpack.c.bf16 %v1719, %v1718
        %v1746 = vpack.c.bf16 %v1721, %v1720
        %v1747 = vpack.c.bf16 %v1723, %v1722
        %v1748 = vpack.c.bf16 %v1725, %v1724
        %v1749 = vpack.c.bf16 %v1727, %v1726
        %v1750 = vpack.c.bf16 %v1729, %v1728
        %v1751 = vpack.c.bf16 %v1731, %v1730
        %v1752 = vpack.c.bf16 %v1733, %v1732
        %v1753 = vpack.c.bf16 %v1735, %v1734
        %v1754 = vpack.c.bf16 %v1737, %v1736
        %v1755 = vpack.c.bf16 %v1739, %v1738
        %s1756 = scalar_lea.vmem %s1, 256
        %v1757 = vld [vmem:[%s1756] sm:$0xf]
        %v1758 = vld [vmem:[%s1756 + $0x4] sm:$0xf]
        %v1759 = vld [vmem:[%s1756 + $0x8] sm:$0xf]
        %v1760 = vld [vmem:[%s1756 + $0xc] sm:$0xf]
        %v1761 = vld [vmem:[%s1756 + $0x10] sm:$0xf]
        %v1762 = vld [vmem:[%s1756 + $0x14] sm:$0xf]
        %v1763 = vld [vmem:[%s1756 + $0x18] sm:$0xf]
        %v1764 = vld [vmem:[%s1756 + $0x1c] sm:$0xf]
        %v1765 = vld [vmem:[%s1756 + $0x20] sm:$0xf]
        %v1766 = vld [vmem:[%s1756 + $0x24] sm:$0xf]
        %v1767 = vld [vmem:[%s1756 + $0x28] sm:$0xf]
        %v1768 = vld [vmem:[%s1756 + $0x2c] sm:$0xf]
        %v1769 = vld [vmem:[%s1756 + $0x30] sm:$0xf]
        %v1770 = vld [vmem:[%s1756 + $0x34] sm:$0xf]
        %v1771 = vld [vmem:[%s1756 + $0x38] sm:$0xf]
        %v1772 = vld [vmem:[%s1756 + $0x3c] sm:$0xf]
        %v1789 = vunpack.c.l.b16 %v1757
        %v1790 = vunpack.c.l.b16 %v1758
        %v1791 = vunpack.c.l.b16 %v1759
        %v1792 = vunpack.c.l.b16 %v1760
        %v1793 = vunpack.c.l.b16 %v1761
        %v1794 = vunpack.c.l.b16 %v1762
        %v1795 = vunpack.c.l.b16 %v1763
        %v1796 = vunpack.c.l.b16 %v1764
        %v1797 = vunpack.c.l.b16 %v1765
        %v1798 = vunpack.c.l.b16 %v1766
        %v1799 = vunpack.c.l.b16 %v1767
        %v1800 = vunpack.c.l.b16 %v1768
        %v1801 = vunpack.c.l.b16 %v1769
        %v1802 = vunpack.c.l.b16 %v1770
        %v1803 = vunpack.c.l.b16 %v1771
        %v1804 = vunpack.c.l.b16 %v1772
        %v1805 = vpack.c.b16 %v1790, %v1789
        %v1806 = vpack.c.b16 %v1792, %v1791
        %v1807 = vpack.c.b16 %v1794, %v1793
        %v1808 = vpack.c.b16 %v1796, %v1795
        %v1809 = vpack.c.b16 %v1798, %v1797
        %v1810 = vpack.c.b16 %v1800, %v1799
        %v1811 = vpack.c.b16 %v1802, %v1801
        %v1812 = vpack.c.b16 %v1804, %v1803
        %1821 = vmatprep.subr.bf16.mxu0 0
        %1822 = vmatpush1.bf16.msra.mxu0 %v1812
        %1823 = vmatprep.subr.bf16.mxu0 0
        %1824 = vmatpush1.bf16.msra.mxu0 %v1811
        %1825 = vmatprep.subr.bf16.mxu0 0
        %1826 = vmatpush1.bf16.msra.mxu0 %v1810
        %1827 = vmatprep.subr.bf16.mxu0 0
        %1828 = vmatpush1.bf16.msra.mxu0 %v1809
        %1829 = vmatprep.subr.bf16.mxu0 0
        %1830 = vmatpush1.bf16.msra.mxu0 %v1808
        %1831 = vmatprep.subr.bf16.mxu0 0
        %1832 = vmatpush1.bf16.msra.mxu0 %v1807
        %1833 = vmatprep.subr.bf16.mxu0 0
        %1834 = vmatpush1.bf16.msra.mxu0 %v1806
        %1835 = vmatprep.subr.bf16.mxu0 0
        %1836 = vmatpush1.bf16.msra.mxu0 %v1805
        %1837 = vmatprep.subr.bf16.mxu0 0
        %1838 = vmatpush2.bf16.msra.mxu0 0
        %1839 = vmatprep.subr.bf16.mxu0 0
        %1840 = vmatpush2.bf16.msra.mxu0 0
        %1841 = vmatprep.subr.bf16.mxu0 0
        %1842 = vmatpush2.bf16.msra.mxu0 0
        %1843 = vmatprep.subr.bf16.mxu0 0
        %1844 = vmatpush2.bf16.msra.mxu0 0
        %1845 = vmatprep.subr.bf16.mxu0 0
        %1846 = vmatpush2.bf16.msra.mxu0 0
        %1847 = vmatprep.subr.bf16.mxu0 0
        %1848 = vmatpush2.bf16.msra.mxu0 0
        %1849 = vmatprep.subr.bf16.mxu0 0
        %1850 = vmatpush2.bf16.msra.mxu0 0
        %1851 = vmatprep.subr.bf16.mxu0 0
        %1852 = vmatpush2.bf16.msra.mxu0 0
        %1853 = vmatprep.mubr.bf16.mxu0 0
        %1854 = vmatmul.mubr.bf16.gmra.mxu0 %v1740
        %v1855 = vpop.f32.mrf.mxu0
        %v1856 = vadd.f32 0.0, %v1855
        %v1857 = vpop.f32.mrf.mxu0
        %v1858 = vpop.f32.mrf.mxu0
        %v1859 = vadd.f32 0.0, %v1858
        %v1860 = vpop.f32.mrf.mxu0
        %1861 = vmatprep.mubr.bf16.mxu0 0
        %1862 = vmatmul.mubr.bf16.gmra.mxu0 %v1741
        %v1863 = vpop.f32.mrf.mxu0
        %v1864 = vadd.f32 0.0, %v1863
        %v1865 = vpop.f32.mrf.mxu0
        %v1866 = vpop.f32.mrf.mxu0
        %v1867 = vadd.f32 0.0, %v1866
        %v1868 = vpop.f32.mrf.mxu0
        %1869 = vmatprep.mubr.bf16.mxu0 0
        %1870 = vmatmul.mubr.bf16.gmra.mxu0 %v1742
        %v1871 = vpop.f32.mrf.mxu0
        %v1872 = vadd.f32 0.0, %v1871
        %v1873 = vpop.f32.mrf.mxu0
        %v1874 = vpop.f32.mrf.mxu0
        %v1875 = vadd.f32 0.0, %v1874
        %v1876 = vpop.f32.mrf.mxu0
        %1877 = vmatprep.mubr.bf16.mxu0 0
        %1878 = vmatmul.mubr.bf16.gmra.mxu0 %v1743
        %v1879 = vpop.f32.mrf.mxu0
        %v1880 = vadd.f32 0.0, %v1879
        %v1881 = vpop.f32.mrf.mxu0
        %v1882 = vpop.f32.mrf.mxu0
        %v1883 = vadd.f32 0.0, %v1882
        %v1884 = vpop.f32.mrf.mxu0
        %1885 = vmatprep.mubr.bf16.mxu0 0
        %1886 = vmatmul.mubr.bf16.gmra.mxu0 %v1744
        %v1887 = vpop.f32.mrf.mxu0
        %v1888 = vadd.f32 0.0, %v1887
        %v1889 = vpop.f32.mrf.mxu0
        %v1890 = vpop.f32.mrf.mxu0
        %v1891 = vadd.f32 0.0, %v1890
        %v1892 = vpop.f32.mrf.mxu0
        %1893 = vmatprep.mubr.bf16.mxu0 0
        %1894 = vmatmul.mubr.bf16.gmra.mxu0 %v1745
        %v1895 = vpop.f32.mrf.mxu0
        %v1896 = vadd.f32 0.0, %v1895
        %v1897 = vpop.f32.mrf.mxu0
        %v1898 = vpop.f32.mrf.mxu0
        %v1899 = vadd.f32 0.0, %v1898
        %v1900 = vpop.f32.mrf.mxu0
        %1901 = vmatprep.mubr.bf16.mxu0 0
        %1902 = vmatmul.mubr.bf16.gmra.mxu0 %v1746
        %v1903 = vpop.f32.mrf.mxu0
        %v1904 = vadd.f32 0.0, %v1903
        %v1905 = vpop.f32.mrf.mxu0
        %v1906 = vpop.f32.mrf.mxu0
        %v1907 = vadd.f32 0.0, %v1906
        %v1908 = vpop.f32.mrf.mxu0
        %1909 = vmatprep.mubr.bf16.mxu0 0
        %1910 = vmatmul.mubr.bf16.gmra.mxu0 %v1747
        %v1911 = vpop.f32.mrf.mxu0
        %v1912 = vadd.f32 0.0, %v1911
        %v1913 = vpop.f32.mrf.mxu0
        %v1914 = vpop.f32.mrf.mxu0
        %v1915 = vadd.f32 0.0, %v1914
        %v1916 = vpop.f32.mrf.mxu0
        %1917 = vmatprep.mubr.bf16.mxu0 0
        %1918 = vmatmul.mubr.bf16.gmra.mxu0 %v1748
        %v1919 = vpop.f32.mrf.mxu0
        %v1920 = vadd.f32 0.0, %v1919
        %v1921 = vpop.f32.mrf.mxu0
        %v1922 = vpop.f32.mrf.mxu0
        %v1923 = vadd.f32 0.0, %v1922
        %v1924 = vpop.f32.mrf.mxu0
        %1925 = vmatprep.mubr.bf16.mxu0 0
        %1926 = vmatmul.mubr.bf16.gmra.mxu0 %v1749
        %v1927 = vpop.f32.mrf.mxu0
        %v1928 = vadd.f32 0.0, %v1927
        %v1929 = vpop.f32.mrf.mxu0
        %v1930 = vpop.f32.mrf.mxu0
        %v1931 = vadd.f32 0.0, %v1930
        %v1932 = vpop.f32.mrf.mxu0
        %1933 = vmatprep.mubr.bf16.mxu0 0
        %1934 = vmatmul.mubr.bf16.gmra.mxu0 %v1750
        %v1935 = vpop.f32.mrf.mxu0
        %v1936 = vadd.f32 0.0, %v1935
        %v1937 = vpop.f32.mrf.mxu0
        %v1938 = vpop.f32.mrf.mxu0
        %v1939 = vadd.f32 0.0, %v1938
        %v1940 = vpop.f32.mrf.mxu0
        %1941 = vmatprep.mubr.bf16.mxu0 0
        %1942 = vmatmul.mubr.bf16.gmra.mxu0 %v1751
        %v1943 = vpop.f32.mrf.mxu0
        %v1944 = vadd.f32 0.0, %v1943
        %v1945 = vpop.f32.mrf.mxu0
        %v1946 = vpop.f32.mrf.mxu0
        %v1947 = vadd.f32 0.0, %v1946
        %v1948 = vpop.f32.mrf.mxu0
        %1949 = vmatprep.mubr.bf16.mxu0 0
        %1950 = vmatmul.mubr.bf16.gmra.mxu0 %v1752
        %v1951 = vpop.f32.mrf.mxu0
        %v1952 = vadd.f32 0.0, %v1951
        %v1953 = vpop.f32.mrf.mxu0
        %v1954 = vpop.f32.mrf.mxu0
        %v1955 = vadd.f32 0.0, %v1954
        %v1956 = vpop.f32.mrf.mxu0
        %1957 = vmatprep.mubr.bf16.mxu0 0
        %1958 = vmatmul.mubr.bf16.gmra.mxu0 %v1753
        %v1959 = vpop.f32.mrf.mxu0
        %v1960 = vadd.f32 0.0, %v1959
        %v1961 = vpop.f32.mrf.mxu0
        %v1962 = vpop.f32.mrf.mxu0
        %v1963 = vadd.f32 0.0, %v1962
        %v1964 = vpop.f32.mrf.mxu0
        %1965 = vmatprep.mubr.bf16.mxu0 0
        %1966 = vmatmul.mubr.bf16.gmra.mxu0 %v1754
        %v1967 = vpop.f32.mrf.mxu0
        %v1968 = vadd.f32 0.0, %v1967
        %v1969 = vpop.f32.mrf.mxu0
        %v1970 = vpop.f32.mrf.mxu0
        %v1971 = vadd.f32 0.0, %v1970
        %v1972 = vpop.f32.mrf.mxu0
        %1973 = vmatprep.mubr.bf16.mxu0 0
        %1974 = vmatmul.mubr.bf16.gmra.mxu0 %v1755
        %v1975 = vpop.f32.mrf.mxu0
        %v1976 = vadd.f32 0.0, %v1975
        %v1977 = vpop.f32.mrf.mxu0
        %v1978 = vpop.f32.mrf.mxu0
        %v1979 = vadd.f32 0.0, %v1978
        %v1980 = vpop.f32.mrf.mxu0
        %1981 = vdwg.mxu0
        %v1982 = vld [vmem:[#allocation2] sm:$0xff]
        %v1983 = vld [vmem:[#allocation2 + $0x8] sm:$0xff]
        %v1984 = vld [vmem:[#allocation2 + $0x10] sm:$0xff]
        %v1985 = vld [vmem:[#allocation2 + $0x18] sm:$0xff]
        %v1986 = vld [vmem:[#allocation2 + $0x20] sm:$0xff]
        %v1987 = vld [vmem:[#allocation2 + $0x28] sm:$0xff]
        %v1988 = vld [vmem:[#allocation2 + $0x30] sm:$0xff]
        %v1989 = vld [vmem:[#allocation2 + $0x38] sm:$0xff]
        %v1990 = vld [vmem:[#allocation2 + $0x40] sm:$0xff]
        %v1991 = vld [vmem:[#allocation2 + $0x48] sm:$0xff]
        %v1992 = vld [vmem:[#allocation2 + $0x50] sm:$0xff]
        %v1993 = vld [vmem:[#allocation2 + $0x58] sm:$0xff]
        %v1994 = vld [vmem:[#allocation2 + $0x60] sm:$0xff]
        %v1995 = vld [vmem:[#allocation2 + $0x68] sm:$0xff]
        %v1996 = vld [vmem:[#allocation2 + $0x70] sm:$0xff]
        %v1997 = vld [vmem:[#allocation2 + $0x78] sm:$0xff]
        %v1998 = vld [vmem:[#allocation2 + $0x80] sm:$0xff]
        %v1999 = vld [vmem:[#allocation2 + $0x88] sm:$0xff]
        %v2000 = vld [vmem:[#allocation2 + $0x90] sm:$0xff]
        %v2001 = vld [vmem:[#allocation2 + $0x98] sm:$0xff]
        %v2002 = vld [vmem:[#allocation2 + $0xa0] sm:$0xff]
        %v2003 = vld [vmem:[#allocation2 + $0xa8] sm:$0xff]
        %v2004 = vld [vmem:[#allocation2 + $0xb0] sm:$0xff]
        %v2005 = vld [vmem:[#allocation2 + $0xb8] sm:$0xff]
        %v2006 = vld [vmem:[#allocation2 + $0xc0] sm:$0xff]
        %v2007 = vld [vmem:[#allocation2 + $0xc8] sm:$0xff]
        %v2008 = vld [vmem:[#allocation2 + $0xd0] sm:$0xff]
        %v2009 = vld [vmem:[#allocation2 + $0xd8] sm:$0xff]
        %v2010 = vld [vmem:[#allocation2 + $0xe0] sm:$0xff]
        %v2011 = vld [vmem:[#allocation2 + $0xe8] sm:$0xff]
        %v2012 = vld [vmem:[#allocation2 + $0xf0] sm:$0xff]
        %v2013 = vld [vmem:[#allocation2 + $0xf8] sm:$0xff]
        %v2014 = vadd.f32 %v1982, %v1856
        %v2015 = vadd.f32 %v1983, %v1859
        %v2016 = vadd.f32 %v1984, %v1864
        %v2017 = vadd.f32 %v1985, %v1867
        %v2018 = vadd.f32 %v1986, %v1872
        %v2019 = vadd.f32 %v1987, %v1875
        %v2020 = vadd.f32 %v1988, %v1880
        %v2021 = vadd.f32 %v1989, %v1883
        %v2022 = vadd.f32 %v1990, %v1888
        %v2023 = vadd.f32 %v1991, %v1891
        %v2024 = vadd.f32 %v1992, %v1896
        %v2025 = vadd.f32 %v1993, %v1899
        %v2026 = vadd.f32 %v1994, %v1904
        %v2027 = vadd.f32 %v1995, %v1907
        %v2028 = vadd.f32 %v1996, %v1912
        %v2029 = vadd.f32 %v1997, %v1915
        %v2030 = vadd.f32 %v1998, %v1920
        %v2031 = vadd.f32 %v1999, %v1923
        %v2032 = vadd.f32 %v2000, %v1928
        %v2033 = vadd.f32 %v2001, %v1931
        %v2034 = vadd.f32 %v2002, %v1936
        %v2035 = vadd.f32 %v2003, %v1939
        %v2036 = vadd.f32 %v2004, %v1944
        %v2037 = vadd.f32 %v2005, %v1947
        %v2038 = vadd.f32 %v2006, %v1952
        %v2039 = vadd.f32 %v2007, %v1955
        %v2040 = vadd.f32 %v2008, %v1960
        %v2041 = vadd.f32 %v2009, %v1963
        %v2042 = vadd.f32 %v2010, %v1968
        %v2043 = vadd.f32 %v2011, %v1971
        %v2044 = vadd.f32 %v2012, %v1976
        %v2045 = vadd.f32 %v2013, %v1979
        %2046 = vst [vmem:[#allocation2] sm:$0xff] %v2014
        %2047 = vst [vmem:[#allocation2 + $0x8] sm:$0xff] %v2015
        %2048 = vst [vmem:[#allocation2 + $0x10] sm:$0xff] %v2016
        %2049 = vst [vmem:[#allocation2 + $0x18] sm:$0xff] %v2017
        %2050 = vst [vmem:[#allocation2 + $0x20] sm:$0xff] %v2018
        %2051 = vst [vmem:[#allocation2 + $0x28] sm:$0xff] %v2019
        %2052 = vst [vmem:[#allocation2 + $0x30] sm:$0xff] %v2020
        %2053 = vst [vmem:[#allocation2 + $0x38] sm:$0xff] %v2021
        %2054 = vst [vmem:[#allocation2 + $0x40] sm:$0xff] %v2022
        %2055 = vst [vmem:[#allocation2 + $0x48] sm:$0xff] %v2023
        %2056 = vst [vmem:[#allocation2 + $0x50] sm:$0xff] %v2024
        %2057 = vst [vmem:[#allocation2 + $0x58] sm:$0xff] %v2025
        %2058 = vst [vmem:[#allocation2 + $0x60] sm:$0xff] %v2026
        %2059 = vst [vmem:[#allocation2 + $0x68] sm:$0xff] %v2027
        %2060 = vst [vmem:[#allocation2 + $0x70] sm:$0xff] %v2028
        %2061 = vst [vmem:[#allocation2 + $0x78] sm:$0xff] %v2029
        %2062 = vst [vmem:[#allocation2 + $0x80] sm:$0xff] %v2030
        %2063 = vst [vmem:[#allocation2 + $0x88] sm:$0xff] %v2031
        %2064 = vst [vmem:[#allocation2 + $0x90] sm:$0xff] %v2032
        %2065 = vst [vmem:[#allocation2 + $0x98] sm:$0xff] %v2033
        %2066 = vst [vmem:[#allocation2 + $0xa0] sm:$0xff] %v2034
        %2067 = vst [vmem:[#allocation2 + $0xa8] sm:$0xff] %v2035
        %2068 = vst [vmem:[#allocation2 + $0xb0] sm:$0xff] %v2036
        %2069 = vst [vmem:[#allocation2 + $0xb8] sm:$0xff] %v2037
        %2070 = vst [vmem:[#allocation2 + $0xc0] sm:$0xff] %v2038
        %2071 = vst [vmem:[#allocation2 + $0xc8] sm:$0xff] %v2039
        %2072 = vst [vmem:[#allocation2 + $0xd0] sm:$0xff] %v2040
        %2073 = vst [vmem:[#allocation2 + $0xd8] sm:$0xff] %v2041
        %2074 = vst [vmem:[#allocation2 + $0xe0] sm:$0xff] %v2042
        %2075 = vst [vmem:[#allocation2 + $0xe8] sm:$0xff] %v2043
        %2076 = vst [vmem:[#allocation2 + $0xf0] sm:$0xff] %v2044
        %2077 = vst [vmem:[#allocation2 + $0xf8] sm:$0xff] %v2045
        %v2078 = vld [vmem:[%s1337 + $0x2] sm:$0xff]
        %v2079 = vld [vmem:[%s1337 + $0xa] sm:$0xff]
        %v2080 = vld [vmem:[%s1337 + $0x1a] sm:$0xff]
        %v2081 = vld [vmem:[%s1337 + $0x22] sm:$0xff]
        %v2082 = vld [vmem:[%s1337 + $0x32] sm:$0xff]
        %v2083 = vld [vmem:[%s1337 + $0x3a] sm:$0xff]
        %v2084 = vld [vmem:[%s1337 + $0x4a] sm:$0xff]
        %v2085 = vld [vmem:[%s1337 + $0x52] sm:$0xff]
        %v2086 = vld [vmem:[%s1337 + $0x62] sm:$0xff]
        %v2087 = vld [vmem:[%s1337 + $0x6a] sm:$0xff]
        %v2088 = vld [vmem:[%s1337 + $0x7a] sm:$0xff]
        %v2089 = vld [vmem:[%s1337 + $0x82] sm:$0xff]
        %v2090 = vld [vmem:[%s1337 + $0x92] sm:$0xff]
        %v2091 = vld [vmem:[%s1337 + $0x9a] sm:$0xff]
        %v2092 = vld [vmem:[%s1337 + $0xaa] sm:$0xff]
        %v2093 = vld [vmem:[%s1337 + $0xb2] sm:$0xff]
        %v2094 = vld [vmem:[%s1337 + $0xc2] sm:$0xff]
        %v2095 = vld [vmem:[%s1337 + $0xca] sm:$0xff]
        %v2096 = vld [vmem:[%s1337 + $0xda] sm:$0xff]
        %v2097 = vld [vmem:[%s1337 + $0xe2] sm:$0xff]
        %v2098 = vld [vmem:[%s1337 + $0xf2] sm:$0xff]
        %v2099 = vld [vmem:[%s1337 + $0xfa] sm:$0xff]
        %v2100 = vld [vmem:[%s1337 + $0x10a] sm:$0xff]
        %v2101 = vld [vmem:[%s1337 + $0x112] sm:$0xff]
        %v2102 = vld [vmem:[%s1337 + $0x122] sm:$0xff]
        %v2103 = vld [vmem:[%s1337 + $0x12a] sm:$0xff]
        %v2104 = vld [vmem:[%s1337 + $0x13a] sm:$0xff]
        %v2105 = vld [vmem:[%s1337 + $0x142] sm:$0xff]
        %v2106 = vld [vmem:[%s1337 + $0x152] sm:$0xff]
        %v2107 = vld [vmem:[%s1337 + $0x15a] sm:$0xff]
        %v2108 = vld [vmem:[%s1337 + $0x16a] sm:$0xff]
        %v2109 = vld [vmem:[%s1337 + $0x172] sm:$0xff]
        %v2110 = vpack.c.bf16 %v2079, %v2078
        %v2111 = vpack.c.bf16 %v2081, %v2080
        %v2112 = vpack.c.bf16 %v2083, %v2082
        %v2113 = vpack.c.bf16 %v2085, %v2084
        %v2114 = vpack.c.bf16 %v2087, %v2086
        %v2115 = vpack.c.bf16 %v2089, %v2088
        %v2116 = vpack.c.bf16 %v2091, %v2090
        %v2117 = vpack.c.bf16 %v2093, %v2092
        %v2118 = vpack.c.bf16 %v2095, %v2094
        %v2119 = vpack.c.bf16 %v2097, %v2096
        %v2120 = vpack.c.bf16 %v2099, %v2098
        %v2121 = vpack.c.bf16 %v2101, %v2100
        %v2122 = vpack.c.bf16 %v2103, %v2102
        %v2123 = vpack.c.bf16 %v2105, %v2104
        %v2124 = vpack.c.bf16 %v2107, %v2106
        %v2125 = vpack.c.bf16 %v2109, %v2108
        %s2126 = scalar_lea.vmem %s1, 320
        %v2127 = vld [vmem:[%s2126] sm:$0xf]
        %v2128 = vld [vmem:[%s2126 + $0x4] sm:$0xf]
        %v2129 = vld [vmem:[%s2126 + $0x8] sm:$0xf]
        %v2130 = vld [vmem:[%s2126 + $0xc] sm:$0xf]
        %v2131 = vld [vmem:[%s2126 + $0x10] sm:$0xf]
        %v2132 = vld [vmem:[%s2126 + $0x14] sm:$0xf]
        %v2133 = vld [vmem:[%s2126 + $0x18] sm:$0xf]
        %v2134 = vld [vmem:[%s2126 + $0x1c] sm:$0xf]
        %v2135 = vld [vmem:[%s2126 + $0x20] sm:$0xf]
        %v2136 = vld [vmem:[%s2126 + $0x24] sm:$0xf]
        %v2137 = vld [vmem:[%s2126 + $0x28] sm:$0xf]
        %v2138 = vld [vmem:[%s2126 + $0x2c] sm:$0xf]
        %v2139 = vld [vmem:[%s2126 + $0x30] sm:$0xf]
        %v2140 = vld [vmem:[%s2126 + $0x34] sm:$0xf]
        %v2141 = vld [vmem:[%s2126 + $0x38] sm:$0xf]
        %v2142 = vld [vmem:[%s2126 + $0x3c] sm:$0xf]
        %v2159 = vunpack.c.l.b16 %v2127
        %v2160 = vunpack.c.l.b16 %v2128
        %v2161 = vunpack.c.l.b16 %v2129
        %v2162 = vunpack.c.l.b16 %v2130
        %v2163 = vunpack.c.l.b16 %v2131
        %v2164 = vunpack.c.l.b16 %v2132
        %v2165 = vunpack.c.l.b16 %v2133
        %v2166 = vunpack.c.l.b16 %v2134
        %v2167 = vunpack.c.l.b16 %v2135
        %v2168 = vunpack.c.l.b16 %v2136
        %v2169 = vunpack.c.l.b16 %v2137
        %v2170 = vunpack.c.l.b16 %v2138
        %v2171 = vunpack.c.l.b16 %v2139
        %v2172 = vunpack.c.l.b16 %v2140
        %v2173 = vunpack.c.l.b16 %v2141
        %v2174 = vunpack.c.l.b16 %v2142
        %v2175 = vpack.c.b16 %v2160, %v2159
        %v2176 = vpack.c.b16 %v2162, %v2161
        %v2177 = vpack.c.b16 %v2164, %v2163
        %v2178 = vpack.c.b16 %v2166, %v2165
        %v2179 = vpack.c.b16 %v2168, %v2167
        %v2180 = vpack.c.b16 %v2170, %v2169
        %v2181 = vpack.c.b16 %v2172, %v2171
        %v2182 = vpack.c.b16 %v2174, %v2173
        %2191 = vmatprep.subr.bf16.mxu0 0
        %2192 = vmatpush1.bf16.msra.mxu0 %v2182
        %2193 = vmatprep.subr.bf16.mxu0 0
        %2194 = vmatpush1.bf16.msra.mxu0 %v2181
        %2195 = vmatprep.subr.bf16.mxu0 0
        %2196 = vmatpush1.bf16.msra.mxu0 %v2180
        %2197 = vmatprep.subr.bf16.mxu0 0
        %2198 = vmatpush1.bf16.msra.mxu0 %v2179
        %2199 = vmatprep.subr.bf16.mxu0 0
        %2200 = vmatpush1.bf16.msra.mxu0 %v2178
        %2201 = vmatprep.subr.bf16.mxu0 0
        %2202 = vmatpush1.bf16.msra.mxu0 %v2177
        %2203 = vmatprep.subr.bf16.mxu0 0
        %2204 = vmatpush1.bf16.msra.mxu0 %v2176
        %2205 = vmatprep.subr.bf16.mxu0 0
        %2206 = vmatpush1.bf16.msra.mxu0 %v2175
        %2207 = vmatprep.subr.bf16.mxu0 0
        %2208 = vmatpush2.bf16.msra.mxu0 0
        %2209 = vmatprep.subr.bf16.mxu0 0
        %2210 = vmatpush2.bf16.msra.mxu0 0
        %2211 = vmatprep.subr.bf16.mxu0 0
        %2212 = vmatpush2.bf16.msra.mxu0 0
        %2213 = vmatprep.subr.bf16.mxu0 0
        %2214 = vmatpush2.bf16.msra.mxu0 0
        %2215 = vmatprep.subr.bf16.mxu0 0
        %2216 = vmatpush2.bf16.msra.mxu0 0
        %2217 = vmatprep.subr.bf16.mxu0 0
        %2218 = vmatpush2.bf16.msra.mxu0 0
        %2219 = vmatprep.subr.bf16.mxu0 0
        %2220 = vmatpush2.bf16.msra.mxu0 0
        %2221 = vmatprep.subr.bf16.mxu0 0
        %2222 = vmatpush2.bf16.msra.mxu0 0
        %2223 = vmatprep.mubr.bf16.mxu0 0
        %2224 = vmatmul.mubr.bf16.gmra.mxu0 %v2110
        %v2225 = vpop.f32.mrf.mxu0
        %v2226 = vadd.f32 0.0, %v2225
        %v2227 = vpop.f32.mrf.mxu0
        %v2228 = vpop.f32.mrf.mxu0
        %v2229 = vadd.f32 0.0, %v2228
        %v2230 = vpop.f32.mrf.mxu0
        %2231 = vmatprep.mubr.bf16.mxu0 0
        %2232 = vmatmul.mubr.bf16.gmra.mxu0 %v2111
        %v2233 = vpop.f32.mrf.mxu0
        %v2234 = vadd.f32 0.0, %v2233
        %v2235 = vpop.f32.mrf.mxu0
        %v2236 = vpop.f32.mrf.mxu0
        %v2237 = vadd.f32 0.0, %v2236
        %v2238 = vpop.f32.mrf.mxu0
        %2239 = vmatprep.mubr.bf16.mxu0 0
        %2240 = vmatmul.mubr.bf16.gmra.mxu0 %v2112
        %v2241 = vpop.f32.mrf.mxu0
        %v2242 = vadd.f32 0.0, %v2241
        %v2243 = vpop.f32.mrf.mxu0
        %v2244 = vpop.f32.mrf.mxu0
        %v2245 = vadd.f32 0.0, %v2244
        %v2246 = vpop.f32.mrf.mxu0
        %2247 = vmatprep.mubr.bf16.mxu0 0
        %2248 = vmatmul.mubr.bf16.gmra.mxu0 %v2113
        %v2249 = vpop.f32.mrf.mxu0
        %v2250 = vadd.f32 0.0, %v2249
        %v2251 = vpop.f32.mrf.mxu0
        %v2252 = vpop.f32.mrf.mxu0
        %v2253 = vadd.f32 0.0, %v2252
        %v2254 = vpop.f32.mrf.mxu0
        %2255 = vmatprep.mubr.bf16.mxu0 0
        %2256 = vmatmul.mubr.bf16.gmra.mxu0 %v2114
        %v2257 = vpop.f32.mrf.mxu0
        %v2258 = vadd.f32 0.0, %v2257
        %v2259 = vpop.f32.mrf.mxu0
        %v2260 = vpop.f32.mrf.mxu0
        %v2261 = vadd.f32 0.0, %v2260
        %v2262 = vpop.f32.mrf.mxu0
        %2263 = vmatprep.mubr.bf16.mxu0 0
        %2264 = vmatmul.mubr.bf16.gmra.mxu0 %v2115
        %v2265 = vpop.f32.mrf.mxu0
        %v2266 = vadd.f32 0.0, %v2265
        %v2267 = vpop.f32.mrf.mxu0
        %v2268 = vpop.f32.mrf.mxu0
        %v2269 = vadd.f32 0.0, %v2268
        %v2270 = vpop.f32.mrf.mxu0
        %2271 = vmatprep.mubr.bf16.mxu0 0
        %2272 = vmatmul.mubr.bf16.gmra.mxu0 %v2116
        %v2273 = vpop.f32.mrf.mxu0
        %v2274 = vadd.f32 0.0, %v2273
        %v2275 = vpop.f32.mrf.mxu0
        %v2276 = vpop.f32.mrf.mxu0
        %v2277 = vadd.f32 0.0, %v2276
        %v2278 = vpop.f32.mrf.mxu0
        %2279 = vmatprep.mubr.bf16.mxu0 0
        %2280 = vmatmul.mubr.bf16.gmra.mxu0 %v2117
        %v2281 = vpop.f32.mrf.mxu0
        %v2282 = vadd.f32 0.0, %v2281
        %v2283 = vpop.f32.mrf.mxu0
        %v2284 = vpop.f32.mrf.mxu0
        %v2285 = vadd.f32 0.0, %v2284
        %v2286 = vpop.f32.mrf.mxu0
        %2287 = vmatprep.mubr.bf16.mxu0 0
        %2288 = vmatmul.mubr.bf16.gmra.mxu0 %v2118
        %v2289 = vpop.f32.mrf.mxu0
        %v2290 = vadd.f32 0.0, %v2289
        %v2291 = vpop.f32.mrf.mxu0
        %v2292 = vpop.f32.mrf.mxu0
        %v2293 = vadd.f32 0.0, %v2292
        %v2294 = vpop.f32.mrf.mxu0
        %2295 = vmatprep.mubr.bf16.mxu0 0
        %2296 = vmatmul.mubr.bf16.gmra.mxu0 %v2119
        %v2297 = vpop.f32.mrf.mxu0
        %v2298 = vadd.f32 0.0, %v2297
        %v2299 = vpop.f32.mrf.mxu0
        %v2300 = vpop.f32.mrf.mxu0
        %v2301 = vadd.f32 0.0, %v2300
        %v2302 = vpop.f32.mrf.mxu0
        %2303 = vmatprep.mubr.bf16.mxu0 0
        %2304 = vmatmul.mubr.bf16.gmra.mxu0 %v2120
        %v2305 = vpop.f32.mrf.mxu0
        %v2306 = vadd.f32 0.0, %v2305
        %v2307 = vpop.f32.mrf.mxu0
        %v2308 = vpop.f32.mrf.mxu0
        %v2309 = vadd.f32 0.0, %v2308
        %v2310 = vpop.f32.mrf.mxu0
        %2311 = vmatprep.mubr.bf16.mxu0 0
        %2312 = vmatmul.mubr.bf16.gmra.mxu0 %v2121
        %v2313 = vpop.f32.mrf.mxu0
        %v2314 = vadd.f32 0.0, %v2313
        %v2315 = vpop.f32.mrf.mxu0
        %v2316 = vpop.f32.mrf.mxu0
        %v2317 = vadd.f32 0.0, %v2316
        %v2318 = vpop.f32.mrf.mxu0
        %2319 = vmatprep.mubr.bf16.mxu0 0
        %2320 = vmatmul.mubr.bf16.gmra.mxu0 %v2122
        %v2321 = vpop.f32.mrf.mxu0
        %v2322 = vadd.f32 0.0, %v2321
        %v2323 = vpop.f32.mrf.mxu0
        %v2324 = vpop.f32.mrf.mxu0
        %v2325 = vadd.f32 0.0, %v2324
        %v2326 = vpop.f32.mrf.mxu0
        %2327 = vmatprep.mubr.bf16.mxu0 0
        %2328 = vmatmul.mubr.bf16.gmra.mxu0 %v2123
        %v2329 = vpop.f32.mrf.mxu0
        %v2330 = vadd.f32 0.0, %v2329
        %v2331 = vpop.f32.mrf.mxu0
        %v2332 = vpop.f32.mrf.mxu0
        %v2333 = vadd.f32 0.0, %v2332
        %v2334 = vpop.f32.mrf.mxu0
        %2335 = vmatprep.mubr.bf16.mxu0 0
        %2336 = vmatmul.mubr.bf16.gmra.mxu0 %v2124
        %v2337 = vpop.f32.mrf.mxu0
        %v2338 = vadd.f32 0.0, %v2337
        %v2339 = vpop.f32.mrf.mxu0
        %v2340 = vpop.f32.mrf.mxu0
        %v2341 = vadd.f32 0.0, %v2340
        %v2342 = vpop.f32.mrf.mxu0
        %2343 = vmatprep.mubr.bf16.mxu0 0
        %2344 = vmatmul.mubr.bf16.gmra.mxu0 %v2125
        %v2345 = vpop.f32.mrf.mxu0
        %v2346 = vadd.f32 0.0, %v2345
        %v2347 = vpop.f32.mrf.mxu0
        %v2348 = vpop.f32.mrf.mxu0
        %v2349 = vadd.f32 0.0, %v2348
        %v2350 = vpop.f32.mrf.mxu0
        %2351 = vdwg.mxu0
        %v2352 = vld [vmem:[#allocation2] sm:$0xff]
        %v2353 = vld [vmem:[#allocation2 + $0x8] sm:$0xff]
        %v2354 = vld [vmem:[#allocation2 + $0x10] sm:$0xff]
        %v2355 = vld [vmem:[#allocation2 + $0x18] sm:$0xff]
        %v2356 = vld [vmem:[#allocation2 + $0x20] sm:$0xff]
        %v2357 = vld [vmem:[#allocation2 + $0x28] sm:$0xff]
        %v2358 = vld [vmem:[#allocation2 + $0x30] sm:$0xff]
        %v2359 = vld [vmem:[#allocation2 + $0x38] sm:$0xff]
        %v2360 = vld [vmem:[#allocation2 + $0x40] sm:$0xff]
        %v2361 = vld [vmem:[#allocation2 + $0x48] sm:$0xff]
        %v2362 = vld [vmem:[#allocation2 + $0x50] sm:$0xff]
        %v2363 = vld [vmem:[#allocation2 + $0x58] sm:$0xff]
        %v2364 = vld [vmem:[#allocation2 + $0x60] sm:$0xff]
        %v2365 = vld [vmem:[#allocation2 + $0x68] sm:$0xff]
        %v2366 = vld [vmem:[#allocation2 + $0x70] sm:$0xff]
        %v2367 = vld [vmem:[#allocation2 + $0x78] sm:$0xff]
        %v2368 = vld [vmem:[#allocation2 + $0x80] sm:$0xff]
        %v2369 = vld [vmem:[#allocation2 + $0x88] sm:$0xff]
        %v2370 = vld [vmem:[#allocation2 + $0x90] sm:$0xff]
        %v2371 = vld [vmem:[#allocation2 + $0x98] sm:$0xff]
        %v2372 = vld [vmem:[#allocation2 + $0xa0] sm:$0xff]
        %v2373 = vld [vmem:[#allocation2 + $0xa8] sm:$0xff]
        %v2374 = vld [vmem:[#allocation2 + $0xb0] sm:$0xff]
        %v2375 = vld [vmem:[#allocation2 + $0xb8] sm:$0xff]
        %v2376 = vld [vmem:[#allocation2 + $0xc0] sm:$0xff]
        %v2377 = vld [vmem:[#allocation2 + $0xc8] sm:$0xff]
        %v2378 = vld [vmem:[#allocation2 + $0xd0] sm:$0xff]
        %v2379 = vld [vmem:[#allocation2 + $0xd8] sm:$0xff]
        %v2380 = vld [vmem:[#allocation2 + $0xe0] sm:$0xff]
        %v2381 = vld [vmem:[#allocation2 + $0xe8] sm:$0xff]
        %v2382 = vld [vmem:[#allocation2 + $0xf0] sm:$0xff]
        %v2383 = vld [vmem:[#allocation2 + $0xf8] sm:$0xff]
        %v2384 = vadd.f32 %v2352, %v2226
        %v2385 = vadd.f32 %v2353, %v2229
        %v2386 = vadd.f32 %v2354, %v2234
        %v2387 = vadd.f32 %v2355, %v2237
        %v2388 = vadd.f32 %v2356, %v2242
        %v2389 = vadd.f32 %v2357, %v2245
        %v2390 = vadd.f32 %v2358, %v2250
        %v2391 = vadd.f32 %v2359, %v2253
        %v2392 = vadd.f32 %v2360, %v2258
        %v2393 = vadd.f32 %v2361, %v2261
        %v2394 = vadd.f32 %v2362, %v2266
        %v2395 = vadd.f32 %v2363, %v2269
        %v2396 = vadd.f32 %v2364, %v2274
        %v2397 = vadd.f32 %v2365, %v2277
        %v2398 = vadd.f32 %v2366, %v2282
        %v2399 = vadd.f32 %v2367, %v2285
        %v2400 = vadd.f32 %v2368, %v2290
        %v2401 = vadd.f32 %v2369, %v2293
        %v2402 = vadd.f32 %v2370, %v2298
        %v2403 = vadd.f32 %v2371, %v2301
        %v2404 = vadd.f32 %v2372, %v2306
        %v2405 = vadd.f32 %v2373, %v2309
        %v2406 = vadd.f32 %v2374, %v2314
        %v2407 = vadd.f32 %v2375, %v2317
        %v2408 = vadd.f32 %v2376, %v2322
        %v2409 = vadd.f32 %v2377, %v2325
        %v2410 = vadd.f32 %v2378, %v2330
        %v2411 = vadd.f32 %v2379, %v2333
        %v2412 = vadd.f32 %v2380, %v2338
        %v2413 = vadd.f32 %v2381, %v2341
        %v2414 = vadd.f32 %v2382, %v2346
        %v2415 = vadd.f32 %v2383, %v2349
        %2416 = vst [vmem:[#allocation2] sm:$0xff] %v2384
        %2417 = vst [vmem:[#allocation2 + $0x8] sm:$0xff] %v2385
        %2418 = vst [vmem:[#allocation2 + $0x10] sm:$0xff] %v2386
        %2419 = vst [vmem:[#allocation2 + $0x18] sm:$0xff] %v2387
        %2420 = vst [vmem:[#allocation2 + $0x20] sm:$0xff] %v2388
        %2421 = vst [vmem:[#allocation2 + $0x28] sm:$0xff] %v2389
        %2422 = vst [vmem:[#allocation2 + $0x30] sm:$0xff] %v2390
        %2423 = vst [vmem:[#allocation2 + $0x38] sm:$0xff] %v2391
        %2424 = vst [vmem:[#allocation2 + $0x40] sm:$0xff] %v2392
        %2425 = vst [vmem:[#allocation2 + $0x48] sm:$0xff] %v2393
        %2426 = vst [vmem:[#allocation2 + $0x50] sm:$0xff] %v2394
        %2427 = vst [vmem:[#allocation2 + $0x58] sm:$0xff] %v2395
        %2428 = vst [vmem:[#allocation2 + $0x60] sm:$0xff] %v2396
        %2429 = vst [vmem:[#allocation2 + $0x68] sm:$0xff] %v2397
        %2430 = vst [vmem:[#allocation2 + $0x70] sm:$0xff] %v2398
        %2431 = vst [vmem:[#allocation2 + $0x78] sm:$0xff] %v2399
        %2432 = vst [vmem:[#allocation2 + $0x80] sm:$0xff] %v2400
        %2433 = vst [vmem:[#allocation2 + $0x88] sm:$0xff] %v2401
        %2434 = vst [vmem:[#allocation2 + $0x90] sm:$0xff] %v2402
        %2435 = vst [vmem:[#allocation2 + $0x98] sm:$0xff] %v2403
        %2436 = vst [vmem:[#allocation2 + $0xa0] sm:$0xff] %v2404
        %2437 = vst [vmem:[#allocation2 + $0xa8] sm:$0xff] %v2405
        %2438 = vst [vmem:[#allocation2 + $0xb0] sm:$0xff] %v2406
        %2439 = vst [vmem:[#allocation2 + $0xb8] sm:$0xff] %v2407
        %2440 = vst [vmem:[#allocation2 + $0xc0] sm:$0xff] %v2408
        %2441 = vst [vmem:[#allocation2 + $0xc8] sm:$0xff] %v2409
        %2442 = vst [vmem:[#allocation2 + $0xd0] sm:$0xff] %v2410
        %2443 = vst [vmem:[#allocation2 + $0xd8] sm:$0xff] %v2411
        %2444 = vst [vmem:[#allocation2 + $0xe0] sm:$0xff] %v2412
        %2445 = vst [vmem:[#allocation2 + $0xe8] sm:$0xff] %v2413
        %2446 = vst [vmem:[#allocation2 + $0xf0] sm:$0xff] %v2414
        %2447 = vst [vmem:[#allocation2 + $0xf8] sm:$0xff] %v2415
        %s2448 = scalar_lea.vmem %s290, 48
        %v2449 = vld [vmem:[%s2448] sm:$0xff]
        %v2450 = vld [vmem:[%s2448 + $0x8] sm:$0xff]
        %v2451 = vld [vmem:[%s2448 + $0x18] sm:$0xff]
        %v2452 = vld [vmem:[%s2448 + $0x20] sm:$0xff]
        %v2453 = vld [vmem:[%s2448 + $0x30] sm:$0xff]
        %v2454 = vld [vmem:[%s2448 + $0x38] sm:$0xff]
        %v2455 = vld [vmem:[%s2448 + $0x48] sm:$0xff]
        %v2456 = vld [vmem:[%s2448 + $0x50] sm:$0xff]
        %v2457 = vld [vmem:[%s2448 + $0x60] sm:$0xff]
        %v2458 = vld [vmem:[%s2448 + $0x68] sm:$0xff]
        %v2459 = vld [vmem:[%s2448 + $0x78] sm:$0xff]
        %v2460 = vld [vmem:[%s2448 + $0x80] sm:$0xff]
        %v2461 = vld [vmem:[%s2448 + $0x90] sm:$0xff]
        %v2462 = vld [vmem:[%s2448 + $0x98] sm:$0xff]
        %v2463 = vld [vmem:[%s2448 + $0xa8] sm:$0xff]
        %v2464 = vld [vmem:[%s2448 + $0xb0] sm:$0xff]
        %v2465 = vld [vmem:[%s2448 + $0xc0] sm:$0xff]
        %v2466 = vld [vmem:[%s2448 + $0xc8] sm:$0xff]
        %v2467 = vld [vmem:[%s2448 + $0xd8] sm:$0xff]
        %v2468 = vld [vmem:[%s2448 + $0xe0] sm:$0xff]
        %v2469 = vld [vmem:[%s2448 + $0xf0] sm:$0xff]
        %v2470 = vld [vmem:[%s2448 + $0xf8] sm:$0xff]
        %v2471 = vld [vmem:[%s2448 + $0x108] sm:$0xff]
        %v2472 = vld [vmem:[%s2448 + $0x110] sm:$0xff]
        %v2473 = vld [vmem:[%s2448 + $0x120] sm:$0xff]
        %v2474 = vld [vmem:[%s2448 + $0x128] sm:$0xff]
        %v2475 = vld [vmem:[%s2448 + $0x138] sm:$0xff]
        %v2476 = vld [vmem:[%s2448 + $0x140] sm:$0xff]
        %v2477 = vld [vmem:[%s2448 + $0x150] sm:$0xff]
        %v2478 = vld [vmem:[%s2448 + $0x158] sm:$0xff]
        %v2479 = vld [vmem:[%s2448 + $0x168] sm:$0xff]
        %v2480 = vld [vmem:[%s2448 + $0x170] sm:$0xff]
        %v2481 = vpack.c.bf16 %v2450, %v2449
        %v2482 = vpack.c.bf16 %v2452, %v2451
        %v2483 = vpack.c.bf16 %v2454, %v2453
        %v2484 = vpack.c.bf16 %v2456, %v2455
        %v2485 = vpack.c.bf16 %v2458, %v2457
        %v2486 = vpack.c.bf16 %v2460, %v2459
        %v2487 = vpack.c.bf16 %v2462, %v2461
        %v2488 = vpack.c.bf16 %v2464, %v2463
        %v2489 = vpack.c.bf16 %v2466, %v2465
        %v2490 = vpack.c.bf16 %v2468, %v2467
        %v2491 = vpack.c.bf16 %v2470, %v2469
        %v2492 = vpack.c.bf16 %v2472, %v2471
        %v2493 = vpack.c.bf16 %v2474, %v2473
        %v2494 = vpack.c.bf16 %v2476, %v2475
        %v2495 = vpack.c.bf16 %v2478, %v2477
        %v2496 = vpack.c.bf16 %v2480, %v2479
        %s2497 = scalar_lea.vmem %s1, 384
        %v2498 = vld [vmem:[%s2497] sm:$0xf]
        %v2499 = vld [vmem:[%s2497 + $0x4] sm:$0xf]
        %v2500 = vld [vmem:[%s2497 + $0x8] sm:$0xf]
        %v2501 = vld [vmem:[%s2497 + $0xc] sm:$0xf]
        %v2502 = vld [vmem:[%s2497 + $0x10] sm:$0xf]
        %v2503 = vld [vmem:[%s2497 + $0x14] sm:$0xf]
        %v2504 = vld [vmem:[%s2497 + $0x18] sm:$0xf]
        %v2505 = vld [vmem:[%s2497 + $0x1c] sm:$0xf]
        %v2506 = vld [vmem:[%s2497 + $0x20] sm:$0xf]
        %v2507 = vld [vmem:[%s2497 + $0x24] sm:$0xf]
        %v2508 = vld [vmem:[%s2497 + $0x28] sm:$0xf]
        %v2509 = vld [vmem:[%s2497 + $0x2c] sm:$0xf]
        %v2510 = vld [vmem:[%s2497 + $0x30] sm:$0xf]
        %v2511 = vld [vmem:[%s2497 + $0x34] sm:$0xf]
        %v2512 = vld [vmem:[%s2497 + $0x38] sm:$0xf]
        %v2513 = vld [vmem:[%s2497 + $0x3c] sm:$0xf]
        %v2530 = vunpack.c.l.b16 %v2498
        %v2531 = vunpack.c.l.b16 %v2499
        %v2532 = vunpack.c.l.b16 %v2500
        %v2533 = vunpack.c.l.b16 %v2501
        %v2534 = vunpack.c.l.b16 %v2502
        %v2535 = vunpack.c.l.b16 %v2503
        %v2536 = vunpack.c.l.b16 %v2504
        %v2537 = vunpack.c.l.b16 %v2505
        %v2538 = vunpack.c.l.b16 %v2506
        %v2539 = vunpack.c.l.b16 %v2507
        %v2540 = vunpack.c.l.b16 %v2508
        %v2541 = vunpack.c.l.b16 %v2509
        %v2542 = vunpack.c.l.b16 %v2510
        %v2543 = vunpack.c.l.b16 %v2511
        %v2544 = vunpack.c.l.b16 %v2512
        %v2545 = vunpack.c.l.b16 %v2513
        %v2546 = vpack.c.b16 %v2531, %v2530
        %v2547 = vpack.c.b16 %v2533, %v2532
        %v2548 = vpack.c.b16 %v2535, %v2534
        %v2549 = vpack.c.b16 %v2537, %v2536
        %v2550 = vpack.c.b16 %v2539, %v2538
        %v2551 = vpack.c.b16 %v2541, %v2540
        %v2552 = vpack.c.b16 %v2543, %v2542
        %v2553 = vpack.c.b16 %v2545, %v2544
        %2562 = vmatprep.subr.bf16.mxu0 0
        %2563 = vmatpush1.bf16.msra.mxu0 %v2553
        %2564 = vmatprep.subr.bf16.mxu0 0
        %2565 = vmatpush1.bf16.msra.mxu0 %v2552
        %2566 = vmatprep.subr.bf16.mxu0 0
        %2567 = vmatpush1.bf16.msra.mxu0 %v2551
        %2568 = vmatprep.subr.bf16.mxu0 0
        %2569 = vmatpush1.bf16.msra.mxu0 %v2550
        %2570 = vmatprep.subr.bf16.mxu0 0
        %2571 = vmatpush1.bf16.msra.mxu0 %v2549
        %2572 = vmatprep.subr.bf16.mxu0 0
        %2573 = vmatpush1.bf16.msra.mxu0 %v2548
        %2574 = vmatprep.subr.bf16.mxu0 0
        %2575 = vmatpush1.bf16.msra.mxu0 %v2547
        %2576 = vmatprep.subr.bf16.mxu0 0
        %2577 = vmatpush1.bf16.msra.mxu0 %v2546
        %2578 = vmatprep.subr.bf16.mxu0 0
        %2579 = vmatpush2.bf16.msra.mxu0 0
        %2580 = vmatprep.subr.bf16.mxu0 0
        %2581 = vmatpush2.bf16.msra.mxu0 0
        %2582 = vmatprep.subr.bf16.mxu0 0
        %2583 = vmatpush2.bf16.msra.mxu0 0
        %2584 = vmatprep.subr.bf16.mxu0 0
        %2585 = vmatpush2.bf16.msra.mxu0 0
        %2586 = vmatprep.subr.bf16.mxu0 0
        %2587 = vmatpush2.bf16.msra.mxu0 0
        %2588 = vmatprep.subr.bf16.mxu0 0
        %2589 = vmatpush2.bf16.msra.mxu0 0
        %2590 = vmatprep.subr.bf16.mxu0 0
        %2591 = vmatpush2.bf16.msra.mxu0 0
        %2592 = vmatprep.subr.bf16.mxu0 0
        %2593 = vmatpush2.bf16.msra.mxu0 0
        %2594 = vmatprep.mubr.bf16.mxu0 0
        %2595 = vmatmul.mubr.bf16.gmra.mxu0 %v2481
        %v2596 = vpop.f32.mrf.mxu0
        %v2597 = vadd.f32 0.0, %v2596
        %v2598 = vpop.f32.mrf.mxu0
        %v2599 = vpop.f32.mrf.mxu0
        %v2600 = vadd.f32 0.0, %v2599
        %v2601 = vpop.f32.mrf.mxu0
        %2602 = vmatprep.mubr.bf16.mxu0 0
        %2603 = vmatmul.mubr.bf16.gmra.mxu0 %v2482
        %v2604 = vpop.f32.mrf.mxu0
        %v2605 = vadd.f32 0.0, %v2604
        %v2606 = vpop.f32.mrf.mxu0
        %v2607 = vpop.f32.mrf.mxu0
        %v2608 = vadd.f32 0.0, %v2607
        %v2609 = vpop.f32.mrf.mxu0
        %2610 = vmatprep.mubr.bf16.mxu0 0
        %2611 = vmatmul.mubr.bf16.gmra.mxu0 %v2483
        %v2612 = vpop.f32.mrf.mxu0
        %v2613 = vadd.f32 0.0, %v2612
        %v2614 = vpop.f32.mrf.mxu0
        %v2615 = vpop.f32.mrf.mxu0
        %v2616 = vadd.f32 0.0, %v2615
        %v2617 = vpop.f32.mrf.mxu0
        %2618 = vmatprep.mubr.bf16.mxu0 0
        %2619 = vmatmul.mubr.bf16.gmra.mxu0 %v2484
        %v2620 = vpop.f32.mrf.mxu0
        %v2621 = vadd.f32 0.0, %v2620
        %v2622 = vpop.f32.mrf.mxu0
        %v2623 = vpop.f32.mrf.mxu0
        %v2624 = vadd.f32 0.0, %v2623
        %v2625 = vpop.f32.mrf.mxu0
        %2626 = vmatprep.mubr.bf16.mxu0 0
        %2627 = vmatmul.mubr.bf16.gmra.mxu0 %v2485
        %v2628 = vpop.f32.mrf.mxu0
        %v2629 = vadd.f32 0.0, %v2628
        %v2630 = vpop.f32.mrf.mxu0
        %v2631 = vpop.f32.mrf.mxu0
        %v2632 = vadd.f32 0.0, %v2631
        %v2633 = vpop.f32.mrf.mxu0
        %2634 = vmatprep.mubr.bf16.mxu0 0
        %2635 = vmatmul.mubr.bf16.gmra.mxu0 %v2486
        %v2636 = vpop.f32.mrf.mxu0
        %v2637 = vadd.f32 0.0, %v2636
        %v2638 = vpop.f32.mrf.mxu0
        %v2639 = vpop.f32.mrf.mxu0
        %v2640 = vadd.f32 0.0, %v2639
        %v2641 = vpop.f32.mrf.mxu0
        %2642 = vmatprep.mubr.bf16.mxu0 0
        %2643 = vmatmul.mubr.bf16.gmra.mxu0 %v2487
        %v2644 = vpop.f32.mrf.mxu0
        %v2645 = vadd.f32 0.0, %v2644
        %v2646 = vpop.f32.mrf.mxu0
        %v2647 = vpop.f32.mrf.mxu0
        %v2648 = vadd.f32 0.0, %v2647
        %v2649 = vpop.f32.mrf.mxu0
        %2650 = vmatprep.mubr.bf16.mxu0 0
        %2651 = vmatmul.mubr.bf16.gmra.mxu0 %v2488
        %v2652 = vpop.f32.mrf.mxu0
        %v2653 = vadd.f32 0.0, %v2652
        %v2654 = vpop.f32.mrf.mxu0
        %v2655 = vpop.f32.mrf.mxu0
        %v2656 = vadd.f32 0.0, %v2655
        %v2657 = vpop.f32.mrf.mxu0
        %2658 = vmatprep.mubr.bf16.mxu0 0
        %2659 = vmatmul.mubr.bf16.gmra.mxu0 %v2489
        %v2660 = vpop.f32.mrf.mxu0
        %v2661 = vadd.f32 0.0, %v2660
        %v2662 = vpop.f32.mrf.mxu0
        %v2663 = vpop.f32.mrf.mxu0
        %v2664 = vadd.f32 0.0, %v2663
        %v2665 = vpop.f32.mrf.mxu0
        %2666 = vmatprep.mubr.bf16.mxu0 0
        %2667 = vmatmul.mubr.bf16.gmra.mxu0 %v2490
        %v2668 = vpop.f32.mrf.mxu0
        %v2669 = vadd.f32 0.0, %v2668
        %v2670 = vpop.f32.mrf.mxu0
        %v2671 = vpop.f32.mrf.mxu0
        %v2672 = vadd.f32 0.0, %v2671
        %v2673 = vpop.f32.mrf.mxu0
        %2674 = vmatprep.mubr.bf16.mxu0 0
        %2675 = vmatmul.mubr.bf16.gmra.mxu0 %v2491
        %v2676 = vpop.f32.mrf.mxu0
        %v2677 = vadd.f32 0.0, %v2676
        %v2678 = vpop.f32.mrf.mxu0
        %v2679 = vpop.f32.mrf.mxu0
        %v2680 = vadd.f32 0.0, %v2679
        %v2681 = vpop.f32.mrf.mxu0
        %2682 = vmatprep.mubr.bf16.mxu0 0
        %2683 = vmatmul.mubr.bf16.gmra.mxu0 %v2492
        %v2684 = vpop.f32.mrf.mxu0
        %v2685 = vadd.f32 0.0, %v2684
        %v2686 = vpop.f32.mrf.mxu0
        %v2687 = vpop.f32.mrf.mxu0
        %v2688 = vadd.f32 0.0, %v2687
        %v2689 = vpop.f32.mrf.mxu0
        %2690 = vmatprep.mubr.bf16.mxu0 0
        %2691 = vmatmul.mubr.bf16.gmra.mxu0 %v2493
        %v2692 = vpop.f32.mrf.mxu0
        %v2693 = vadd.f32 0.0, %v2692
        %v2694 = vpop.f32.mrf.mxu0
        %v2695 = vpop.f32.mrf.mxu0
        %v2696 = vadd.f32 0.0, %v2695
        %v2697 = vpop.f32.mrf.mxu0
        %2698 = vmatprep.mubr.bf16.mxu0 0
        %2699 = vmatmul.mubr.bf16.gmra.mxu0 %v2494
        %v2700 = vpop.f32.mrf.mxu0
        %v2701 = vadd.f32 0.0, %v2700
        %v2702 = vpop.f32.mrf.mxu0
        %v2703 = vpop.f32.mrf.mxu0
        %v2704 = vadd.f32 0.0, %v2703
        %v2705 = vpop.f32.mrf.mxu0
        %2706 = vmatprep.mubr.bf16.mxu0 0
        %2707 = vmatmul.mubr.bf16.gmra.mxu0 %v2495
        %v2708 = vpop.f32.mrf.mxu0
        %v2709 = vadd.f32 0.0, %v2708
        %v2710 = vpop.f32.mrf.mxu0
        %v2711 = vpop.f32.mrf.mxu0
        %v2712 = vadd.f32 0.0, %v2711
        %v2713 = vpop.f32.mrf.mxu0
        %2714 = vmatprep.mubr.bf16.mxu0 0
        %2715 = vmatmul.mubr.bf16.gmra.mxu0 %v2496
        %v2716 = vpop.f32.mrf.mxu0
        %v2717 = vadd.f32 0.0, %v2716
        %v2718 = vpop.f32.mrf.mxu0
        %v2719 = vpop.f32.mrf.mxu0
        %v2720 = vadd.f32 0.0, %v2719
        %v2721 = vpop.f32.mrf.mxu0
        %2722 = vdwg.mxu0
        %v2723 = vld [vmem:[#allocation2] sm:$0xff]
        %v2724 = vld [vmem:[#allocation2 + $0x8] sm:$0xff]
        %v2725 = vld [vmem:[#allocation2 + $0x10] sm:$0xff]
        %v2726 = vld [vmem:[#allocation2 + $0x18] sm:$0xff]
        %v2727 = vld [vmem:[#allocation2 + $0x20] sm:$0xff]
        %v2728 = vld [vmem:[#allocation2 + $0x28] sm:$0xff]
        %v2729 = vld [vmem:[#allocation2 + $0x30] sm:$0xff]
        %v2730 = vld [vmem:[#allocation2 + $0x38] sm:$0xff]
        %v2731 = vld [vmem:[#allocation2 + $0x40] sm:$0xff]
        %v2732 = vld [vmem:[#allocation2 + $0x48] sm:$0xff]
        %v2733 = vld [vmem:[#allocation2 + $0x50] sm:$0xff]
        %v2734 = vld [vmem:[#allocation2 + $0x58] sm:$0xff]
        %v2735 = vld [vmem:[#allocation2 + $0x60] sm:$0xff]
        %v2736 = vld [vmem:[#allocation2 + $0x68] sm:$0xff]
        %v2737 = vld [vmem:[#allocation2 + $0x70] sm:$0xff]
        %v2738 = vld [vmem:[#allocation2 + $0x78] sm:$0xff]
        %v2739 = vld [vmem:[#allocation2 + $0x80] sm:$0xff]
        %v2740 = vld [vmem:[#allocation2 + $0x88] sm:$0xff]
        %v2741 = vld [vmem:[#allocation2 + $0x90] sm:$0xff]
        %v2742 = vld [vmem:[#allocation2 + $0x98] sm:$0xff]
        %v2743 = vld [vmem:[#allocation2 + $0xa0] sm:$0xff]
        %v2744 = vld [vmem:[#allocation2 + $0xa8] sm:$0xff]
        %v2745 = vld [vmem:[#allocation2 + $0xb0] sm:$0xff]
        %v2746 = vld [vmem:[#allocation2 + $0xb8] sm:$0xff]
        %v2747 = vld [vmem:[#allocation2 + $0xc0] sm:$0xff]
        %v2748 = vld [vmem:[#allocation2 + $0xc8] sm:$0xff]
        %v2749 = vld [vmem:[#allocation2 + $0xd0] sm:$0xff]
        %v2750 = vld [vmem:[#allocation2 + $0xd8] sm:$0xff]
        %v2751 = vld [vmem:[#allocation2 + $0xe0] sm:$0xff]
        %v2752 = vld [vmem:[#allocation2 + $0xe8] sm:$0xff]
        %v2753 = vld [vmem:[#allocation2 + $0xf0] sm:$0xff]
        %v2754 = vld [vmem:[#allocation2 + $0xf8] sm:$0xff]
        %v2755 = vadd.f32 %v2723, %v2597
        %v2756 = vadd.f32 %v2724, %v2600
        %v2757 = vadd.f32 %v2725, %v2605
        %v2758 = vadd.f32 %v2726, %v2608
        %v2759 = vadd.f32 %v2727, %v2613
        %v2760 = vadd.f32 %v2728, %v2616
        %v2761 = vadd.f32 %v2729, %v2621
        %v2762 = vadd.f32 %v2730, %v2624
        %v2763 = vadd.f32 %v2731, %v2629
        %v2764 = vadd.f32 %v2732, %v2632
        %v2765 = vadd.f32 %v2733, %v2637
        %v2766 = vadd.f32 %v2734, %v2640
        %v2767 = vadd.f32 %v2735, %v2645
        %v2768 = vadd.f32 %v2736, %v2648
        %v2769 = vadd.f32 %v2737, %v2653
        %v2770 = vadd.f32 %v2738, %v2656
        %v2771 = vadd.f32 %v2739, %v2661
        %v2772 = vadd.f32 %v2740, %v2664
        %v2773 = vadd.f32 %v2741, %v2669
        %v2774 = vadd.f32 %v2742, %v2672
        %v2775 = vadd.f32 %v2743, %v2677
        %v2776 = vadd.f32 %v2744, %v2680
        %v2777 = vadd.f32 %v2745, %v2685
        %v2778 = vadd.f32 %v2746, %v2688
        %v2779 = vadd.f32 %v2747, %v2693
        %v2780 = vadd.f32 %v2748, %v2696
        %v2781 = vadd.f32 %v2749, %v2701
        %v2782 = vadd.f32 %v2750, %v2704
        %v2783 = vadd.f32 %v2751, %v2709
        %v2784 = vadd.f32 %v2752, %v2712
        %v2785 = vadd.f32 %v2753, %v2717
        %v2786 = vadd.f32 %v2754, %v2720
        %2787 = vst [vmem:[#allocation2] sm:$0xff] %v2755
        %2788 = vst [vmem:[#allocation2 + $0x8] sm:$0xff] %v2756
        %2789 = vst [vmem:[#allocation2 + $0x10] sm:$0xff] %v2757
        %2790 = vst [vmem:[#allocation2 + $0x18] sm:$0xff] %v2758
        %2791 = vst [vmem:[#allocation2 + $0x20] sm:$0xff] %v2759
        %2792 = vst [vmem:[#allocation2 + $0x28] sm:$0xff] %v2760
        %2793 = vst [vmem:[#allocation2 + $0x30] sm:$0xff] %v2761
        %2794 = vst [vmem:[#allocation2 + $0x38] sm:$0xff] %v2762
        %2795 = vst [vmem:[#allocation2 + $0x40] sm:$0xff] %v2763
        %2796 = vst [vmem:[#allocation2 + $0x48] sm:$0xff] %v2764
        %2797 = vst [vmem:[#allocation2 + $0x50] sm:$0xff] %v2765
        %2798 = vst [vmem:[#allocation2 + $0x58] sm:$0xff] %v2766
        %2799 = vst [vmem:[#allocation2 + $0x60] sm:$0xff] %v2767
        %2800 = vst [vmem:[#allocation2 + $0x68] sm:$0xff] %v2768
        %2801 = vst [vmem:[#allocation2 + $0x70] sm:$0xff] %v2769
        %2802 = vst [vmem:[#allocation2 + $0x78] sm:$0xff] %v2770
        %2803 = vst [vmem:[#allocation2 + $0x80] sm:$0xff] %v2771
        %2804 = vst [vmem:[#allocation2 + $0x88] sm:$0xff] %v2772
        %2805 = vst [vmem:[#allocation2 + $0x90] sm:$0xff] %v2773
        %2806 = vst [vmem:[#allocation2 + $0x98] sm:$0xff] %v2774
        %2807 = vst [vmem:[#allocation2 + $0xa0] sm:$0xff] %v2775
        %2808 = vst [vmem:[#allocation2 + $0xa8] sm:$0xff] %v2776
        %2809 = vst [vmem:[#allocation2 + $0xb0] sm:$0xff] %v2777
        %2810 = vst [vmem:[#allocation2 + $0xb8] sm:$0xff] %v2778
        %2811 = vst [vmem:[#allocation2 + $0xc0] sm:$0xff] %v2779
        %2812 = vst [vmem:[#allocation2 + $0xc8] sm:$0xff] %v2780
        %2813 = vst [vmem:[#allocation2 + $0xd0] sm:$0xff] %v2781
        %2814 = vst [vmem:[#allocation2 + $0xd8] sm:$0xff] %v2782
        %2815 = vst [vmem:[#allocation2 + $0xe0] sm:$0xff] %v2783
        %2816 = vst [vmem:[#allocation2 + $0xe8] sm:$0xff] %v2784
        %2817 = vst [vmem:[#allocation2 + $0xf0] sm:$0xff] %v2785
        %2818 = vst [vmem:[#allocation2 + $0xf8] sm:$0xff] %v2786
        %v2819 = vld [vmem:[%s2448 + $0x1] sm:$0xff]
        %v2820 = vld [vmem:[%s2448 + $0x9] sm:$0xff]
        %v2821 = vld [vmem:[%s2448 + $0x19] sm:$0xff]
        %v2822 = vld [vmem:[%s2448 + $0x21] sm:$0xff]
        %v2823 = vld [vmem:[%s2448 + $0x31] sm:$0xff]
        %v2824 = vld [vmem:[%s2448 + $0x39] sm:$0xff]
        %v2825 = vld [vmem:[%s2448 + $0x49] sm:$0xff]
        %v2826 = vld [vmem:[%s2448 + $0x51] sm:$0xff]
        %v2827 = vld [vmem:[%s2448 + $0x61] sm:$0xff]
        %v2828 = vld [vmem:[%s2448 + $0x69] sm:$0xff]
        %v2829 = vld [vmem:[%s2448 + $0x79] sm:$0xff]
        %v2830 = vld [vmem:[%s2448 + $0x81] sm:$0xff]
        %v2831 = vld [vmem:[%s2448 + $0x91] sm:$0xff]
        %v2832 = vld [vmem:[%s2448 + $0x99] sm:$0xff]
        %v2833 = vld [vmem:[%s2448 + $0xa9] sm:$0xff]
        %v2834 = vld [vmem:[%s2448 + $0xb1] sm:$0xff]
        %v2835 = vld [vmem:[%s2448 + $0xc1] sm:$0xff]
        %v2836 = vld [vmem:[%s2448 + $0xc9] sm:$0xff]
        %v2837 = vld [vmem:[%s2448 + $0xd9] sm:$0xff]
        %v2838 = vld [vmem:[%s2448 + $0xe1] sm:$0xff]
        %v2839 = vld [vmem:[%s2448 + $0xf1] sm:$0xff]
        %v2840 = vld [vmem:[%s2448 + $0xf9] sm:$0xff]
        %v2841 = vld [vmem:[%s2448 + $0x109] sm:$0xff]
        %v2842 = vld [vmem:[%s2448 + $0x111] sm:$0xff]
        %v2843 = vld [vmem:[%s2448 + $0x121] sm:$0xff]
        %v2844 = vld [vmem:[%s2448 + $0x129] sm:$0xff]
        %v2845 = vld [vmem:[%s2448 + $0x139] sm:$0xff]
        %v2846 = vld [vmem:[%s2448 + $0x141] sm:$0xff]
        %v2847 = vld [vmem:[%s2448 + $0x151] sm:$0xff]
        %v2848 = vld [vmem:[%s2448 + $0x159] sm:$0xff]
        %v2849 = vld [vmem:[%s2448 + $0x169] sm:$0xff]
        %v2850 = vld [vmem:[%s2448 + $0x171] sm:$0xff]
        %v2851 = vpack.c.bf16 %v2820, %v2819
        %v2852 = vpack.c.bf16 %v2822, %v2821
        %v2853 = vpack.c.bf16 %v2824, %v2823
        %v2854 = vpack.c.bf16 %v2826, %v2825
        %v2855 = vpack.c.bf16 %v2828, %v2827
        %v2856 = vpack.c.bf16 %v2830, %v2829
        %v2857 = vpack.c.bf16 %v2832, %v2831
        %v2858 = vpack.c.bf16 %v2834, %v2833
        %v2859 = vpack.c.bf16 %v2836, %v2835
        %v2860 = vpack.c.bf16 %v2838, %v2837
        %v2861 = vpack.c.bf16 %v2840, %v2839
        %v2862 = vpack.c.bf16 %v2842, %v2841
        %v2863 = vpack.c.bf16 %v2844, %v2843
        %v2864 = vpack.c.bf16 %v2846, %v2845
        %v2865 = vpack.c.bf16 %v2848, %v2847
        %v2866 = vpack.c.bf16 %v2850, %v2849
        %s2867 = scalar_lea.vmem %s1, 448
        %v2868 = vld [vmem:[%s2867] sm:$0xf]
        %v2869 = vld [vmem:[%s2867 + $0x4] sm:$0xf]
        %v2870 = vld [vmem:[%s2867 + $0x8] sm:$0xf]
        %v2871 = vld [vmem:[%s2867 + $0xc] sm:$0xf]
        %v2872 = vld [vmem:[%s2867 + $0x10] sm:$0xf]
        %v2873 = vld [vmem:[%s2867 + $0x14] sm:$0xf]
        %v2874 = vld [vmem:[%s2867 + $0x18] sm:$0xf]
        %v2875 = vld [vmem:[%s2867 + $0x1c] sm:$0xf]
        %v2876 = vld [vmem:[%s2867 + $0x20] sm:$0xf]
        %v2877 = vld [vmem:[%s2867 + $0x24] sm:$0xf]
        %v2878 = vld [vmem:[%s2867 + $0x28] sm:$0xf]
        %v2879 = vld [vmem:[%s2867 + $0x2c] sm:$0xf]
        %v2880 = vld [vmem:[%s2867 + $0x30] sm:$0xf]
        %v2881 = vld [vmem:[%s2867 + $0x34] sm:$0xf]
        %v2882 = vld [vmem:[%s2867 + $0x38] sm:$0xf]
        %v2883 = vld [vmem:[%s2867 + $0x3c] sm:$0xf]
        %v2900 = vunpack.c.l.b16 %v2868
        %v2901 = vunpack.c.l.b16 %v2869
        %v2902 = vunpack.c.l.b16 %v2870
        %v2903 = vunpack.c.l.b16 %v2871
        %v2904 = vunpack.c.l.b16 %v2872
        %v2905 = vunpack.c.l.b16 %v2873
        %v2906 = vunpack.c.l.b16 %v2874
        %v2907 = vunpack.c.l.b16 %v2875
        %v2908 = vunpack.c.l.b16 %v2876
        %v2909 = vunpack.c.l.b16 %v2877
        %v2910 = vunpack.c.l.b16 %v2878
        %v2911 = vunpack.c.l.b16 %v2879
        %v2912 = vunpack.c.l.b16 %v2880
        %v2913 = vunpack.c.l.b16 %v2881
        %v2914 = vunpack.c.l.b16 %v2882
        %v2915 = vunpack.c.l.b16 %v2883
        %v2916 = vpack.c.b16 %v2901, %v2900
        %v2917 = vpack.c.b16 %v2903, %v2902
        %v2918 = vpack.c.b16 %v2905, %v2904
        %v2919 = vpack.c.b16 %v2907, %v2906
        %v2920 = vpack.c.b16 %v2909, %v2908
        %v2921 = vpack.c.b16 %v2911, %v2910
        %v2922 = vpack.c.b16 %v2913, %v2912
        %v2923 = vpack.c.b16 %v2915, %v2914
        %2932 = vmatprep.subr.bf16.mxu0 0
        %2933 = vmatpush1.bf16.msra.mxu0 %v2923
        %2934 = vmatprep.subr.bf16.mxu0 0
        %2935 = vmatpush1.bf16.msra.mxu0 %v2922
        %2936 = vmatprep.subr.bf16.mxu0 0
        %2937 = vmatpush1.bf16.msra.mxu0 %v2921
        %2938 = vmatprep.subr.bf16.mxu0 0
        %2939 = vmatpush1.bf16.msra.mxu0 %v2920
        %2940 = vmatprep.subr.bf16.mxu0 0
        %2941 = vmatpush1.bf16.msra.mxu0 %v2919
        %2942 = vmatprep.subr.bf16.mxu0 0
        %2943 = vmatpush1.bf16.msra.mxu0 %v2918
        %2944 = vmatprep.subr.bf16.mxu0 0
        %2945 = vmatpush1.bf16.msra.mxu0 %v2917
        %2946 = vmatprep.subr.bf16.mxu0 0
        %2947 = vmatpush1.bf16.msra.mxu0 %v2916
        %2948 = vmatprep.subr.bf16.mxu0 0
        %2949 = vmatpush2.bf16.msra.mxu0 0
        %2950 = vmatprep.subr.bf16.mxu0 0
        %2951 = vmatpush2.bf16.msra.mxu0 0
        %2952 = vmatprep.subr.bf16.mxu0 0
        %2953 = vmatpush2.bf16.msra.mxu0 0
        %2954 = vmatprep.subr.bf16.mxu0 0
        %2955 = vmatpush2.bf16.msra.mxu0 0
        %2956 = vmatprep.subr.bf16.mxu0 0
        %2957 = vmatpush2.bf16.msra.mxu0 0
        %2958 = vmatprep.subr.bf16.mxu0 0
        %2959 = vmatpush2.bf16.msra.mxu0 0
        %2960 = vmatprep.subr.bf16.mxu0 0
        %2961 = vmatpush2.bf16.msra.mxu0 0
        %2962 = vmatprep.subr.bf16.mxu0 0
        %2963 = vmatpush2.bf16.msra.mxu0 0
        %2964 = vmatprep.mubr.bf16.mxu0 0
        %2965 = vmatmul.mubr.bf16.gmra.mxu0 %v2851
        %v2966 = vpop.f32.mrf.mxu0
        %v2967 = vadd.f32 0.0, %v2966
        %v2968 = vpop.f32.mrf.mxu0
        %v2969 = vpop.f32.mrf.mxu0
        %v2970 = vadd.f32 0.0, %v2969
        %v2971 = vpop.f32.mrf.mxu0
        %2972 = vmatprep.mubr.bf16.mxu0 0
        %2973 = vmatmul.mubr.bf16.gmra.mxu0 %v2852
        %v2974 = vpop.f32.mrf.mxu0
        %v2975 = vadd.f32 0.0, %v2974
        %v2976 = vpop.f32.mrf.mxu0
        %v2977 = vpop.f32.mrf.mxu0
        %v2978 = vadd.f32 0.0, %v2977
        %v2979 = vpop.f32.mrf.mxu0
        %2980 = vmatprep.mubr.bf16.mxu0 0
        %2981 = vmatmul.mubr.bf16.gmra.mxu0 %v2853
        %v2982 = vpop.f32.mrf.mxu0
        %v2983 = vadd.f32 0.0, %v2982
        %v2984 = vpop.f32.mrf.mxu0
        %v2985 = vpop.f32.mrf.mxu0
        %v2986 = vadd.f32 0.0, %v2985
        %v2987 = vpop.f32.mrf.mxu0
        %2988 = vmatprep.mubr.bf16.mxu0 0
        %2989 = vmatmul.mubr.bf16.gmra.mxu0 %v2854
        %v2990 = vpop.f32.mrf.mxu0
        %v2991 = vadd.f32 0.0, %v2990
        %v2992 = vpop.f32.mrf.mxu0
        %v2993 = vpop.f32.mrf.mxu0
        %v2994 = vadd.f32 0.0, %v2993
        %v2995 = vpop.f32.mrf.mxu0
        %2996 = vmatprep.mubr.bf16.mxu0 0
        %2997 = vmatmul.mubr.bf16.gmra.mxu0 %v2855
        %v2998 = vpop.f32.mrf.mxu0
        %v2999 = vadd.f32 0.0, %v2998
        %v3000 = vpop.f32.mrf.mxu0
        %v3001 = vpop.f32.mrf.mxu0
        %v3002 = vadd.f32 0.0, %v3001
        %v3003 = vpop.f32.mrf.mxu0
        %3004 = vmatprep.mubr.bf16.mxu0 0
        %3005 = vmatmul.mubr.bf16.gmra.mxu0 %v2856
        %v3006 = vpop.f32.mrf.mxu0
        %v3007 = vadd.f32 0.0, %v3006
        %v3008 = vpop.f32.mrf.mxu0
        %v3009 = vpop.f32.mrf.mxu0
        %v3010 = vadd.f32 0.0, %v3009
        %v3011 = vpop.f32.mrf.mxu0
        %3012 = vmatprep.mubr.bf16.mxu0 0
        %3013 = vmatmul.mubr.bf16.gmra.mxu0 %v2857
        %v3014 = vpop.f32.mrf.mxu0
        %v3015 = vadd.f32 0.0, %v3014
        %v3016 = vpop.f32.mrf.mxu0
        %v3017 = vpop.f32.mrf.mxu0
        %v3018 = vadd.f32 0.0, %v3017
        %v3019 = vpop.f32.mrf.mxu0
        %3020 = vmatprep.mubr.bf16.mxu0 0
        %3021 = vmatmul.mubr.bf16.gmra.mxu0 %v2858
        %v3022 = vpop.f32.mrf.mxu0
        %v3023 = vadd.f32 0.0, %v3022
        %v3024 = vpop.f32.mrf.mxu0
        %v3025 = vpop.f32.mrf.mxu0
        %v3026 = vadd.f32 0.0, %v3025
        %v3027 = vpop.f32.mrf.mxu0
        %3028 = vmatprep.mubr.bf16.mxu0 0
        %3029 = vmatmul.mubr.bf16.gmra.mxu0 %v2859
        %v3030 = vpop.f32.mrf.mxu0
        %v3031 = vadd.f32 0.0, %v3030
        %v3032 = vpop.f32.mrf.mxu0
        %v3033 = vpop.f32.mrf.mxu0
        %v3034 = vadd.f32 0.0, %v3033
        %v3035 = vpop.f32.mrf.mxu0
        %3036 = vmatprep.mubr.bf16.mxu0 0
        %3037 = vmatmul.mubr.bf16.gmra.mxu0 %v2860
        %v3038 = vpop.f32.mrf.mxu0
        %v3039 = vadd.f32 0.0, %v3038
        %v3040 = vpop.f32.mrf.mxu0
        %v3041 = vpop.f32.mrf.mxu0
        %v3042 = vadd.f32 0.0, %v3041
        %v3043 = vpop.f32.mrf.mxu0
        %3044 = vmatprep.mubr.bf16.mxu0 0
        %3045 = vmatmul.mubr.bf16.gmra.mxu0 %v2861
        %v3046 = vpop.f32.mrf.mxu0
        %v3047 = vadd.f32 0.0, %v3046
        %v3048 = vpop.f32.mrf.mxu0
        %v3049 = vpop.f32.mrf.mxu0
        %v3050 = vadd.f32 0.0, %v3049
        %v3051 = vpop.f32.mrf.mxu0
        %3052 = vmatprep.mubr.bf16.mxu0 0
        %3053 = vmatmul.mubr.bf16.gmra.mxu0 %v2862
        %v3054 = vpop.f32.mrf.mxu0
        %v3055 = vadd.f32 0.0, %v3054
        %v3056 = vpop.f32.mrf.mxu0
        %v3057 = vpop.f32.mrf.mxu0
        %v3058 = vadd.f32 0.0, %v3057
        %v3059 = vpop.f32.mrf.mxu0
        %3060 = vmatprep.mubr.bf16.mxu0 0
        %3061 = vmatmul.mubr.bf16.gmra.mxu0 %v2863
        %v3062 = vpop.f32.mrf.mxu0
        %v3063 = vadd.f32 0.0, %v3062
        %v3064 = vpop.f32.mrf.mxu0
        %v3065 = vpop.f32.mrf.mxu0
        %v3066 = vadd.f32 0.0, %v3065
        %v3067 = vpop.f32.mrf.mxu0
        %3068 = vmatprep.mubr.bf16.mxu0 0
        %3069 = vmatmul.mubr.bf16.gmra.mxu0 %v2864
        %v3070 = vpop.f32.mrf.mxu0
        %v3071 = vadd.f32 0.0, %v3070
        %v3072 = vpop.f32.mrf.mxu0
        %v3073 = vpop.f32.mrf.mxu0
        %v3074 = vadd.f32 0.0, %v3073
        %v3075 = vpop.f32.mrf.mxu0
        %3076 = vmatprep.mubr.bf16.mxu0 0
        %3077 = vmatmul.mubr.bf16.gmra.mxu0 %v2865
        %v3078 = vpop.f32.mrf.mxu0
        %v3079 = vadd.f32 0.0, %v3078
        %v3080 = vpop.f32.mrf.mxu0
        %v3081 = vpop.f32.mrf.mxu0
        %v3082 = vadd.f32 0.0, %v3081
        %v3083 = vpop.f32.mrf.mxu0
        %3084 = vmatprep.mubr.bf16.mxu0 0
        %3085 = vmatmul.mubr.bf16.gmra.mxu0 %v2866
        %v3086 = vpop.f32.mrf.mxu0
        %v3087 = vadd.f32 0.0, %v3086
        %v3088 = vpop.f32.mrf.mxu0
        %v3089 = vpop.f32.mrf.mxu0
        %v3090 = vadd.f32 0.0, %v3089
        %v3091 = vpop.f32.mrf.mxu0
        %3092 = vdwg.mxu0
        %v3093 = vld [vmem:[#allocation2] sm:$0xff]
        %v3094 = vld [vmem:[#allocation2 + $0x8] sm:$0xff]
        %v3095 = vld [vmem:[#allocation2 + $0x10] sm:$0xff]
        %v3096 = vld [vmem:[#allocation2 + $0x18] sm:$0xff]
        %v3097 = vld [vmem:[#allocation2 + $0x20] sm:$0xff]
        %v3098 = vld [vmem:[#allocation2 + $0x28] sm:$0xff]
        %v3099 = vld [vmem:[#allocation2 + $0x30] sm:$0xff]
        %v3100 = vld [vmem:[#allocation2 + $0x38] sm:$0xff]
        %v3101 = vld [vmem:[#allocation2 + $0x40] sm:$0xff]
        %v3102 = vld [vmem:[#allocation2 + $0x48] sm:$0xff]
        %v3103 = vld [vmem:[#allocation2 + $0x50] sm:$0xff]
        %v3104 = vld [vmem:[#allocation2 + $0x58] sm:$0xff]
        %v3105 = vld [vmem:[#allocation2 + $0x60] sm:$0xff]
        %v3106 = vld [vmem:[#allocation2 + $0x68] sm:$0xff]
        %v3107 = vld [vmem:[#allocation2 + $0x70] sm:$0xff]
        %v3108 = vld [vmem:[#allocation2 + $0x78] sm:$0xff]
        %v3109 = vld [vmem:[#allocation2 + $0x80] sm:$0xff]
        %v3110 = vld [vmem:[#allocation2 + $0x88] sm:$0xff]
        %v3111 = vld [vmem:[#allocation2 + $0x90] sm:$0xff]
        %v3112 = vld [vmem:[#allocation2 + $0x98] sm:$0xff]
        %v3113 = vld [vmem:[#allocation2 + $0xa0] sm:$0xff]
        %v3114 = vld [vmem:[#allocation2 + $0xa8] sm:$0xff]
        %v3115 = vld [vmem:[#allocation2 + $0xb0] sm:$0xff]
        %v3116 = vld [vmem:[#allocation2 + $0xb8] sm:$0xff]
        %v3117 = vld [vmem:[#allocation2 + $0xc0] sm:$0xff]
        %v3118 = vld [vmem:[#allocation2 + $0xc8] sm:$0xff]
        %v3119 = vld [vmem:[#allocation2 + $0xd0] sm:$0xff]
        %v3120 = vld [vmem:[#allocation2 + $0xd8] sm:$0xff]
        %v3121 = vld [vmem:[#allocation2 + $0xe0] sm:$0xff]
        %v3122 = vld [vmem:[#allocation2 + $0xe8] sm:$0xff]
        %v3123 = vld [vmem:[#allocation2 + $0xf0] sm:$0xff]
        %v3124 = vld [vmem:[#allocation2 + $0xf8] sm:$0xff]
        %v3125 = vadd.f32 %v3093, %v2967
        %v3126 = vadd.f32 %v3094, %v2970
        %v3127 = vadd.f32 %v3095, %v2975
        %v3128 = vadd.f32 %v3096, %v2978
        %v3129 = vadd.f32 %v3097, %v2983
        %v3130 = vadd.f32 %v3098, %v2986
        %v3131 = vadd.f32 %v3099, %v2991
        %v3132 = vadd.f32 %v3100, %v2994
        %v3133 = vadd.f32 %v3101, %v2999
        %v3134 = vadd.f32 %v3102, %v3002
        %v3135 = vadd.f32 %v3103, %v3007
        %v3136 = vadd.f32 %v3104, %v3010
        %v3137 = vadd.f32 %v3105, %v3015
        %v3138 = vadd.f32 %v3106, %v3018
        %v3139 = vadd.f32 %v3107, %v3023
        %v3140 = vadd.f32 %v3108, %v3026
        %v3141 = vadd.f32 %v3109, %v3031
        %v3142 = vadd.f32 %v3110, %v3034
        %v3143 = vadd.f32 %v3111, %v3039
        %v3144 = vadd.f32 %v3112, %v3042
        %v3145 = vadd.f32 %v3113, %v3047
        %v3146 = vadd.f32 %v3114, %v3050
        %v3147 = vadd.f32 %v3115, %v3055
        %v3148 = vadd.f32 %v3116, %v3058
        %v3149 = vadd.f32 %v3117, %v3063
        %v3150 = vadd.f32 %v3118, %v3066
        %v3151 = vadd.f32 %v3119, %v3071
        %v3152 = vadd.f32 %v3120, %v3074
        %v3153 = vadd.f32 %v3121, %v3079
        %v3154 = vadd.f32 %v3122, %v3082
        %v3155 = vadd.f32 %v3123, %v3087
        %v3156 = vadd.f32 %v3124, %v3090
        %3157 = vst [vmem:[#allocation2] sm:$0xff] %v3125
        %3158 = vst [vmem:[#allocation2 + $0x8] sm:$0xff] %v3126
        %3159 = vst [vmem:[#allocation2 + $0x10] sm:$0xff] %v3127
        %3160 = vst [vmem:[#allocation2 + $0x18] sm:$0xff] %v3128
        %3161 = vst [vmem:[#allocation2 + $0x20] sm:$0xff] %v3129
        %3162 = vst [vmem:[#allocation2 + $0x28] sm:$0xff] %v3130
        %3163 = vst [vmem:[#allocation2 + $0x30] sm:$0xff] %v3131
        %3164 = vst [vmem:[#allocation2 + $0x38] sm:$0xff] %v3132
        %3165 = vst [vmem:[#allocation2 + $0x40] sm:$0xff] %v3133
        %3166 = vst [vmem:[#allocation2 + $0x48] sm:$0xff] %v3134
        %3167 = vst [vmem:[#allocation2 + $0x50] sm:$0xff] %v3135
        %3168 = vst [vmem:[#allocation2 + $0x58] sm:$0xff] %v3136
        %3169 = vst [vmem:[#allocation2 + $0x60] sm:$0xff] %v3137
        %3170 = vst [vmem:[#allocation2 + $0x68] sm:$0xff] %v3138
        %3171 = vst [vmem:[#allocation2 + $0x70] sm:$0xff] %v3139
        %3172 = vst [vmem:[#allocation2 + $0x78] sm:$0xff] %v3140
        %3173 = vst [vmem:[#allocation2 + $0x80] sm:$0xff] %v3141
        %3174 = vst [vmem:[#allocation2 + $0x88] sm:$0xff] %v3142
        %3175 = vst [vmem:[#allocation2 + $0x90] sm:$0xff] %v3143
        %3176 = vst [vmem:[#allocation2 + $0x98] sm:$0xff] %v3144
        %3177 = vst [vmem:[#allocation2 + $0xa0] sm:$0xff] %v3145
        %3178 = vst [vmem:[#allocation2 + $0xa8] sm:$0xff] %v3146
        %3179 = vst [vmem:[#allocation2 + $0xb0] sm:$0xff] %v3147
        %3180 = vst [vmem:[#allocation2 + $0xb8] sm:$0xff] %v3148
        %3181 = vst [vmem:[#allocation2 + $0xc0] sm:$0xff] %v3149
        %3182 = vst [vmem:[#allocation2 + $0xc8] sm:$0xff] %v3150
        %3183 = vst [vmem:[#allocation2 + $0xd0] sm:$0xff] %v3151
        %3184 = vst [vmem:[#allocation2 + $0xd8] sm:$0xff] %v3152
        %3185 = vst [vmem:[#allocation2 + $0xe0] sm:$0xff] %v3153
        %3186 = vst [vmem:[#allocation2 + $0xe8] sm:$0xff] %v3154
        %3187 = vst [vmem:[#allocation2 + $0xf0] sm:$0xff] %v3155
        %3188 = vst [vmem:[#allocation2 + $0xf8] sm:$0xff] %v3156
        %v3189 = vld [vmem:[%s2448 + $0x2] sm:$0xff]
        %v3190 = vld [vmem:[%s2448 + $0xa] sm:$0xff]
        %v3191 = vld [vmem:[%s2448 + $0x1a] sm:$0xff]
        %v3192 = vld [vmem:[%s2448 + $0x22] sm:$0xff]
        %v3193 = vld [vmem:[%s2448 + $0x32] sm:$0xff]
        %v3194 = vld [vmem:[%s2448 + $0x3a] sm:$0xff]
        %v3195 = vld [vmem:[%s2448 + $0x4a] sm:$0xff]
        %v3196 = vld [vmem:[%s2448 + $0x52] sm:$0xff]
        %v3197 = vld [vmem:[%s2448 + $0x62] sm:$0xff]
        %v3198 = vld [vmem:[%s2448 + $0x6a] sm:$0xff]
        %v3199 = vld [vmem:[%s2448 + $0x7a] sm:$0xff]
        %v3200 = vld [vmem:[%s2448 + $0x82] sm:$0xff]
        %v3201 = vld [vmem:[%s2448 + $0x92] sm:$0xff]
        %v3202 = vld [vmem:[%s2448 + $0x9a] sm:$0xff]
        %v3203 = vld [vmem:[%s2448 + $0xaa] sm:$0xff]
        %v3204 = vld [vmem:[%s2448 + $0xb2] sm:$0xff]
        %v3205 = vld [vmem:[%s2448 + $0xc2] sm:$0xff]
        %v3206 = vld [vmem:[%s2448 + $0xca] sm:$0xff]
        %v3207 = vld [vmem:[%s2448 + $0xda] sm:$0xff]
        %v3208 = vld [vmem:[%s2448 + $0xe2] sm:$0xff]
        %v3209 = vld [vmem:[%s2448 + $0xf2] sm:$0xff]
        %v3210 = vld [vmem:[%s2448 + $0xfa] sm:$0xff]
        %v3211 = vld [vmem:[%s2448 + $0x10a] sm:$0xff]
        %v3212 = vld [vmem:[%s2448 + $0x112] sm:$0xff]
        %v3213 = vld [vmem:[%s2448 + $0x122] sm:$0xff]
        %v3214 = vld [vmem:[%s2448 + $0x12a] sm:$0xff]
        %v3215 = vld [vmem:[%s2448 + $0x13a] sm:$0xff]
        %v3216 = vld [vmem:[%s2448 + $0x142] sm:$0xff]
        %v3217 = vld [vmem:[%s2448 + $0x152] sm:$0xff]
        %v3218 = vld [vmem:[%s2448 + $0x15a] sm:$0xff]
        %v3219 = vld [vmem:[%s2448 + $0x16a] sm:$0xff]
        %v3220 = vld [vmem:[%s2448 + $0x172] sm:$0xff]
        %v3221 = vpack.c.bf16 %v3190, %v3189
        %v3222 = vpack.c.bf16 %v3192, %v3191
        %v3223 = vpack.c.bf16 %v3194, %v3193
        %v3224 = vpack.c.bf16 %v3196, %v3195
        %v3225 = vpack.c.bf16 %v3198, %v3197
        %v3226 = vpack.c.bf16 %v3200, %v3199
        %v3227 = vpack.c.bf16 %v3202, %v3201
        %v3228 = vpack.c.bf16 %v3204, %v3203
        %v3229 = vpack.c.bf16 %v3206, %v3205
        %v3230 = vpack.c.bf16 %v3208, %v3207
        %v3231 = vpack.c.bf16 %v3210, %v3209
        %v3232 = vpack.c.bf16 %v3212, %v3211
        %v3233 = vpack.c.bf16 %v3214, %v3213
        %v3234 = vpack.c.bf16 %v3216, %v3215
        %v3235 = vpack.c.bf16 %v3218, %v3217
        %v3236 = vpack.c.bf16 %v3220, %v3219
        %s3237 = scalar_lea.vmem %s1, 512
        %v3238 = vld [vmem:[%s3237] sm:$0xf]
        %v3239 = vld [vmem:[%s3237 + $0x4] sm:$0xf]
        %v3240 = vld [vmem:[%s3237 + $0x8] sm:$0xf]
        %v3241 = vld [vmem:[%s3237 + $0xc] sm:$0xf]
        %v3242 = vld [vmem:[%s3237 + $0x10] sm:$0xf]
        %v3243 = vld [vmem:[%s3237 + $0x14] sm:$0xf]
        %v3244 = vld [vmem:[%s3237 + $0x18] sm:$0xf]
        %v3245 = vld [vmem:[%s3237 + $0x1c] sm:$0xf]
        %v3246 = vld [vmem:[%s3237 + $0x20] sm:$0xf]
        %v3247 = vld [vmem:[%s3237 + $0x24] sm:$0xf]
        %v3248 = vld [vmem:[%s3237 + $0x28] sm:$0xf]
        %v3249 = vld [vmem:[%s3237 + $0x2c] sm:$0xf]
        %v3250 = vld [vmem:[%s3237 + $0x30] sm:$0xf]
        %v3251 = vld [vmem:[%s3237 + $0x34] sm:$0xf]
        %v3252 = vld [vmem:[%s3237 + $0x38] sm:$0xf]
        %v3253 = vld [vmem:[%s3237 + $0x3c] sm:$0xf]
        %v3270 = vunpack.c.l.b16 %v3238
        %v3271 = vunpack.c.l.b16 %v3239
        %v3272 = vunpack.c.l.b16 %v3240
        %v3273 = vunpack.c.l.b16 %v3241
        %v3274 = vunpack.c.l.b16 %v3242
        %v3275 = vunpack.c.l.b16 %v3243
        %v3276 = vunpack.c.l.b16 %v3244
        %v3277 = vunpack.c.l.b16 %v3245
        %v3278 = vunpack.c.l.b16 %v3246
        %v3279 = vunpack.c.l.b16 %v3247
        %v3280 = vunpack.c.l.b16 %v3248
        %v3281 = vunpack.c.l.b16 %v3249
        %v3282 = vunpack.c.l.b16 %v3250
        %v3283 = vunpack.c.l.b16 %v3251
        %v3284 = vunpack.c.l.b16 %v3252
        %v3285 = vunpack.c.l.b16 %v3253
        %v3286 = vpack.c.b16 %v3271, %v3270
        %v3287 = vpack.c.b16 %v3273, %v3272
        %v3288 = vpack.c.b16 %v3275, %v3274
        %v3289 = vpack.c.b16 %v3277, %v3276
        %v3290 = vpack.c.b16 %v3279, %v3278
        %v3291 = vpack.c.b16 %v3281, %v3280
        %v3292 = vpack.c.b16 %v3283, %v3282
        %v3293 = vpack.c.b16 %v3285, %v3284
        %3302 = vmatprep.subr.bf16.mxu0 0
        %3303 = vmatpush1.bf16.msra.mxu0 %v3293
        %3304 = vmatprep.subr.bf16.mxu0 0
        %3305 = vmatpush1.bf16.msra.mxu0 %v3292
        %3306 = vmatprep.subr.bf16.mxu0 0
        %3307 = vmatpush1.bf16.msra.mxu0 %v3291
        %3308 = vmatprep.subr.bf16.mxu0 0
        %3309 = vmatpush1.bf16.msra.mxu0 %v3290
        %3310 = vmatprep.subr.bf16.mxu0 0
        %3311 = vmatpush1.bf16.msra.mxu0 %v3289
        %3312 = vmatprep.subr.bf16.mxu0 0
        %3313 = vmatpush1.bf16.msra.mxu0 %v3288
        %3314 = vmatprep.subr.bf16.mxu0 0
        %3315 = vmatpush1.bf16.msra.mxu0 %v3287
        %3316 = vmatprep.subr.bf16.mxu0 0
        %3317 = vmatpush1.bf16.msra.mxu0 %v3286
        %3318 = vmatprep.subr.bf16.mxu0 0
        %3319 = vmatpush2.bf16.msra.mxu0 0
        %3320 = vmatprep.subr.bf16.mxu0 0
        %3321 = vmatpush2.bf16.msra.mxu0 0
        %3322 = vmatprep.subr.bf16.mxu0 0
        %3323 = vmatpush2.bf16.msra.mxu0 0
        %3324 = vmatprep.subr.bf16.mxu0 0
        %3325 = vmatpush2.bf16.msra.mxu0 0
        %3326 = vmatprep.subr.bf16.mxu0 0
        %3327 = vmatpush2.bf16.msra.mxu0 0
        %3328 = vmatprep.subr.bf16.mxu0 0
        %3329 = vmatpush2.bf16.msra.mxu0 0
        %3330 = vmatprep.subr.bf16.mxu0 0
        %3331 = vmatpush2.bf16.msra.mxu0 0
        %3332 = vmatprep.subr.bf16.mxu0 0
        %3333 = vmatpush2.bf16.msra.mxu0 0
        %3334 = vmatprep.mubr.bf16.mxu0 0
        %3335 = vmatmul.mubr.bf16.gmra.mxu0 %v3221
        %v3336 = vpop.f32.mrf.mxu0
        %v3337 = vadd.f32 0.0, %v3336
        %v3338 = vpop.f32.mrf.mxu0
        %v3339 = vpop.f32.mrf.mxu0
        %v3340 = vadd.f32 0.0, %v3339
        %v3341 = vpop.f32.mrf.mxu0
        %3342 = vmatprep.mubr.bf16.mxu0 0
        %3343 = vmatmul.mubr.bf16.gmra.mxu0 %v3222
        %v3344 = vpop.f32.mrf.mxu0
        %v3345 = vadd.f32 0.0, %v3344
        %v3346 = vpop.f32.mrf.mxu0
        %v3347 = vpop.f32.mrf.mxu0
        %v3348 = vadd.f32 0.0, %v3347
        %v3349 = vpop.f32.mrf.mxu0
        %3350 = vmatprep.mubr.bf16.mxu0 0
        %3351 = vmatmul.mubr.bf16.gmra.mxu0 %v3223
        %v3352 = vpop.f32.mrf.mxu0
        %v3353 = vadd.f32 0.0, %v3352
        %v3354 = vpop.f32.mrf.mxu0
        %v3355 = vpop.f32.mrf.mxu0
        %v3356 = vadd.f32 0.0, %v3355
        %v3357 = vpop.f32.mrf.mxu0
        %3358 = vmatprep.mubr.bf16.mxu0 0
        %3359 = vmatmul.mubr.bf16.gmra.mxu0 %v3224
        %v3360 = vpop.f32.mrf.mxu0
        %v3361 = vadd.f32 0.0, %v3360
        %v3362 = vpop.f32.mrf.mxu0
        %v3363 = vpop.f32.mrf.mxu0
        %v3364 = vadd.f32 0.0, %v3363
        %v3365 = vpop.f32.mrf.mxu0
        %3366 = vmatprep.mubr.bf16.mxu0 0
        %3367 = vmatmul.mubr.bf16.gmra.mxu0 %v3225
        %v3368 = vpop.f32.mrf.mxu0
        %v3369 = vadd.f32 0.0, %v3368
        %v3370 = vpop.f32.mrf.mxu0
        %v3371 = vpop.f32.mrf.mxu0
        %v3372 = vadd.f32 0.0, %v3371
        %v3373 = vpop.f32.mrf.mxu0
        %3374 = vmatprep.mubr.bf16.mxu0 0
        %3375 = vmatmul.mubr.bf16.gmra.mxu0 %v3226
        %v3376 = vpop.f32.mrf.mxu0
        %v3377 = vadd.f32 0.0, %v3376
        %v3378 = vpop.f32.mrf.mxu0
        %v3379 = vpop.f32.mrf.mxu0
        %v3380 = vadd.f32 0.0, %v3379
        %v3381 = vpop.f32.mrf.mxu0
        %3382 = vmatprep.mubr.bf16.mxu0 0
        %3383 = vmatmul.mubr.bf16.gmra.mxu0 %v3227
        %v3384 = vpop.f32.mrf.mxu0
        %v3385 = vadd.f32 0.0, %v3384
        %v3386 = vpop.f32.mrf.mxu0
        %v3387 = vpop.f32.mrf.mxu0
        %v3388 = vadd.f32 0.0, %v3387
        %v3389 = vpop.f32.mrf.mxu0
        %3390 = vmatprep.mubr.bf16.mxu0 0
        %3391 = vmatmul.mubr.bf16.gmra.mxu0 %v3228
        %v3392 = vpop.f32.mrf.mxu0
        %v3393 = vadd.f32 0.0, %v3392
        %v3394 = vpop.f32.mrf.mxu0
        %v3395 = vpop.f32.mrf.mxu0
        %v3396 = vadd.f32 0.0, %v3395
        %v3397 = vpop.f32.mrf.mxu0
        %3398 = vmatprep.mubr.bf16.mxu0 0
        %3399 = vmatmul.mubr.bf16.gmra.mxu0 %v3229
        %v3400 = vpop.f32.mrf.mxu0
        %v3401 = vadd.f32 0.0, %v3400
        %v3402 = vpop.f32.mrf.mxu0
        %v3403 = vpop.f32.mrf.mxu0
        %v3404 = vadd.f32 0.0, %v3403
        %v3405 = vpop.f32.mrf.mxu0
        %3406 = vmatprep.mubr.bf16.mxu0 0
        %3407 = vmatmul.mubr.bf16.gmra.mxu0 %v3230
        %v3408 = vpop.f32.mrf.mxu0
        %v3409 = vadd.f32 0.0, %v3408
        %v3410 = vpop.f32.mrf.mxu0
        %v3411 = vpop.f32.mrf.mxu0
        %v3412 = vadd.f32 0.0, %v3411
        %v3413 = vpop.f32.mrf.mxu0
        %3414 = vmatprep.mubr.bf16.mxu0 0
        %3415 = vmatmul.mubr.bf16.gmra.mxu0 %v3231
        %v3416 = vpop.f32.mrf.mxu0
        %v3417 = vadd.f32 0.0, %v3416
        %v3418 = vpop.f32.mrf.mxu0
        %v3419 = vpop.f32.mrf.mxu0
        %v3420 = vadd.f32 0.0, %v3419
        %v3421 = vpop.f32.mrf.mxu0
        %3422 = vmatprep.mubr.bf16.mxu0 0
        %3423 = vmatmul.mubr.bf16.gmra.mxu0 %v3232
        %v3424 = vpop.f32.mrf.mxu0
        %v3425 = vadd.f32 0.0, %v3424
        %v3426 = vpop.f32.mrf.mxu0
        %v3427 = vpop.f32.mrf.mxu0
        %v3428 = vadd.f32 0.0, %v3427
        %v3429 = vpop.f32.mrf.mxu0
        %3430 = vmatprep.mubr.bf16.mxu0 0
        %3431 = vmatmul.mubr.bf16.gmra.mxu0 %v3233
        %v3432 = vpop.f32.mrf.mxu0
        %v3433 = vadd.f32 0.0, %v3432
        %v3434 = vpop.f32.mrf.mxu0
        %v3435 = vpop.f32.mrf.mxu0
        %v3436 = vadd.f32 0.0, %v3435
        %v3437 = vpop.f32.mrf.mxu0
        %3438 = vmatprep.mubr.bf16.mxu0 0
        %3439 = vmatmul.mubr.bf16.gmra.mxu0 %v3234
        %v3440 = vpop.f32.mrf.mxu0
        %v3441 = vadd.f32 0.0, %v3440
        %v3442 = vpop.f32.mrf.mxu0
        %v3443 = vpop.f32.mrf.mxu0
        %v3444 = vadd.f32 0.0, %v3443
        %v3445 = vpop.f32.mrf.mxu0
        %3446 = vmatprep.mubr.bf16.mxu0 0
        %3447 = vmatmul.mubr.bf16.gmra.mxu0 %v3235
        %v3448 = vpop.f32.mrf.mxu0
        %v3449 = vadd.f32 0.0, %v3448
        %v3450 = vpop.f32.mrf.mxu0
        %v3451 = vpop.f32.mrf.mxu0
        %v3452 = vadd.f32 0.0, %v3451
        %v3453 = vpop.f32.mrf.mxu0
        %3454 = vmatprep.mubr.bf16.mxu0 0
        %3455 = vmatmul.mubr.bf16.gmra.mxu0 %v3236
        %v3456 = vpop.f32.mrf.mxu0
        %v3457 = vadd.f32 0.0, %v3456
        %v3458 = vpop.f32.mrf.mxu0
        %v3459 = vpop.f32.mrf.mxu0
        %v3460 = vadd.f32 0.0, %v3459
        %v3461 = vpop.f32.mrf.mxu0
        %3462 = vdwg.mxu0
        %v3463 = vld [vmem:[#allocation2] sm:$0xff]
        %v3464 = vld [vmem:[#allocation2 + $0x8] sm:$0xff]
        %v3465 = vld [vmem:[#allocation2 + $0x10] sm:$0xff]
        %v3466 = vld [vmem:[#allocation2 + $0x18] sm:$0xff]
        %v3467 = vld [vmem:[#allocation2 + $0x20] sm:$0xff]
        %v3468 = vld [vmem:[#allocation2 + $0x28] sm:$0xff]
        %v3469 = vld [vmem:[#allocation2 + $0x30] sm:$0xff]
        %v3470 = vld [vmem:[#allocation2 + $0x38] sm:$0xff]
        %v3471 = vld [vmem:[#allocation2 + $0x40] sm:$0xff]
        %v3472 = vld [vmem:[#allocation2 + $0x48] sm:$0xff]
        %v3473 = vld [vmem:[#allocation2 + $0x50] sm:$0xff]
        %v3474 = vld [vmem:[#allocation2 + $0x58] sm:$0xff]
        %v3475 = vld [vmem:[#allocation2 + $0x60] sm:$0xff]
        %v3476 = vld [vmem:[#allocation2 + $0x68] sm:$0xff]
        %v3477 = vld [vmem:[#allocation2 + $0x70] sm:$0xff]
        %v3478 = vld [vmem:[#allocation2 + $0x78] sm:$0xff]
        %v3479 = vld [vmem:[#allocation2 + $0x80] sm:$0xff]
        %v3480 = vld [vmem:[#allocation2 + $0x88] sm:$0xff]
        %v3481 = vld [vmem:[#allocation2 + $0x90] sm:$0xff]
        %v3482 = vld [vmem:[#allocation2 + $0x98] sm:$0xff]
        %v3483 = vld [vmem:[#allocation2 + $0xa0] sm:$0xff]
        %v3484 = vld [vmem:[#allocation2 + $0xa8] sm:$0xff]
        %v3485 = vld [vmem:[#allocation2 + $0xb0] sm:$0xff]
        %v3486 = vld [vmem:[#allocation2 + $0xb8] sm:$0xff]
        %v3487 = vld [vmem:[#allocation2 + $0xc0] sm:$0xff]
        %v3488 = vld [vmem:[#allocation2 + $0xc8] sm:$0xff]
        %v3489 = vld [vmem:[#allocation2 + $0xd0] sm:$0xff]
        %v3490 = vld [vmem:[#allocation2 + $0xd8] sm:$0xff]
        %v3491 = vld [vmem:[#allocation2 + $0xe0] sm:$0xff]
        %v3492 = vld [vmem:[#allocation2 + $0xe8] sm:$0xff]
        %v3493 = vld [vmem:[#allocation2 + $0xf0] sm:$0xff]
        %v3494 = vld [vmem:[#allocation2 + $0xf8] sm:$0xff]
        %v3495 = vadd.f32 %v3463, %v3337
        %v3496 = vadd.f32 %v3464, %v3340
        %v3497 = vadd.f32 %v3465, %v3345
        %v3498 = vadd.f32 %v3466, %v3348
        %v3499 = vadd.f32 %v3467, %v3353
        %v3500 = vadd.f32 %v3468, %v3356
        %v3501 = vadd.f32 %v3469, %v3361
        %v3502 = vadd.f32 %v3470, %v3364
        %v3503 = vadd.f32 %v3471, %v3369
        %v3504 = vadd.f32 %v3472, %v3372
        %v3505 = vadd.f32 %v3473, %v3377
        %v3506 = vadd.f32 %v3474, %v3380
        %v3507 = vadd.f32 %v3475, %v3385
        %v3508 = vadd.f32 %v3476, %v3388
        %v3509 = vadd.f32 %v3477, %v3393
        %v3510 = vadd.f32 %v3478, %v3396
        %v3511 = vadd.f32 %v3479, %v3401
        %v3512 = vadd.f32 %v3480, %v3404
        %v3513 = vadd.f32 %v3481, %v3409
        %v3514 = vadd.f32 %v3482, %v3412
        %v3515 = vadd.f32 %v3483, %v3417
        %v3516 = vadd.f32 %v3484, %v3420
        %v3517 = vadd.f32 %v3485, %v3425
        %v3518 = vadd.f32 %v3486, %v3428
        %v3519 = vadd.f32 %v3487, %v3433
        %v3520 = vadd.f32 %v3488, %v3436
        %v3521 = vadd.f32 %v3489, %v3441
        %v3522 = vadd.f32 %v3490, %v3444
        %v3523 = vadd.f32 %v3491, %v3449
        %v3524 = vadd.f32 %v3492, %v3452
        %v3525 = vadd.f32 %v3493, %v3457
        %v3526 = vadd.f32 %v3494, %v3460
        %3527 = vst [vmem:[#allocation2] sm:$0xff] %v3495
        %3528 = vst [vmem:[#allocation2 + $0x8] sm:$0xff] %v3496
        %3529 = vst [vmem:[#allocation2 + $0x10] sm:$0xff] %v3497
        %3530 = vst [vmem:[#allocation2 + $0x18] sm:$0xff] %v3498
        %3531 = vst [vmem:[#allocation2 + $0x20] sm:$0xff] %v3499
        %3532 = vst [vmem:[#allocation2 + $0x28] sm:$0xff] %v3500
        %3533 = vst [vmem:[#allocation2 + $0x30] sm:$0xff] %v3501
        %3534 = vst [vmem:[#allocation2 + $0x38] sm:$0xff] %v3502
        %3535 = vst [vmem:[#allocation2 + $0x40] sm:$0xff] %v3503
        %3536 = vst [vmem:[#allocation2 + $0x48] sm:$0xff] %v3504
        %3537 = vst [vmem:[#allocation2 + $0x50] sm:$0xff] %v3505
        %3538 = vst [vmem:[#allocation2 + $0x58] sm:$0xff] %v3506
        %3539 = vst [vmem:[#allocation2 + $0x60] sm:$0xff] %v3507
        %3540 = vst [vmem:[#allocation2 + $0x68] sm:$0xff] %v3508
        %3541 = vst [vmem:[#allocation2 + $0x70] sm:$0xff] %v3509
        %3542 = vst [vmem:[#allocation2 + $0x78] sm:$0xff] %v3510
        %3543 = vst [vmem:[#allocation2 + $0x80] sm:$0xff] %v3511
        %3544 = vst [vmem:[#allocation2 + $0x88] sm:$0xff] %v3512
        %3545 = vst [vmem:[#allocation2 + $0x90] sm:$0xff] %v3513
        %3546 = vst [vmem:[#allocation2 + $0x98] sm:$0xff] %v3514
        %3547 = vst [vmem:[#allocation2 + $0xa0] sm:$0xff] %v3515
        %3548 = vst [vmem:[#allocation2 + $0xa8] sm:$0xff] %v3516
        %3549 = vst [vmem:[#allocation2 + $0xb0] sm:$0xff] %v3517
        %3550 = vst [vmem:[#allocation2 + $0xb8] sm:$0xff] %v3518
        %3551 = vst [vmem:[#allocation2 + $0xc0] sm:$0xff] %v3519
        %3552 = vst [vmem:[#allocation2 + $0xc8] sm:$0xff] %v3520
        %3553 = vst [vmem:[#allocation2 + $0xd0] sm:$0xff] %v3521
        %3554 = vst [vmem:[#allocation2 + $0xd8] sm:$0xff] %v3522
        %3555 = vst [vmem:[#allocation2 + $0xe0] sm:$0xff] %v3523
        %3556 = vst [vmem:[#allocation2 + $0xe8] sm:$0xff] %v3524
        %3557 = vst [vmem:[#allocation2 + $0xf0] sm:$0xff] %v3525
        %3558 = vst [vmem:[#allocation2 + $0xf8] sm:$0xff] %v3526
        %v3559 = vld [vmem:[#allocation2] sm:$0xff]
        %v3560 = vld [vmem:[#allocation2 + $0x8] sm:$0xff]
        %v3561 = vld [vmem:[#allocation2 + $0x10] sm:$0xff]
        %v3562 = vld [vmem:[#allocation2 + $0x18] sm:$0xff]
        %v3563 = vld [vmem:[#allocation2 + $0x20] sm:$0xff]
        %v3564 = vld [vmem:[#allocation2 + $0x28] sm:$0xff]
        %v3565 = vld [vmem:[#allocation2 + $0x30] sm:$0xff]
        %v3566 = vld [vmem:[#allocation2 + $0x38] sm:$0xff]
        %v3567 = vld [vmem:[#allocation2 + $0x40] sm:$0xff]
        %v3568 = vld [vmem:[#allocation2 + $0x48] sm:$0xff]
        %v3569 = vld [vmem:[#allocation2 + $0x50] sm:$0xff]
        %v3570 = vld [vmem:[#allocation2 + $0x58] sm:$0xff]
        %v3571 = vld [vmem:[#allocation2 + $0x60] sm:$0xff]
        %v3572 = vld [vmem:[#allocation2 + $0x68] sm:$0xff]
        %v3573 = vld [vmem:[#allocation2 + $0x70] sm:$0xff]
        %v3574 = vld [vmem:[#allocation2 + $0x78] sm:$0xff]
        %v3575 = vld [vmem:[#allocation2 + $0x80] sm:$0xff]
        %v3576 = vld [vmem:[#allocation2 + $0x88] sm:$0xff]
        %v3577 = vld [vmem:[#allocation2 + $0x90] sm:$0xff]
        %v3578 = vld [vmem:[#allocation2 + $0x98] sm:$0xff]
        %v3579 = vld [vmem:[#allocation2 + $0xa0] sm:$0xff]
        %v3580 = vld [vmem:[#allocation2 + $0xa8] sm:$0xff]
        %v3581 = vld [vmem:[#allocation2 + $0xb0] sm:$0xff]
        %v3582 = vld [vmem:[#allocation2 + $0xb8] sm:$0xff]
        %v3583 = vld [vmem:[#allocation2 + $0xc0] sm:$0xff]
        %v3584 = vld [vmem:[#allocation2 + $0xc8] sm:$0xff]
        %v3585 = vld [vmem:[#allocation2 + $0xd0] sm:$0xff]
        %v3586 = vld [vmem:[#allocation2 + $0xd8] sm:$0xff]
        %v3587 = vld [vmem:[#allocation2 + $0xe0] sm:$0xff]
        %v3588 = vld [vmem:[#allocation2 + $0xe8] sm:$0xff]
        %v3589 = vld [vmem:[#allocation2 + $0xf0] sm:$0xff]
        %v3590 = vld [vmem:[#allocation2 + $0xf8] sm:$0xff]
        %v3591 = vld [vmem:[%s2] sm:$0x1]
        %v3593 = vlaneseq
        %v3594 = vshrl.u32 %v3593, 7
        %v3595 = vsub.s32 0, %v3594
        %v3596 = vrot.slane %v3591, %v3595
        %v3598 = vadd.f32 %v3559, %v3596
        %v3599 = vadd.f32 %v3560, %v3596
        %v3600 = vadd.f32 %v3561, %v3596
        %v3601 = vadd.f32 %v3562, %v3596
        %v3602 = vadd.f32 %v3563, %v3596
        %v3603 = vadd.f32 %v3564, %v3596
        %v3604 = vadd.f32 %v3565, %v3596
        %v3605 = vadd.f32 %v3566, %v3596
        %v3606 = vadd.f32 %v3567, %v3596
        %v3607 = vadd.f32 %v3568, %v3596
        %v3608 = vadd.f32 %v3569, %v3596
        %v3609 = vadd.f32 %v3570, %v3596
        %v3610 = vadd.f32 %v3571, %v3596
        %v3611 = vadd.f32 %v3572, %v3596
        %v3612 = vadd.f32 %v3573, %v3596
        %v3613 = vadd.f32 %v3574, %v3596
        %v3614 = vadd.f32 %v3575, %v3596
        %v3615 = vadd.f32 %v3576, %v3596
        %v3616 = vadd.f32 %v3577, %v3596
        %v3617 = vadd.f32 %v3578, %v3596
        %v3618 = vadd.f32 %v3579, %v3596
        %v3619 = vadd.f32 %v3580, %v3596
        %v3620 = vadd.f32 %v3581, %v3596
        %v3621 = vadd.f32 %v3582, %v3596
        %v3622 = vadd.f32 %v3583, %v3596
        %v3623 = vadd.f32 %v3584, %v3596
        %v3624 = vadd.f32 %v3585, %v3596
        %v3625 = vadd.f32 %v3586, %v3596
        %v3626 = vadd.f32 %v3587, %v3596
        %v3627 = vadd.f32 %v3588, %v3596
        %v3628 = vadd.f32 %v3589, %v3596
        %v3629 = vadd.f32 %v3590, %v3596
        %v3630 = vmax.f32 %v3598, 0.0
        %v3631 = vmax.f32 %v3599, 0.0
        %v3632 = vmax.f32 %v3600, 0.0
        %v3633 = vmax.f32 %v3601, 0.0
        %v3634 = vmax.f32 %v3602, 0.0
        %v3635 = vmax.f32 %v3603, 0.0
        %v3636 = vmax.f32 %v3604, 0.0
        %v3637 = vmax.f32 %v3605, 0.0
        %v3638 = vmax.f32 %v3606, 0.0
        %v3639 = vmax.f32 %v3607, 0.0
        %v3640 = vmax.f32 %v3608, 0.0
        %v3641 = vmax.f32 %v3609, 0.0
        %v3642 = vmax.f32 %v3610, 0.0
        %v3643 = vmax.f32 %v3611, 0.0
        %v3644 = vmax.f32 %v3612, 0.0
        %v3645 = vmax.f32 %v3613, 0.0
        %v3646 = vmax.f32 %v3614, 0.0
        %v3647 = vmax.f32 %v3615, 0.0
        %v3648 = vmax.f32 %v3616, 0.0
        %v3649 = vmax.f32 %v3617, 0.0
        %v3650 = vmax.f32 %v3618, 0.0
        %v3651 = vmax.f32 %v3619, 0.0
        %v3652 = vmax.f32 %v3620, 0.0
        %v3653 = vmax.f32 %v3621, 0.0
        %v3654 = vmax.f32 %v3622, 0.0
        %v3655 = vmax.f32 %v3623, 0.0
        %v3656 = vmax.f32 %v3624, 0.0
        %v3657 = vmax.f32 %v3625, 0.0
        %v3658 = vmax.f32 %v3626, 0.0
        %v3659 = vmax.f32 %v3627, 0.0
        %v3660 = vmax.f32 %v3628, 0.0
        %v3661 = vmax.f32 %v3629, 0.0
        %v3694 = vcombine.high %v3630, %v3630
        %v3696 = vunpack.c.l.s4 1983009808
        %v3697 = vunpack.c.0.s8 %v3696
        %v3698 = vlaneseq
        %v3699 = vshrl.u32 %v3698, 7
        %v3700 = vsub.s32 %v3697, %v3699
        %v3701 = vrot.slane %v3630, %v3700
        %v3703 = vunpack.c.l.s4 1983009808
        %v3704 = vunpack.c.0.s8 %v3703
        %v3705 = vlaneseq
        %v3706 = vshrl.u32 %v3705, 7
        %v3707 = vsub.s32 %v3704, %v3706
        %v3708 = vrot.slane %v3694, %v3707
        %v3709 = vcombine.high %v3701, %v3701
        %v3710 = vcombine.high %v3708, %v3708
        %v3711 = vcombine.high %v3631, %v3631
        %v3713 = vunpack.c.l.s4 1983009808
        %v3714 = vunpack.c.0.s8 %v3713
        %v3715 = vlaneseq
        %v3716 = vshrl.u32 %v3715, 7
        %v3717 = vsub.s32 %v3714, %v3716
        %v3718 = vrot.slane %v3631, %v3717
        %v3720 = vunpack.c.l.s4 1983009808
        %v3721 = vunpack.c.0.s8 %v3720
        %v3722 = vlaneseq
        %v3723 = vshrl.u32 %v3722, 7
        %v3724 = vsub.s32 %v3721, %v3723
        %v3725 = vrot.slane %v3711, %v3724
        %v3726 = vcombine.high %v3718, %v3718
        %v3727 = vcombine.high %v3725, %v3725
        %v3728 = vcombine.high %v3632, %v3632
        %v3730 = vunpack.c.l.s4 1983009808
        %v3731 = vunpack.c.0.s8 %v3730
        %v3732 = vlaneseq
        %v3733 = vshrl.u32 %v3732, 7
        %v3734 = vsub.s32 %v3731, %v3733
        %v3735 = vrot.slane %v3632, %v3734
        %v3737 = vunpack.c.l.s4 1983009808
        %v3738 = vunpack.c.0.s8 %v3737
        %v3739 = vlaneseq
        %v3740 = vshrl.u32 %v3739, 7
        %v3741 = vsub.s32 %v3738, %v3740
        %v3742 = vrot.slane %v3728, %v3741
        %v3743 = vcombine.high %v3735, %v3735
        %v3744 = vcombine.high %v3742, %v3742
        %v3745 = vcombine.high %v3633, %v3633
        %v3747 = vunpack.c.l.s4 1983009808
        %v3748 = vunpack.c.0.s8 %v3747
        %v3749 = vlaneseq
        %v3750 = vshrl.u32 %v3749, 7
        %v3751 = vsub.s32 %v3748, %v3750
        %v3752 = vrot.slane %v3633, %v3751
        %v3754 = vunpack.c.l.s4 1983009808
        %v3755 = vunpack.c.0.s8 %v3754
        %v3756 = vlaneseq
        %v3757 = vshrl.u32 %v3756, 7
        %v3758 = vsub.s32 %v3755, %v3757
        %v3759 = vrot.slane %v3745, %v3758
        %v3760 = vcombine.high %v3752, %v3752
        %v3761 = vcombine.high %v3759, %v3759
        %v3762 = vcombine.high %v3634, %v3634
        %v3764 = vunpack.c.l.s4 1983009808
        %v3765 = vunpack.c.0.s8 %v3764
        %v3766 = vlaneseq
        %v3767 = vshrl.u32 %v3766, 7
        %v3768 = vsub.s32 %v3765, %v3767
        %v3769 = vrot.slane %v3634, %v3768
        %v3771 = vunpack.c.l.s4 1983009808
        %v3772 = vunpack.c.0.s8 %v3771
        %v3773 = vlaneseq
        %v3774 = vshrl.u32 %v3773, 7
        %v3775 = vsub.s32 %v3772, %v3774
        %v3776 = vrot.slane %v3762, %v3775
        %v3777 = vcombine.high %v3769, %v3769
        %v3778 = vcombine.high %v3776, %v3776
        %v3779 = vcombine.high %v3635, %v3635
        %v3781 = vunpack.c.l.s4 1983009808
        %v3782 = vunpack.c.0.s8 %v3781
        %v3783 = vlaneseq
        %v3784 = vshrl.u32 %v3783, 7
        %v3785 = vsub.s32 %v3782, %v3784
        %v3786 = vrot.slane %v3635, %v3785
        %v3788 = vunpack.c.l.s4 1983009808
        %v3789 = vunpack.c.0.s8 %v3788
        %v3790 = vlaneseq
        %v3791 = vshrl.u32 %v3790, 7
        %v3792 = vsub.s32 %v3789, %v3791
        %v3793 = vrot.slane %v3779, %v3792
        %v3794 = vcombine.high %v3786, %v3786
        %v3795 = vcombine.high %v3793, %v3793
        %v3796 = vcombine.high %v3636, %v3636
        %v3798 = vunpack.c.l.s4 1983009808
        %v3799 = vunpack.c.0.s8 %v3798
        %v3800 = vlaneseq
        %v3801 = vshrl.u32 %v3800, 7
        %v3802 = vsub.s32 %v3799, %v3801
        %v3803 = vrot.slane %v3636, %v3802
        %v3805 = vunpack.c.l.s4 1983009808
        %v3806 = vunpack.c.0.s8 %v3805
        %v3807 = vlaneseq
        %v3808 = vshrl.u32 %v3807, 7
        %v3809 = vsub.s32 %v3806, %v3808
        %v3810 = vrot.slane %v3796, %v3809
        %v3811 = vcombine.high %v3803, %v3803
        %v3812 = vcombine.high %v3810, %v3810
        %v3813 = vcombine.high %v3637, %v3637
        %v3815 = vunpack.c.l.s4 1983009808
        %v3816 = vunpack.c.0.s8 %v3815
        %v3817 = vlaneseq
        %v3818 = vshrl.u32 %v3817, 7
        %v3819 = vsub.s32 %v3816, %v3818
        %v3820 = vrot.slane %v3637, %v3819
        %v3822 = vunpack.c.l.s4 1983009808
        %v3823 = vunpack.c.0.s8 %v3822
        %v3824 = vlaneseq
        %v3825 = vshrl.u32 %v3824, 7
        %v3826 = vsub.s32 %v3823, %v3825
        %v3827 = vrot.slane %v3813, %v3826
        %v3828 = vcombine.high %v3820, %v3820
        %v3829 = vcombine.high %v3827, %v3827
        %v3830 = vcombine.high %v3638, %v3638
        %v3832 = vunpack.c.l.s4 1983009808
        %v3833 = vunpack.c.0.s8 %v3832
        %v3834 = vlaneseq
        %v3835 = vshrl.u32 %v3834, 7
        %v3836 = vsub.s32 %v3833, %v3835
        %v3837 = vrot.slane %v3638, %v3836
        %v3839 = vunpack.c.l.s4 1983009808
        %v3840 = vunpack.c.0.s8 %v3839
        %v3841 = vlaneseq
        %v3842 = vshrl.u32 %v3841, 7
        %v3843 = vsub.s32 %v3840, %v3842
        %v3844 = vrot.slane %v3830, %v3843
        %v3845 = vcombine.high %v3837, %v3837
        %v3846 = vcombine.high %v3844, %v3844
        %v3847 = vcombine.high %v3639, %v3639
        %v3849 = vunpack.c.l.s4 1983009808
        %v3850 = vunpack.c.0.s8 %v3849
        %v3851 = vlaneseq
        %v3852 = vshrl.u32 %v3851, 7
        %v3853 = vsub.s32 %v3850, %v3852
        %v3854 = vrot.slane %v3639, %v3853
        %v3856 = vunpack.c.l.s4 1983009808
        %v3857 = vunpack.c.0.s8 %v3856
        %v3858 = vlaneseq
        %v3859 = vshrl.u32 %v3858, 7
        %v3860 = vsub.s32 %v3857, %v3859
        %v3861 = vrot.slane %v3847, %v3860
        %v3862 = vcombine.high %v3854, %v3854
        %v3863 = vcombine.high %v3861, %v3861
        %v3864 = vcombine.high %v3640, %v3640
        %v3866 = vunpack.c.l.s4 1983009808
        %v3867 = vunpack.c.0.s8 %v3866
        %v3868 = vlaneseq
        %v3869 = vshrl.u32 %v3868, 7
        %v3870 = vsub.s32 %v3867, %v3869
        %v3871 = vrot.slane %v3640, %v3870
        %v3873 = vunpack.c.l.s4 1983009808
        %v3874 = vunpack.c.0.s8 %v3873
        %v3875 = vlaneseq
        %v3876 = vshrl.u32 %v3875, 7
        %v3877 = vsub.s32 %v3874, %v3876
        %v3878 = vrot.slane %v3864, %v3877
        %v3879 = vcombine.high %v3871, %v3871
        %v3880 = vcombine.high %v3878, %v3878
        %v3881 = vcombine.high %v3641, %v3641
        %v3883 = vunpack.c.l.s4 1983009808
        %v3884 = vunpack.c.0.s8 %v3883
        %v3885 = vlaneseq
        %v3886 = vshrl.u32 %v3885, 7
        %v3887 = vsub.s32 %v3884, %v3886
        %v3888 = vrot.slane %v3641, %v3887
        %v3890 = vunpack.c.l.s4 1983009808
        %v3891 = vunpack.c.0.s8 %v3890
        %v3892 = vlaneseq
        %v3893 = vshrl.u32 %v3892, 7
        %v3894 = vsub.s32 %v3891, %v3893
        %v3895 = vrot.slane %v3881, %v3894
        %v3896 = vcombine.high %v3888, %v3888
        %v3897 = vcombine.high %v3895, %v3895
        %v3898 = vcombine.high %v3642, %v3642
        %v3900 = vunpack.c.l.s4 1983009808
        %v3901 = vunpack.c.0.s8 %v3900
        %v3902 = vlaneseq
        %v3903 = vshrl.u32 %v3902, 7
        %v3904 = vsub.s32 %v3901, %v3903
        %v3905 = vrot.slane %v3642, %v3904
        %v3907 = vunpack.c.l.s4 1983009808
        %v3908 = vunpack.c.0.s8 %v3907
        %v3909 = vlaneseq
        %v3910 = vshrl.u32 %v3909, 7
        %v3911 = vsub.s32 %v3908, %v3910
        %v3912 = vrot.slane %v3898, %v3911
        %v3913 = vcombine.high %v3905, %v3905
        %v3914 = vcombine.high %v3912, %v3912
        %v3915 = vcombine.high %v3643, %v3643
        %v3917 = vunpack.c.l.s4 1983009808
        %v3918 = vunpack.c.0.s8 %v3917
        %v3919 = vlaneseq
        %v3920 = vshrl.u32 %v3919, 7
        %v3921 = vsub.s32 %v3918, %v3920
        %v3922 = vrot.slane %v3643, %v3921
        %v3924 = vunpack.c.l.s4 1983009808
        %v3925 = vunpack.c.0.s8 %v3924
        %v3926 = vlaneseq
        %v3927 = vshrl.u32 %v3926, 7
        %v3928 = vsub.s32 %v3925, %v3927
        %v3929 = vrot.slane %v3915, %v3928
        %v3930 = vcombine.high %v3922, %v3922
        %v3931 = vcombine.high %v3929, %v3929
        %v3932 = vcombine.high %v3644, %v3644
        %v3934 = vunpack.c.l.s4 1983009808
        %v3935 = vunpack.c.0.s8 %v3934
        %v3936 = vlaneseq
        %v3937 = vshrl.u32 %v3936, 7
        %v3938 = vsub.s32 %v3935, %v3937
        %v3939 = vrot.slane %v3644, %v3938
        %v3941 = vunpack.c.l.s4 1983009808
        %v3942 = vunpack.c.0.s8 %v3941
        %v3943 = vlaneseq
        %v3944 = vshrl.u32 %v3943, 7
        %v3945 = vsub.s32 %v3942, %v3944
        %v3946 = vrot.slane %v3932, %v3945
        %v3947 = vcombine.high %v3939, %v3939
        %v3948 = vcombine.high %v3946, %v3946
        %v3949 = vcombine.high %v3645, %v3645
        %v3951 = vunpack.c.l.s4 1983009808
        %v3952 = vunpack.c.0.s8 %v3951
        %v3953 = vlaneseq
        %v3954 = vshrl.u32 %v3953, 7
        %v3955 = vsub.s32 %v3952, %v3954
        %v3956 = vrot.slane %v3645, %v3955
        %v3958 = vunpack.c.l.s4 1983009808
        %v3959 = vunpack.c.0.s8 %v3958
        %v3960 = vlaneseq
        %v3961 = vshrl.u32 %v3960, 7
        %v3962 = vsub.s32 %v3959, %v3961
        %v3963 = vrot.slane %v3949, %v3962
        %v3964 = vcombine.high %v3956, %v3956
        %v3965 = vcombine.high %v3963, %v3963
        %v3966 = vcombine.high %v3646, %v3646
        %v3968 = vunpack.c.l.s4 1983009808
        %v3969 = vunpack.c.0.s8 %v3968
        %v3970 = vlaneseq
        %v3971 = vshrl.u32 %v3970, 7
        %v3972 = vsub.s32 %v3969, %v3971
        %v3973 = vrot.slane %v3646, %v3972
        %v3975 = vunpack.c.l.s4 1983009808
        %v3976 = vunpack.c.0.s8 %v3975
        %v3977 = vlaneseq
        %v3978 = vshrl.u32 %v3977, 7
        %v3979 = vsub.s32 %v3976, %v3978
        %v3980 = vrot.slane %v3966, %v3979
        %v3981 = vcombine.high %v3973, %v3973
        %v3982 = vcombine.high %v3980, %v3980
        %v3983 = vcombine.high %v3647, %v3647
        %v3985 = vunpack.c.l.s4 1983009808
        %v3986 = vunpack.c.0.s8 %v3985
        %v3987 = vlaneseq
        %v3988 = vshrl.u32 %v3987, 7
        %v3989 = vsub.s32 %v3986, %v3988
        %v3990 = vrot.slane %v3647, %v3989
        %v3992 = vunpack.c.l.s4 1983009808
        %v3993 = vunpack.c.0.s8 %v3992
        %v3994 = vlaneseq
        %v3995 = vshrl.u32 %v3994, 7
        %v3996 = vsub.s32 %v3993, %v3995
        %v3997 = vrot.slane %v3983, %v3996
        %v3998 = vcombine.high %v3990, %v3990
        %v3999 = vcombine.high %v3997, %v3997
        %v4000 = vcombine.high %v3648, %v3648
        %v4002 = vunpack.c.l.s4 1983009808
        %v4003 = vunpack.c.0.s8 %v4002
        %v4004 = vlaneseq
        %v4005 = vshrl.u32 %v4004, 7
        %v4006 = vsub.s32 %v4003, %v4005
        %v4007 = vrot.slane %v3648, %v4006
        %v4009 = vunpack.c.l.s4 1983009808
        %v4010 = vunpack.c.0.s8 %v4009
        %v4011 = vlaneseq
        %v4012 = vshrl.u32 %v4011, 7
        %v4013 = vsub.s32 %v4010, %v4012
        %v4014 = vrot.slane %v4000, %v4013
        %v4015 = vcombine.high %v4007, %v4007
        %v4016 = vcombine.high %v4014, %v4014
        %v4017 = vcombine.high %v3649, %v3649
        %v4019 = vunpack.c.l.s4 1983009808
        %v4020 = vunpack.c.0.s8 %v4019
        %v4021 = vlaneseq
        %v4022 = vshrl.u32 %v4021, 7
        %v4023 = vsub.s32 %v4020, %v4022
        %v4024 = vrot.slane %v3649, %v4023
        %v4026 = vunpack.c.l.s4 1983009808
        %v4027 = vunpack.c.0.s8 %v4026
        %v4028 = vlaneseq
        %v4029 = vshrl.u32 %v4028, 7
        %v4030 = vsub.s32 %v4027, %v4029
        %v4031 = vrot.slane %v4017, %v4030
        %v4032 = vcombine.high %v4024, %v4024
        %v4033 = vcombine.high %v4031, %v4031
        %v4034 = vcombine.high %v3650, %v3650
        %v4036 = vunpack.c.l.s4 1983009808
        %v4037 = vunpack.c.0.s8 %v4036
        %v4038 = vlaneseq
        %v4039 = vshrl.u32 %v4038, 7
        %v4040 = vsub.s32 %v4037, %v4039
        %v4041 = vrot.slane %v3650, %v4040
        %v4043 = vunpack.c.l.s4 1983009808
        %v4044 = vunpack.c.0.s8 %v4043
        %v4045 = vlaneseq
        %v4046 = vshrl.u32 %v4045, 7
        %v4047 = vsub.s32 %v4044, %v4046
        %v4048 = vrot.slane %v4034, %v4047
        %v4049 = vcombine.high %v4041, %v4041
        %v4050 = vcombine.high %v4048, %v4048
        %v4051 = vcombine.high %v3651, %v3651
        %v4053 = vunpack.c.l.s4 1983009808
        %v4054 = vunpack.c.0.s8 %v4053
        %v4055 = vlaneseq
        %v4056 = vshrl.u32 %v4055, 7
        %v4057 = vsub.s32 %v4054, %v4056
        %v4058 = vrot.slane %v3651, %v4057
        %v4060 = vunpack.c.l.s4 1983009808
        %v4061 = vunpack.c.0.s8 %v4060
        %v4062 = vlaneseq
        %v4063 = vshrl.u32 %v4062, 7
        %v4064 = vsub.s32 %v4061, %v4063
        %v4065 = vrot.slane %v4051, %v4064
        %v4066 = vcombine.high %v4058, %v4058
        %v4067 = vcombine.high %v4065, %v4065
        %v4068 = vcombine.high %v3652, %v3652
        %v4070 = vunpack.c.l.s4 1983009808
        %v4071 = vunpack.c.0.s8 %v4070
        %v4072 = vlaneseq
        %v4073 = vshrl.u32 %v4072, 7
        %v4074 = vsub.s32 %v4071, %v4073
        %v4075 = vrot.slane %v3652, %v4074
        %v4077 = vunpack.c.l.s4 1983009808
        %v4078 = vunpack.c.0.s8 %v4077
        %v4079 = vlaneseq
        %v4080 = vshrl.u32 %v4079, 7
        %v4081 = vsub.s32 %v4078, %v4080
        %v4082 = vrot.slane %v4068, %v4081
        %v4083 = vcombine.high %v4075, %v4075
        %v4084 = vcombine.high %v4082, %v4082
        %v4085 = vcombine.high %v3653, %v3653
        %v4087 = vunpack.c.l.s4 1983009808
        %v4088 = vunpack.c.0.s8 %v4087
        %v4089 = vlaneseq
        %v4090 = vshrl.u32 %v4089, 7
        %v4091 = vsub.s32 %v4088, %v4090
        %v4092 = vrot.slane %v3653, %v4091
        %v4094 = vunpack.c.l.s4 1983009808
        %v4095 = vunpack.c.0.s8 %v4094
        %v4096 = vlaneseq
        %v4097 = vshrl.u32 %v4096, 7
        %v4098 = vsub.s32 %v4095, %v4097
        %v4099 = vrot.slane %v4085, %v4098
        %v4100 = vcombine.high %v4092, %v4092
        %v4101 = vcombine.high %v4099, %v4099
        %v4102 = vcombine.high %v3654, %v3654
        %v4104 = vunpack.c.l.s4 1983009808
        %v4105 = vunpack.c.0.s8 %v4104
        %v4106 = vlaneseq
        %v4107 = vshrl.u32 %v4106, 7
        %v4108 = vsub.s32 %v4105, %v4107
        %v4109 = vrot.slane %v3654, %v4108
        %v4111 = vunpack.c.l.s4 1983009808
        %v4112 = vunpack.c.0.s8 %v4111
        %v4113 = vlaneseq
        %v4114 = vshrl.u32 %v4113, 7
        %v4115 = vsub.s32 %v4112, %v4114
        %v4116 = vrot.slane %v4102, %v4115
        %v4117 = vcombine.high %v4109, %v4109
        %v4118 = vcombine.high %v4116, %v4116
        %v4119 = vcombine.high %v3655, %v3655
        %v4121 = vunpack.c.l.s4 1983009808
        %v4122 = vunpack.c.0.s8 %v4121
        %v4123 = vlaneseq
        %v4124 = vshrl.u32 %v4123, 7
        %v4125 = vsub.s32 %v4122, %v4124
        %v4126 = vrot.slane %v3655, %v4125
        %v4128 = vunpack.c.l.s4 1983009808
        %v4129 = vunpack.c.0.s8 %v4128
        %v4130 = vlaneseq
        %v4131 = vshrl.u32 %v4130, 7
        %v4132 = vsub.s32 %v4129, %v4131
        %v4133 = vrot.slane %v4119, %v4132
        %v4134 = vcombine.high %v4126, %v4126
        %v4135 = vcombine.high %v4133, %v4133
        %v4136 = vcombine.high %v3656, %v3656
        %v4138 = vunpack.c.l.s4 1983009808
        %v4139 = vunpack.c.0.s8 %v4138
        %v4140 = vlaneseq
        %v4141 = vshrl.u32 %v4140, 7
        %v4142 = vsub.s32 %v4139, %v4141
        %v4143 = vrot.slane %v3656, %v4142
        %v4145 = vunpack.c.l.s4 1983009808
        %v4146 = vunpack.c.0.s8 %v4145
        %v4147 = vlaneseq
        %v4148 = vshrl.u32 %v4147, 7
        %v4149 = vsub.s32 %v4146, %v4148
        %v4150 = vrot.slane %v4136, %v4149
        %v4151 = vcombine.high %v4143, %v4143
        %v4152 = vcombine.high %v4150, %v4150
        %v4153 = vcombine.high %v3657, %v3657
        %v4155 = vunpack.c.l.s4 1983009808
        %v4156 = vunpack.c.0.s8 %v4155
        %v4157 = vlaneseq
        %v4158 = vshrl.u32 %v4157, 7
        %v4159 = vsub.s32 %v4156, %v4158
        %v4160 = vrot.slane %v3657, %v4159
        %v4162 = vunpack.c.l.s4 1983009808
        %v4163 = vunpack.c.0.s8 %v4162
        %v4164 = vlaneseq
        %v4165 = vshrl.u32 %v4164, 7
        %v4166 = vsub.s32 %v4163, %v4165
        %v4167 = vrot.slane %v4153, %v4166
        %v4168 = vcombine.high %v4160, %v4160
        %v4169 = vcombine.high %v4167, %v4167
        %v4170 = vcombine.high %v3658, %v3658
        %v4172 = vunpack.c.l.s4 1983009808
        %v4173 = vunpack.c.0.s8 %v4172
        %v4174 = vlaneseq
        %v4175 = vshrl.u32 %v4174, 7
        %v4176 = vsub.s32 %v4173, %v4175
        %v4177 = vrot.slane %v3658, %v4176
        %v4179 = vunpack.c.l.s4 1983009808
        %v4180 = vunpack.c.0.s8 %v4179
        %v4181 = vlaneseq
        %v4182 = vshrl.u32 %v4181, 7
        %v4183 = vsub.s32 %v4180, %v4182
        %v4184 = vrot.slane %v4170, %v4183
        %v4185 = vcombine.high %v4177, %v4177
        %v4186 = vcombine.high %v4184, %v4184
        %v4187 = vcombine.high %v3659, %v3659
        %v4189 = vunpack.c.l.s4 1983009808
        %v4190 = vunpack.c.0.s8 %v4189
        %v4191 = vlaneseq
        %v4192 = vshrl.u32 %v4191, 7
        %v4193 = vsub.s32 %v4190, %v4192
        %v4194 = vrot.slane %v3659, %v4193
        %v4196 = vunpack.c.l.s4 1983009808
        %v4197 = vunpack.c.0.s8 %v4196
        %v4198 = vlaneseq
        %v4199 = vshrl.u32 %v4198, 7
        %v4200 = vsub.s32 %v4197, %v4199
        %v4201 = vrot.slane %v4187, %v4200
        %v4202 = vcombine.high %v4194, %v4194
        %v4203 = vcombine.high %v4201, %v4201
        %v4204 = vcombine.high %v3660, %v3660
        %v4206 = vunpack.c.l.s4 1983009808
        %v4207 = vunpack.c.0.s8 %v4206
        %v4208 = vlaneseq
        %v4209 = vshrl.u32 %v4208, 7
        %v4210 = vsub.s32 %v4207, %v4209
        %v4211 = vrot.slane %v3660, %v4210
        %v4213 = vunpack.c.l.s4 1983009808
        %v4214 = vunpack.c.0.s8 %v4213
        %v4215 = vlaneseq
        %v4216 = vshrl.u32 %v4215, 7
        %v4217 = vsub.s32 %v4214, %v4216
        %v4218 = vrot.slane %v4204, %v4217
        %v4219 = vcombine.high %v4211, %v4211
        %v4220 = vcombine.high %v4218, %v4218
        %v4221 = vcombine.high %v3661, %v3661
        %v4223 = vunpack.c.l.s4 1983009808
        %v4224 = vunpack.c.0.s8 %v4223
        %v4225 = vlaneseq
        %v4226 = vshrl.u32 %v4225, 7
        %v4227 = vsub.s32 %v4224, %v4226
        %v4228 = vrot.slane %v3661, %v4227
        %v4230 = vunpack.c.l.s4 1983009808
        %v4231 = vunpack.c.0.s8 %v4230
        %v4232 = vlaneseq
        %v4233 = vshrl.u32 %v4232, 7
        %v4234 = vsub.s32 %v4231, %v4233
        %v4235 = vrot.slane %v4221, %v4234
        %v4236 = vcombine.high %v4228, %v4228
        %v4237 = vcombine.high %v4235, %v4235
        %vm4366 = vcmask 1041408
        %v4367 = vsel %vm4366, %v3701, -inf
        %v4368 = vrot.slane %v4367, 4
        %v4369 = vmax.f32 %v4367, %v4368
        %v4370 = vrot.slane %v4369, 2
        %v4371 = vmax.f32 %v4369, %v4370
        %v4372 = vrot.slane %v4371, 1
        %v4373 = vmax.f32 %v4371, %v4372
        %v4374 = vsel %vm4366, %v3709, -inf
        %v4375 = vrot.slane %v4374, 4
        %v4376 = vmax.f32 %v4374, %v4375
        %v4377 = vrot.slane %v4376, 2
        %v4378 = vmax.f32 %v4376, %v4377
        %v4379 = vrot.slane %v4378, 1
        %v4380 = vmax.f32 %v4378, %v4379
        %v4381 = vsel %vm4366, %v3708, -inf
        %v4382 = vrot.slane %v4381, 4
        %v4383 = vmax.f32 %v4381, %v4382
        %v4384 = vrot.slane %v4383, 2
        %v4385 = vmax.f32 %v4383, %v4384
        %v4386 = vrot.slane %v4385, 1
        %v4387 = vmax.f32 %v4385, %v4386
        %v4388 = vsel %vm4366, %v3710, -inf
        %v4389 = vrot.slane %v4388, 4
        %v4390 = vmax.f32 %v4388, %v4389
        %v4391 = vrot.slane %v4390, 2
        %v4392 = vmax.f32 %v4390, %v4391
        %v4393 = vrot.slane %v4392, 1
        %v4394 = vmax.f32 %v4392, %v4393
        %v4395 = vsel %vm4366, %v3718, -inf
        %v4396 = vrot.slane %v4395, 4
        %v4397 = vmax.f32 %v4395, %v4396
        %v4398 = vrot.slane %v4397, 2
        %v4399 = vmax.f32 %v4397, %v4398
        %v4400 = vrot.slane %v4399, 1
        %v4401 = vmax.f32 %v4399, %v4400
        %v4402 = vsel %vm4366, %v3726, -inf
        %v4403 = vrot.slane %v4402, 4
        %v4404 = vmax.f32 %v4402, %v4403
        %v4405 = vrot.slane %v4404, 2
        %v4406 = vmax.f32 %v4404, %v4405
        %v4407 = vrot.slane %v4406, 1
        %v4408 = vmax.f32 %v4406, %v4407
        %v4409 = vsel %vm4366, %v3725, -inf
        %v4410 = vrot.slane %v4409, 4
        %v4411 = vmax.f32 %v4409, %v4410
        %v4412 = vrot.slane %v4411, 2
        %v4413 = vmax.f32 %v4411, %v4412
        %v4414 = vrot.slane %v4413, 1
        %v4415 = vmax.f32 %v4413, %v4414
        %v4416 = vsel %vm4366, %v3727, -inf
        %v4417 = vrot.slane %v4416, 4
        %v4418 = vmax.f32 %v4416, %v4417
        %v4419 = vrot.slane %v4418, 2
        %v4420 = vmax.f32 %v4418, %v4419
        %v4421 = vrot.slane %v4420, 1
        %v4422 = vmax.f32 %v4420, %v4421
        %v4423 = vsel %vm4366, %v3735, -inf
        %v4424 = vrot.slane %v4423, 4
        %v4425 = vmax.f32 %v4423, %v4424
        %v4426 = vrot.slane %v4425, 2
        %v4427 = vmax.f32 %v4425, %v4426
        %v4428 = vrot.slane %v4427, 1
        %v4429 = vmax.f32 %v4427, %v4428
        %v4430 = vsel %vm4366, %v3743, -inf
        %v4431 = vrot.slane %v4430, 4
        %v4432 = vmax.f32 %v4430, %v4431
        %v4433 = vrot.slane %v4432, 2
        %v4434 = vmax.f32 %v4432, %v4433
        %v4435 = vrot.slane %v4434, 1
        %v4436 = vmax.f32 %v4434, %v4435
        %v4437 = vsel %vm4366, %v3742, -inf
        %v4438 = vrot.slane %v4437, 4
        %v4439 = vmax.f32 %v4437, %v4438
        %v4440 = vrot.slane %v4439, 2
        %v4441 = vmax.f32 %v4439, %v4440
        %v4442 = vrot.slane %v4441, 1
        %v4443 = vmax.f32 %v4441, %v4442
        %v4444 = vsel %vm4366, %v3744, -inf
        %v4445 = vrot.slane %v4444, 4
        %v4446 = vmax.f32 %v4444, %v4445
        %v4447 = vrot.slane %v4446, 2
        %v4448 = vmax.f32 %v4446, %v4447
        %v4449 = vrot.slane %v4448, 1
        %v4450 = vmax.f32 %v4448, %v4449
        %v4451 = vsel %vm4366, %v3752, -inf
        %v4452 = vrot.slane %v4451, 4
        %v4453 = vmax.f32 %v4451, %v4452
        %v4454 = vrot.slane %v4453, 2
        %v4455 = vmax.f32 %v4453, %v4454
        %v4456 = vrot.slane %v4455, 1
        %v4457 = vmax.f32 %v4455, %v4456
        %v4458 = vsel %vm4366, %v3760, -inf
        %v4459 = vrot.slane %v4458, 4
        %v4460 = vmax.f32 %v4458, %v4459
        %v4461 = vrot.slane %v4460, 2
        %v4462 = vmax.f32 %v4460, %v4461
        %v4463 = vrot.slane %v4462, 1
        %v4464 = vmax.f32 %v4462, %v4463
        %v4465 = vsel %vm4366, %v3759, -inf
        %v4466 = vrot.slane %v4465, 4
        %v4467 = vmax.f32 %v4465, %v4466
        %v4468 = vrot.slane %v4467, 2
        %v4469 = vmax.f32 %v4467, %v4468
        %v4470 = vrot.slane %v4469, 1
        %v4471 = vmax.f32 %v4469, %v4470
        %v4472 = vsel %vm4366, %v3761, -inf
        %v4473 = vrot.slane %v4472, 4
        %v4474 = vmax.f32 %v4472, %v4473
        %v4475 = vrot.slane %v4474, 2
        %v4476 = vmax.f32 %v4474, %v4475
        %v4477 = vrot.slane %v4476, 1
        %v4478 = vmax.f32 %v4476, %v4477
        %v4479 = vsel %vm4366, %v3769, -inf
        %v4480 = vrot.slane %v4479, 4
        %v4481 = vmax.f32 %v4479, %v4480
        %v4482 = vrot.slane %v4481, 2
        %v4483 = vmax.f32 %v4481, %v4482
        %v4484 = vrot.slane %v4483, 1
        %v4485 = vmax.f32 %v4483, %v4484
        %v4486 = vsel %vm4366, %v3777, -inf
        %v4487 = vrot.slane %v4486, 4
        %v4488 = vmax.f32 %v4486, %v4487
        %v4489 = vrot.slane %v4488, 2
        %v4490 = vmax.f32 %v4488, %v4489
        %v4491 = vrot.slane %v4490, 1
        %v4492 = vmax.f32 %v4490, %v4491
        %v4493 = vsel %vm4366, %v3776, -inf
        %v4494 = vrot.slane %v4493, 4
        %v4495 = vmax.f32 %v4493, %v4494
        %v4496 = vrot.slane %v4495, 2
        %v4497 = vmax.f32 %v4495, %v4496
        %v4498 = vrot.slane %v4497, 1
        %v4499 = vmax.f32 %v4497, %v4498
        %v4500 = vsel %vm4366, %v3778, -inf
        %v4501 = vrot.slane %v4500, 4
        %v4502 = vmax.f32 %v4500, %v4501
        %v4503 = vrot.slane %v4502, 2
        %v4504 = vmax.f32 %v4502, %v4503
        %v4505 = vrot.slane %v4504, 1
        %v4506 = vmax.f32 %v4504, %v4505
        %v4507 = vsel %vm4366, %v3786, -inf
        %v4508 = vrot.slane %v4507, 4
        %v4509 = vmax.f32 %v4507, %v4508
        %v4510 = vrot.slane %v4509, 2
        %v4511 = vmax.f32 %v4509, %v4510
        %v4512 = vrot.slane %v4511, 1
        %v4513 = vmax.f32 %v4511, %v4512
        %v4514 = vsel %vm4366, %v3794, -inf
        %v4515 = vrot.slane %v4514, 4
        %v4516 = vmax.f32 %v4514, %v4515
        %v4517 = vrot.slane %v4516, 2
        %v4518 = vmax.f32 %v4516, %v4517
        %v4519 = vrot.slane %v4518, 1
        %v4520 = vmax.f32 %v4518, %v4519
        %v4521 = vsel %vm4366, %v3793, -inf
        %v4522 = vrot.slane %v4521, 4
        %v4523 = vmax.f32 %v4521, %v4522
        %v4524 = vrot.slane %v4523, 2
        %v4525 = vmax.f32 %v4523, %v4524
        %v4526 = vrot.slane %v4525, 1
        %v4527 = vmax.f32 %v4525, %v4526
        %v4528 = vsel %vm4366, %v3795, -inf
        %v4529 = vrot.slane %v4528, 4
        %v4530 = vmax.f32 %v4528, %v4529
        %v4531 = vrot.slane %v4530, 2
        %v4532 = vmax.f32 %v4530, %v4531
        %v4533 = vrot.slane %v4532, 1
        %v4534 = vmax.f32 %v4532, %v4533
        %v4535 = vsel %vm4366, %v3803, -inf
        %v4536 = vrot.slane %v4535, 4
        %v4537 = vmax.f32 %v4535, %v4536
        %v4538 = vrot.slane %v4537, 2
        %v4539 = vmax.f32 %v4537, %v4538
        %v4540 = vrot.slane %v4539, 1
        %v4541 = vmax.f32 %v4539, %v4540
        %v4542 = vsel %vm4366, %v3811, -inf
        %v4543 = vrot.slane %v4542, 4
        %v4544 = vmax.f32 %v4542, %v4543
        %v4545 = vrot.slane %v4544, 2
        %v4546 = vmax.f32 %v4544, %v4545
        %v4547 = vrot.slane %v4546, 1
        %v4548 = vmax.f32 %v4546, %v4547
        %v4549 = vsel %vm4366, %v3810, -inf
        %v4550 = vrot.slane %v4549, 4
        %v4551 = vmax.f32 %v4549, %v4550
        %v4552 = vrot.slane %v4551, 2
        %v4553 = vmax.f32 %v4551, %v4552
        %v4554 = vrot.slane %v4553, 1
        %v4555 = vmax.f32 %v4553, %v4554
        %v4556 = vsel %vm4366, %v3812, -inf
        %v4557 = vrot.slane %v4556, 4
        %v4558 = vmax.f32 %v4556, %v4557
        %v4559 = vrot.slane %v4558, 2
        %v4560 = vmax.f32 %v4558, %v4559
        %v4561 = vrot.slane %v4560, 1
        %v4562 = vmax.f32 %v4560, %v4561
        %v4563 = vsel %vm4366, %v3820, -inf
        %v4564 = vrot.slane %v4563, 4
        %v4565 = vmax.f32 %v4563, %v4564
        %v4566 = vrot.slane %v4565, 2
        %v4567 = vmax.f32 %v4565, %v4566
        %v4568 = vrot.slane %v4567, 1
        %v4569 = vmax.f32 %v4567, %v4568
        %v4570 = vsel %vm4366, %v3828, -inf
        %v4571 = vrot.slane %v4570, 4
        %v4572 = vmax.f32 %v4570, %v4571
        %v4573 = vrot.slane %v4572, 2
        %v4574 = vmax.f32 %v4572, %v4573
        %v4575 = vrot.slane %v4574, 1
        %v4576 = vmax.f32 %v4574, %v4575
        %v4577 = vsel %vm4366, %v3827, -inf
        %v4578 = vrot.slane %v4577, 4
        %v4579 = vmax.f32 %v4577, %v4578
        %v4580 = vrot.slane %v4579, 2
        %v4581 = vmax.f32 %v4579, %v4580
        %v4582 = vrot.slane %v4581, 1
        %v4583 = vmax.f32 %v4581, %v4582
        %v4584 = vsel %vm4366, %v3829, -inf
        %v4585 = vrot.slane %v4584, 4
        %v4586 = vmax.f32 %v4584, %v4585
        %v4587 = vrot.slane %v4586, 2
        %v4588 = vmax.f32 %v4586, %v4587
        %v4589 = vrot.slane %v4588, 1
        %v4590 = vmax.f32 %v4588, %v4589
        %v4591 = vsel %vm4366, %v3837, -inf
        %v4592 = vrot.slane %v4591, 4
        %v4593 = vmax.f32 %v4591, %v4592
        %v4594 = vrot.slane %v4593, 2
        %v4595 = vmax.f32 %v4593, %v4594
        %v4596 = vrot.slane %v4595, 1
        %v4597 = vmax.f32 %v4595, %v4596
        %v4598 = vsel %vm4366, %v3845, -inf
        %v4599 = vrot.slane %v4598, 4
        %v4600 = vmax.f32 %v4598, %v4599
        %v4601 = vrot.slane %v4600, 2
        %v4602 = vmax.f32 %v4600, %v4601
        %v4603 = vrot.slane %v4602, 1
        %v4604 = vmax.f32 %v4602, %v4603
        %v4605 = vsel %vm4366, %v3844, -inf
        %v4606 = vrot.slane %v4605, 4
        %v4607 = vmax.f32 %v4605, %v4606
        %v4608 = vrot.slane %v4607, 2
        %v4609 = vmax.f32 %v4607, %v4608
        %v4610 = vrot.slane %v4609, 1
        %v4611 = vmax.f32 %v4609, %v4610
        %v4612 = vsel %vm4366, %v3846, -inf
        %v4613 = vrot.slane %v4612, 4
        %v4614 = vmax.f32 %v4612, %v4613
        %v4615 = vrot.slane %v4614, 2
        %v4616 = vmax.f32 %v4614, %v4615
        %v4617 = vrot.slane %v4616, 1
        %v4618 = vmax.f32 %v4616, %v4617
        %v4619 = vsel %vm4366, %v3854, -inf
        %v4620 = vrot.slane %v4619, 4
        %v4621 = vmax.f32 %v4619, %v4620
        %v4622 = vrot.slane %v4621, 2
        %v4623 = vmax.f32 %v4621, %v4622
        %v4624 = vrot.slane %v4623, 1
        %v4625 = vmax.f32 %v4623, %v4624
        %v4626 = vsel %vm4366, %v3862, -inf
        %v4627 = vrot.slane %v4626, 4
        %v4628 = vmax.f32 %v4626, %v4627
        %v4629 = vrot.slane %v4628, 2
        %v4630 = vmax.f32 %v4628, %v4629
        %v4631 = vrot.slane %v4630, 1
        %v4632 = vmax.f32 %v4630, %v4631
        %v4633 = vsel %vm4366, %v3861, -inf
        %v4634 = vrot.slane %v4633, 4
        %v4635 = vmax.f32 %v4633, %v4634
        %v4636 = vrot.slane %v4635, 2
        %v4637 = vmax.f32 %v4635, %v4636
        %v4638 = vrot.slane %v4637, 1
        %v4639 = vmax.f32 %v4637, %v4638
        %v4640 = vsel %vm4366, %v3863, -inf
        %v4641 = vrot.slane %v4640, 4
        %v4642 = vmax.f32 %v4640, %v4641
        %v4643 = vrot.slane %v4642, 2
        %v4644 = vmax.f32 %v4642, %v4643
        %v4645 = vrot.slane %v4644, 1
        %v4646 = vmax.f32 %v4644, %v4645
        %v4647 = vsel %vm4366, %v3871, -inf
        %v4648 = vrot.slane %v4647, 4
        %v4649 = vmax.f32 %v4647, %v4648
        %v4650 = vrot.slane %v4649, 2
        %v4651 = vmax.f32 %v4649, %v4650
        %v4652 = vrot.slane %v4651, 1
        %v4653 = vmax.f32 %v4651, %v4652
        %v4654 = vsel %vm4366, %v3879, -inf
        %v4655 = vrot.slane %v4654, 4
        %v4656 = vmax.f32 %v4654, %v4655
        %v4657 = vrot.slane %v4656, 2
        %v4658 = vmax.f32 %v4656, %v4657
        %v4659 = vrot.slane %v4658, 1
        %v4660 = vmax.f32 %v4658, %v4659
        %v4661 = vsel %vm4366, %v3878, -inf
        %v4662 = vrot.slane %v4661, 4
        %v4663 = vmax.f32 %v4661, %v4662
        %v4664 = vrot.slane %v4663, 2
        %v4665 = vmax.f32 %v4663, %v4664
        %v4666 = vrot.slane %v4665, 1
        %v4667 = vmax.f32 %v4665, %v4666
        %v4668 = vsel %vm4366, %v3880, -inf
        %v4669 = vrot.slane %v4668, 4
        %v4670 = vmax.f32 %v4668, %v4669
        %v4671 = vrot.slane %v4670, 2
        %v4672 = vmax.f32 %v4670, %v4671
        %v4673 = vrot.slane %v4672, 1
        %v4674 = vmax.f32 %v4672, %v4673
        %v4675 = vsel %vm4366, %v3888, -inf
        %v4676 = vrot.slane %v4675, 4
        %v4677 = vmax.f32 %v4675, %v4676
        %v4678 = vrot.slane %v4677, 2
        %v4679 = vmax.f32 %v4677, %v4678
        %v4680 = vrot.slane %v4679, 1
        %v4681 = vmax.f32 %v4679, %v4680
        %v4682 = vsel %vm4366, %v3896, -inf
        %v4683 = vrot.slane %v4682, 4
        %v4684 = vmax.f32 %v4682, %v4683
        %v4685 = vrot.slane %v4684, 2
        %v4686 = vmax.f32 %v4684, %v4685
        %v4687 = vrot.slane %v4686, 1
        %v4688 = vmax.f32 %v4686, %v4687
        %v4689 = vsel %vm4366, %v3895, -inf
        %v4690 = vrot.slane %v4689, 4
        %v4691 = vmax.f32 %v4689, %v4690
        %v4692 = vrot.slane %v4691, 2
        %v4693 = vmax.f32 %v4691, %v4692
        %v4694 = vrot.slane %v4693, 1
        %v4695 = vmax.f32 %v4693, %v4694
        %v4696 = vsel %vm4366, %v3897, -inf
        %v4697 = vrot.slane %v4696, 4
        %v4698 = vmax.f32 %v4696, %v4697
        %v4699 = vrot.slane %v4698, 2
        %v4700 = vmax.f32 %v4698, %v4699
        %v4701 = vrot.slane %v4700, 1
        %v4702 = vmax.f32 %v4700, %v4701
        %v4703 = vsel %vm4366, %v3905, -inf
        %v4704 = vrot.slane %v4703, 4
        %v4705 = vmax.f32 %v4703, %v4704
        %v4706 = vrot.slane %v4705, 2
        %v4707 = vmax.f32 %v4705, %v4706
        %v4708 = vrot.slane %v4707, 1
        %v4709 = vmax.f32 %v4707, %v4708
        %v4710 = vsel %vm4366, %v3913, -inf
        %v4711 = vrot.slane %v4710, 4
        %v4712 = vmax.f32 %v4710, %v4711
        %v4713 = vrot.slane %v4712, 2
        %v4714 = vmax.f32 %v4712, %v4713
        %v4715 = vrot.slane %v4714, 1
        %v4716 = vmax.f32 %v4714, %v4715
        %v4717 = vsel %vm4366, %v3912, -inf
        %v4718 = vrot.slane %v4717, 4
        %v4719 = vmax.f32 %v4717, %v4718
        %v4720 = vrot.slane %v4719, 2
        %v4721 = vmax.f32 %v4719, %v4720
        %v4722 = vrot.slane %v4721, 1
        %v4723 = vmax.f32 %v4721, %v4722
        %v4724 = vsel %vm4366, %v3914, -inf
        %v4725 = vrot.slane %v4724, 4
        %v4726 = vmax.f32 %v4724, %v4725
        %v4727 = vrot.slane %v4726, 2
        %v4728 = vmax.f32 %v4726, %v4727
        %v4729 = vrot.slane %v4728, 1
        %v4730 = vmax.f32 %v4728, %v4729
        %v4731 = vsel %vm4366, %v3922, -inf
        %v4732 = vrot.slane %v4731, 4
        %v4733 = vmax.f32 %v4731, %v4732
        %v4734 = vrot.slane %v4733, 2
        %v4735 = vmax.f32 %v4733, %v4734
        %v4736 = vrot.slane %v4735, 1
        %v4737 = vmax.f32 %v4735, %v4736
        %v4738 = vsel %vm4366, %v3930, -inf
        %v4739 = vrot.slane %v4738, 4
        %v4740 = vmax.f32 %v4738, %v4739
        %v4741 = vrot.slane %v4740, 2
        %v4742 = vmax.f32 %v4740, %v4741
        %v4743 = vrot.slane %v4742, 1
        %v4744 = vmax.f32 %v4742, %v4743
        %v4745 = vsel %vm4366, %v3929, -inf
        %v4746 = vrot.slane %v4745, 4
        %v4747 = vmax.f32 %v4745, %v4746
        %v4748 = vrot.slane %v4747, 2
        %v4749 = vmax.f32 %v4747, %v4748
        %v4750 = vrot.slane %v4749, 1
        %v4751 = vmax.f32 %v4749, %v4750
        %v4752 = vsel %vm4366, %v3931, -inf
        %v4753 = vrot.slane %v4752, 4
        %v4754 = vmax.f32 %v4752, %v4753
        %v4755 = vrot.slane %v4754, 2
        %v4756 = vmax.f32 %v4754, %v4755
        %v4757 = vrot.slane %v4756, 1
        %v4758 = vmax.f32 %v4756, %v4757
        %v4759 = vsel %vm4366, %v3939, -inf
        %v4760 = vrot.slane %v4759, 4
        %v4761 = vmax.f32 %v4759, %v4760
        %v4762 = vrot.slane %v4761, 2
        %v4763 = vmax.f32 %v4761, %v4762
        %v4764 = vrot.slane %v4763, 1
        %v4765 = vmax.f32 %v4763, %v4764
        %v4766 = vsel %vm4366, %v3947, -inf
        %v4767 = vrot.slane %v4766, 4
        %v4768 = vmax.f32 %v4766, %v4767
        %v4769 = vrot.slane %v4768, 2
        %v4770 = vmax.f32 %v4768, %v4769
        %v4771 = vrot.slane %v4770, 1
        %v4772 = vmax.f32 %v4770, %v4771
        %v4773 = vsel %vm4366, %v3946, -inf
        %v4774 = vrot.slane %v4773, 4
        %v4775 = vmax.f32 %v4773, %v4774
        %v4776 = vrot.slane %v4775, 2
        %v4777 = vmax.f32 %v4775, %v4776
        %v4778 = vrot.slane %v4777, 1
        %v4779 = vmax.f32 %v4777, %v4778
        %v4780 = vsel %vm4366, %v3948, -inf
        %v4781 = vrot.slane %v4780, 4
        %v4782 = vmax.f32 %v4780, %v4781
        %v4783 = vrot.slane %v4782, 2
        %v4784 = vmax.f32 %v4782, %v4783
        %v4785 = vrot.slane %v4784, 1
        %v4786 = vmax.f32 %v4784, %v4785
        %v4787 = vsel %vm4366, %v3956, -inf
        %v4788 = vrot.slane %v4787, 4
        %v4789 = vmax.f32 %v4787, %v4788
        %v4790 = vrot.slane %v4789, 2
        %v4791 = vmax.f32 %v4789, %v4790
        %v4792 = vrot.slane %v4791, 1
        %v4793 = vmax.f32 %v4791, %v4792
        %v4794 = vsel %vm4366, %v3964, -inf
        %v4795 = vrot.slane %v4794, 4
        %v4796 = vmax.f32 %v4794, %v4795
        %v4797 = vrot.slane %v4796, 2
        %v4798 = vmax.f32 %v4796, %v4797
        %v4799 = vrot.slane %v4798, 1
        %v4800 = vmax.f32 %v4798, %v4799
        %v4801 = vsel %vm4366, %v3963, -inf
        %v4802 = vrot.slane %v4801, 4
        %v4803 = vmax.f32 %v4801, %v4802
        %v4804 = vrot.slane %v4803, 2
        %v4805 = vmax.f32 %v4803, %v4804
        %v4806 = vrot.slane %v4805, 1
        %v4807 = vmax.f32 %v4805, %v4806
        %v4808 = vsel %vm4366, %v3965, -inf
        %v4809 = vrot.slane %v4808, 4
        %v4810 = vmax.f32 %v4808, %v4809
        %v4811 = vrot.slane %v4810, 2
        %v4812 = vmax.f32 %v4810, %v4811
        %v4813 = vrot.slane %v4812, 1
        %v4814 = vmax.f32 %v4812, %v4813
        %v4815 = vsel %vm4366, %v3973, -inf
        %v4816 = vrot.slane %v4815, 4
        %v4817 = vmax.f32 %v4815, %v4816
        %v4818 = vrot.slane %v4817, 2
        %v4819 = vmax.f32 %v4817, %v4818
        %v4820 = vrot.slane %v4819, 1
        %v4821 = vmax.f32 %v4819, %v4820
        %v4822 = vsel %vm4366, %v3981, -inf
        %v4823 = vrot.slane %v4822, 4
        %v4824 = vmax.f32 %v4822, %v4823
        %v4825 = vrot.slane %v4824, 2
        %v4826 = vmax.f32 %v4824, %v4825
        %v4827 = vrot.slane %v4826, 1
        %v4828 = vmax.f32 %v4826, %v4827
        %v4829 = vsel %vm4366, %v3980, -inf
        %v4830 = vrot.slane %v4829, 4
        %v4831 = vmax.f32 %v4829, %v4830
        %v4832 = vrot.slane %v4831, 2
        %v4833 = vmax.f32 %v4831, %v4832
        %v4834 = vrot.slane %v4833, 1
        %v4835 = vmax.f32 %v4833, %v4834
        %v4836 = vsel %vm4366, %v3982, -inf
        %v4837 = vrot.slane %v4836, 4
        %v4838 = vmax.f32 %v4836, %v4837
        %v4839 = vrot.slane %v4838, 2
        %v4840 = vmax.f32 %v4838, %v4839
        %v4841 = vrot.slane %v4840, 1
        %v4842 = vmax.f32 %v4840, %v4841
        %v4843 = vsel %vm4366, %v3990, -inf
        %v4844 = vrot.slane %v4843, 4
        %v4845 = vmax.f32 %v4843, %v4844
        %v4846 = vrot.slane %v4845, 2
        %v4847 = vmax.f32 %v4845, %v4846
        %v4848 = vrot.slane %v4847, 1
        %v4849 = vmax.f32 %v4847, %v4848
        %v4850 = vsel %vm4366, %v3998, -inf
        %v4851 = vrot.slane %v4850, 4
        %v4852 = vmax.f32 %v4850, %v4851
        %v4853 = vrot.slane %v4852, 2
        %v4854 = vmax.f32 %v4852, %v4853
        %v4855 = vrot.slane %v4854, 1
        %v4856 = vmax.f32 %v4854, %v4855
        %v4857 = vsel %vm4366, %v3997, -inf
        %v4858 = vrot.slane %v4857, 4
        %v4859 = vmax.f32 %v4857, %v4858
        %v4860 = vrot.slane %v4859, 2
        %v4861 = vmax.f32 %v4859, %v4860
        %v4862 = vrot.slane %v4861, 1
        %v4863 = vmax.f32 %v4861, %v4862
        %v4864 = vsel %vm4366, %v3999, -inf
        %v4865 = vrot.slane %v4864, 4
        %v4866 = vmax.f32 %v4864, %v4865
        %v4867 = vrot.slane %v4866, 2
        %v4868 = vmax.f32 %v4866, %v4867
        %v4869 = vrot.slane %v4868, 1
        %v4870 = vmax.f32 %v4868, %v4869
        %v4871 = vsel %vm4366, %v4007, -inf
        %v4872 = vrot.slane %v4871, 4
        %v4873 = vmax.f32 %v4871, %v4872
        %v4874 = vrot.slane %v4873, 2
        %v4875 = vmax.f32 %v4873, %v4874
        %v4876 = vrot.slane %v4875, 1
        %v4877 = vmax.f32 %v4875, %v4876
        %v4878 = vsel %vm4366, %v4015, -inf
        %v4879 = vrot.slane %v4878, 4
        %v4880 = vmax.f32 %v4878, %v4879
        %v4881 = vrot.slane %v4880, 2
        %v4882 = vmax.f32 %v4880, %v4881
        %v4883 = vrot.slane %v4882, 1
        %v4884 = vmax.f32 %v4882, %v4883
        %v4885 = vsel %vm4366, %v4014, -inf
        %v4886 = vrot.slane %v4885, 4
        %v4887 = vmax.f32 %v4885, %v4886
        %v4888 = vrot.slane %v4887, 2
        %v4889 = vmax.f32 %v4887, %v4888
        %v4890 = vrot.slane %v4889, 1
        %v4891 = vmax.f32 %v4889, %v4890
        %v4892 = vsel %vm4366, %v4016, -inf
        %v4893 = vrot.slane %v4892, 4
        %v4894 = vmax.f32 %v4892, %v4893
        %v4895 = vrot.slane %v4894, 2
        %v4896 = vmax.f32 %v4894, %v4895
        %v4897 = vrot.slane %v4896, 1
        %v4898 = vmax.f32 %v4896, %v4897
        %v4899 = vsel %vm4366, %v4024, -inf
        %v4900 = vrot.slane %v4899, 4
        %v4901 = vmax.f32 %v4899, %v4900
        %v4902 = vrot.slane %v4901, 2
        %v4903 = vmax.f32 %v4901, %v4902
        %v4904 = vrot.slane %v4903, 1
        %v4905 = vmax.f32 %v4903, %v4904
        %v4906 = vsel %vm4366, %v4032, -inf
        %v4907 = vrot.slane %v4906, 4
        %v4908 = vmax.f32 %v4906, %v4907
        %v4909 = vrot.slane %v4908, 2
        %v4910 = vmax.f32 %v4908, %v4909
        %v4911 = vrot.slane %v4910, 1
        %v4912 = vmax.f32 %v4910, %v4911
        %v4913 = vsel %vm4366, %v4031, -inf
        %v4914 = vrot.slane %v4913, 4
        %v4915 = vmax.f32 %v4913, %v4914
        %v4916 = vrot.slane %v4915, 2
        %v4917 = vmax.f32 %v4915, %v4916
        %v4918 = vrot.slane %v4917, 1
        %v4919 = vmax.f32 %v4917, %v4918
        %v4920 = vsel %vm4366, %v4033, -inf
        %v4921 = vrot.slane %v4920, 4
        %v4922 = vmax.f32 %v4920, %v4921
        %v4923 = vrot.slane %v4922, 2
        %v4924 = vmax.f32 %v4922, %v4923
        %v4925 = vrot.slane %v4924, 1
        %v4926 = vmax.f32 %v4924, %v4925
        %v4927 = vsel %vm4366, %v4041, -inf
        %v4928 = vrot.slane %v4927, 4
        %v4929 = vmax.f32 %v4927, %v4928
        %v4930 = vrot.slane %v4929, 2
        %v4931 = vmax.f32 %v4929, %v4930
        %v4932 = vrot.slane %v4931, 1
        %v4933 = vmax.f32 %v4931, %v4932
        %v4934 = vsel %vm4366, %v4049, -inf
        %v4935 = vrot.slane %v4934, 4
        %v4936 = vmax.f32 %v4934, %v4935
        %v4937 = vrot.slane %v4936, 2
        %v4938 = vmax.f32 %v4936, %v4937
        %v4939 = vrot.slane %v4938, 1
        %v4940 = vmax.f32 %v4938, %v4939
        %v4941 = vsel %vm4366, %v4048, -inf
        %v4942 = vrot.slane %v4941, 4
        %v4943 = vmax.f32 %v4941, %v4942
        %v4944 = vrot.slane %v4943, 2
        %v4945 = vmax.f32 %v4943, %v4944
        %v4946 = vrot.slane %v4945, 1
        %v4947 = vmax.f32 %v4945, %v4946
        %v4948 = vsel %vm4366, %v4050, -inf
        %v4949 = vrot.slane %v4948, 4
        %v4950 = vmax.f32 %v4948, %v4949
        %v4951 = vrot.slane %v4950, 2
        %v4952 = vmax.f32 %v4950, %v4951
        %v4953 = vrot.slane %v4952, 1
        %v4954 = vmax.f32 %v4952, %v4953
        %v4955 = vsel %vm4366, %v4058, -inf
        %v4956 = vrot.slane %v4955, 4
        %v4957 = vmax.f32 %v4955, %v4956
        %v4958 = vrot.slane %v4957, 2
        %v4959 = vmax.f32 %v4957, %v4958
        %v4960 = vrot.slane %v4959, 1
        %v4961 = vmax.f32 %v4959, %v4960
        %v4962 = vsel %vm4366, %v4066, -inf
        %v4963 = vrot.slane %v4962, 4
        %v4964 = vmax.f32 %v4962, %v4963
        %v4965 = vrot.slane %v4964, 2
        %v4966 = vmax.f32 %v4964, %v4965
        %v4967 = vrot.slane %v4966, 1
        %v4968 = vmax.f32 %v4966, %v4967
        %v4969 = vsel %vm4366, %v4065, -inf
        %v4970 = vrot.slane %v4969, 4
        %v4971 = vmax.f32 %v4969, %v4970
        %v4972 = vrot.slane %v4971, 2
        %v4973 = vmax.f32 %v4971, %v4972
        %v4974 = vrot.slane %v4973, 1
        %v4975 = vmax.f32 %v4973, %v4974
        %v4976 = vsel %vm4366, %v4067, -inf
        %v4977 = vrot.slane %v4976, 4
        %v4978 = vmax.f32 %v4976, %v4977
        %v4979 = vrot.slane %v4978, 2
        %v4980 = vmax.f32 %v4978, %v4979
        %v4981 = vrot.slane %v4980, 1
        %v4982 = vmax.f32 %v4980, %v4981
        %v4983 = vsel %vm4366, %v4075, -inf
        %v4984 = vrot.slane %v4983, 4
        %v4985 = vmax.f32 %v4983, %v4984
        %v4986 = vrot.slane %v4985, 2
        %v4987 = vmax.f32 %v4985, %v4986
        %v4988 = vrot.slane %v4987, 1
        %v4989 = vmax.f32 %v4987, %v4988
        %v4990 = vsel %vm4366, %v4083, -inf
        %v4991 = vrot.slane %v4990, 4
        %v4992 = vmax.f32 %v4990, %v4991
        %v4993 = vrot.slane %v4992, 2
        %v4994 = vmax.f32 %v4992, %v4993
        %v4995 = vrot.slane %v4994, 1
        %v4996 = vmax.f32 %v4994, %v4995
        %v4997 = vsel %vm4366, %v4082, -inf
        %v4998 = vrot.slane %v4997, 4
        %v4999 = vmax.f32 %v4997, %v4998
        %v5000 = vrot.slane %v4999, 2
        %v5001 = vmax.f32 %v4999, %v5000
        %v5002 = vrot.slane %v5001, 1
        %v5003 = vmax.f32 %v5001, %v5002
        %v5004 = vsel %vm4366, %v4084, -inf
        %v5005 = vrot.slane %v5004, 4
        %v5006 = vmax.f32 %v5004, %v5005
        %v5007 = vrot.slane %v5006, 2
        %v5008 = vmax.f32 %v5006, %v5007
        %v5009 = vrot.slane %v5008, 1
        %v5010 = vmax.f32 %v5008, %v5009
        %v5011 = vsel %vm4366, %v4092, -inf
        %v5012 = vrot.slane %v5011, 4
        %v5013 = vmax.f32 %v5011, %v5012
        %v5014 = vrot.slane %v5013, 2
        %v5015 = vmax.f32 %v5013, %v5014
        %v5016 = vrot.slane %v5015, 1
        %v5017 = vmax.f32 %v5015, %v5016
        %v5018 = vsel %vm4366, %v4100, -inf
        %v5019 = vrot.slane %v5018, 4
        %v5020 = vmax.f32 %v5018, %v5019
        %v5021 = vrot.slane %v5020, 2
        %v5022 = vmax.f32 %v5020, %v5021
        %v5023 = vrot.slane %v5022, 1
        %v5024 = vmax.f32 %v5022, %v5023
        %v5025 = vsel %vm4366, %v4099, -inf
        %v5026 = vrot.slane %v5025, 4
        %v5027 = vmax.f32 %v5025, %v5026
        %v5028 = vrot.slane %v5027, 2
        %v5029 = vmax.f32 %v5027, %v5028
        %v5030 = vrot.slane %v5029, 1
        %v5031 = vmax.f32 %v5029, %v5030
        %v5032 = vsel %vm4366, %v4101, -inf
        %v5033 = vrot.slane %v5032, 4
        %v5034 = vmax.f32 %v5032, %v5033
        %v5035 = vrot.slane %v5034, 2
        %v5036 = vmax.f32 %v5034, %v5035
        %v5037 = vrot.slane %v5036, 1
        %v5038 = vmax.f32 %v5036, %v5037
        %v5039 = vsel %vm4366, %v4109, -inf
        %v5040 = vrot.slane %v5039, 4
        %v5041 = vmax.f32 %v5039, %v5040
        %v5042 = vrot.slane %v5041, 2
        %v5043 = vmax.f32 %v5041, %v5042
        %v5044 = vrot.slane %v5043, 1
        %v5045 = vmax.f32 %v5043, %v5044
        %v5046 = vsel %vm4366, %v4117, -inf
        %v5047 = vrot.slane %v5046, 4
        %v5048 = vmax.f32 %v5046, %v5047
        %v5049 = vrot.slane %v5048, 2
        %v5050 = vmax.f32 %v5048, %v5049
        %v5051 = vrot.slane %v5050, 1
        %v5052 = vmax.f32 %v5050, %v5051
        %v5053 = vsel %vm4366, %v4116, -inf
        %v5054 = vrot.slane %v5053, 4
        %v5055 = vmax.f32 %v5053, %v5054
        %v5056 = vrot.slane %v5055, 2
        %v5057 = vmax.f32 %v5055, %v5056
        %v5058 = vrot.slane %v5057, 1
        %v5059 = vmax.f32 %v5057, %v5058
        %v5060 = vsel %vm4366, %v4118, -inf
        %v5061 = vrot.slane %v5060, 4
        %v5062 = vmax.f32 %v5060, %v5061
        %v5063 = vrot.slane %v5062, 2
        %v5064 = vmax.f32 %v5062, %v5063
        %v5065 = vrot.slane %v5064, 1
        %v5066 = vmax.f32 %v5064, %v5065
        %v5067 = vsel %vm4366, %v4126, -inf
        %v5068 = vrot.slane %v5067, 4
        %v5069 = vmax.f32 %v5067, %v5068
        %v5070 = vrot.slane %v5069, 2
        %v5071 = vmax.f32 %v5069, %v5070
        %v5072 = vrot.slane %v5071, 1
        %v5073 = vmax.f32 %v5071, %v5072
        %v5074 = vsel %vm4366, %v4134, -inf
        %v5075 = vrot.slane %v5074, 4
        %v5076 = vmax.f32 %v5074, %v5075
        %v5077 = vrot.slane %v5076, 2
        %v5078 = vmax.f32 %v5076, %v5077
        %v5079 = vrot.slane %v5078, 1
        %v5080 = vmax.f32 %v5078, %v5079
        %v5081 = vsel %vm4366, %v4133, -inf
        %v5082 = vrot.slane %v5081, 4
        %v5083 = vmax.f32 %v5081, %v5082
        %v5084 = vrot.slane %v5083, 2
        %v5085 = vmax.f32 %v5083, %v5084
        %v5086 = vrot.slane %v5085, 1
        %v5087 = vmax.f32 %v5085, %v5086
        %v5088 = vsel %vm4366, %v4135, -inf
        %v5089 = vrot.slane %v5088, 4
        %v5090 = vmax.f32 %v5088, %v5089
        %v5091 = vrot.slane %v5090, 2
        %v5092 = vmax.f32 %v5090, %v5091
        %v5093 = vrot.slane %v5092, 1
        %v5094 = vmax.f32 %v5092, %v5093
        %v5095 = vsel %vm4366, %v4143, -inf
        %v5096 = vrot.slane %v5095, 4
        %v5097 = vmax.f32 %v5095, %v5096
        %v5098 = vrot.slane %v5097, 2
        %v5099 = vmax.f32 %v5097, %v5098
        %v5100 = vrot.slane %v5099, 1
        %v5101 = vmax.f32 %v5099, %v5100
        %v5102 = vsel %vm4366, %v4151, -inf
        %v5103 = vrot.slane %v5102, 4
        %v5104 = vmax.f32 %v5102, %v5103
        %v5105 = vrot.slane %v5104, 2
        %v5106 = vmax.f32 %v5104, %v5105
        %v5107 = vrot.slane %v5106, 1
        %v5108 = vmax.f32 %v5106, %v5107
        %v5109 = vsel %vm4366, %v4150, -inf
        %v5110 = vrot.slane %v5109, 4
        %v5111 = vmax.f32 %v5109, %v5110
        %v5112 = vrot.slane %v5111, 2
        %v5113 = vmax.f32 %v5111, %v5112
        %v5114 = vrot.slane %v5113, 1
        %v5115 = vmax.f32 %v5113, %v5114
        %v5116 = vsel %vm4366, %v4152, -inf
        %v5117 = vrot.slane %v5116, 4
        %v5118 = vmax.f32 %v5116, %v5117
        %v5119 = vrot.slane %v5118, 2
        %v5120 = vmax.f32 %v5118, %v5119
        %v5121 = vrot.slane %v5120, 1
        %v5122 = vmax.f32 %v5120, %v5121
        %v5123 = vsel %vm4366, %v4160, -inf
        %v5124 = vrot.slane %v5123, 4
        %v5125 = vmax.f32 %v5123, %v5124
        %v5126 = vrot.slane %v5125, 2
        %v5127 = vmax.f32 %v5125, %v5126
        %v5128 = vrot.slane %v5127, 1
        %v5129 = vmax.f32 %v5127, %v5128
        %v5130 = vsel %vm4366, %v4168, -inf
        %v5131 = vrot.slane %v5130, 4
        %v5132 = vmax.f32 %v5130, %v5131
        %v5133 = vrot.slane %v5132, 2
        %v5134 = vmax.f32 %v5132, %v5133
        %v5135 = vrot.slane %v5134, 1
        %v5136 = vmax.f32 %v5134, %v5135
        %v5137 = vsel %vm4366, %v4167, -inf
        %v5138 = vrot.slane %v5137, 4
        %v5139 = vmax.f32 %v5137, %v5138
        %v5140 = vrot.slane %v5139, 2
        %v5141 = vmax.f32 %v5139, %v5140
        %v5142 = vrot.slane %v5141, 1
        %v5143 = vmax.f32 %v5141, %v5142
        %v5144 = vsel %vm4366, %v4169, -inf
        %v5145 = vrot.slane %v5144, 4
        %v5146 = vmax.f32 %v5144, %v5145
        %v5147 = vrot.slane %v5146, 2
        %v5148 = vmax.f32 %v5146, %v5147
        %v5149 = vrot.slane %v5148, 1
        %v5150 = vmax.f32 %v5148, %v5149
        %v5151 = vsel %vm4366, %v4177, -inf
        %v5152 = vrot.slane %v5151, 4
        %v5153 = vmax.f32 %v5151, %v5152
        %v5154 = vrot.slane %v5153, 2
        %v5155 = vmax.f32 %v5153, %v5154
        %v5156 = vrot.slane %v5155, 1
        %v5157 = vmax.f32 %v5155, %v5156
        %v5158 = vsel %vm4366, %v4185, -inf
        %v5159 = vrot.slane %v5158, 4
        %v5160 = vmax.f32 %v5158, %v5159
        %v5161 = vrot.slane %v5160, 2
        %v5162 = vmax.f32 %v5160, %v5161
        %v5163 = vrot.slane %v5162, 1
        %v5164 = vmax.f32 %v5162, %v5163
        %v5165 = vsel %vm4366, %v4184, -inf
        %v5166 = vrot.slane %v5165, 4
        %v5167 = vmax.f32 %v5165, %v5166
        %v5168 = vrot.slane %v5167, 2
        %v5169 = vmax.f32 %v5167, %v5168
        %v5170 = vrot.slane %v5169, 1
        %v5171 = vmax.f32 %v5169, %v5170
        %v5172 = vsel %vm4366, %v4186, -inf
        %v5173 = vrot.slane %v5172, 4
        %v5174 = vmax.f32 %v5172, %v5173
        %v5175 = vrot.slane %v5174, 2
        %v5176 = vmax.f32 %v5174, %v5175
        %v5177 = vrot.slane %v5176, 1
        %v5178 = vmax.f32 %v5176, %v5177
        %v5179 = vsel %vm4366, %v4194, -inf
        %v5180 = vrot.slane %v5179, 4
        %v5181 = vmax.f32 %v5179, %v5180
        %v5182 = vrot.slane %v5181, 2
        %v5183 = vmax.f32 %v5181, %v5182
        %v5184 = vrot.slane %v5183, 1
        %v5185 = vmax.f32 %v5183, %v5184
        %v5186 = vsel %vm4366, %v4202, -inf
        %v5187 = vrot.slane %v5186, 4
        %v5188 = vmax.f32 %v5186, %v5187
        %v5189 = vrot.slane %v5188, 2
        %v5190 = vmax.f32 %v5188, %v5189
        %v5191 = vrot.slane %v5190, 1
        %v5192 = vmax.f32 %v5190, %v5191
        %v5193 = vsel %vm4366, %v4201, -inf
        %v5194 = vrot.slane %v5193, 4
        %v5195 = vmax.f32 %v5193, %v5194
        %v5196 = vrot.slane %v5195, 2
        %v5197 = vmax.f32 %v5195, %v5196
        %v5198 = vrot.slane %v5197, 1
        %v5199 = vmax.f32 %v5197, %v5198
        %v5200 = vsel %vm4366, %v4203, -inf
        %v5201 = vrot.slane %v5200, 4
        %v5202 = vmax.f32 %v5200, %v5201
        %v5203 = vrot.slane %v5202, 2
        %v5204 = vmax.f32 %v5202, %v5203
        %v5205 = vrot.slane %v5204, 1
        %v5206 = vmax.f32 %v5204, %v5205
        %v5207 = vsel %vm4366, %v4211, -inf
        %v5208 = vrot.slane %v5207, 4
        %v5209 = vmax.f32 %v5207, %v5208
        %v5210 = vrot.slane %v5209, 2
        %v5211 = vmax.f32 %v5209, %v5210
        %v5212 = vrot.slane %v5211, 1
        %v5213 = vmax.f32 %v5211, %v5212
        %v5214 = vsel %vm4366, %v4219, -inf
        %v5215 = vrot.slane %v5214, 4
        %v5216 = vmax.f32 %v5214, %v5215
        %v5217 = vrot.slane %v5216, 2
        %v5218 = vmax.f32 %v5216, %v5217
        %v5219 = vrot.slane %v5218, 1
        %v5220 = vmax.f32 %v5218, %v5219
        %v5221 = vsel %vm4366, %v4218, -inf
        %v5222 = vrot.slane %v5221, 4
        %v5223 = vmax.f32 %v5221, %v5222
        %v5224 = vrot.slane %v5223, 2
        %v5225 = vmax.f32 %v5223, %v5224
        %v5226 = vrot.slane %v5225, 1
        %v5227 = vmax.f32 %v5225, %v5226
        %v5228 = vsel %vm4366, %v4220, -inf
        %v5229 = vrot.slane %v5228, 4
        %v5230 = vmax.f32 %v5228, %v5229
        %v5231 = vrot.slane %v5230, 2
        %v5232 = vmax.f32 %v5230, %v5231
        %v5233 = vrot.slane %v5232, 1
        %v5234 = vmax.f32 %v5232, %v5233
        %v5235 = vsel %vm4366, %v4228, -inf
        %v5236 = vrot.slane %v5235, 4
        %v5237 = vmax.f32 %v5235, %v5236
        %v5238 = vrot.slane %v5237, 2
        %v5239 = vmax.f32 %v5237, %v5238
        %v5240 = vrot.slane %v5239, 1
        %v5241 = vmax.f32 %v5239, %v5240
        %v5242 = vsel %vm4366, %v4236, -inf
        %v5243 = vrot.slane %v5242, 4
        %v5244 = vmax.f32 %v5242, %v5243
        %v5245 = vrot.slane %v5244, 2
        %v5246 = vmax.f32 %v5244, %v5245
        %v5247 = vrot.slane %v5246, 1
        %v5248 = vmax.f32 %v5246, %v5247
        %v5249 = vsel %vm4366, %v4235, -inf
        %v5250 = vrot.slane %v5249, 4
        %v5251 = vmax.f32 %v5249, %v5250
        %v5252 = vrot.slane %v5251, 2
        %v5253 = vmax.f32 %v5251, %v5252
        %v5254 = vrot.slane %v5253, 1
        %v5255 = vmax.f32 %v5253, %v5254
        %v5256 = vsel %vm4366, %v4237, -inf
        %v5257 = vrot.slane %v5256, 4
        %v5258 = vmax.f32 %v5256, %v5257
        %v5259 = vrot.slane %v5258, 2
        %v5260 = vmax.f32 %v5258, %v5259
        %v5261 = vrot.slane %v5260, 1
        %v5262 = vmax.f32 %v5260, %v5261
        %v5263 = vmax.f32 %v4373, %v4429
        %v5264 = vmax.f32 %v4380, %v4436
        %v5265 = vmax.f32 %v4387, %v4443
        %v5266 = vmax.f32 %v4394, %v4450
        %v5267 = vmax.f32 %v4401, %v4457
        %v5268 = vmax.f32 %v4408, %v4464
        %v5269 = vmax.f32 %v4415, %v4471
        %v5270 = vmax.f32 %v4422, %v4478
        %v5271 = vmax.f32 %v4485, %v4541
        %v5272 = vmax.f32 %v4492, %v4548
        %v5273 = vmax.f32 %v4499, %v4555
        %v5274 = vmax.f32 %v4506, %v4562
        %v5275 = vmax.f32 %v4513, %v4569
        %v5276 = vmax.f32 %v4520, %v4576
        %v5277 = vmax.f32 %v4527, %v4583
        %v5278 = vmax.f32 %v4534, %v4590
        %v5279 = vmax.f32 %v4597, %v4653
        %v5280 = vmax.f32 %v4604, %v4660
        %v5281 = vmax.f32 %v4611, %v4667
        %v5282 = vmax.f32 %v4618, %v4674
        %v5283 = vmax.f32 %v4625, %v4681
        %v5284 = vmax.f32 %v4632, %v4688
        %v5285 = vmax.f32 %v4639, %v4695
        %v5286 = vmax.f32 %v4646, %v4702
        %v5287 = vmax.f32 %v4709, %v4765
        %v5288 = vmax.f32 %v4716, %v4772
        %v5289 = vmax.f32 %v4723, %v4779
        %v5290 = vmax.f32 %v4730, %v4786
        %v5291 = vmax.f32 %v4737, %v4793
        %v5292 = vmax.f32 %v4744, %v4800
        %v5293 = vmax.f32 %v4751, %v4807
        %v5294 = vmax.f32 %v4758, %v4814
        %v5295 = vmax.f32 %v4821, %v4877
        %v5296 = vmax.f32 %v4828, %v4884
        %v5297 = vmax.f32 %v4835, %v4891
        %v5298 = vmax.f32 %v4842, %v4898
        %v5299 = vmax.f32 %v4849, %v4905
        %v5300 = vmax.f32 %v4856, %v4912
        %v5301 = vmax.f32 %v4863, %v4919
        %v5302 = vmax.f32 %v4870, %v4926
        %v5303 = vmax.f32 %v4933, %v4989
        %v5304 = vmax.f32 %v4940, %v4996
        %v5305 = vmax.f32 %v4947, %v5003
        %v5306 = vmax.f32 %v4954, %v5010
        %v5307 = vmax.f32 %v4961, %v5017
        %v5308 = vmax.f32 %v4968, %v5024
        %v5309 = vmax.f32 %v4975, %v5031
        %v5310 = vmax.f32 %v4982, %v5038
        %v5311 = vmax.f32 %v5045, %v5101
        %v5312 = vmax.f32 %v5052, %v5108
        %v5313 = vmax.f32 %v5059, %v5115
        %v5314 = vmax.f32 %v5066, %v5122
        %v5315 = vmax.f32 %v5073, %v5129
        %v5316 = vmax.f32 %v5080, %v5136
        %v5317 = vmax.f32 %v5087, %v5143
        %v5318 = vmax.f32 %v5094, %v5150
        %v5319 = vmax.f32 %v5157, %v5213
        %v5320 = vmax.f32 %v5164, %v5220
        %v5321 = vmax.f32 %v5171, %v5227
        %v5322 = vmax.f32 %v5178, %v5234
        %v5323 = vmax.f32 %v5185, %v5241
        %v5324 = vmax.f32 %v5192, %v5248
        %v5325 = vmax.f32 %v5199, %v5255
        %v5326 = vmax.f32 %v5206, %v5262
        %5327 = vst [vmem:[#allocation3] sm:$0xff] 0.0
        %5328 = vst [vmem:[#allocation3 + $0x8] sm:$0x3] 0.0
        %5329 = vst [vmem:[#allocation3 + $0x10] sm:$0xff] 0.0
        %5330 = vst [vmem:[#allocation3 + $0x18] sm:$0x3] 0.0
        %5331 = vst [vmem:[#allocation3 + $0x20] sm:$0xff] 0.0
        %5332 = vst [vmem:[#allocation3 + $0x28] sm:$0x3] 0.0
        %5333 = vst [vmem:[#allocation3 + $0x30] sm:$0xff] 0.0
        %5334 = vst [vmem:[#allocation3 + $0x38] sm:$0x3] 0.0
        %5335 = vst [vmem:[#allocation3 + $0x40] sm:$0xff] 0.0
        %5336 = vst [vmem:[#allocation3 + $0x48] sm:$0x3] 0.0
        %5337 = vst [vmem:[#allocation3 + $0x50] sm:$0xff] 0.0
        %5338 = vst [vmem:[#allocation3 + $0x58] sm:$0x3] 0.0
        %5339 = vst [vmem:[#allocation3 + $0x60] sm:$0xff] 0.0
        %5340 = vst [vmem:[#allocation3 + $0x68] sm:$0x3] 0.0
        %5341 = vst [vmem:[#allocation3 + $0x70] sm:$0xff] 0.0
        %5342 = vst [vmem:[#allocation3 + $0x78] sm:$0x3] 0.0
        %5343 = vst [vmem:[#allocation3 + $0x80] sm:$0xff] 0.0
        %5344 = vst [vmem:[#allocation3 + $0x88] sm:$0x3] 0.0
        %5345 = vst [vmem:[#allocation3 + $0x90] sm:$0xff] 0.0
        %5346 = vst [vmem:[#allocation3 + $0x98] sm:$0x3] 0.0
        %vm5411 = vcmask 1041409
        %v5412 = vsel %vm5411, %v5264, %v5263
        %vm5413 = vcmask 1042434
        %v5414 = vsel %vm5413, %v5265, %v5412
        %vm5415 = vcmask 1043459
        %v5416 = vsel %vm5415, %v5266, %v5414
        %vm5417 = vcmask 1044484
        %v5418 = vsel %vm5417, %v5267, %v5416
        %vm5419 = vcmask 1045509
        %v5420 = vsel %vm5419, %v5268, %v5418
        %vm5421 = vcmask 1046534
        %v5422 = vsel %vm5421, %v5269, %v5420
        %vm5423 = vcmask 1047559
        %v5424 = vsel %vm5423, %v5270, %v5422
        %v5425 = vsel %vm5411, %v5272, %v5271
        %v5426 = vsel %vm5413, %v5273, %v5425
        %v5427 = vsel %vm5415, %v5274, %v5426
        %v5428 = vsel %vm5417, %v5275, %v5427
        %v5429 = vsel %vm5419, %v5276, %v5428
        %v5430 = vsel %vm5421, %v5277, %v5429
        %v5431 = vsel %vm5423, %v5278, %v5430
        %v5432 = vsel %vm5411, %v5280, %v5279
        %v5433 = vsel %vm5413, %v5281, %v5432
        %v5434 = vsel %vm5415, %v5282, %v5433
        %v5435 = vsel %vm5417, %v5283, %v5434
        %v5436 = vsel %vm5419, %v5284, %v5435
        %v5437 = vsel %vm5421, %v5285, %v5436
        %v5438 = vsel %vm5423, %v5286, %v5437
        %v5439 = vsel %vm5411, %v5288, %v5287
        %v5440 = vsel %vm5413, %v5289, %v5439
        %v5441 = vsel %vm5415, %v5290, %v5440
        %v5442 = vsel %vm5417, %v5291, %v5441
        %v5443 = vsel %vm5419, %v5292, %v5442
        %v5444 = vsel %vm5421, %v5293, %v5443
        %v5445 = vsel %vm5423, %v5294, %v5444
        %v5446 = vsel %vm5411, %v5296, %v5295
        %v5447 = vsel %vm5413, %v5297, %v5446
        %v5448 = vsel %vm5415, %v5298, %v5447
        %v5449 = vsel %vm5417, %v5299, %v5448
        %v5450 = vsel %vm5419, %v5300, %v5449
        %v5451 = vsel %vm5421, %v5301, %v5450
        %v5452 = vsel %vm5423, %v5302, %v5451
        %v5453 = vsel %vm5411, %v5304, %v5303
        %v5454 = vsel %vm5413, %v5305, %v5453
        %v5455 = vsel %vm5415, %v5306, %v5454
        %v5456 = vsel %vm5417, %v5307, %v5455
        %v5457 = vsel %vm5419, %v5308, %v5456
        %v5458 = vsel %vm5421, %v5309, %v5457
        %v5459 = vsel %vm5423, %v5310, %v5458
        %v5460 = vsel %vm5411, %v5312, %v5311
        %v5461 = vsel %vm5413, %v5313, %v5460
        %v5462 = vsel %vm5415, %v5314, %v5461
        %v5463 = vsel %vm5417, %v5315, %v5462
        %v5464 = vsel %vm5419, %v5316, %v5463
        %v5465 = vsel %vm5421, %v5317, %v5464
        %v5466 = vsel %vm5423, %v5318, %v5465
        %v5467 = vsel %vm5411, %v5320, %v5319
        %v5468 = vsel %vm5413, %v5321, %v5467
        %v5469 = vsel %vm5415, %v5322, %v5468
        %v5470 = vsel %vm5417, %v5323, %v5469
        %v5471 = vsel %vm5419, %v5324, %v5470
        %v5472 = vsel %vm5421, %v5325, %v5471
        %v5473 = vsel %vm5423, %v5326, %v5472
        %s5482 = scalar_lea.vmem [#allocation3], 16
        %5483 = vst [vmem:[%s5482 + $0x1] sm:$0xff] %v5424
        %5484 = vst [vmem:[%s5482 + $0x11] sm:$0xff] %v5431
        %5485 = vst [vmem:[%s5482 + $0x21] sm:$0xff] %v5438
        %5486 = vst [vmem:[%s5482 + $0x31] sm:$0xff] %v5445
        %5487 = vst [vmem:[%s5482 + $0x41] sm:$0xff] %v5452
        %5488 = vst [vmem:[%s5482 + $0x51] sm:$0xff] %v5459
        %5489 = vst [vmem:[%s5482 + $0x61] sm:$0xff] %v5466
        %5490 = vst [vmem:[%s5482 + $0x71] sm:$0xff] %v5473
        %v5491 = vld [vmem:[#allocation3] sm:$0xff]
        %v5492 = vld [vmem:[#allocation3 + $0x10] sm:$0xff]
        %v5493 = vld [vmem:[#allocation3 + $0x20] sm:$0xff]
        %v5494 = vld [vmem:[#allocation3 + $0x30] sm:$0xff]
        %v5495 = vld [vmem:[#allocation3 + $0x40] sm:$0xff]
        %v5496 = vld [vmem:[#allocation3 + $0x50] sm:$0xff]
        %v5497 = vld [vmem:[#allocation3 + $0x60] sm:$0xff]
        %v5498 = vld [vmem:[#allocation3 + $0x70] sm:$0xff]
        %v5499 = vpack.c.bf16 %v5492, %v5491
        %v5500 = vpack.c.bf16 %v5494, %v5493
        %v5501 = vpack.c.bf16 %v5496, %v5495
        %v5502 = vpack.c.bf16 %v5498, %v5497
        %v5503 = vld [vmem:[#allocation4] sm:$0xf]
        %v5504 = vld [vmem:[#allocation4 + $0x4] sm:$0xf]
        %v5505 = vld [vmem:[#allocation4 + $0x8] sm:$0xf]
        %v5506 = vld [vmem:[#allocation4 + $0xc] sm:$0xf]
        %v5507 = vld [vmem:[#allocation4 + $0x10] sm:$0xf]
        %v5508 = vld [vmem:[#allocation4 + $0x14] sm:$0xf]
        %v5509 = vld [vmem:[#allocation4 + $0x18] sm:$0xf]
        %v5510 = vld [vmem:[#allocation4 + $0x1c] sm:$0xf]
        %v5511 = vld [vmem:[#allocation4 + $0x20] sm:$0xf]
        %v5512 = vld [vmem:[#allocation4 + $0x24] sm:$0xf]
        %v5513 = vld [vmem:[#allocation4 + $0x28] sm:$0xf]
        %v5514 = vld [vmem:[#allocation4 + $0x2c] sm:$0xf]
        %v5515 = vld [vmem:[#allocation4 + $0x30] sm:$0xf]
        %v5516 = vld [vmem:[#allocation4 + $0x34] sm:$0xf]
        %v5517 = vld [vmem:[#allocation4 + $0x38] sm:$0xf]
        %v5518 = vld [vmem:[#allocation4 + $0x3c] sm:$0xf]
        %v5519 = vld [vmem:[#allocation3 + $0x1] sm:$0xff]
        %v5520 = vld [vmem:[#allocation3 + $0x11] sm:$0xff]
        %v5521 = vld [vmem:[#allocation3 + $0x21] sm:$0xff]
        %v5522 = vld [vmem:[#allocation3 + $0x31] sm:$0xff]
        %v5523 = vld [vmem:[#allocation3 + $0x41] sm:$0xff]
        %v5524 = vld [vmem:[#allocation3 + $0x51] sm:$0xff]
        %v5525 = vld [vmem:[#allocation3 + $0x61] sm:$0xff]
        %v5526 = vld [vmem:[#allocation3 + $0x71] sm:$0xff]
        %v5527 = vpack.c.bf16 %v5520, %v5519
        %v5528 = vpack.c.bf16 %v5522, %v5521
        %v5529 = vpack.c.bf16 %v5524, %v5523
        %v5530 = vpack.c.bf16 %v5526, %v5525
        %s5531 = scalar_lea.vmem [#allocation4], 64
        %v5532 = vld [vmem:[%s5531] sm:$0xf]
        %v5533 = vld [vmem:[%s5531 + $0x4] sm:$0xf]
        %v5534 = vld [vmem:[%s5531 + $0x8] sm:$0xf]
        %v5535 = vld [vmem:[%s5531 + $0xc] sm:$0xf]
        %v5536 = vld [vmem:[%s5531 + $0x10] sm:$0xf]
        %v5537 = vld [vmem:[%s5531 + $0x14] sm:$0xf]
        %v5538 = vld [vmem:[%s5531 + $0x18] sm:$0xf]
        %v5539 = vld [vmem:[%s5531 + $0x1c] sm:$0xf]
        %v5540 = vld [vmem:[%s5531 + $0x20] sm:$0xf]
        %v5541 = vld [vmem:[%s5531 + $0x24] sm:$0xf]
        %v5542 = vld [vmem:[%s5531 + $0x28] sm:$0xf]
        %v5543 = vld [vmem:[%s5531 + $0x2c] sm:$0xf]
        %v5544 = vld [vmem:[%s5531 + $0x30] sm:$0xf]
        %v5545 = vld [vmem:[%s5531 + $0x34] sm:$0xf]
        %v5546 = vld [vmem:[%s5531 + $0x38] sm:$0xf]
        %v5547 = vld [vmem:[%s5531 + $0x3c] sm:$0xf]
        %v5564 = vunpack.c.l.b16 %v5532
        %v5565 = vunpack.c.l.b16 %v5533
        %v5566 = vunpack.c.l.b16 %v5534
        %v5567 = vunpack.c.l.b16 %v5535
        %v5568 = vunpack.c.l.b16 %v5536
        %v5569 = vunpack.c.l.b16 %v5537
        %v5570 = vunpack.c.l.b16 %v5538
        %v5571 = vunpack.c.l.b16 %v5539
        %v5572 = vunpack.c.l.b16 %v5540
        %v5573 = vunpack.c.l.b16 %v5541
        %v5574 = vunpack.c.l.b16 %v5542
        %v5575 = vunpack.c.l.b16 %v5543
        %v5576 = vunpack.c.l.b16 %v5544
        %v5577 = vunpack.c.l.b16 %v5545
        %v5578 = vunpack.c.l.b16 %v5546
        %v5579 = vunpack.c.l.b16 %v5547
        %v5580 = vpack.c.b16 %v5565, %v5564
        %v5581 = vpack.c.b16 %v5567, %v5566
        %v5582 = vpack.c.b16 %v5569, %v5568
        %v5583 = vpack.c.b16 %v5571, %v5570
        %v5584 = vpack.c.b16 %v5573, %v5572
        %v5585 = vpack.c.b16 %v5575, %v5574
        %v5586 = vpack.c.b16 %v5577, %v5576
        %v5587 = vpack.c.b16 %v5579, %v5578
        %5596 = vmatprep.subr.bf16.mxu0 0
        %5597 = vmatpush1.bf16.msra.mxu0 %v5587
        %5598 = vmatprep.subr.bf16.mxu0 0
        %5599 = vmatpush1.bf16.msra.mxu0 %v5586
        %5600 = vmatprep.subr.bf16.mxu0 0
        %5601 = vmatpush1.bf16.msra.mxu0 %v5585
        %5602 = vmatprep.subr.bf16.mxu0 0
        %5603 = vmatpush1.bf16.msra.mxu0 %v5584
        %5604 = vmatprep.subr.bf16.mxu0 0
        %5605 = vmatpush1.bf16.msra.mxu0 %v5583
        %5606 = vmatprep.subr.bf16.mxu0 0
        %5607 = vmatpush1.bf16.msra.mxu0 %v5582
        %5608 = vmatprep.subr.bf16.mxu0 0
        %5609 = vmatpush1.bf16.msra.mxu0 %v5581
        %5610 = vmatprep.subr.bf16.mxu0 0
        %5611 = vmatpush1.bf16.msra.mxu0 %v5580
        %5612 = vmatprep.subr.bf16.mxu0 0
        %5613 = vmatpush2.bf16.msra.mxu0 0
        %5614 = vmatprep.subr.bf16.mxu0 0
        %5615 = vmatpush2.bf16.msra.mxu0 0
        %5616 = vmatprep.subr.bf16.mxu0 0
        %5617 = vmatpush2.bf16.msra.mxu0 0
        %5618 = vmatprep.subr.bf16.mxu0 0
        %5619 = vmatpush2.bf16.msra.mxu0 0
        %5620 = vmatprep.subr.bf16.mxu0 0
        %5621 = vmatpush2.bf16.msra.mxu0 0
        %5622 = vmatprep.subr.bf16.mxu0 0
        %5623 = vmatpush2.bf16.msra.mxu0 0
        %5624 = vmatprep.subr.bf16.mxu0 0
        %5625 = vmatpush2.bf16.msra.mxu0 0
        %5626 = vmatprep.subr.bf16.mxu0 0
        %5627 = vmatpush2.bf16.msra.mxu0 0
        %5628 = vmatprep.mubr.bf16.mxu0 0
        %5629 = vmatmul.mubr.bf16.gmra.mxu0 %v5527
        %v5630 = vpop.f32.mrf.mxu0
        %v5631 = vadd.f32 0.0, %v5630
        %v5632 = vpop.f32.mrf.mxu0
        %v5633 = vpop.f32.mrf.mxu0
        %v5634 = vadd.f32 0.0, %v5633
        %v5635 = vpop.f32.mrf.mxu0
        %5636 = vmatprep.mubr.bf16.mxu0 0
        %5637 = vmatmul.mubr.bf16.gmra.mxu0 %v5528
        %v5638 = vpop.f32.mrf.mxu0
        %v5639 = vadd.f32 0.0, %v5638
        %v5640 = vpop.f32.mrf.mxu0
        %v5641 = vpop.f32.mrf.mxu0
        %v5642 = vadd.f32 0.0, %v5641
        %v5643 = vpop.f32.mrf.mxu0
        %5644 = vmatprep.mubr.bf16.mxu0 0
        %5645 = vmatmul.mubr.bf16.gmra.mxu0 %v5529
        %v5646 = vpop.f32.mrf.mxu0
        %v5647 = vadd.f32 0.0, %v5646
        %v5648 = vpop.f32.mrf.mxu0
        %v5649 = vpop.f32.mrf.mxu0
        %v5650 = vadd.f32 0.0, %v5649
        %v5651 = vpop.f32.mrf.mxu0
        %5652 = vmatprep.mubr.bf16.mxu0 0
        %5653 = vmatmul.mubr.bf16.gmra.mxu0 %v5530
        %v5654 = vpop.f32.mrf.mxu0
        %v5655 = vadd.f32 0.0, %v5654
        %v5656 = vpop.f32.mrf.mxu0
        %v5657 = vpop.f32.mrf.mxu0
        %v5658 = vadd.f32 0.0, %v5657
        %v5659 = vpop.f32.mrf.mxu0
        %5660 = vdwg.mxu0
        %v5677 = vunpack.c.l.b16 %v5503
        %v5678 = vunpack.c.l.b16 %v5504
        %v5679 = vunpack.c.l.b16 %v5505
        %v5680 = vunpack.c.l.b16 %v5506
        %v5681 = vunpack.c.l.b16 %v5507
        %v5682 = vunpack.c.l.b16 %v5508
        %v5683 = vunpack.c.l.b16 %v5509
        %v5684 = vunpack.c.l.b16 %v5510
        %v5685 = vunpack.c.l.b16 %v5511
        %v5686 = vunpack.c.l.b16 %v5512
        %v5687 = vunpack.c.l.b16 %v5513
        %v5688 = vunpack.c.l.b16 %v5514
        %v5689 = vunpack.c.l.b16 %v5515
        %v5690 = vunpack.c.l.b16 %v5516
        %v5691 = vunpack.c.l.b16 %v5517
        %v5692 = vunpack.c.l.b16 %v5518
        %v5693 = vpack.c.b16 %v5678, %v5677
        %v5694 = vpack.c.b16 %v5680, %v5679
        %v5695 = vpack.c.b16 %v5682, %v5681
        %v5696 = vpack.c.b16 %v5684, %v5683
        %v5697 = vpack.c.b16 %v5686, %v5685
        %v5698 = vpack.c.b16 %v5688, %v5687
        %v5699 = vpack.c.b16 %v5690, %v5689
        %v5700 = vpack.c.b16 %v5692, %v5691
        %5709 = vmatprep.subr.bf16.mxu0 0
        %5710 = vmatpush1.bf16.msra.mxu0 %v5700
        %5711 = vmatprep.subr.bf16.mxu0 0
        %5712 = vmatpush1.bf16.msra.mxu0 %v5699
        %5713 = vmatprep.subr.bf16.mxu0 0
        %5714 = vmatpush1.bf16.msra.mxu0 %v5698
        %5715 = vmatprep.subr.bf16.mxu0 0
        %5716 = vmatpush1.bf16.msra.mxu0 %v5697
        %5717 = vmatprep.subr.bf16.mxu0 0
        %5718 = vmatpush1.bf16.msra.mxu0 %v5696
        %5719 = vmatprep.subr.bf16.mxu0 0
        %5720 = vmatpush1.bf16.msra.mxu0 %v5695
        %5721 = vmatprep.subr.bf16.mxu0 0
        %5722 = vmatpush1.bf16.msra.mxu0 %v5694
        %5723 = vmatprep.subr.bf16.mxu0 0
        %5724 = vmatpush1.bf16.msra.mxu0 %v5693
        %5725 = vmatprep.subr.bf16.mxu0 0
        %5726 = vmatpush2.bf16.msra.mxu0 0
        %5727 = vmatprep.subr.bf16.mxu0 0
        %5728 = vmatpush2.bf16.msra.mxu0 0
        %5729 = vmatprep.subr.bf16.mxu0 0
        %5730 = vmatpush2.bf16.msra.mxu0 0
        %5731 = vmatprep.subr.bf16.mxu0 0
        %5732 = vmatpush2.bf16.msra.mxu0 0
        %5733 = vmatprep.subr.bf16.mxu0 0
        %5734 = vmatpush2.bf16.msra.mxu0 0
        %5735 = vmatprep.subr.bf16.mxu0 0
        %5736 = vmatpush2.bf16.msra.mxu0 0
        %5737 = vmatprep.subr.bf16.mxu0 0
        %5738 = vmatpush2.bf16.msra.mxu0 0
        %5739 = vmatprep.subr.bf16.mxu0 0
        %5740 = vmatpush2.bf16.msra.mxu0 0
        %5741 = vmatprep.mubr.bf16.mxu0 0
        %5742 = vmatmul.mubr.bf16.gmra.mxu0 %v5499
        %v5743 = vpop.f32.mrf.mxu0
        %v5744 = vadd.f32 %v5631, %v5743
        %v5745 = vpop.f32.mrf.mxu0
        %v5746 = vpop.f32.mrf.mxu0
        %v5747 = vadd.f32 %v5634, %v5746
        %v5748 = vpop.f32.mrf.mxu0
        %5749 = vmatprep.mubr.bf16.mxu0 0
        %5750 = vmatmul.mubr.bf16.gmra.mxu0 %v5500
        %v5751 = vpop.f32.mrf.mxu0
        %v5752 = vadd.f32 %v5639, %v5751
        %v5753 = vpop.f32.mrf.mxu0
        %v5754 = vpop.f32.mrf.mxu0
        %v5755 = vadd.f32 %v5642, %v5754
        %v5756 = vpop.f32.mrf.mxu0
        %5757 = vmatprep.mubr.bf16.mxu0 0
        %5758 = vmatmul.mubr.bf16.gmra.mxu0 %v5501
        %v5759 = vpop.f32.mrf.mxu0
        %v5760 = vadd.f32 %v5647, %v5759
        %v5761 = vpop.f32.mrf.mxu0
        %v5762 = vpop.f32.mrf.mxu0
        %v5763 = vadd.f32 %v5650, %v5762
        %v5764 = vpop.f32.mrf.mxu0
        %5765 = vmatprep.mubr.bf16.mxu0 0
        %5766 = vmatmul.mubr.bf16.gmra.mxu0 %v5502
        %v5767 = vpop.f32.mrf.mxu0
        %v5768 = vadd.f32 %v5655, %v5767
        %v5769 = vpop.f32.mrf.mxu0
        %v5770 = vpop.f32.mrf.mxu0
        %v5771 = vadd.f32 %v5658, %v5770
        %v5772 = vpop.f32.mrf.mxu0
        %5773 = vdwg.mxu0
        %v5774 = vld [vmem:[#allocation3 + $0x2] sm:$0xff]
        %v5775 = vld [vmem:[#allocation3 + $0x12] sm:$0xff]
        %v5776 = vld [vmem:[#allocation3 + $0x22] sm:$0xff]
        %v5777 = vld [vmem:[#allocation3 + $0x32] sm:$0xff]
        %v5778 = vld [vmem:[#allocation3 + $0x42] sm:$0xff]
        %v5779 = vld [vmem:[#allocation3 + $0x52] sm:$0xff]
        %v5780 = vld [vmem:[#allocation3 + $0x62] sm:$0xff]
        %v5781 = vld [vmem:[#allocation3 + $0x72] sm:$0xff]
        %v5782 = vpack.c.bf16 %v5775, %v5774
        %v5783 = vpack.c.bf16 %v5777, %v5776
        %v5784 = vpack.c.bf16 %v5779, %v5778
        %v5785 = vpack.c.bf16 %v5781, %v5780
        %s5786 = scalar_lea.vmem [#allocation4], 128
        %v5787 = vld [vmem:[%s5786] sm:$0xf]
        %v5788 = vld [vmem:[%s5786 + $0x4] sm:$0xf]
        %v5789 = vld [vmem:[%s5786 + $0x8] sm:$0xf]
        %v5790 = vld [vmem:[%s5786 + $0xc] sm:$0xf]
        %v5791 = vld [vmem:[%s5786 + $0x10] sm:$0xf]
        %v5792 = vld [vmem:[%s5786 + $0x14] sm:$0xf]
        %v5793 = vld [vmem:[%s5786 + $0x18] sm:$0xf]
        %v5794 = vld [vmem:[%s5786 + $0x1c] sm:$0xf]
        %v5795 = vld [vmem:[%s5786 + $0x20] sm:$0xf]
        %v5796 = vld [vmem:[%s5786 + $0x24] sm:$0xf]
        %v5797 = vld [vmem:[%s5786 + $0x28] sm:$0xf]
        %v5798 = vld [vmem:[%s5786 + $0x2c] sm:$0xf]
        %v5799 = vld [vmem:[%s5786 + $0x30] sm:$0xf]
        %v5800 = vld [vmem:[%s5786 + $0x34] sm:$0xf]
        %v5801 = vld [vmem:[%s5786 + $0x38] sm:$0xf]
        %v5802 = vld [vmem:[%s5786 + $0x3c] sm:$0xf]
        %v5819 = vunpack.c.l.b16 %v5787
        %v5820 = vunpack.c.l.b16 %v5788
        %v5821 = vunpack.c.l.b16 %v5789
        %v5822 = vunpack.c.l.b16 %v5790
        %v5823 = vunpack.c.l.b16 %v5791
        %v5824 = vunpack.c.l.b16 %v5792
        %v5825 = vunpack.c.l.b16 %v5793
        %v5826 = vunpack.c.l.b16 %v5794
        %v5827 = vunpack.c.l.b16 %v5795
        %v5828 = vunpack.c.l.b16 %v5796
        %v5829 = vunpack.c.l.b16 %v5797
        %v5830 = vunpack.c.l.b16 %v5798
        %v5831 = vunpack.c.l.b16 %v5799
        %v5832 = vunpack.c.l.b16 %v5800
        %v5833 = vunpack.c.l.b16 %v5801
        %v5834 = vunpack.c.l.b16 %v5802
        %v5835 = vpack.c.b16 %v5820, %v5819
        %v5836 = vpack.c.b16 %v5822, %v5821
        %v5837 = vpack.c.b16 %v5824, %v5823
        %v5838 = vpack.c.b16 %v5826, %v5825
        %v5839 = vpack.c.b16 %v5828, %v5827
        %v5840 = vpack.c.b16 %v5830, %v5829
        %v5841 = vpack.c.b16 %v5832, %v5831
        %v5842 = vpack.c.b16 %v5834, %v5833
        %5851 = vmatprep.subr.bf16.mxu0 0
        %5852 = vmatpush1.bf16.msra.mxu0 %v5842
        %5853 = vmatprep.subr.bf16.mxu0 0
        %5854 = vmatpush1.bf16.msra.mxu0 %v5841
        %5855 = vmatprep.subr.bf16.mxu0 0
        %5856 = vmatpush1.bf16.msra.mxu0 %v5840
        %5857 = vmatprep.subr.bf16.mxu0 0
        %5858 = vmatpush1.bf16.msra.mxu0 %v5839
        %5859 = vmatprep.subr.bf16.mxu0 0
        %5860 = vmatpush1.bf16.msra.mxu0 %v5838
        %5861 = vmatprep.subr.bf16.mxu0 0
        %5862 = vmatpush1.bf16.msra.mxu0 %v5837
        %5863 = vmatprep.subr.bf16.mxu0 0
        %5864 = vmatpush1.bf16.msra.mxu0 %v5836
        %5865 = vmatprep.subr.bf16.mxu0 0
        %5866 = vmatpush1.bf16.msra.mxu0 %v5835
        %5867 = vmatprep.subr.bf16.mxu0 0
        %5868 = vmatpush2.bf16.msra.mxu0 0
        %5869 = vmatprep.subr.bf16.mxu0 0
        %5870 = vmatpush2.bf16.msra.mxu0 0
        %5871 = vmatprep.subr.bf16.mxu0 0
        %5872 = vmatpush2.bf16.msra.mxu0 0
        %5873 = vmatprep.subr.bf16.mxu0 0
        %5874 = vmatpush2.bf16.msra.mxu0 0
        %5875 = vmatprep.subr.bf16.mxu0 0
        %5876 = vmatpush2.bf16.msra.mxu0 0
        %5877 = vmatprep.subr.bf16.mxu0 0
        %5878 = vmatpush2.bf16.msra.mxu0 0
        %5879 = vmatprep.subr.bf16.mxu0 0
        %5880 = vmatpush2.bf16.msra.mxu0 0
        %5881 = vmatprep.subr.bf16.mxu0 0
        %5882 = vmatpush2.bf16.msra.mxu0 0
        %5883 = vmatprep.mubr.bf16.mxu0 0
        %5884 = vmatmul.mubr.bf16.gmra.mxu0 %v5782
        %v5885 = vpop.f32.mrf.mxu0
        %v5886 = vadd.f32 0.0, %v5885
        %v5887 = vpop.f32.mrf.mxu0
        %v5888 = vpop.f32.mrf.mxu0
        %v5889 = vadd.f32 0.0, %v5888
        %v5890 = vpop.f32.mrf.mxu0
        %5891 = vmatprep.mubr.bf16.mxu0 0
        %5892 = vmatmul.mubr.bf16.gmra.mxu0 %v5783
        %v5893 = vpop.f32.mrf.mxu0
        %v5894 = vadd.f32 0.0, %v5893
        %v5895 = vpop.f32.mrf.mxu0
        %v5896 = vpop.f32.mrf.mxu0
        %v5897 = vadd.f32 0.0, %v5896
        %v5898 = vpop.f32.mrf.mxu0
        %5899 = vmatprep.mubr.bf16.mxu0 0
        %5900 = vmatmul.mubr.bf16.gmra.mxu0 %v5784
        %v5901 = vpop.f32.mrf.mxu0
        %v5902 = vadd.f32 0.0, %v5901
        %v5903 = vpop.f32.mrf.mxu0
        %v5904 = vpop.f32.mrf.mxu0
        %v5905 = vadd.f32 0.0, %v5904
        %v5906 = vpop.f32.mrf.mxu0
        %5907 = vmatprep.mubr.bf16.mxu0 0
        %5908 = vmatmul.mubr.bf16.gmra.mxu0 %v5785
        %v5909 = vpop.f32.mrf.mxu0
        %v5910 = vadd.f32 0.0, %v5909
        %v5911 = vpop.f32.mrf.mxu0
        %v5912 = vpop.f32.mrf.mxu0
        %v5913 = vadd.f32 0.0, %v5912
        %v5914 = vpop.f32.mrf.mxu0
        %5915 = vdwg.mxu0
        %v5916 = vadd.f32 %v5744, %v5886
        %v5917 = vadd.f32 %v5747, %v5889
        %v5918 = vadd.f32 %v5752, %v5894
        %v5919 = vadd.f32 %v5755, %v5897
        %v5920 = vadd.f32 %v5760, %v5902
        %v5921 = vadd.f32 %v5763, %v5905
        %v5922 = vadd.f32 %v5768, %v5910
        %v5923 = vadd.f32 %v5771, %v5913
        %v5924 = vld [vmem:[%s5482] sm:$0xff]
        %v5925 = vld [vmem:[%s5482 + $0x10] sm:$0xff]
        %v5926 = vld [vmem:[%s5482 + $0x20] sm:$0xff]
        %v5927 = vld [vmem:[%s5482 + $0x30] sm:$0xff]
        %v5928 = vld [vmem:[%s5482 + $0x40] sm:$0xff]
        %v5929 = vld [vmem:[%s5482 + $0x50] sm:$0xff]
        %v5930 = vld [vmem:[%s5482 + $0x60] sm:$0xff]
        %v5931 = vld [vmem:[%s5482 + $0x70] sm:$0xff]
        %v5932 = vpack.c.bf16 %v5925, %v5924
        %v5933 = vpack.c.bf16 %v5927, %v5926
        %v5934 = vpack.c.bf16 %v5929, %v5928
        %v5935 = vpack.c.bf16 %v5931, %v5930
        %s5936 = scalar_lea.vmem [#allocation4], 192
        %v5937 = vld [vmem:[%s5936] sm:$0xf]
        %v5938 = vld [vmem:[%s5936 + $0x4] sm:$0xf]
        %v5939 = vld [vmem:[%s5936 + $0x8] sm:$0xf]
        %v5940 = vld [vmem:[%s5936 + $0xc] sm:$0xf]
        %v5941 = vld [vmem:[%s5936 + $0x10] sm:$0xf]
        %v5942 = vld [vmem:[%s5936 + $0x14] sm:$0xf]
        %v5943 = vld [vmem:[%s5936 + $0x18] sm:$0xf]
        %v5944 = vld [vmem:[%s5936 + $0x1c] sm:$0xf]
        %v5945 = vld [vmem:[%s5936 + $0x20] sm:$0xf]
        %v5946 = vld [vmem:[%s5936 + $0x24] sm:$0xf]
        %v5947 = vld [vmem:[%s5936 + $0x28] sm:$0xf]
        %v5948 = vld [vmem:[%s5936 + $0x2c] sm:$0xf]
        %v5949 = vld [vmem:[%s5936 + $0x30] sm:$0xf]
        %v5950 = vld [vmem:[%s5936 + $0x34] sm:$0xf]
        %v5951 = vld [vmem:[%s5936 + $0x38] sm:$0xf]
        %v5952 = vld [vmem:[%s5936 + $0x3c] sm:$0xf]
        %v5969 = vunpack.c.l.b16 %v5937
        %v5970 = vunpack.c.l.b16 %v5938
        %v5971 = vunpack.c.l.b16 %v5939
        %v5972 = vunpack.c.l.b16 %v5940
        %v5973 = vunpack.c.l.b16 %v5941
        %v5974 = vunpack.c.l.b16 %v5942
        %v5975 = vunpack.c.l.b16 %v5943
        %v5976 = vunpack.c.l.b16 %v5944
        %v5977 = vunpack.c.l.b16 %v5945
        %v5978 = vunpack.c.l.b16 %v5946
        %v5979 = vunpack.c.l.b16 %v5947
        %v5980 = vunpack.c.l.b16 %v5948
        %v5981 = vunpack.c.l.b16 %v5949
        %v5982 = vunpack.c.l.b16 %v5950
        %v5983 = vunpack.c.l.b16 %v5951
        %v5984 = vunpack.c.l.b16 %v5952
        %v5985 = vpack.c.b16 %v5970, %v5969
        %v5986 = vpack.c.b16 %v5972, %v5971
        %v5987 = vpack.c.b16 %v5974, %v5973
        %v5988 = vpack.c.b16 %v5976, %v5975
        %v5989 = vpack.c.b16 %v5978, %v5977
        %v5990 = vpack.c.b16 %v5980, %v5979
        %v5991 = vpack.c.b16 %v5982, %v5981
        %v5992 = vpack.c.b16 %v5984, %v5983
        %6001 = vmatprep.subr.bf16.mxu0 0
        %6002 = vmatpush1.bf16.msra.mxu0 %v5992
        %6003 = vmatprep.subr.bf16.mxu0 0
        %6004 = vmatpush1.bf16.msra.mxu0 %v5991
        %6005 = vmatprep.subr.bf16.mxu0 0
        %6006 = vmatpush1.bf16.msra.mxu0 %v5990
        %6007 = vmatprep.subr.bf16.mxu0 0
        %6008 = vmatpush1.bf16.msra.mxu0 %v5989
        %6009 = vmatprep.subr.bf16.mxu0 0
        %6010 = vmatpush1.bf16.msra.mxu0 %v5988
        %6011 = vmatprep.subr.bf16.mxu0 0
        %6012 = vmatpush1.bf16.msra.mxu0 %v5987
        %6013 = vmatprep.subr.bf16.mxu0 0
        %6014 = vmatpush1.bf16.msra.mxu0 %v5986
        %6015 = vmatprep.subr.bf16.mxu0 0
        %6016 = vmatpush1.bf16.msra.mxu0 %v5985
        %6017 = vmatprep.subr.bf16.mxu0 0
        %6018 = vmatpush2.bf16.msra.mxu0 0
        %6019 = vmatprep.subr.bf16.mxu0 0
        %6020 = vmatpush2.bf16.msra.mxu0 0
        %6021 = vmatprep.subr.bf16.mxu0 0
        %6022 = vmatpush2.bf16.msra.mxu0 0
        %6023 = vmatprep.subr.bf16.mxu0 0
        %6024 = vmatpush2.bf16.msra.mxu0 0
        %6025 = vmatprep.subr.bf16.mxu0 0
        %6026 = vmatpush2.bf16.msra.mxu0 0
        %6027 = vmatprep.subr.bf16.mxu0 0
        %6028 = vmatpush2.bf16.msra.mxu0 0
        %6029 = vmatprep.subr.bf16.mxu0 0
        %6030 = vmatpush2.bf16.msra.mxu0 0
        %6031 = vmatprep.subr.bf16.mxu0 0
        %6032 = vmatpush2.bf16.msra.mxu0 0
        %6033 = vmatprep.mubr.bf16.mxu0 0
        %6034 = vmatmul.mubr.bf16.gmra.mxu0 %v5932
        %v6035 = vpop.f32.mrf.mxu0
        %v6036 = vadd.f32 0.0, %v6035
        %v6037 = vpop.f32.mrf.mxu0
        %v6038 = vpop.f32.mrf.mxu0
        %v6039 = vadd.f32 0.0, %v6038
        %v6040 = vpop.f32.mrf.mxu0
        %6041 = vmatprep.mubr.bf16.mxu0 0
        %6042 = vmatmul.mubr.bf16.gmra.mxu0 %v5933
        %v6043 = vpop.f32.mrf.mxu0
        %v6044 = vadd.f32 0.0, %v6043
        %v6045 = vpop.f32.mrf.mxu0
        %v6046 = vpop.f32.mrf.mxu0
        %v6047 = vadd.f32 0.0, %v6046
        %v6048 = vpop.f32.mrf.mxu0
        %6049 = vmatprep.mubr.bf16.mxu0 0
        %6050 = vmatmul.mubr.bf16.gmra.mxu0 %v5934
        %v6051 = vpop.f32.mrf.mxu0
        %v6052 = vadd.f32 0.0, %v6051
        %v6053 = vpop.f32.mrf.mxu0
        %v6054 = vpop.f32.mrf.mxu0
        %v6055 = vadd.f32 0.0, %v6054
        %v6056 = vpop.f32.mrf.mxu0
        %6057 = vmatprep.mubr.bf16.mxu0 0
        %6058 = vmatmul.mubr.bf16.gmra.mxu0 %v5935
        %v6059 = vpop.f32.mrf.mxu0
        %v6060 = vadd.f32 0.0, %v6059
        %v6061 = vpop.f32.mrf.mxu0
        %v6062 = vpop.f32.mrf.mxu0
        %v6063 = vadd.f32 0.0, %v6062
        %v6064 = vpop.f32.mrf.mxu0
        %6065 = vdwg.mxu0
        %v6066 = vadd.f32 %v5916, %v6036
        %v6067 = vadd.f32 %v5917, %v6039
        %v6068 = vadd.f32 %v5918, %v6044
        %v6069 = vadd.f32 %v5919, %v6047
        %v6070 = vadd.f32 %v5920, %v6052
        %v6071 = vadd.f32 %v5921, %v6055
        %v6072 = vadd.f32 %v5922, %v6060
        %v6073 = vadd.f32 %v5923, %v6063
        %v6074 = vld [vmem:[%s5482 + $0x1] sm:$0xff]
        %v6075 = vld [vmem:[%s5482 + $0x11] sm:$0xff]
        %v6076 = vld [vmem:[%s5482 + $0x21] sm:$0xff]
        %v6077 = vld [vmem:[%s5482 + $0x31] sm:$0xff]
        %v6078 = vld [vmem:[%s5482 + $0x41] sm:$0xff]
        %v6079 = vld [vmem:[%s5482 + $0x51] sm:$0xff]
        %v6080 = vld [vmem:[%s5482 + $0x61] sm:$0xff]
        %v6081 = vld [vmem:[%s5482 + $0x71] sm:$0xff]
        %v6082 = vpack.c.bf16 %v6075, %v6074
        %v6083 = vpack.c.bf16 %v6077, %v6076
        %v6084 = vpack.c.bf16 %v6079, %v6078
        %v6085 = vpack.c.bf16 %v6081, %v6080
        %s6086 = scalar_lea.vmem [#allocation4], 256
        %v6087 = vld [vmem:[%s6086] sm:$0xf]
        %v6088 = vld [vmem:[%s6086 + $0x4] sm:$0xf]
        %v6089 = vld [vmem:[%s6086 + $0x8] sm:$0xf]
        %v6090 = vld [vmem:[%s6086 + $0xc] sm:$0xf]
        %v6091 = vld [vmem:[%s6086 + $0x10] sm:$0xf]
        %v6092 = vld [vmem:[%s6086 + $0x14] sm:$0xf]
        %v6093 = vld [vmem:[%s6086 + $0x18] sm:$0xf]
        %v6094 = vld [vmem:[%s6086 + $0x1c] sm:$0xf]
        %v6095 = vld [vmem:[%s6086 + $0x20] sm:$0xf]
        %v6096 = vld [vmem:[%s6086 + $0x24] sm:$0xf]
        %v6097 = vld [vmem:[%s6086 + $0x28] sm:$0xf]
        %v6098 = vld [vmem:[%s6086 + $0x2c] sm:$0xf]
        %v6099 = vld [vmem:[%s6086 + $0x30] sm:$0xf]
        %v6100 = vld [vmem:[%s6086 + $0x34] sm:$0xf]
        %v6101 = vld [vmem:[%s6086 + $0x38] sm:$0xf]
        %v6102 = vld [vmem:[%s6086 + $0x3c] sm:$0xf]
        %v6119 = vunpack.c.l.b16 %v6087
        %v6120 = vunpack.c.l.b16 %v6088
        %v6121 = vunpack.c.l.b16 %v6089
        %v6122 = vunpack.c.l.b16 %v6090
        %v6123 = vunpack.c.l.b16 %v6091
        %v6124 = vunpack.c.l.b16 %v6092
        %v6125 = vunpack.c.l.b16 %v6093
        %v6126 = vunpack.c.l.b16 %v6094
        %v6127 = vunpack.c.l.b16 %v6095
        %v6128 = vunpack.c.l.b16 %v6096
        %v6129 = vunpack.c.l.b16 %v6097
        %v6130 = vunpack.c.l.b16 %v6098
        %v6131 = vunpack.c.l.b16 %v6099
        %v6132 = vunpack.c.l.b16 %v6100
        %v6133 = vunpack.c.l.b16 %v6101
        %v6134 = vunpack.c.l.b16 %v6102
        %v6135 = vpack.c.b16 %v6120, %v6119
        %v6136 = vpack.c.b16 %v6122, %v6121
        %v6137 = vpack.c.b16 %v6124, %v6123
        %v6138 = vpack.c.b16 %v6126, %v6125
        %v6139 = vpack.c.b16 %v6128, %v6127
        %v6140 = vpack.c.b16 %v6130, %v6129
        %v6141 = vpack.c.b16 %v6132, %v6131
        %v6142 = vpack.c.b16 %v6134, %v6133
        %6151 = vmatprep.subr.bf16.mxu0 0
        %6152 = vmatpush1.bf16.msra.mxu0 %v6142
        %6153 = vmatprep.subr.bf16.mxu0 0
        %6154 = vmatpush1.bf16.msra.mxu0 %v6141
        %6155 = vmatprep.subr.bf16.mxu0 0
        %6156 = vmatpush1.bf16.msra.mxu0 %v6140
        %6157 = vmatprep.subr.bf16.mxu0 0
        %6158 = vmatpush1.bf16.msra.mxu0 %v6139
        %6159 = vmatprep.subr.bf16.mxu0 0
        %6160 = vmatpush1.bf16.msra.mxu0 %v6138
        %6161 = vmatprep.subr.bf16.mxu0 0
        %6162 = vmatpush1.bf16.msra.mxu0 %v6137
        %6163 = vmatprep.subr.bf16.mxu0 0
        %6164 = vmatpush1.bf16.msra.mxu0 %v6136
        %6165 = vmatprep.subr.bf16.mxu0 0
        %6166 = vmatpush1.bf16.msra.mxu0 %v6135
        %6167 = vmatprep.subr.bf16.mxu0 0
        %6168 = vmatpush2.bf16.msra.mxu0 0
        %6169 = vmatprep.subr.bf16.mxu0 0
        %6170 = vmatpush2.bf16.msra.mxu0 0
        %6171 = vmatprep.subr.bf16.mxu0 0
        %6172 = vmatpush2.bf16.msra.mxu0 0
        %6173 = vmatprep.subr.bf16.mxu0 0
        %6174 = vmatpush2.bf16.msra.mxu0 0
        %6175 = vmatprep.subr.bf16.mxu0 0
        %6176 = vmatpush2.bf16.msra.mxu0 0
        %6177 = vmatprep.subr.bf16.mxu0 0
        %6178 = vmatpush2.bf16.msra.mxu0 0
        %6179 = vmatprep.subr.bf16.mxu0 0
        %6180 = vmatpush2.bf16.msra.mxu0 0
        %6181 = vmatprep.subr.bf16.mxu0 0
        %6182 = vmatpush2.bf16.msra.mxu0 0
        %6183 = vmatprep.mubr.bf16.mxu0 0
        %6184 = vmatmul.mubr.bf16.gmra.mxu0 %v6082
        %v6185 = vpop.f32.mrf.mxu0
        %v6186 = vadd.f32 0.0, %v6185
        %v6187 = vpop.f32.mrf.mxu0
        %v6188 = vpop.f32.mrf.mxu0
        %v6189 = vadd.f32 0.0, %v6188
        %v6190 = vpop.f32.mrf.mxu0
        %6191 = vmatprep.mubr.bf16.mxu0 0
        %6192 = vmatmul.mubr.bf16.gmra.mxu0 %v6083
        %v6193 = vpop.f32.mrf.mxu0
        %v6194 = vadd.f32 0.0, %v6193
        %v6195 = vpop.f32.mrf.mxu0
        %v6196 = vpop.f32.mrf.mxu0
        %v6197 = vadd.f32 0.0, %v6196
        %v6198 = vpop.f32.mrf.mxu0
        %6199 = vmatprep.mubr.bf16.mxu0 0
        %6200 = vmatmul.mubr.bf16.gmra.mxu0 %v6084
        %v6201 = vpop.f32.mrf.mxu0
        %v6202 = vadd.f32 0.0, %v6201
        %v6203 = vpop.f32.mrf.mxu0
        %v6204 = vpop.f32.mrf.mxu0
        %v6205 = vadd.f32 0.0, %v6204
        %v6206 = vpop.f32.mrf.mxu0
        %6207 = vmatprep.mubr.bf16.mxu0 0
        %6208 = vmatmul.mubr.bf16.gmra.mxu0 %v6085
        %v6209 = vpop.f32.mrf.mxu0
        %v6210 = vadd.f32 0.0, %v6209
        %v6211 = vpop.f32.mrf.mxu0
        %v6212 = vpop.f32.mrf.mxu0
        %v6213 = vadd.f32 0.0, %v6212
        %v6214 = vpop.f32.mrf.mxu0
        %6215 = vdwg.mxu0
        %v6216 = vadd.f32 %v6066, %v6186
        %v6217 = vadd.f32 %v6067, %v6189
        %v6218 = vadd.f32 %v6068, %v6194
        %v6219 = vadd.f32 %v6069, %v6197
        %v6220 = vadd.f32 %v6070, %v6202
        %v6221 = vadd.f32 %v6071, %v6205
        %v6222 = vadd.f32 %v6072, %v6210
        %v6223 = vadd.f32 %v6073, %v6213
        %v6224 = vld [vmem:[%s5482 + $0x2] sm:$0xff]
        %v6225 = vld [vmem:[%s5482 + $0x12] sm:$0xff]
        %v6226 = vld [vmem:[%s5482 + $0x22] sm:$0xff]
        %v6227 = vld [vmem:[%s5482 + $0x32] sm:$0xff]
        %v6228 = vld [vmem:[%s5482 + $0x42] sm:$0xff]
        %v6229 = vld [vmem:[%s5482 + $0x52] sm:$0xff]
        %v6230 = vld [vmem:[%s5482 + $0x62] sm:$0xff]
        %v6231 = vld [vmem:[%s5482 + $0x72] sm:$0xff]
        %v6232 = vpack.c.bf16 %v6225, %v6224
        %v6233 = vpack.c.bf16 %v6227, %v6226
        %v6234 = vpack.c.bf16 %v6229, %v6228
        %v6235 = vpack.c.bf16 %v6231, %v6230
        %s6236 = scalar_lea.vmem [#allocation4], 320
        %v6237 = vld [vmem:[%s6236] sm:$0xf]
        %v6238 = vld [vmem:[%s6236 + $0x4] sm:$0xf]
        %v6239 = vld [vmem:[%s6236 + $0x8] sm:$0xf]
        %v6240 = vld [vmem:[%s6236 + $0xc] sm:$0xf]
        %v6241 = vld [vmem:[%s6236 + $0x10] sm:$0xf]
        %v6242 = vld [vmem:[%s6236 + $0x14] sm:$0xf]
        %v6243 = vld [vmem:[%s6236 + $0x18] sm:$0xf]
        %v6244 = vld [vmem:[%s6236 + $0x1c] sm:$0xf]
        %v6245 = vld [vmem:[%s6236 + $0x20] sm:$0xf]
        %v6246 = vld [vmem:[%s6236 + $0x24] sm:$0xf]
        %v6247 = vld [vmem:[%s6236 + $0x28] sm:$0xf]
        %v6248 = vld [vmem:[%s6236 + $0x2c] sm:$0xf]
        %v6249 = vld [vmem:[%s6236 + $0x30] sm:$0xf]
        %v6250 = vld [vmem:[%s6236 + $0x34] sm:$0xf]
        %v6251 = vld [vmem:[%s6236 + $0x38] sm:$0xf]
        %v6252 = vld [vmem:[%s6236 + $0x3c] sm:$0xf]
        %v6269 = vunpack.c.l.b16 %v6237
        %v6270 = vunpack.c.l.b16 %v6238
        %v6271 = vunpack.c.l.b16 %v6239
        %v6272 = vunpack.c.l.b16 %v6240
        %v6273 = vunpack.c.l.b16 %v6241
        %v6274 = vunpack.c.l.b16 %v6242
        %v6275 = vunpack.c.l.b16 %v6243
        %v6276 = vunpack.c.l.b16 %v6244
        %v6277 = vunpack.c.l.b16 %v6245
        %v6278 = vunpack.c.l.b16 %v6246
        %v6279 = vunpack.c.l.b16 %v6247
        %v6280 = vunpack.c.l.b16 %v6248
        %v6281 = vunpack.c.l.b16 %v6249
        %v6282 = vunpack.c.l.b16 %v6250
        %v6283 = vunpack.c.l.b16 %v6251
        %v6284 = vunpack.c.l.b16 %v6252
        %v6285 = vpack.c.b16 %v6270, %v6269
        %v6286 = vpack.c.b16 %v6272, %v6271
        %v6287 = vpack.c.b16 %v6274, %v6273
        %v6288 = vpack.c.b16 %v6276, %v6275
        %v6289 = vpack.c.b16 %v6278, %v6277
        %v6290 = vpack.c.b16 %v6280, %v6279
        %v6291 = vpack.c.b16 %v6282, %v6281
        %v6292 = vpack.c.b16 %v6284, %v6283
        %6301 = vmatprep.subr.bf16.mxu0 0
        %6302 = vmatpush1.bf16.msra.mxu0 %v6292
        %6303 = vmatprep.subr.bf16.mxu0 0
        %6304 = vmatpush1.bf16.msra.mxu0 %v6291
        %6305 = vmatprep.subr.bf16.mxu0 0
        %6306 = vmatpush1.bf16.msra.mxu0 %v6290
        %6307 = vmatprep.subr.bf16.mxu0 0
        %6308 = vmatpush1.bf16.msra.mxu0 %v6289
        %6309 = vmatprep.subr.bf16.mxu0 0
        %6310 = vmatpush1.bf16.msra.mxu0 %v6288
        %6311 = vmatprep.subr.bf16.mxu0 0
        %6312 = vmatpush1.bf16.msra.mxu0 %v6287
        %6313 = vmatprep.subr.bf16.mxu0 0
        %6314 = vmatpush1.bf16.msra.mxu0 %v6286
        %6315 = vmatprep.subr.bf16.mxu0 0
        %6316 = vmatpush1.bf16.msra.mxu0 %v6285
        %6317 = vmatprep.subr.bf16.mxu0 0
        %6318 = vmatpush2.bf16.msra.mxu0 0
        %6319 = vmatprep.subr.bf16.mxu0 0
        %6320 = vmatpush2.bf16.msra.mxu0 0
        %6321 = vmatprep.subr.bf16.mxu0 0
        %6322 = vmatpush2.bf16.msra.mxu0 0
        %6323 = vmatprep.subr.bf16.mxu0 0
        %6324 = vmatpush2.bf16.msra.mxu0 0
        %6325 = vmatprep.subr.bf16.mxu0 0
        %6326 = vmatpush2.bf16.msra.mxu0 0
        %6327 = vmatprep.subr.bf16.mxu0 0
        %6328 = vmatpush2.bf16.msra.mxu0 0
        %6329 = vmatprep.subr.bf16.mxu0 0
        %6330 = vmatpush2.bf16.msra.mxu0 0
        %6331 = vmatprep.subr.bf16.mxu0 0
        %6332 = vmatpush2.bf16.msra.mxu0 0
        %6333 = vmatprep.mubr.bf16.mxu0 0
        %6334 = vmatmul.mubr.bf16.gmra.mxu0 %v6232
        %v6335 = vpop.f32.mrf.mxu0
        %v6336 = vadd.f32 0.0, %v6335
        %v6337 = vpop.f32.mrf.mxu0
        %v6338 = vpop.f32.mrf.mxu0
        %v6339 = vadd.f32 0.0, %v6338
        %v6340 = vpop.f32.mrf.mxu0
        %6341 = vmatprep.mubr.bf16.mxu0 0
        %6342 = vmatmul.mubr.bf16.gmra.mxu0 %v6233
        %v6343 = vpop.f32.mrf.mxu0
        %v6344 = vadd.f32 0.0, %v6343
        %v6345 = vpop.f32.mrf.mxu0
        %v6346 = vpop.f32.mrf.mxu0
        %v6347 = vadd.f32 0.0, %v6346
        %v6348 = vpop.f32.mrf.mxu0
        %6349 = vmatprep.mubr.bf16.mxu0 0
        %6350 = vmatmul.mubr.bf16.gmra.mxu0 %v6234
        %v6351 = vpop.f32.mrf.mxu0
        %v6352 = vadd.f32 0.0, %v6351
        %v6353 = vpop.f32.mrf.mxu0
        %v6354 = vpop.f32.mrf.mxu0
        %v6355 = vadd.f32 0.0, %v6354
        %v6356 = vpop.f32.mrf.mxu0
        %6357 = vmatprep.mubr.bf16.mxu0 0
        %6358 = vmatmul.mubr.bf16.gmra.mxu0 %v6235
        %v6359 = vpop.f32.mrf.mxu0
        %v6360 = vadd.f32 0.0, %v6359
        %v6361 = vpop.f32.mrf.mxu0
        %v6362 = vpop.f32.mrf.mxu0
        %v6363 = vadd.f32 0.0, %v6362
        %v6364 = vpop.f32.mrf.mxu0
        %6365 = vdwg.mxu0
        %v6366 = vadd.f32 %v6216, %v6336
        %v6367 = vadd.f32 %v6217, %v6339
        %v6368 = vadd.f32 %v6218, %v6344
        %v6369 = vadd.f32 %v6219, %v6347
        %v6370 = vadd.f32 %v6220, %v6352
        %v6371 = vadd.f32 %v6221, %v6355
        %v6372 = vadd.f32 %v6222, %v6360
        %v6373 = vadd.f32 %v6223, %v6363
        %s6374 = scalar_lea.vmem [#allocation3], 32
        %v6375 = vld [vmem:[%s6374] sm:$0xff]
        %v6376 = vld [vmem:[%s6374 + $0x10] sm:$0xff]
        %v6377 = vld [vmem:[%s6374 + $0x20] sm:$0xff]
        %v6378 = vld [vmem:[%s6374 + $0x30] sm:$0xff]
        %v6379 = vld [vmem:[%s6374 + $0x40] sm:$0xff]
        %v6380 = vld [vmem:[%s6374 + $0x50] sm:$0xff]
        %v6381 = vld [vmem:[%s6374 + $0x60] sm:$0xff]
        %v6382 = vld [vmem:[%s6374 + $0x70] sm:$0xff]
        %v6383 = vpack.c.bf16 %v6376, %v6375
        %v6384 = vpack.c.bf16 %v6378, %v6377
        %v6385 = vpack.c.bf16 %v6380, %v6379
        %v6386 = vpack.c.bf16 %v6382, %v6381
        %s6387 = scalar_lea.vmem [#allocation4], 384
        %v6388 = vld [vmem:[%s6387] sm:$0xf]
        %v6389 = vld [vmem:[%s6387 + $0x4] sm:$0xf]
        %v6390 = vld [vmem:[%s6387 + $0x8] sm:$0xf]
        %v6391 = vld [vmem:[%s6387 + $0xc] sm:$0xf]
        %v6392 = vld [vmem:[%s6387 + $0x10] sm:$0xf]
        %v6393 = vld [vmem:[%s6387 + $0x14] sm:$0xf]
        %v6394 = vld [vmem:[%s6387 + $0x18] sm:$0xf]
        %v6395 = vld [vmem:[%s6387 + $0x1c] sm:$0xf]
        %v6396 = vld [vmem:[%s6387 + $0x20] sm:$0xf]
        %v6397 = vld [vmem:[%s6387 + $0x24] sm:$0xf]
        %v6398 = vld [vmem:[%s6387 + $0x28] sm:$0xf]
        %v6399 = vld [vmem:[%s6387 + $0x2c] sm:$0xf]
        %v6400 = vld [vmem:[%s6387 + $0x30] sm:$0xf]
        %v6401 = vld [vmem:[%s6387 + $0x34] sm:$0xf]
        %v6402 = vld [vmem:[%s6387 + $0x38] sm:$0xf]
        %v6403 = vld [vmem:[%s6387 + $0x3c] sm:$0xf]
        %v6420 = vunpack.c.l.b16 %v6388
        %v6421 = vunpack.c.l.b16 %v6389
        %v6422 = vunpack.c.l.b16 %v6390
        %v6423 = vunpack.c.l.b16 %v6391
        %v6424 = vunpack.c.l.b16 %v6392
        %v6425 = vunpack.c.l.b16 %v6393
        %v6426 = vunpack.c.l.b16 %v6394
        %v6427 = vunpack.c.l.b16 %v6395
        %v6428 = vunpack.c.l.b16 %v6396
        %v6429 = vunpack.c.l.b16 %v6397
        %v6430 = vunpack.c.l.b16 %v6398
        %v6431 = vunpack.c.l.b16 %v6399
        %v6432 = vunpack.c.l.b16 %v6400
        %v6433 = vunpack.c.l.b16 %v6401
        %v6434 = vunpack.c.l.b16 %v6402
        %v6435 = vunpack.c.l.b16 %v6403
        %v6436 = vpack.c.b16 %v6421, %v6420
        %v6437 = vpack.c.b16 %v6423, %v6422
        %v6438 = vpack.c.b16 %v6425, %v6424
        %v6439 = vpack.c.b16 %v6427, %v6426
        %v6440 = vpack.c.b16 %v6429, %v6428
        %v6441 = vpack.c.b16 %v6431, %v6430
        %v6442 = vpack.c.b16 %v6433, %v6432
        %v6443 = vpack.c.b16 %v6435, %v6434
        %6452 = vmatprep.subr.bf16.mxu0 0
        %6453 = vmatpush1.bf16.msra.mxu0 %v6443
        %6454 = vmatprep.subr.bf16.mxu0 0
        %6455 = vmatpush1.bf16.msra.mxu0 %v6442
        %6456 = vmatprep.subr.bf16.mxu0 0
        %6457 = vmatpush1.bf16.msra.mxu0 %v6441
        %6458 = vmatprep.subr.bf16.mxu0 0
        %6459 = vmatpush1.bf16.msra.mxu0 %v6440
        %6460 = vmatprep.subr.bf16.mxu0 0
        %6461 = vmatpush1.bf16.msra.mxu0 %v6439
        %6462 = vmatprep.subr.bf16.mxu0 0
        %6463 = vmatpush1.bf16.msra.mxu0 %v6438
        %6464 = vmatprep.subr.bf16.mxu0 0
        %6465 = vmatpush1.bf16.msra.mxu0 %v6437
        %6466 = vmatprep.subr.bf16.mxu0 0
        %6467 = vmatpush1.bf16.msra.mxu0 %v6436
        %6468 = vmatprep.subr.bf16.mxu0 0
        %6469 = vmatpush2.bf16.msra.mxu0 0
        %6470 = vmatprep.subr.bf16.mxu0 0
        %6471 = vmatpush2.bf16.msra.mxu0 0
        %6472 = vmatprep.subr.bf16.mxu0 0
        %6473 = vmatpush2.bf16.msra.mxu0 0
        %6474 = vmatprep.subr.bf16.mxu0 0
        %6475 = vmatpush2.bf16.msra.mxu0 0
        %6476 = vmatprep.subr.bf16.mxu0 0
        %6477 = vmatpush2.bf16.msra.mxu0 0
        %6478 = vmatprep.subr.bf16.mxu0 0
        %6479 = vmatpush2.bf16.msra.mxu0 0
        %6480 = vmatprep.subr.bf16.mxu0 0
        %6481 = vmatpush2.bf16.msra.mxu0 0
        %6482 = vmatprep.subr.bf16.mxu0 0
        %6483 = vmatpush2.bf16.msra.mxu0 0
        %6484 = vmatprep.mubr.bf16.mxu0 0
        %6485 = vmatmul.mubr.bf16.gmra.mxu0 %v6383
        %v6486 = vpop.f32.mrf.mxu0
        %v6487 = vadd.f32 0.0, %v6486
        %v6488 = vpop.f32.mrf.mxu0
        %v6489 = vpop.f32.mrf.mxu0
        %v6490 = vadd.f32 0.0, %v6489
        %v6491 = vpop.f32.mrf.mxu0
        %6492 = vmatprep.mubr.bf16.mxu0 0
        %6493 = vmatmul.mubr.bf16.gmra.mxu0 %v6384
        %v6494 = vpop.f32.mrf.mxu0
        %v6495 = vadd.f32 0.0, %v6494
        %v6496 = vpop.f32.mrf.mxu0
        %v6497 = vpop.f32.mrf.mxu0
        %v6498 = vadd.f32 0.0, %v6497
        %v6499 = vpop.f32.mrf.mxu0
        %6500 = vmatprep.mubr.bf16.mxu0 0
        %6501 = vmatmul.mubr.bf16.gmra.mxu0 %v6385
        %v6502 = vpop.f32.mrf.mxu0
        %v6503 = vadd.f32 0.0, %v6502
        %v6504 = vpop.f32.mrf.mxu0
        %v6505 = vpop.f32.mrf.mxu0
        %v6506 = vadd.f32 0.0, %v6505
        %v6507 = vpop.f32.mrf.mxu0
        %6508 = vmatprep.mubr.bf16.mxu0 0
        %6509 = vmatmul.mubr.bf16.gmra.mxu0 %v6386
        %v6510 = vpop.f32.mrf.mxu0
        %v6511 = vadd.f32 0.0, %v6510
        %v6512 = vpop.f32.mrf.mxu0
        %v6513 = vpop.f32.mrf.mxu0
        %v6514 = vadd.f32 0.0, %v6513
        %v6515 = vpop.f32.mrf.mxu0
        %6516 = vdwg.mxu0
        %v6517 = vadd.f32 %v6366, %v6487
        %v6518 = vadd.f32 %v6367, %v6490
        %v6519 = vadd.f32 %v6368, %v6495
        %v6520 = vadd.f32 %v6369, %v6498
        %v6521 = vadd.f32 %v6370, %v6503
        %v6522 = vadd.f32 %v6371, %v6506
        %v6523 = vadd.f32 %v6372, %v6511
        %v6524 = vadd.f32 %v6373, %v6514
        %v6525 = vld [vmem:[%s6374 + $0x1] sm:$0xff]
        %v6526 = vld [vmem:[%s6374 + $0x11] sm:$0xff]
        %v6527 = vld [vmem:[%s6374 + $0x21] sm:$0xff]
        %v6528 = vld [vmem:[%s6374 + $0x31] sm:$0xff]
        %v6529 = vld [vmem:[%s6374 + $0x41] sm:$0xff]
        %v6530 = vld [vmem:[%s6374 + $0x51] sm:$0xff]
        %v6531 = vld [vmem:[%s6374 + $0x61] sm:$0xff]
        %v6532 = vld [vmem:[%s6374 + $0x71] sm:$0xff]
        %v6533 = vpack.c.bf16 %v6526, %v6525
        %v6534 = vpack.c.bf16 %v6528, %v6527
        %v6535 = vpack.c.bf16 %v6530, %v6529
        %v6536 = vpack.c.bf16 %v6532, %v6531
        %s6537 = scalar_lea.vmem [#allocation4], 448
        %v6538 = vld [vmem:[%s6537] sm:$0xf]
        %v6539 = vld [vmem:[%s6537 + $0x4] sm:$0xf]
        %v6540 = vld [vmem:[%s6537 + $0x8] sm:$0xf]
        %v6541 = vld [vmem:[%s6537 + $0xc] sm:$0xf]
        %v6542 = vld [vmem:[%s6537 + $0x10] sm:$0xf]
        %v6543 = vld [vmem:[%s6537 + $0x14] sm:$0xf]
        %v6544 = vld [vmem:[%s6537 + $0x18] sm:$0xf]
        %v6545 = vld [vmem:[%s6537 + $0x1c] sm:$0xf]
        %v6546 = vld [vmem:[%s6537 + $0x20] sm:$0xf]
        %v6547 = vld [vmem:[%s6537 + $0x24] sm:$0xf]
        %v6548 = vld [vmem:[%s6537 + $0x28] sm:$0xf]
        %v6549 = vld [vmem:[%s6537 + $0x2c] sm:$0xf]
        %v6550 = vld [vmem:[%s6537 + $0x30] sm:$0xf]
        %v6551 = vld [vmem:[%s6537 + $0x34] sm:$0xf]
        %v6552 = vld [vmem:[%s6537 + $0x38] sm:$0xf]
        %v6553 = vld [vmem:[%s6537 + $0x3c] sm:$0xf]
        %v6570 = vunpack.c.l.b16 %v6538
        %v6571 = vunpack.c.l.b16 %v6539
        %v6572 = vunpack.c.l.b16 %v6540
        %v6573 = vunpack.c.l.b16 %v6541
        %v6574 = vunpack.c.l.b16 %v6542
        %v6575 = vunpack.c.l.b16 %v6543
        %v6576 = vunpack.c.l.b16 %v6544
        %v6577 = vunpack.c.l.b16 %v6545
        %v6578 = vunpack.c.l.b16 %v6546
        %v6579 = vunpack.c.l.b16 %v6547
        %v6580 = vunpack.c.l.b16 %v6548
        %v6581 = vunpack.c.l.b16 %v6549
        %v6582 = vunpack.c.l.b16 %v6550
        %v6583 = vunpack.c.l.b16 %v6551
        %v6584 = vunpack.c.l.b16 %v6552
        %v6585 = vunpack.c.l.b16 %v6553
        %v6586 = vpack.c.b16 %v6571, %v6570
        %v6587 = vpack.c.b16 %v6573, %v6572
        %v6588 = vpack.c.b16 %v6575, %v6574
        %v6589 = vpack.c.b16 %v6577, %v6576
        %v6590 = vpack.c.b16 %v6579, %v6578
        %v6591 = vpack.c.b16 %v6581, %v6580
        %v6592 = vpack.c.b16 %v6583, %v6582
        %v6593 = vpack.c.b16 %v6585, %v6584
        %6602 = vmatprep.subr.bf16.mxu0 0
        %6603 = vmatpush1.bf16.msra.mxu0 %v6593
        %6604 = vmatprep.subr.bf16.mxu0 0
        %6605 = vmatpush1.bf16.msra.mxu0 %v6592
        %6606 = vmatprep.subr.bf16.mxu0 0
        %6607 = vmatpush1.bf16.msra.mxu0 %v6591
        %6608 = vmatprep.subr.bf16.mxu0 0
        %6609 = vmatpush1.bf16.msra.mxu0 %v6590
        %6610 = vmatprep.subr.bf16.mxu0 0
        %6611 = vmatpush1.bf16.msra.mxu0 %v6589
        %6612 = vmatprep.subr.bf16.mxu0 0
        %6613 = vmatpush1.bf16.msra.mxu0 %v6588
        %6614 = vmatprep.subr.bf16.mxu0 0
        %6615 = vmatpush1.bf16.msra.mxu0 %v6587
        %6616 = vmatprep.subr.bf16.mxu0 0
        %6617 = vmatpush1.bf16.msra.mxu0 %v6586
        %6618 = vmatprep.subr.bf16.mxu0 0
        %6619 = vmatpush2.bf16.msra.mxu0 0
        %6620 = vmatprep.subr.bf16.mxu0 0
        %6621 = vmatpush2.bf16.msra.mxu0 0
        %6622 = vmatprep.subr.bf16.mxu0 0
        %6623 = vmatpush2.bf16.msra.mxu0 0
        %6624 = vmatprep.subr.bf16.mxu0 0
        %6625 = vmatpush2.bf16.msra.mxu0 0
        %6626 = vmatprep.subr.bf16.mxu0 0
        %6627 = vmatpush2.bf16.msra.mxu0 0
        %6628 = vmatprep.subr.bf16.mxu0 0
        %6629 = vmatpush2.bf16.msra.mxu0 0
        %6630 = vmatprep.subr.bf16.mxu0 0
        %6631 = vmatpush2.bf16.msra.mxu0 0
        %6632 = vmatprep.subr.bf16.mxu0 0
        %6633 = vmatpush2.bf16.msra.mxu0 0
        %6634 = vmatprep.mubr.bf16.mxu0 0
        %6635 = vmatmul.mubr.bf16.gmra.mxu0 %v6533
        %v6636 = vpop.f32.mrf.mxu0
        %v6637 = vadd.f32 0.0, %v6636
        %v6638 = vpop.f32.mrf.mxu0
        %v6639 = vpop.f32.mrf.mxu0
        %v6640 = vadd.f32 0.0, %v6639
        %v6641 = vpop.f32.mrf.mxu0
        %6642 = vmatprep.mubr.bf16.mxu0 0
        %6643 = vmatmul.mubr.bf16.gmra.mxu0 %v6534
        %v6644 = vpop.f32.mrf.mxu0
        %v6645 = vadd.f32 0.0, %v6644
        %v6646 = vpop.f32.mrf.mxu0
        %v6647 = vpop.f32.mrf.mxu0
        %v6648 = vadd.f32 0.0, %v6647
        %v6649 = vpop.f32.mrf.mxu0
        %6650 = vmatprep.mubr.bf16.mxu0 0
        %6651 = vmatmul.mubr.bf16.gmra.mxu0 %v6535
        %v6652 = vpop.f32.mrf.mxu0
        %v6653 = vadd.f32 0.0, %v6652
        %v6654 = vpop.f32.mrf.mxu0
        %v6655 = vpop.f32.mrf.mxu0
        %v6656 = vadd.f32 0.0, %v6655
        %v6657 = vpop.f32.mrf.mxu0
        %6658 = vmatprep.mubr.bf16.mxu0 0
        %6659 = vmatmul.mubr.bf16.gmra.mxu0 %v6536
        %v6660 = vpop.f32.mrf.mxu0
        %v6661 = vadd.f32 0.0, %v6660
        %v6662 = vpop.f32.mrf.mxu0
        %v6663 = vpop.f32.mrf.mxu0
        %v6664 = vadd.f32 0.0, %v6663
        %v6665 = vpop.f32.mrf.mxu0
        %6666 = vdwg.mxu0
        %v6667 = vadd.f32 %v6517, %v6637
        %v6668 = vadd.f32 %v6518, %v6640
        %v6669 = vadd.f32 %v6519, %v6645
        %v6670 = vadd.f32 %v6520, %v6648
        %v6671 = vadd.f32 %v6521, %v6653
        %v6672 = vadd.f32 %v6522, %v6656
        %v6673 = vadd.f32 %v6523, %v6661
        %v6674 = vadd.f32 %v6524, %v6664
        %v6675 = vld [vmem:[%s6374 + $0x2] sm:$0xff]
        %v6676 = vld [vmem:[%s6374 + $0x12] sm:$0xff]
        %v6677 = vld [vmem:[%s6374 + $0x22] sm:$0xff]
        %v6678 = vld [vmem:[%s6374 + $0x32] sm:$0xff]
        %v6679 = vld [vmem:[%s6374 + $0x42] sm:$0xff]
        %v6680 = vld [vmem:[%s6374 + $0x52] sm:$0xff]
        %v6681 = vld [vmem:[%s6374 + $0x62] sm:$0xff]
        %v6682 = vld [vmem:[%s6374 + $0x72] sm:$0xff]
        %v6683 = vpack.c.bf16 %v6676, %v6675
        %v6684 = vpack.c.bf16 %v6678, %v6677
        %v6685 = vpack.c.bf16 %v6680, %v6679
        %v6686 = vpack.c.bf16 %v6682, %v6681
        %s6687 = scalar_lea.vmem [#allocation4], 512
        %v6688 = vld [vmem:[%s6687] sm:$0xf]
        %v6689 = vld [vmem:[%s6687 + $0x4] sm:$0xf]
        %v6690 = vld [vmem:[%s6687 + $0x8] sm:$0xf]
        %v6691 = vld [vmem:[%s6687 + $0xc] sm:$0xf]
        %v6692 = vld [vmem:[%s6687 + $0x10] sm:$0xf]
        %v6693 = vld [vmem:[%s6687 + $0x14] sm:$0xf]
        %v6694 = vld [vmem:[%s6687 + $0x18] sm:$0xf]
        %v6695 = vld [vmem:[%s6687 + $0x1c] sm:$0xf]
        %v6696 = vld [vmem:[%s6687 + $0x20] sm:$0xf]
        %v6697 = vld [vmem:[%s6687 + $0x24] sm:$0xf]
        %v6698 = vld [vmem:[%s6687 + $0x28] sm:$0xf]
        %v6699 = vld [vmem:[%s6687 + $0x2c] sm:$0xf]
        %v6700 = vld [vmem:[%s6687 + $0x30] sm:$0xf]
        %v6701 = vld [vmem:[%s6687 + $0x34] sm:$0xf]
        %v6702 = vld [vmem:[%s6687 + $0x38] sm:$0xf]
        %v6703 = vld [vmem:[%s6687 + $0x3c] sm:$0xf]
        %v6720 = vunpack.c.l.b16 %v6688
        %v6721 = vunpack.c.l.b16 %v6689
        %v6722 = vunpack.c.l.b16 %v6690
        %v6723 = vunpack.c.l.b16 %v6691
        %v6724 = vunpack.c.l.b16 %v6692
        %v6725 = vunpack.c.l.b16 %v6693
        %v6726 = vunpack.c.l.b16 %v6694
        %v6727 = vunpack.c.l.b16 %v6695
        %v6728 = vunpack.c.l.b16 %v6696
        %v6729 = vunpack.c.l.b16 %v6697
        %v6730 = vunpack.c.l.b16 %v6698
        %v6731 = vunpack.c.l.b16 %v6699
        %v6732 = vunpack.c.l.b16 %v6700
        %v6733 = vunpack.c.l.b16 %v6701
        %v6734 = vunpack.c.l.b16 %v6702
        %v6735 = vunpack.c.l.b16 %v6703
        %v6736 = vpack.c.b16 %v6721, %v6720
        %v6737 = vpack.c.b16 %v6723, %v6722
        %v6738 = vpack.c.b16 %v6725, %v6724
        %v6739 = vpack.c.b16 %v6727, %v6726
        %v6740 = vpack.c.b16 %v6729, %v6728
        %v6741 = vpack.c.b16 %v6731, %v6730
        %v6742 = vpack.c.b16 %v6733, %v6732
        %v6743 = vpack.c.b16 %v6735, %v6734
        %6752 = vmatprep.subr.bf16.mxu0 0
        %6753 = vmatpush1.bf16.msra.mxu0 %v6743
        %6754 = vmatprep.subr.bf16.mxu0 0
        %6755 = vmatpush1.bf16.msra.mxu0 %v6742
        %6756 = vmatprep.subr.bf16.mxu0 0
        %6757 = vmatpush1.bf16.msra.mxu0 %v6741
        %6758 = vmatprep.subr.bf16.mxu0 0
        %6759 = vmatpush1.bf16.msra.mxu0 %v6740
        %6760 = vmatprep.subr.bf16.mxu0 0
        %6761 = vmatpush1.bf16.msra.mxu0 %v6739
        %6762 = vmatprep.subr.bf16.mxu0 0
        %6763 = vmatpush1.bf16.msra.mxu0 %v6738
        %6764 = vmatprep.subr.bf16.mxu0 0
        %6765 = vmatpush1.bf16.msra.mxu0 %v6737
        %6766 = vmatprep.subr.bf16.mxu0 0
        %6767 = vmatpush1.bf16.msra.mxu0 %v6736
        %6768 = vmatprep.subr.bf16.mxu0 0
        %6769 = vmatpush2.bf16.msra.mxu0 0
        %6770 = vmatprep.subr.bf16.mxu0 0
        %6771 = vmatpush2.bf16.msra.mxu0 0
        %6772 = vmatprep.subr.bf16.mxu0 0
        %6773 = vmatpush2.bf16.msra.mxu0 0
        %6774 = vmatprep.subr.bf16.mxu0 0
        %6775 = vmatpush2.bf16.msra.mxu0 0
        %6776 = vmatprep.subr.bf16.mxu0 0
        %6777 = vmatpush2.bf16.msra.mxu0 0
        %6778 = vmatprep.subr.bf16.mxu0 0
        %6779 = vmatpush2.bf16.msra.mxu0 0
        %6780 = vmatprep.subr.bf16.mxu0 0
        %6781 = vmatpush2.bf16.msra.mxu0 0
        %6782 = vmatprep.subr.bf16.mxu0 0
        %6783 = vmatpush2.bf16.msra.mxu0 0
        %6784 = vmatprep.mubr.bf16.mxu0 0
        %6785 = vmatmul.mubr.bf16.gmra.mxu0 %v6683
        %v6786 = vpop.f32.mrf.mxu0
        %v6787 = vadd.f32 0.0, %v6786
        %v6788 = vpop.f32.mrf.mxu0
        %v6789 = vpop.f32.mrf.mxu0
        %v6790 = vadd.f32 0.0, %v6789
        %v6791 = vpop.f32.mrf.mxu0
        %6792 = vmatprep.mubr.bf16.mxu0 0
        %6793 = vmatmul.mubr.bf16.gmra.mxu0 %v6684
        %v6794 = vpop.f32.mrf.mxu0
        %v6795 = vadd.f32 0.0, %v6794
        %v6796 = vpop.f32.mrf.mxu0
        %v6797 = vpop.f32.mrf.mxu0
        %v6798 = vadd.f32 0.0, %v6797
        %v6799 = vpop.f32.mrf.mxu0
        %6800 = vmatprep.mubr.bf16.mxu0 0
        %6801 = vmatmul.mubr.bf16.gmra.mxu0 %v6685
        %v6802 = vpop.f32.mrf.mxu0
        %v6803 = vadd.f32 0.0, %v6802
        %v6804 = vpop.f32.mrf.mxu0
        %v6805 = vpop.f32.mrf.mxu0
        %v6806 = vadd.f32 0.0, %v6805
        %v6807 = vpop.f32.mrf.mxu0
        %6808 = vmatprep.mubr.bf16.mxu0 0
        %6809 = vmatmul.mubr.bf16.gmra.mxu0 %v6686
        %v6810 = vpop.f32.mrf.mxu0
        %v6811 = vadd.f32 0.0, %v6810
        %v6812 = vpop.f32.mrf.mxu0
        %v6813 = vpop.f32.mrf.mxu0
        %v6814 = vadd.f32 0.0, %v6813
        %v6815 = vpop.f32.mrf.mxu0
        %6816 = vdwg.mxu0
        %v6817 = vadd.f32 %v6667, %v6787
        %v6818 = vadd.f32 %v6668, %v6790
        %v6819 = vadd.f32 %v6669, %v6795
        %v6820 = vadd.f32 %v6670, %v6798
        %v6821 = vadd.f32 %v6671, %v6803
        %v6822 = vadd.f32 %v6672, %v6806
        %v6823 = vadd.f32 %v6673, %v6811
        %v6824 = vadd.f32 %v6674, %v6814
        %v6825 = vld [vmem:[%s4] sm:$0x1]
        %v6827 = vlaneseq
        %v6828 = vshrl.u32 %v6827, 7
        %v6829 = vsub.s32 0, %v6828
        %v6830 = vrot.slane %v6825, %v6829
        %v6832 = vadd.f32 %v6817, %v6830
        %v6833 = vadd.f32 %v6818, %v6830
        %v6834 = vadd.f32 %v6819, %v6830
        %v6835 = vadd.f32 %v6820, %v6830
        %v6836 = vadd.f32 %v6821, %v6830
        %v6837 = vadd.f32 %v6822, %v6830
        %v6838 = vadd.f32 %v6823, %v6830
        %v6839 = vadd.f32 %v6824, %v6830
        %v6840 = vmax.f32 %v6832, 0.0
        %v6841 = vmax.f32 %v6833, 0.0
        %v6842 = vmax.f32 %v6834, 0.0
        %v6843 = vmax.f32 %v6835, 0.0
        %v6844 = vmax.f32 %v6836, 0.0
        %v6845 = vmax.f32 %v6837, 0.0
        %v6846 = vmax.f32 %v6838, 0.0
        %v6847 = vmax.f32 %v6839, 0.0
        %v6856 = vcombine.high %v6840, %v6840
        %v6858 = vunpack.c.l.s4 1983009808
        %v6859 = vunpack.c.0.s8 %v6858
        %v6860 = vlaneseq
        %v6861 = vshrl.u32 %v6860, 7
        %v6862 = vsub.s32 %v6859, %v6861
        %v6863 = vrot.slane %v6840, %v6862
        %v6865 = vunpack.c.l.s4 1983009808
        %v6866 = vunpack.c.0.s8 %v6865
        %v6867 = vlaneseq
        %v6868 = vshrl.u32 %v6867, 7
        %v6869 = vsub.s32 %v6866, %v6868
        %v6870 = vrot.slane %v6856, %v6869
        %v6871 = vcombine.high %v6863, %v6863
        %v6872 = vcombine.high %v6870, %v6870
        %v6873 = vcombine.high %v6841, %v6841
        %v6875 = vunpack.c.l.s4 1983009808
        %v6876 = vunpack.c.0.s8 %v6875
        %v6877 = vlaneseq
        %v6878 = vshrl.u32 %v6877, 7
        %v6879 = vsub.s32 %v6876, %v6878
        %v6880 = vrot.slane %v6841, %v6879
        %v6882 = vunpack.c.l.s4 1983009808
        %v6883 = vunpack.c.0.s8 %v6882
        %v6884 = vlaneseq
        %v6885 = vshrl.u32 %v6884, 7
        %v6886 = vsub.s32 %v6883, %v6885
        %v6887 = vrot.slane %v6873, %v6886
        %v6888 = vcombine.high %v6880, %v6880
        %v6889 = vcombine.high %v6887, %v6887
        %v6890 = vcombine.high %v6842, %v6842
        %v6892 = vunpack.c.l.s4 1983009808
        %v6893 = vunpack.c.0.s8 %v6892
        %v6894 = vlaneseq
        %v6895 = vshrl.u32 %v6894, 7
        %v6896 = vsub.s32 %v6893, %v6895
        %v6897 = vrot.slane %v6842, %v6896
        %v6899 = vunpack.c.l.s4 1983009808
        %v6900 = vunpack.c.0.s8 %v6899
        %v6901 = vlaneseq
        %v6902 = vshrl.u32 %v6901, 7
        %v6903 = vsub.s32 %v6900, %v6902
        %v6904 = vrot.slane %v6890, %v6903
        %v6905 = vcombine.high %v6897, %v6897
        %v6906 = vcombine.high %v6904, %v6904
        %v6907 = vcombine.high %v6843, %v6843
        %v6909 = vunpack.c.l.s4 1983009808
        %v6910 = vunpack.c.0.s8 %v6909
        %v6911 = vlaneseq
        %v6912 = vshrl.u32 %v6911, 7
        %v6913 = vsub.s32 %v6910, %v6912
        %v6914 = vrot.slane %v6843, %v6913
        %v6916 = vunpack.c.l.s4 1983009808
        %v6917 = vunpack.c.0.s8 %v6916
        %v6918 = vlaneseq
        %v6919 = vshrl.u32 %v6918, 7
        %v6920 = vsub.s32 %v6917, %v6919
        %v6921 = vrot.slane %v6907, %v6920
        %v6922 = vcombine.high %v6914, %v6914
        %v6923 = vcombine.high %v6921, %v6921
        %v6924 = vcombine.high %v6844, %v6844
        %v6926 = vunpack.c.l.s4 1983009808
        %v6927 = vunpack.c.0.s8 %v6926
        %v6928 = vlaneseq
        %v6929 = vshrl.u32 %v6928, 7
        %v6930 = vsub.s32 %v6927, %v6929
        %v6931 = vrot.slane %v6844, %v6930
        %v6933 = vunpack.c.l.s4 1983009808
        %v6934 = vunpack.c.0.s8 %v6933
        %v6935 = vlaneseq
        %v6936 = vshrl.u32 %v6935, 7
        %v6937 = vsub.s32 %v6934, %v6936
        %v6938 = vrot.slane %v6924, %v6937
        %v6939 = vcombine.high %v6931, %v6931
        %v6940 = vcombine.high %v6938, %v6938
        %v6941 = vcombine.high %v6845, %v6845
        %v6943 = vunpack.c.l.s4 1983009808
        %v6944 = vunpack.c.0.s8 %v6943
        %v6945 = vlaneseq
        %v6946 = vshrl.u32 %v6945, 7
        %v6947 = vsub.s32 %v6944, %v6946
        %v6948 = vrot.slane %v6845, %v6947
        %v6950 = vunpack.c.l.s4 1983009808
        %v6951 = vunpack.c.0.s8 %v6950
        %v6952 = vlaneseq
        %v6953 = vshrl.u32 %v6952, 7
        %v6954 = vsub.s32 %v6951, %v6953
        %v6955 = vrot.slane %v6941, %v6954
        %v6956 = vcombine.high %v6948, %v6948
        %v6957 = vcombine.high %v6955, %v6955
        %v6958 = vcombine.high %v6846, %v6846
        %v6960 = vunpack.c.l.s4 1983009808
        %v6961 = vunpack.c.0.s8 %v6960
        %v6962 = vlaneseq
        %v6963 = vshrl.u32 %v6962, 7
        %v6964 = vsub.s32 %v6961, %v6963
        %v6965 = vrot.slane %v6846, %v6964
        %v6967 = vunpack.c.l.s4 1983009808
        %v6968 = vunpack.c.0.s8 %v6967
        %v6969 = vlaneseq
        %v6970 = vshrl.u32 %v6969, 7
        %v6971 = vsub.s32 %v6968, %v6970
        %v6972 = vrot.slane %v6958, %v6971
        %v6973 = vcombine.high %v6965, %v6965
        %v6974 = vcombine.high %v6972, %v6972
        %v6975 = vcombine.high %v6847, %v6847
        %v6977 = vunpack.c.l.s4 1983009808
        %v6978 = vunpack.c.0.s8 %v6977
        %v6979 = vlaneseq
        %v6980 = vshrl.u32 %v6979, 7
        %v6981 = vsub.s32 %v6978, %v6980
        %v6982 = vrot.slane %v6847, %v6981
        %v6984 = vunpack.c.l.s4 1983009808
        %v6985 = vunpack.c.0.s8 %v6984
        %v6986 = vlaneseq
        %v6987 = vshrl.u32 %v6986, 7
        %v6988 = vsub.s32 %v6985, %v6987
        %v6989 = vrot.slane %v6975, %v6988
        %v6990 = vcombine.high %v6982, %v6982
        %v6991 = vcombine.high %v6989, %v6989
        %v7024 = vsel %vm4366, %v6863, -inf
        %v7025 = vrot.slane %v7024, 4
        %v7026 = vmax.f32 %v7024, %v7025
        %v7027 = vrot.slane %v7026, 2
        %v7028 = vmax.f32 %v7026, %v7027
        %v7029 = vrot.slane %v7028, 1
        %v7030 = vmax.f32 %v7028, %v7029
        %v7031 = vsel %vm4366, %v6871, -inf
        %v7032 = vrot.slane %v7031, 4
        %v7033 = vmax.f32 %v7031, %v7032
        %v7034 = vrot.slane %v7033, 2
        %v7035 = vmax.f32 %v7033, %v7034
        %v7036 = vrot.slane %v7035, 1
        %v7037 = vmax.f32 %v7035, %v7036
        %v7038 = vsel %vm4366, %v6870, -inf
        %v7039 = vrot.slane %v7038, 4
        %v7040 = vmax.f32 %v7038, %v7039
        %v7041 = vrot.slane %v7040, 2
        %v7042 = vmax.f32 %v7040, %v7041
        %v7043 = vrot.slane %v7042, 1
        %v7044 = vmax.f32 %v7042, %v7043
        %v7045 = vsel %vm4366, %v6872, -inf
        %v7046 = vrot.slane %v7045, 4
        %v7047 = vmax.f32 %v7045, %v7046
        %v7048 = vrot.slane %v7047, 2
        %v7049 = vmax.f32 %v7047, %v7048
        %v7050 = vrot.slane %v7049, 1
        %v7051 = vmax.f32 %v7049, %v7050
        %v7052 = vsel %vm4366, %v6880, -inf
        %v7053 = vrot.slane %v7052, 4
        %v7054 = vmax.f32 %v7052, %v7053
        %v7055 = vrot.slane %v7054, 2
        %v7056 = vmax.f32 %v7054, %v7055
        %v7057 = vrot.slane %v7056, 1
        %v7058 = vmax.f32 %v7056, %v7057
        %v7059 = vsel %vm4366, %v6888, -inf
        %v7060 = vrot.slane %v7059, 4
        %v7061 = vmax.f32 %v7059, %v7060
        %v7062 = vrot.slane %v7061, 2
        %v7063 = vmax.f32 %v7061, %v7062
        %v7064 = vrot.slane %v7063, 1
        %v7065 = vmax.f32 %v7063, %v7064
        %v7066 = vsel %vm4366, %v6887, -inf
        %v7067 = vrot.slane %v7066, 4
        %v7068 = vmax.f32 %v7066, %v7067
        %v7069 = vrot.slane %v7068, 2
        %v7070 = vmax.f32 %v7068, %v7069
        %v7071 = vrot.slane %v7070, 1
        %v7072 = vmax.f32 %v7070, %v7071
        %v7073 = vsel %vm4366, %v6889, -inf
        %v7074 = vrot.slane %v7073, 4
        %v7075 = vmax.f32 %v7073, %v7074
        %v7076 = vrot.slane %v7075, 2
        %v7077 = vmax.f32 %v7075, %v7076
        %v7078 = vrot.slane %v7077, 1
        %v7079 = vmax.f32 %v7077, %v7078
        %v7080 = vsel %vm4366, %v6897, -inf
        %v7081 = vrot.slane %v7080, 4
        %v7082 = vmax.f32 %v7080, %v7081
        %v7083 = vrot.slane %v7082, 2
        %v7084 = vmax.f32 %v7082, %v7083
        %v7085 = vrot.slane %v7084, 1
        %v7086 = vmax.f32 %v7084, %v7085
        %v7087 = vsel %vm4366, %v6905, -inf
        %v7088 = vrot.slane %v7087, 4
        %v7089 = vmax.f32 %v7087, %v7088
        %v7090 = vrot.slane %v7089, 2
        %v7091 = vmax.f32 %v7089, %v7090
        %v7092 = vrot.slane %v7091, 1
        %v7093 = vmax.f32 %v7091, %v7092
        %v7094 = vsel %vm4366, %v6904, -inf
        %v7095 = vrot.slane %v7094, 4
        %v7096 = vmax.f32 %v7094, %v7095
        %v7097 = vrot.slane %v7096, 2
        %v7098 = vmax.f32 %v7096, %v7097
        %v7099 = vrot.slane %v7098, 1
        %v7100 = vmax.f32 %v7098, %v7099
        %v7101 = vsel %vm4366, %v6906, -inf
        %v7102 = vrot.slane %v7101, 4
        %v7103 = vmax.f32 %v7101, %v7102
        %v7104 = vrot.slane %v7103, 2
        %v7105 = vmax.f32 %v7103, %v7104
        %v7106 = vrot.slane %v7105, 1
        %v7107 = vmax.f32 %v7105, %v7106
        %v7108 = vsel %vm4366, %v6914, -inf
        %v7109 = vrot.slane %v7108, 4
        %v7110 = vmax.f32 %v7108, %v7109
        %v7111 = vrot.slane %v7110, 2
        %v7112 = vmax.f32 %v7110, %v7111
        %v7113 = vrot.slane %v7112, 1
        %v7114 = vmax.f32 %v7112, %v7113
        %v7115 = vsel %vm4366, %v6922, -inf
        %v7116 = vrot.slane %v7115, 4
        %v7117 = vmax.f32 %v7115, %v7116
        %v7118 = vrot.slane %v7117, 2
        %v7119 = vmax.f32 %v7117, %v7118
        %v7120 = vrot.slane %v7119, 1
        %v7121 = vmax.f32 %v7119, %v7120
        %v7122 = vsel %vm4366, %v6921, -inf
        %v7123 = vrot.slane %v7122, 4
        %v7124 = vmax.f32 %v7122, %v7123
        %v7125 = vrot.slane %v7124, 2
        %v7126 = vmax.f32 %v7124, %v7125
        %v7127 = vrot.slane %v7126, 1
        %v7128 = vmax.f32 %v7126, %v7127
        %v7129 = vsel %vm4366, %v6923, -inf
        %v7130 = vrot.slane %v7129, 4
        %v7131 = vmax.f32 %v7129, %v7130
        %v7132 = vrot.slane %v7131, 2
        %v7133 = vmax.f32 %v7131, %v7132
        %v7134 = vrot.slane %v7133, 1
        %v7135 = vmax.f32 %v7133, %v7134
        %v7136 = vsel %vm4366, %v6931, -inf
        %v7137 = vrot.slane %v7136, 4
        %v7138 = vmax.f32 %v7136, %v7137
        %v7139 = vrot.slane %v7138, 2
        %v7140 = vmax.f32 %v7138, %v7139
        %v7141 = vrot.slane %v7140, 1
        %v7142 = vmax.f32 %v7140, %v7141
        %v7143 = vsel %vm4366, %v6939, -inf
        %v7144 = vrot.slane %v7143, 4
        %v7145 = vmax.f32 %v7143, %v7144
        %v7146 = vrot.slane %v7145, 2
        %v7147 = vmax.f32 %v7145, %v7146
        %v7148 = vrot.slane %v7147, 1
        %v7149 = vmax.f32 %v7147, %v7148
        %v7150 = vsel %vm4366, %v6938, -inf
        %v7151 = vrot.slane %v7150, 4
        %v7152 = vmax.f32 %v7150, %v7151
        %v7153 = vrot.slane %v7152, 2
        %v7154 = vmax.f32 %v7152, %v7153
        %v7155 = vrot.slane %v7154, 1
        %v7156 = vmax.f32 %v7154, %v7155
        %v7157 = vsel %vm4366, %v6940, -inf
        %v7158 = vrot.slane %v7157, 4
        %v7159 = vmax.f32 %v7157, %v7158
        %v7160 = vrot.slane %v7159, 2
        %v7161 = vmax.f32 %v7159, %v7160
        %v7162 = vrot.slane %v7161, 1
        %v7163 = vmax.f32 %v7161, %v7162
        %v7164 = vsel %vm4366, %v6948, -inf
        %v7165 = vrot.slane %v7164, 4
        %v7166 = vmax.f32 %v7164, %v7165
        %v7167 = vrot.slane %v7166, 2
        %v7168 = vmax.f32 %v7166, %v7167
        %v7169 = vrot.slane %v7168, 1
        %v7170 = vmax.f32 %v7168, %v7169
        %v7171 = vsel %vm4366, %v6956, -inf
        %v7172 = vrot.slane %v7171, 4
        %v7173 = vmax.f32 %v7171, %v7172
        %v7174 = vrot.slane %v7173, 2
        %v7175 = vmax.f32 %v7173, %v7174
        %v7176 = vrot.slane %v7175, 1
        %v7177 = vmax.f32 %v7175, %v7176
        %v7178 = vsel %vm4366, %v6955, -inf
        %v7179 = vrot.slane %v7178, 4
        %v7180 = vmax.f32 %v7178, %v7179
        %v7181 = vrot.slane %v7180, 2
        %v7182 = vmax.f32 %v7180, %v7181
        %v7183 = vrot.slane %v7182, 1
        %v7184 = vmax.f32 %v7182, %v7183
        %v7185 = vsel %vm4366, %v6957, -inf
        %v7186 = vrot.slane %v7185, 4
        %v7187 = vmax.f32 %v7185, %v7186
        %v7188 = vrot.slane %v7187, 2
        %v7189 = vmax.f32 %v7187, %v7188
        %v7190 = vrot.slane %v7189, 1
        %v7191 = vmax.f32 %v7189, %v7190
        %v7192 = vsel %vm4366, %v6965, -inf
        %v7193 = vrot.slane %v7192, 4
        %v7194 = vmax.f32 %v7192, %v7193
        %v7195 = vrot.slane %v7194, 2
        %v7196 = vmax.f32 %v7194, %v7195
        %v7197 = vrot.slane %v7196, 1
        %v7198 = vmax.f32 %v7196, %v7197
        %v7199 = vsel %vm4366, %v6973, -inf
        %v7200 = vrot.slane %v7199, 4
        %v7201 = vmax.f32 %v7199, %v7200
        %v7202 = vrot.slane %v7201, 2
        %v7203 = vmax.f32 %v7201, %v7202
        %v7204 = vrot.slane %v7203, 1
        %v7205 = vmax.f32 %v7203, %v7204
        %v7206 = vsel %vm4366, %v6972, -inf
        %v7207 = vrot.slane %v7206, 4
        %v7208 = vmax.f32 %v7206, %v7207
        %v7209 = vrot.slane %v7208, 2
        %v7210 = vmax.f32 %v7208, %v7209
        %v7211 = vrot.slane %v7210, 1
        %v7212 = vmax.f32 %v7210, %v7211
        %v7213 = vsel %vm4366, %v6974, -inf
        %v7214 = vrot.slane %v7213, 4
        %v7215 = vmax.f32 %v7213, %v7214
        %v7216 = vrot.slane %v7215, 2
        %v7217 = vmax.f32 %v7215, %v7216
        %v7218 = vrot.slane %v7217, 1
        %v7219 = vmax.f32 %v7217, %v7218
        %v7220 = vsel %vm4366, %v6982, -inf
        %v7221 = vrot.slane %v7220, 4
        %v7222 = vmax.f32 %v7220, %v7221
        %v7223 = vrot.slane %v7222, 2
        %v7224 = vmax.f32 %v7222, %v7223
        %v7225 = vrot.slane %v7224, 1
        %v7226 = vmax.f32 %v7224, %v7225
        %v7227 = vsel %vm4366, %v6990, -inf
        %v7228 = vrot.slane %v7227, 4
        %v7229 = vmax.f32 %v7227, %v7228
        %v7230 = vrot.slane %v7229, 2
        %v7231 = vmax.f32 %v7229, %v7230
        %v7232 = vrot.slane %v7231, 1
        %v7233 = vmax.f32 %v7231, %v7232
        %v7234 = vsel %vm4366, %v6989, -inf
        %v7235 = vrot.slane %v7234, 4
        %v7236 = vmax.f32 %v7234, %v7235
        %v7237 = vrot.slane %v7236, 2
        %v7238 = vmax.f32 %v7236, %v7237
        %v7239 = vrot.slane %v7238, 1
        %v7240 = vmax.f32 %v7238, %v7239
        %v7241 = vsel %vm4366, %v6991, -inf
        %v7242 = vrot.slane %v7241, 4
        %v7243 = vmax.f32 %v7241, %v7242
        %v7244 = vrot.slane %v7243, 2
        %v7245 = vmax.f32 %v7243, %v7244
        %v7246 = vrot.slane %v7245, 1
        %v7247 = vmax.f32 %v7245, %v7246
        %v7248 = vmax.f32 %v7030, %v7058
        %v7249 = vmax.f32 %v7037, %v7065
        %v7250 = vmax.f32 %v7044, %v7072
        %v7251 = vmax.f32 %v7051, %v7079
        %v7252 = vmax.f32 %v7086, %v7114
        %v7253 = vmax.f32 %v7093, %v7121
        %v7254 = vmax.f32 %v7100, %v7128
        %v7255 = vmax.f32 %v7107, %v7135
        %v7256 = vmax.f32 %v7142, %v7170
        %v7257 = vmax.f32 %v7149, %v7177
        %v7258 = vmax.f32 %v7156, %v7184
        %v7259 = vmax.f32 %v7163, %v7191
        %v7260 = vmax.f32 %v7198, %v7226
        %v7261 = vmax.f32 %v7205, %v7233
        %v7262 = vmax.f32 %v7212, %v7240
        %v7263 = vmax.f32 %v7219, %v7247
        %v7264 = vpack.c.bf16 %v7248, %v7248
        %v7265 = vld [vmem:[%s5] sm:$0xf]
        %v7266 = vld [vmem:[%s5 + $0x4] sm:$0xf]
        %v7267 = vld [vmem:[%s5 + $0x8] sm:$0xf]
        %v7268 = vld [vmem:[%s5 + $0xc] sm:$0xf]
        %v7269 = vld [vmem:[%s5 + $0x10] sm:$0xf]
        %v7270 = vld [vmem:[%s5 + $0x14] sm:$0xf]
        %v7271 = vld [vmem:[%s5 + $0x18] sm:$0xf]
        %v7272 = vld [vmem:[%s5 + $0x1c] sm:$0xf]
        %v7273 = vld [vmem:[%s5 + $0x20] sm:$0xf]
        %v7274 = vld [vmem:[%s5 + $0x24] sm:$0xf]
        %v7275 = vld [vmem:[%s5 + $0x28] sm:$0xf]
        %v7276 = vld [vmem:[%s5 + $0x2c] sm:$0xf]
        %v7277 = vld [vmem:[%s5 + $0x30] sm:$0xf]
        %v7278 = vld [vmem:[%s5 + $0x34] sm:$0xf]
        %v7279 = vld [vmem:[%s5 + $0x38] sm:$0xf]
        %v7280 = vld [vmem:[%s5 + $0x3c] sm:$0xf]
        %v7281 = vpack.c.bf16 %v7249, %v7249
        %s7282 = scalar_lea.vmem %s5, 64
        %v7283 = vld [vmem:[%s7282] sm:$0xf]
        %v7284 = vld [vmem:[%s7282 + $0x4] sm:$0xf]
        %v7285 = vld [vmem:[%s7282 + $0x8] sm:$0xf]
        %v7286 = vld [vmem:[%s7282 + $0xc] sm:$0xf]
        %v7287 = vld [vmem:[%s7282 + $0x10] sm:$0xf]
        %v7288 = vld [vmem:[%s7282 + $0x14] sm:$0xf]
        %v7289 = vld [vmem:[%s7282 + $0x18] sm:$0xf]
        %v7290 = vld [vmem:[%s7282 + $0x1c] sm:$0xf]
        %v7291 = vld [vmem:[%s7282 + $0x20] sm:$0xf]
        %v7292 = vld [vmem:[%s7282 + $0x24] sm:$0xf]
        %v7293 = vld [vmem:[%s7282 + $0x28] sm:$0xf]
        %v7294 = vld [vmem:[%s7282 + $0x2c] sm:$0xf]
        %v7295 = vld [vmem:[%s7282 + $0x30] sm:$0xf]
        %v7296 = vld [vmem:[%s7282 + $0x34] sm:$0xf]
        %v7297 = vld [vmem:[%s7282 + $0x38] sm:$0xf]
        %v7298 = vld [vmem:[%s7282 + $0x3c] sm:$0xf]
        %v7315 = vunpack.c.l.b16 %v7283
        %v7316 = vunpack.c.l.b16 %v7284
        %v7317 = vunpack.c.l.b16 %v7285
        %v7318 = vunpack.c.l.b16 %v7286
        %v7319 = vunpack.c.l.b16 %v7287
        %v7320 = vunpack.c.l.b16 %v7288
        %v7321 = vunpack.c.l.b16 %v7289
        %v7322 = vunpack.c.l.b16 %v7290
        %v7323 = vunpack.c.l.b16 %v7291
        %v7324 = vunpack.c.l.b16 %v7292
        %v7325 = vunpack.c.l.b16 %v7293
        %v7326 = vunpack.c.l.b16 %v7294
        %v7327 = vunpack.c.l.b16 %v7295
        %v7328 = vunpack.c.l.b16 %v7296
        %v7329 = vunpack.c.l.b16 %v7297
        %v7330 = vunpack.c.l.b16 %v7298
        %v7331 = vpack.c.b16 %v7316, %v7315
        %v7332 = vpack.c.b16 %v7318, %v7317
        %v7333 = vpack.c.b16 %v7320, %v7319
        %v7334 = vpack.c.b16 %v7322, %v7321
        %v7335 = vpack.c.b16 %v7324, %v7323
        %v7336 = vpack.c.b16 %v7326, %v7325
        %v7337 = vpack.c.b16 %v7328, %v7327
        %v7338 = vpack.c.b16 %v7330, %v7329
        %7347 = vmatprep.subr.bf16.mxu0 0
        %7348 = vmatpush1.bf16.msra.mxu0 %v7338
        %7349 = vmatprep.subr.bf16.mxu0 0
        %7350 = vmatpush1.bf16.msra.mxu0 %v7337
        %7351 = vmatprep.subr.bf16.mxu0 0
        %7352 = vmatpush1.bf16.msra.mxu0 %v7336
        %7353 = vmatprep.subr.bf16.mxu0 0
        %7354 = vmatpush1.bf16.msra.mxu0 %v7335
        %7355 = vmatprep.subr.bf16.mxu0 0
        %7356 = vmatpush1.bf16.msra.mxu0 %v7334
        %7357 = vmatprep.subr.bf16.mxu0 0
        %7358 = vmatpush1.bf16.msra.mxu0 %v7333
        %7359 = vmatprep.subr.bf16.mxu0 0
        %7360 = vmatpush1.bf16.msra.mxu0 %v7332
        %7361 = vmatprep.subr.bf16.mxu0 0
        %7362 = vmatpush1.bf16.msra.mxu0 %v7331
        %7363 = vmatprep.subr.bf16.mxu0 0
        %7364 = vmatpush2.bf16.msra.mxu0 0
        %7365 = vmatprep.subr.bf16.mxu0 0
        %7366 = vmatpush2.bf16.msra.mxu0 0
        %7367 = vmatprep.subr.bf16.mxu0 0
        %7368 = vmatpush2.bf16.msra.mxu0 0
        %7369 = vmatprep.subr.bf16.mxu0 0
        %7370 = vmatpush2.bf16.msra.mxu0 0
        %7371 = vmatprep.subr.bf16.mxu0 0
        %7372 = vmatpush2.bf16.msra.mxu0 0
        %7373 = vmatprep.subr.bf16.mxu0 0
        %7374 = vmatpush2.bf16.msra.mxu0 0
        %7375 = vmatprep.subr.bf16.mxu0 0
        %7376 = vmatpush2.bf16.msra.mxu0 0
        %7377 = vmatprep.subr.bf16.mxu0 0
        %7378 = vmatpush2.bf16.msra.mxu0 0
        %7379 = vmatprep.mubr.bf16.mxu0 0
        %7380 = vmatmul.mubr.bf16.gmra.mxu0 %v7281
        %v7381 = vpop.f32.mrf.mxu0
        %v7382 = vadd.f32 0.0, %v7381
        %v7383 = vpop.f32.mrf.mxu0
        %v7384 = vpop.f32.mrf.mxu0
        %v7385 = vpop.f32.mrf.mxu0
        %7386 = vdwg.mxu0
        %v7403 = vunpack.c.l.b16 %v7265
        %v7404 = vunpack.c.l.b16 %v7266
        %v7405 = vunpack.c.l.b16 %v7267
        %v7406 = vunpack.c.l.b16 %v7268
        %v7407 = vunpack.c.l.b16 %v7269
        %v7408 = vunpack.c.l.b16 %v7270
        %v7409 = vunpack.c.l.b16 %v7271
        %v7410 = vunpack.c.l.b16 %v7272
        %v7411 = vunpack.c.l.b16 %v7273
        %v7412 = vunpack.c.l.b16 %v7274
        %v7413 = vunpack.c.l.b16 %v7275
        %v7414 = vunpack.c.l.b16 %v7276
        %v7415 = vunpack.c.l.b16 %v7277
        %v7416 = vunpack.c.l.b16 %v7278
        %v7417 = vunpack.c.l.b16 %v7279
        %v7418 = vunpack.c.l.b16 %v7280
        %v7419 = vpack.c.b16 %v7404, %v7403
        %v7420 = vpack.c.b16 %v7406, %v7405
        %v7421 = vpack.c.b16 %v7408, %v7407
        %v7422 = vpack.c.b16 %v7410, %v7409
        %v7423 = vpack.c.b16 %v7412, %v7411
        %v7424 = vpack.c.b16 %v7414, %v7413
        %v7425 = vpack.c.b16 %v7416, %v7415
        %v7426 = vpack.c.b16 %v7418, %v7417
        %7435 = vmatprep.subr.bf16.mxu0 0
        %7436 = vmatpush1.bf16.msra.mxu0 %v7426
        %7437 = vmatprep.subr.bf16.mxu0 0
        %7438 = vmatpush1.bf16.msra.mxu0 %v7425
        %7439 = vmatprep.subr.bf16.mxu0 0
        %7440 = vmatpush1.bf16.msra.mxu0 %v7424
        %7441 = vmatprep.subr.bf16.mxu0 0
        %7442 = vmatpush1.bf16.msra.mxu0 %v7423
        %7443 = vmatprep.subr.bf16.mxu0 0
        %7444 = vmatpush1.bf16.msra.mxu0 %v7422
        %7445 = vmatprep.subr.bf16.mxu0 0
        %7446 = vmatpush1.bf16.msra.mxu0 %v7421
        %7447 = vmatprep.subr.bf16.mxu0 0
        %7448 = vmatpush1.bf16.msra.mxu0 %v7420
        %7449 = vmatprep.subr.bf16.mxu0 0
        %7450 = vmatpush1.bf16.msra.mxu0 %v7419
        %7451 = vmatprep.subr.bf16.mxu0 0
        %7452 = vmatpush2.bf16.msra.mxu0 0
        %7453 = vmatprep.subr.bf16.mxu0 0
        %7454 = vmatpush2.bf16.msra.mxu0 0
        %7455 = vmatprep.subr.bf16.mxu0 0
        %7456 = vmatpush2.bf16.msra.mxu0 0
        %7457 = vmatprep.subr.bf16.mxu0 0
        %7458 = vmatpush2.bf16.msra.mxu0 0
        %7459 = vmatprep.subr.bf16.mxu0 0
        %7460 = vmatpush2.bf16.msra.mxu0 0
        %7461 = vmatprep.subr.bf16.mxu0 0
        %7462 = vmatpush2.bf16.msra.mxu0 0
        %7463 = vmatprep.subr.bf16.mxu0 0
        %7464 = vmatpush2.bf16.msra.mxu0 0
        %7465 = vmatprep.subr.bf16.mxu0 0
        %7466 = vmatpush2.bf16.msra.mxu0 0
        %7467 = vmatprep.mubr.bf16.mxu0 0
        %7468 = vmatmul.mubr.bf16.gmra.mxu0 %v7264
        %v7469 = vpop.f32.mrf.mxu0
        %v7470 = vadd.f32 %v7382, %v7469
        %v7471 = vpop.f32.mrf.mxu0
        %v7472 = vpop.f32.mrf.mxu0
        %v7473 = vpop.f32.mrf.mxu0
        %7474 = vdwg.mxu0
        %v7475 = vpack.c.bf16 %v7250, %v7250
        %s7476 = scalar_lea.vmem %s5, 128
        %v7477 = vld [vmem:[%s7476] sm:$0xf]
        %v7478 = vld [vmem:[%s7476 + $0x4] sm:$0xf]
        %v7479 = vld [vmem:[%s7476 + $0x8] sm:$0xf]
        %v7480 = vld [vmem:[%s7476 + $0xc] sm:$0xf]
        %v7481 = vld [vmem:[%s7476 + $0x10] sm:$0xf]
        %v7482 = vld [vmem:[%s7476 + $0x14] sm:$0xf]
        %v7483 = vld [vmem:[%s7476 + $0x18] sm:$0xf]
        %v7484 = vld [vmem:[%s7476 + $0x1c] sm:$0xf]
        %v7485 = vld [vmem:[%s7476 + $0x20] sm:$0xf]
        %v7486 = vld [vmem:[%s7476 + $0x24] sm:$0xf]
        %v7487 = vld [vmem:[%s7476 + $0x28] sm:$0xf]
        %v7488 = vld [vmem:[%s7476 + $0x2c] sm:$0xf]
        %v7489 = vld [vmem:[%s7476 + $0x30] sm:$0xf]
        %v7490 = vld [vmem:[%s7476 + $0x34] sm:$0xf]
        %v7491 = vld [vmem:[%s7476 + $0x38] sm:$0xf]
        %v7492 = vld [vmem:[%s7476 + $0x3c] sm:$0xf]
        %v7509 = vunpack.c.l.b16 %v7477
        %v7510 = vunpack.c.l.b16 %v7478
        %v7511 = vunpack.c.l.b16 %v7479
        %v7512 = vunpack.c.l.b16 %v7480
        %v7513 = vunpack.c.l.b16 %v7481
        %v7514 = vunpack.c.l.b16 %v7482
        %v7515 = vunpack.c.l.b16 %v7483
        %v7516 = vunpack.c.l.b16 %v7484
        %v7517 = vunpack.c.l.b16 %v7485
        %v7518 = vunpack.c.l.b16 %v7486
        %v7519 = vunpack.c.l.b16 %v7487
        %v7520 = vunpack.c.l.b16 %v7488
        %v7521 = vunpack.c.l.b16 %v7489
        %v7522 = vunpack.c.l.b16 %v7490
        %v7523 = vunpack.c.l.b16 %v7491
        %v7524 = vunpack.c.l.b16 %v7492
        %v7525 = vpack.c.b16 %v7510, %v7509
        %v7526 = vpack.c.b16 %v7512, %v7511
        %v7527 = vpack.c.b16 %v7514, %v7513
        %v7528 = vpack.c.b16 %v7516, %v7515
        %v7529 = vpack.c.b16 %v7518, %v7517
        %v7530 = vpack.c.b16 %v7520, %v7519
        %v7531 = vpack.c.b16 %v7522, %v7521
        %v7532 = vpack.c.b16 %v7524, %v7523
        %7541 = vmatprep.subr.bf16.mxu0 0
        %7542 = vmatpush1.bf16.msra.mxu0 %v7532
        %7543 = vmatprep.subr.bf16.mxu0 0
        %7544 = vmatpush1.bf16.msra.mxu0 %v7531
        %7545 = vmatprep.subr.bf16.mxu0 0
        %7546 = vmatpush1.bf16.msra.mxu0 %v7530
        %7547 = vmatprep.subr.bf16.mxu0 0
        %7548 = vmatpush1.bf16.msra.mxu0 %v7529
        %7549 = vmatprep.subr.bf16.mxu0 0
        %7550 = vmatpush1.bf16.msra.mxu0 %v7528
        %7551 = vmatprep.subr.bf16.mxu0 0
        %7552 = vmatpush1.bf16.msra.mxu0 %v7527
        %7553 = vmatprep.subr.bf16.mxu0 0
        %7554 = vmatpush1.bf16.msra.mxu0 %v7526
        %7555 = vmatprep.subr.bf16.mxu0 0
        %7556 = vmatpush1.bf16.msra.mxu0 %v7525
        %7557 = vmatprep.subr.bf16.mxu0 0
        %7558 = vmatpush2.bf16.msra.mxu0 0
        %7559 = vmatprep.subr.bf16.mxu0 0
        %7560 = vmatpush2.bf16.msra.mxu0 0
        %7561 = vmatprep.subr.bf16.mxu0 0
        %7562 = vmatpush2.bf16.msra.mxu0 0
        %7563 = vmatprep.subr.bf16.mxu0 0
        %7564 = vmatpush2.bf16.msra.mxu0 0
        %7565 = vmatprep.subr.bf16.mxu0 0
        %7566 = vmatpush2.bf16.msra.mxu0 0
        %7567 = vmatprep.subr.bf16.mxu0 0
        %7568 = vmatpush2.bf16.msra.mxu0 0
        %7569 = vmatprep.subr.bf16.mxu0 0
        %7570 = vmatpush2.bf16.msra.mxu0 0
        %7571 = vmatprep.subr.bf16.mxu0 0
        %7572 = vmatpush2.bf16.msra.mxu0 0
        %7573 = vmatprep.mubr.bf16.mxu0 0
        %7574 = vmatmul.mubr.bf16.gmra.mxu0 %v7475
        %v7575 = vpop.f32.mrf.mxu0
        %v7576 = vadd.f32 0.0, %v7575
        %v7577 = vpop.f32.mrf.mxu0
        %v7578 = vpop.f32.mrf.mxu0
        %v7579 = vpop.f32.mrf.mxu0
        %7580 = vdwg.mxu0
        %v7581 = vadd.f32 %v7470, %v7576
        %v7582 = vpack.c.bf16 %v7251, %v7251
        %s7583 = scalar_lea.vmem %s5, 192
        %v7584 = vld [vmem:[%s7583] sm:$0xf]
        %v7585 = vld [vmem:[%s7583 + $0x4] sm:$0xf]
        %v7586 = vld [vmem:[%s7583 + $0x8] sm:$0xf]
        %v7587 = vld [vmem:[%s7583 + $0xc] sm:$0xf]
        %v7588 = vld [vmem:[%s7583 + $0x10] sm:$0xf]
        %v7589 = vld [vmem:[%s7583 + $0x14] sm:$0xf]
        %v7590 = vld [vmem:[%s7583 + $0x18] sm:$0xf]
        %v7591 = vld [vmem:[%s7583 + $0x1c] sm:$0xf]
        %v7592 = vld [vmem:[%s7583 + $0x20] sm:$0xf]
        %v7593 = vld [vmem:[%s7583 + $0x24] sm:$0xf]
        %v7594 = vld [vmem:[%s7583 + $0x28] sm:$0xf]
        %v7595 = vld [vmem:[%s7583 + $0x2c] sm:$0xf]
        %v7596 = vld [vmem:[%s7583 + $0x30] sm:$0xf]
        %v7597 = vld [vmem:[%s7583 + $0x34] sm:$0xf]
        %v7598 = vld [vmem:[%s7583 + $0x38] sm:$0xf]
        %v7599 = vld [vmem:[%s7583 + $0x3c] sm:$0xf]
        %v7616 = vunpack.c.l.b16 %v7584
        %v7617 = vunpack.c.l.b16 %v7585
        %v7618 = vunpack.c.l.b16 %v7586
        %v7619 = vunpack.c.l.b16 %v7587
        %v7620 = vunpack.c.l.b16 %v7588
        %v7621 = vunpack.c.l.b16 %v7589
        %v7622 = vunpack.c.l.b16 %v7590
        %v7623 = vunpack.c.l.b16 %v7591
        %v7624 = vunpack.c.l.b16 %v7592
        %v7625 = vunpack.c.l.b16 %v7593
        %v7626 = vunpack.c.l.b16 %v7594
        %v7627 = vunpack.c.l.b16 %v7595
        %v7628 = vunpack.c.l.b16 %v7596
        %v7629 = vunpack.c.l.b16 %v7597
        %v7630 = vunpack.c.l.b16 %v7598
        %v7631 = vunpack.c.l.b16 %v7599
        %v7632 = vpack.c.b16 %v7617, %v7616
        %v7633 = vpack.c.b16 %v7619, %v7618
        %v7634 = vpack.c.b16 %v7621, %v7620
        %v7635 = vpack.c.b16 %v7623, %v7622
        %v7636 = vpack.c.b16 %v7625, %v7624
        %v7637 = vpack.c.b16 %v7627, %v7626
        %v7638 = vpack.c.b16 %v7629, %v7628
        %v7639 = vpack.c.b16 %v7631, %v7630
        %7648 = vmatprep.subr.bf16.mxu0 0
        %7649 = vmatpush1.bf16.msra.mxu0 %v7639
        %7650 = vmatprep.subr.bf16.mxu0 0
        %7651 = vmatpush1.bf16.msra.mxu0 %v7638
        %7652 = vmatprep.subr.bf16.mxu0 0
        %7653 = vmatpush1.bf16.msra.mxu0 %v7637
        %7654 = vmatprep.subr.bf16.mxu0 0
        %7655 = vmatpush1.bf16.msra.mxu0 %v7636
        %7656 = vmatprep.subr.bf16.mxu0 0
        %7657 = vmatpush1.bf16.msra.mxu0 %v7635
        %7658 = vmatprep.subr.bf16.mxu0 0
        %7659 = vmatpush1.bf16.msra.mxu0 %v7634
        %7660 = vmatprep.subr.bf16.mxu0 0
        %7661 = vmatpush1.bf16.msra.mxu0 %v7633
        %7662 = vmatprep.subr.bf16.mxu0 0
        %7663 = vmatpush1.bf16.msra.mxu0 %v7632
        %7664 = vmatprep.subr.bf16.mxu0 0
        %7665 = vmatpush2.bf16.msra.mxu0 0
        %7666 = vmatprep.subr.bf16.mxu0 0
        %7667 = vmatpush2.bf16.msra.mxu0 0
        %7668 = vmatprep.subr.bf16.mxu0 0
        %7669 = vmatpush2.bf16.msra.mxu0 0
        %7670 = vmatprep.subr.bf16.mxu0 0
        %7671 = vmatpush2.bf16.msra.mxu0 0
        %7672 = vmatprep.subr.bf16.mxu0 0
        %7673 = vmatpush2.bf16.msra.mxu0 0
        %7674 = vmatprep.subr.bf16.mxu0 0
        %7675 = vmatpush2.bf16.msra.mxu0 0
        %7676 = vmatprep.subr.bf16.mxu0 0
        %7677 = vmatpush2.bf16.msra.mxu0 0
        %7678 = vmatprep.subr.bf16.mxu0 0
        %7679 = vmatpush2.bf16.msra.mxu0 0
        %7680 = vmatprep.mubr.bf16.mxu0 0
        %7681 = vmatmul.mubr.bf16.gmra.mxu0 %v7582
        %v7682 = vpop.f32.mrf.mxu0
        %v7683 = vadd.f32 0.0, %v7682
        %v7684 = vpop.f32.mrf.mxu0
        %v7685 = vpop.f32.mrf.mxu0
        %v7686 = vpop.f32.mrf.mxu0
        %7687 = vdwg.mxu0
        %v7688 = vadd.f32 %v7581, %v7683
        %v7689 = vpack.c.bf16 %v7252, %v7252
        %s7690 = scalar_lea.vmem %s5, 256
        %v7691 = vld [vmem:[%s7690] sm:$0xf]
        %v7692 = vld [vmem:[%s7690 + $0x4] sm:$0xf]
        %v7693 = vld [vmem:[%s7690 + $0x8] sm:$0xf]
        %v7694 = vld [vmem:[%s7690 + $0xc] sm:$0xf]
        %v7695 = vld [vmem:[%s7690 + $0x10] sm:$0xf]
        %v7696 = vld [vmem:[%s7690 + $0x14] sm:$0xf]
        %v7697 = vld [vmem:[%s7690 + $0x18] sm:$0xf]
        %v7698 = vld [vmem:[%s7690 + $0x1c] sm:$0xf]
        %v7699 = vld [vmem:[%s7690 + $0x20] sm:$0xf]
        %v7700 = vld [vmem:[%s7690 + $0x24] sm:$0xf]
        %v7701 = vld [vmem:[%s7690 + $0x28] sm:$0xf]
        %v7702 = vld [vmem:[%s7690 + $0x2c] sm:$0xf]
        %v7703 = vld [vmem:[%s7690 + $0x30] sm:$0xf]
        %v7704 = vld [vmem:[%s7690 + $0x34] sm:$0xf]
        %v7705 = vld [vmem:[%s7690 + $0x38] sm:$0xf]
        %v7706 = vld [vmem:[%s7690 + $0x3c] sm:$0xf]
        %v7723 = vunpack.c.l.b16 %v7691
        %v7724 = vunpack.c.l.b16 %v7692
        %v7725 = vunpack.c.l.b16 %v7693
        %v7726 = vunpack.c.l.b16 %v7694
        %v7727 = vunpack.c.l.b16 %v7695
        %v7728 = vunpack.c.l.b16 %v7696
        %v7729 = vunpack.c.l.b16 %v7697
        %v7730 = vunpack.c.l.b16 %v7698
        %v7731 = vunpack.c.l.b16 %v7699
        %v7732 = vunpack.c.l.b16 %v7700
        %v7733 = vunpack.c.l.b16 %v7701
        %v7734 = vunpack.c.l.b16 %v7702
        %v7735 = vunpack.c.l.b16 %v7703
        %v7736 = vunpack.c.l.b16 %v7704
        %v7737 = vunpack.c.l.b16 %v7705
        %v7738 = vunpack.c.l.b16 %v7706
        %v7739 = vpack.c.b16 %v7724, %v7723
        %v7740 = vpack.c.b16 %v7726, %v7725
        %v7741 = vpack.c.b16 %v7728, %v7727
        %v7742 = vpack.c.b16 %v7730, %v7729
        %v7743 = vpack.c.b16 %v7732, %v7731
        %v7744 = vpack.c.b16 %v7734, %v7733
        %v7745 = vpack.c.b16 %v7736, %v7735
        %v7746 = vpack.c.b16 %v7738, %v7737
        %7755 = vmatprep.subr.bf16.mxu0 0
        %7756 = vmatpush1.bf16.msra.mxu0 %v7746
        %7757 = vmatprep.subr.bf16.mxu0 0
        %7758 = vmatpush1.bf16.msra.mxu0 %v7745
        %7759 = vmatprep.subr.bf16.mxu0 0
        %7760 = vmatpush1.bf16.msra.mxu0 %v7744
        %7761 = vmatprep.subr.bf16.mxu0 0
        %7762 = vmatpush1.bf16.msra.mxu0 %v7743
        %7763 = vmatprep.subr.bf16.mxu0 0
        %7764 = vmatpush1.bf16.msra.mxu0 %v7742
        %7765 = vmatprep.subr.bf16.mxu0 0
        %7766 = vmatpush1.bf16.msra.mxu0 %v7741
        %7767 = vmatprep.subr.bf16.mxu0 0
        %7768 = vmatpush1.bf16.msra.mxu0 %v7740
        %7769 = vmatprep.subr.bf16.mxu0 0
        %7770 = vmatpush1.bf16.msra.mxu0 %v7739
        %7771 = vmatprep.subr.bf16.mxu0 0
        %7772 = vmatpush2.bf16.msra.mxu0 0
        %7773 = vmatprep.subr.bf16.mxu0 0
        %7774 = vmatpush2.bf16.msra.mxu0 0
        %7775 = vmatprep.subr.bf16.mxu0 0
        %7776 = vmatpush2.bf16.msra.mxu0 0
        %7777 = vmatprep.subr.bf16.mxu0 0
        %7778 = vmatpush2.bf16.msra.mxu0 0
        %7779 = vmatprep.subr.bf16.mxu0 0
        %7780 = vmatpush2.bf16.msra.mxu0 0
        %7781 = vmatprep.subr.bf16.mxu0 0
        %7782 = vmatpush2.bf16.msra.mxu0 0
        %7783 = vmatprep.subr.bf16.mxu0 0
        %7784 = vmatpush2.bf16.msra.mxu0 0
        %7785 = vmatprep.subr.bf16.mxu0 0
        %7786 = vmatpush2.bf16.msra.mxu0 0
        %7787 = vmatprep.mubr.bf16.mxu0 0
        %7788 = vmatmul.mubr.bf16.gmra.mxu0 %v7689
        %v7789 = vpop.f32.mrf.mxu0
        %v7790 = vadd.f32 0.0, %v7789
        %v7791 = vpop.f32.mrf.mxu0
        %v7792 = vpop.f32.mrf.mxu0
        %v7793 = vpop.f32.mrf.mxu0
        %7794 = vdwg.mxu0
        %v7795 = vadd.f32 %v7688, %v7790
        %v7796 = vpack.c.bf16 %v7253, %v7253
        %s7797 = scalar_lea.vmem %s5, 320
        %v7798 = vld [vmem:[%s7797] sm:$0xf]
        %v7799 = vld [vmem:[%s7797 + $0x4] sm:$0xf]
        %v7800 = vld [vmem:[%s7797 + $0x8] sm:$0xf]
        %v7801 = vld [vmem:[%s7797 + $0xc] sm:$0xf]
        %v7802 = vld [vmem:[%s7797 + $0x10] sm:$0xf]
        %v7803 = vld [vmem:[%s7797 + $0x14] sm:$0xf]
        %v7804 = vld [vmem:[%s7797 + $0x18] sm:$0xf]
        %v7805 = vld [vmem:[%s7797 + $0x1c] sm:$0xf]
        %v7806 = vld [vmem:[%s7797 + $0x20] sm:$0xf]
        %v7807 = vld [vmem:[%s7797 + $0x24] sm:$0xf]
        %v7808 = vld [vmem:[%s7797 + $0x28] sm:$0xf]
        %v7809 = vld [vmem:[%s7797 + $0x2c] sm:$0xf]
        %v7810 = vld [vmem:[%s7797 + $0x30] sm:$0xf]
        %v7811 = vld [vmem:[%s7797 + $0x34] sm:$0xf]
        %v7812 = vld [vmem:[%s7797 + $0x38] sm:$0xf]
        %v7813 = vld [vmem:[%s7797 + $0x3c] sm:$0xf]
        %v7830 = vunpack.c.l.b16 %v7798
        %v7831 = vunpack.c.l.b16 %v7799
        %v7832 = vunpack.c.l.b16 %v7800
        %v7833 = vunpack.c.l.b16 %v7801
        %v7834 = vunpack.c.l.b16 %v7802
        %v7835 = vunpack.c.l.b16 %v7803
        %v7836 = vunpack.c.l.b16 %v7804
        %v7837 = vunpack.c.l.b16 %v7805
        %v7838 = vunpack.c.l.b16 %v7806
        %v7839 = vunpack.c.l.b16 %v7807
        %v7840 = vunpack.c.l.b16 %v7808
        %v7841 = vunpack.c.l.b16 %v7809
        %v7842 = vunpack.c.l.b16 %v7810
        %v7843 = vunpack.c.l.b16 %v7811
        %v7844 = vunpack.c.l.b16 %v7812
        %v7845 = vunpack.c.l.b16 %v7813
        %v7846 = vpack.c.b16 %v7831, %v7830
        %v7847 = vpack.c.b16 %v7833, %v7832
        %v7848 = vpack.c.b16 %v7835, %v7834
        %v7849 = vpack.c.b16 %v7837, %v7836
        %v7850 = vpack.c.b16 %v7839, %v7838
        %v7851 = vpack.c.b16 %v7841, %v7840
        %v7852 = vpack.c.b16 %v7843, %v7842
        %v7853 = vpack.c.b16 %v7845, %v7844
        %7862 = vmatprep.subr.bf16.mxu0 0
        %7863 = vmatpush1.bf16.msra.mxu0 %v7853
        %7864 = vmatprep.subr.bf16.mxu0 0
        %7865 = vmatpush1.bf16.msra.mxu0 %v7852
        %7866 = vmatprep.subr.bf16.mxu0 0
        %7867 = vmatpush1.bf16.msra.mxu0 %v7851
        %7868 = vmatprep.subr.bf16.mxu0 0
        %7869 = vmatpush1.bf16.msra.mxu0 %v7850
        %7870 = vmatprep.subr.bf16.mxu0 0
        %7871 = vmatpush1.bf16.msra.mxu0 %v7849
        %7872 = vmatprep.subr.bf16.mxu0 0
        %7873 = vmatpush1.bf16.msra.mxu0 %v7848
        %7874 = vmatprep.subr.bf16.mxu0 0
        %7875 = vmatpush1.bf16.msra.mxu0 %v7847
        %7876 = vmatprep.subr.bf16.mxu0 0
        %7877 = vmatpush1.bf16.msra.mxu0 %v7846
        %7878 = vmatprep.subr.bf16.mxu0 0
        %7879 = vmatpush2.bf16.msra.mxu0 0
        %7880 = vmatprep.subr.bf16.mxu0 0
        %7881 = vmatpush2.bf16.msra.mxu0 0
        %7882 = vmatprep.subr.bf16.mxu0 0
        %7883 = vmatpush2.bf16.msra.mxu0 0
        %7884 = vmatprep.subr.bf16.mxu0 0
        %7885 = vmatpush2.bf16.msra.mxu0 0
        %7886 = vmatprep.subr.bf16.mxu0 0
        %7887 = vmatpush2.bf16.msra.mxu0 0
        %7888 = vmatprep.subr.bf16.mxu0 0
        %7889 = vmatpush2.bf16.msra.mxu0 0
        %7890 = vmatprep.subr.bf16.mxu0 0
        %7891 = vmatpush2.bf16.msra.mxu0 0
        %7892 = vmatprep.subr.bf16.mxu0 0
        %7893 = vmatpush2.bf16.msra.mxu0 0
        %7894 = vmatprep.mubr.bf16.mxu0 0
        %7895 = vmatmul.mubr.bf16.gmra.mxu0 %v7796
        %v7896 = vpop.f32.mrf.mxu0
        %v7897 = vadd.f32 0.0, %v7896
        %v7898 = vpop.f32.mrf.mxu0
        %v7899 = vpop.f32.mrf.mxu0
        %v7900 = vpop.f32.mrf.mxu0
        %7901 = vdwg.mxu0
        %v7902 = vadd.f32 %v7795, %v7897
        %v7903 = vpack.c.bf16 %v7254, %v7254
        %s7904 = scalar_lea.vmem %s5, 384
        %v7905 = vld [vmem:[%s7904] sm:$0xf]
        %v7906 = vld [vmem:[%s7904 + $0x4] sm:$0xf]
        %v7907 = vld [vmem:[%s7904 + $0x8] sm:$0xf]
        %v7908 = vld [vmem:[%s7904 + $0xc] sm:$0xf]
        %v7909 = vld [vmem:[%s7904 + $0x10] sm:$0xf]
        %v7910 = vld [vmem:[%s7904 + $0x14] sm:$0xf]
        %v7911 = vld [vmem:[%s7904 + $0x18] sm:$0xf]
        %v7912 = vld [vmem:[%s7904 + $0x1c] sm:$0xf]
        %v7913 = vld [vmem:[%s7904 + $0x20] sm:$0xf]
        %v7914 = vld [vmem:[%s7904 + $0x24] sm:$0xf]
        %v7915 = vld [vmem:[%s7904 + $0x28] sm:$0xf]
        %v7916 = vld [vmem:[%s7904 + $0x2c] sm:$0xf]
        %v7917 = vld [vmem:[%s7904 + $0x30] sm:$0xf]
        %v7918 = vld [vmem:[%s7904 + $0x34] sm:$0xf]
        %v7919 = vld [vmem:[%s7904 + $0x38] sm:$0xf]
        %v7920 = vld [vmem:[%s7904 + $0x3c] sm:$0xf]
        %v7937 = vunpack.c.l.b16 %v7905
        %v7938 = vunpack.c.l.b16 %v7906
        %v7939 = vunpack.c.l.b16 %v7907
        %v7940 = vunpack.c.l.b16 %v7908
        %v7941 = vunpack.c.l.b16 %v7909
        %v7942 = vunpack.c.l.b16 %v7910
        %v7943 = vunpack.c.l.b16 %v7911
        %v7944 = vunpack.c.l.b16 %v7912
        %v7945 = vunpack.c.l.b16 %v7913
        %v7946 = vunpack.c.l.b16 %v7914
        %v7947 = vunpack.c.l.b16 %v7915
        %v7948 = vunpack.c.l.b16 %v7916
        %v7949 = vunpack.c.l.b16 %v7917
        %v7950 = vunpack.c.l.b16 %v7918
        %v7951 = vunpack.c.l.b16 %v7919
        %v7952 = vunpack.c.l.b16 %v7920
        %v7953 = vpack.c.b16 %v7938, %v7937
        %v7954 = vpack.c.b16 %v7940, %v7939
        %v7955 = vpack.c.b16 %v7942, %v7941
        %v7956 = vpack.c.b16 %v7944, %v7943
        %v7957 = vpack.c.b16 %v7946, %v7945
        %v7958 = vpack.c.b16 %v7948, %v7947
        %v7959 = vpack.c.b16 %v7950, %v7949
        %v7960 = vpack.c.b16 %v7952, %v7951
        %7969 = vmatprep.subr.bf16.mxu0 0
        %7970 = vmatpush1.bf16.msra.mxu0 %v7960
        %7971 = vmatprep.subr.bf16.mxu0 0
        %7972 = vmatpush1.bf16.msra.mxu0 %v7959
        %7973 = vmatprep.subr.bf16.mxu0 0
        %7974 = vmatpush1.bf16.msra.mxu0 %v7958
        %7975 = vmatprep.subr.bf16.mxu0 0
        %7976 = vmatpush1.bf16.msra.mxu0 %v7957
        %7977 = vmatprep.subr.bf16.mxu0 0
        %7978 = vmatpush1.bf16.msra.mxu0 %v7956
        %7979 = vmatprep.subr.bf16.mxu0 0
        %7980 = vmatpush1.bf16.msra.mxu0 %v7955
        %7981 = vmatprep.subr.bf16.mxu0 0
        %7982 = vmatpush1.bf16.msra.mxu0 %v7954
        %7983 = vmatprep.subr.bf16.mxu0 0
        %7984 = vmatpush1.bf16.msra.mxu0 %v7953
        %7985 = vmatprep.subr.bf16.mxu0 0
        %7986 = vmatpush2.bf16.msra.mxu0 0
        %7987 = vmatprep.subr.bf16.mxu0 0
        %7988 = vmatpush2.bf16.msra.mxu0 0
        %7989 = vmatprep.subr.bf16.mxu0 0
        %7990 = vmatpush2.bf16.msra.mxu0 0
        %7991 = vmatprep.subr.bf16.mxu0 0
        %7992 = vmatpush2.bf16.msra.mxu0 0
        %7993 = vmatprep.subr.bf16.mxu0 0
        %7994 = vmatpush2.bf16.msra.mxu0 0
        %7995 = vmatprep.subr.bf16.mxu0 0
        %7996 = vmatpush2.bf16.msra.mxu0 0
        %7997 = vmatprep.subr.bf16.mxu0 0
        %7998 = vmatpush2.bf16.msra.mxu0 0
        %7999 = vmatprep.subr.bf16.mxu0 0
        %8000 = vmatpush2.bf16.msra.mxu0 0
        %8001 = vmatprep.mubr.bf16.mxu0 0
        %8002 = vmatmul.mubr.bf16.gmra.mxu0 %v7903
        %v8003 = vpop.f32.mrf.mxu0
        %v8004 = vadd.f32 0.0, %v8003
        %v8005 = vpop.f32.mrf.mxu0
        %v8006 = vpop.f32.mrf.mxu0
        %v8007 = vpop.f32.mrf.mxu0
        %8008 = vdwg.mxu0
        %v8009 = vadd.f32 %v7902, %v8004
        %v8010 = vpack.c.bf16 %v7255, %v7255
        %s8011 = scalar_lea.vmem %s5, 448
        %v8012 = vld [vmem:[%s8011] sm:$0xf]
        %v8013 = vld [vmem:[%s8011 + $0x4] sm:$0xf]
        %v8014 = vld [vmem:[%s8011 + $0x8] sm:$0xf]
        %v8015 = vld [vmem:[%s8011 + $0xc] sm:$0xf]
        %v8016 = vld [vmem:[%s8011 + $0x10] sm:$0xf]
        %v8017 = vld [vmem:[%s8011 + $0x14] sm:$0xf]
        %v8018 = vld [vmem:[%s8011 + $0x18] sm:$0xf]
        %v8019 = vld [vmem:[%s8011 + $0x1c] sm:$0xf]
        %v8020 = vld [vmem:[%s8011 + $0x20] sm:$0xf]
        %v8021 = vld [vmem:[%s8011 + $0x24] sm:$0xf]
        %v8022 = vld [vmem:[%s8011 + $0x28] sm:$0xf]
        %v8023 = vld [vmem:[%s8011 + $0x2c] sm:$0xf]
        %v8024 = vld [vmem:[%s8011 + $0x30] sm:$0xf]
        %v8025 = vld [vmem:[%s8011 + $0x34] sm:$0xf]
        %v8026 = vld [vmem:[%s8011 + $0x38] sm:$0xf]
        %v8027 = vld [vmem:[%s8011 + $0x3c] sm:$0xf]
        %v8044 = vunpack.c.l.b16 %v8012
        %v8045 = vunpack.c.l.b16 %v8013
        %v8046 = vunpack.c.l.b16 %v8014
        %v8047 = vunpack.c.l.b16 %v8015
        %v8048 = vunpack.c.l.b16 %v8016
        %v8049 = vunpack.c.l.b16 %v8017
        %v8050 = vunpack.c.l.b16 %v8018
        %v8051 = vunpack.c.l.b16 %v8019
        %v8052 = vunpack.c.l.b16 %v8020
        %v8053 = vunpack.c.l.b16 %v8021
        %v8054 = vunpack.c.l.b16 %v8022
        %v8055 = vunpack.c.l.b16 %v8023
        %v8056 = vunpack.c.l.b16 %v8024
        %v8057 = vunpack.c.l.b16 %v8025
        %v8058 = vunpack.c.l.b16 %v8026
        %v8059 = vunpack.c.l.b16 %v8027
        %v8060 = vpack.c.b16 %v8045, %v8044
        %v8061 = vpack.c.b16 %v8047, %v8046
        %v8062 = vpack.c.b16 %v8049, %v8048
        %v8063 = vpack.c.b16 %v8051, %v8050
        %v8064 = vpack.c.b16 %v8053, %v8052
        %v8065 = vpack.c.b16 %v8055, %v8054
        %v8066 = vpack.c.b16 %v8057, %v8056
        %v8067 = vpack.c.b16 %v8059, %v8058
        %8076 = vmatprep.subr.bf16.mxu0 0
        %8077 = vmatpush1.bf16.msra.mxu0 %v8067
        %8078 = vmatprep.subr.bf16.mxu0 0
        %8079 = vmatpush1.bf16.msra.mxu0 %v8066
        %8080 = vmatprep.subr.bf16.mxu0 0
        %8081 = vmatpush1.bf16.msra.mxu0 %v8065
        %8082 = vmatprep.subr.bf16.mxu0 0
        %8083 = vmatpush1.bf16.msra.mxu0 %v8064
        %8084 = vmatprep.subr.bf16.mxu0 0
        %8085 = vmatpush1.bf16.msra.mxu0 %v8063
        %8086 = vmatprep.subr.bf16.mxu0 0
        %8087 = vmatpush1.bf16.msra.mxu0 %v8062
        %8088 = vmatprep.subr.bf16.mxu0 0
        %8089 = vmatpush1.bf16.msra.mxu0 %v8061
        %8090 = vmatprep.subr.bf16.mxu0 0
        %8091 = vmatpush1.bf16.msra.mxu0 %v8060
        %8092 = vmatprep.subr.bf16.mxu0 0
        %8093 = vmatpush2.bf16.msra.mxu0 0
        %8094 = vmatprep.subr.bf16.mxu0 0
        %8095 = vmatpush2.bf16.msra.mxu0 0
        %8096 = vmatprep.subr.bf16.mxu0 0
        %8097 = vmatpush2.bf16.msra.mxu0 0
        %8098 = vmatprep.subr.bf16.mxu0 0
        %8099 = vmatpush2.bf16.msra.mxu0 0
        %8100 = vmatprep.subr.bf16.mxu0 0
        %8101 = vmatpush2.bf16.msra.mxu0 0
        %8102 = vmatprep.subr.bf16.mxu0 0
        %8103 = vmatpush2.bf16.msra.mxu0 0
        %8104 = vmatprep.subr.bf16.mxu0 0
        %8105 = vmatpush2.bf16.msra.mxu0 0
        %8106 = vmatprep.subr.bf16.mxu0 0
        %8107 = vmatpush2.bf16.msra.mxu0 0
        %8108 = vmatprep.mubr.bf16.mxu0 0
        %8109 = vmatmul.mubr.bf16.gmra.mxu0 %v8010
        %v8110 = vpop.f32.mrf.mxu0
        %v8111 = vadd.f32 0.0, %v8110
        %v8112 = vpop.f32.mrf.mxu0
        %v8113 = vpop.f32.mrf.mxu0
        %v8114 = vpop.f32.mrf.mxu0
        %8115 = vdwg.mxu0
        %v8116 = vadd.f32 %v8009, %v8111
        %v8117 = vpack.c.bf16 %v7256, %v7256
        %s8118 = scalar_lea.vmem %s5, 512
        %v8119 = vld [vmem:[%s8118] sm:$0xf]
        %v8120 = vld [vmem:[%s8118 + $0x4] sm:$0xf]
        %v8121 = vld [vmem:[%s8118 + $0x8] sm:$0xf]
        %v8122 = vld [vmem:[%s8118 + $0xc] sm:$0xf]
        %v8123 = vld [vmem:[%s8118 + $0x10] sm:$0xf]
        %v8124 = vld [vmem:[%s8118 + $0x14] sm:$0xf]
        %v8125 = vld [vmem:[%s8118 + $0x18] sm:$0xf]
        %v8126 = vld [vmem:[%s8118 + $0x1c] sm:$0xf]
        %v8127 = vld [vmem:[%s8118 + $0x20] sm:$0xf]
        %v8128 = vld [vmem:[%s8118 + $0x24] sm:$0xf]
        %v8129 = vld [vmem:[%s8118 + $0x28] sm:$0xf]
        %v8130 = vld [vmem:[%s8118 + $0x2c] sm:$0xf]
        %v8131 = vld [vmem:[%s8118 + $0x30] sm:$0xf]
        %v8132 = vld [vmem:[%s8118 + $0x34] sm:$0xf]
        %v8133 = vld [vmem:[%s8118 + $0x38] sm:$0xf]
        %v8134 = vld [vmem:[%s8118 + $0x3c] sm:$0xf]
        %v8151 = vunpack.c.l.b16 %v8119
        %v8152 = vunpack.c.l.b16 %v8120
        %v8153 = vunpack.c.l.b16 %v8121
        %v8154 = vunpack.c.l.b16 %v8122
        %v8155 = vunpack.c.l.b16 %v8123
        %v8156 = vunpack.c.l.b16 %v8124
        %v8157 = vunpack.c.l.b16 %v8125
        %v8158 = vunpack.c.l.b16 %v8126
        %v8159 = vunpack.c.l.b16 %v8127
        %v8160 = vunpack.c.l.b16 %v8128
        %v8161 = vunpack.c.l.b16 %v8129
        %v8162 = vunpack.c.l.b16 %v8130
        %v8163 = vunpack.c.l.b16 %v8131
        %v8164 = vunpack.c.l.b16 %v8132
        %v8165 = vunpack.c.l.b16 %v8133
        %v8166 = vunpack.c.l.b16 %v8134
        %v8167 = vpack.c.b16 %v8152, %v8151
        %v8168 = vpack.c.b16 %v8154, %v8153
        %v8169 = vpack.c.b16 %v8156, %v8155
        %v8170 = vpack.c.b16 %v8158, %v8157
        %v8171 = vpack.c.b16 %v8160, %v8159
        %v8172 = vpack.c.b16 %v8162, %v8161
        %v8173 = vpack.c.b16 %v8164, %v8163
        %v8174 = vpack.c.b16 %v8166, %v8165
        %8183 = vmatprep.subr.bf16.mxu0 0
        %8184 = vmatpush1.bf16.msra.mxu0 %v8174
        %8185 = vmatprep.subr.bf16.mxu0 0
        %8186 = vmatpush1.bf16.msra.mxu0 %v8173
        %8187 = vmatprep.subr.bf16.mxu0 0
        %8188 = vmatpush1.bf16.msra.mxu0 %v8172
        %8189 = vmatprep.subr.bf16.mxu0 0
        %8190 = vmatpush1.bf16.msra.mxu0 %v8171
        %8191 = vmatprep.subr.bf16.mxu0 0
        %8192 = vmatpush1.bf16.msra.mxu0 %v8170
        %8193 = vmatprep.subr.bf16.mxu0 0
        %8194 = vmatpush1.bf16.msra.mxu0 %v8169
        %8195 = vmatprep.subr.bf16.mxu0 0
        %8196 = vmatpush1.bf16.msra.mxu0 %v8168
        %8197 = vmatprep.subr.bf16.mxu0 0
        %8198 = vmatpush1.bf16.msra.mxu0 %v8167
        %8199 = vmatprep.subr.bf16.mxu0 0
        %8200 = vmatpush2.bf16.msra.mxu0 0
        %8201 = vmatprep.subr.bf16.mxu0 0
        %8202 = vmatpush2.bf16.msra.mxu0 0
        %8203 = vmatprep.subr.bf16.mxu0 0
        %8204 = vmatpush2.bf16.msra.mxu0 0
        %8205 = vmatprep.subr.bf16.mxu0 0
        %8206 = vmatpush2.bf16.msra.mxu0 0
        %8207 = vmatprep.subr.bf16.mxu0 0
        %8208 = vmatpush2.bf16.msra.mxu0 0
        %8209 = vmatprep.subr.bf16.mxu0 0
        %8210 = vmatpush2.bf16.msra.mxu0 0
        %8211 = vmatprep.subr.bf16.mxu0 0
        %8212 = vmatpush2.bf16.msra.mxu0 0
        %8213 = vmatprep.subr.bf16.mxu0 0
        %8214 = vmatpush2.bf16.msra.mxu0 0
        %8215 = vmatprep.mubr.bf16.mxu0 0
        %8216 = vmatmul.mubr.bf16.gmra.mxu0 %v8117
        %v8217 = vpop.f32.mrf.mxu0
        %v8218 = vadd.f32 0.0, %v8217
        %v8219 = vpop.f32.mrf.mxu0
        %v8220 = vpop.f32.mrf.mxu0
        %v8221 = vpop.f32.mrf.mxu0
        %8222 = vdwg.mxu0
        %v8223 = vadd.f32 %v8116, %v8218
        %v8224 = vpack.c.bf16 %v7257, %v7257
        %s8225 = scalar_lea.vmem %s5, 576
        %v8226 = vld [vmem:[%s8225] sm:$0xf]
        %v8227 = vld [vmem:[%s8225 + $0x4] sm:$0xf]
        %v8228 = vld [vmem:[%s8225 + $0x8] sm:$0xf]
        %v8229 = vld [vmem:[%s8225 + $0xc] sm:$0xf]
        %v8230 = vld [vmem:[%s8225 + $0x10] sm:$0xf]
        %v8231 = vld [vmem:[%s8225 + $0x14] sm:$0xf]
        %v8232 = vld [vmem:[%s8225 + $0x18] sm:$0xf]
        %v8233 = vld [vmem:[%s8225 + $0x1c] sm:$0xf]
        %v8234 = vld [vmem:[%s8225 + $0x20] sm:$0xf]
        %v8235 = vld [vmem:[%s8225 + $0x24] sm:$0xf]
        %v8236 = vld [vmem:[%s8225 + $0x28] sm:$0xf]
        %v8237 = vld [vmem:[%s8225 + $0x2c] sm:$0xf]
        %v8238 = vld [vmem:[%s8225 + $0x30] sm:$0xf]
        %v8239 = vld [vmem:[%s8225 + $0x34] sm:$0xf]
        %v8240 = vld [vmem:[%s8225 + $0x38] sm:$0xf]
        %v8241 = vld [vmem:[%s8225 + $0x3c] sm:$0xf]
        %v8258 = vunpack.c.l.b16 %v8226
        %v8259 = vunpack.c.l.b16 %v8227
        %v8260 = vunpack.c.l.b16 %v8228
        %v8261 = vunpack.c.l.b16 %v8229
        %v8262 = vunpack.c.l.b16 %v8230
        %v8263 = vunpack.c.l.b16 %v8231
        %v8264 = vunpack.c.l.b16 %v8232
        %v8265 = vunpack.c.l.b16 %v8233
        %v8266 = vunpack.c.l.b16 %v8234
        %v8267 = vunpack.c.l.b16 %v8235
        %v8268 = vunpack.c.l.b16 %v8236
        %v8269 = vunpack.c.l.b16 %v8237
        %v8270 = vunpack.c.l.b16 %v8238
        %v8271 = vunpack.c.l.b16 %v8239
        %v8272 = vunpack.c.l.b16 %v8240
        %v8273 = vunpack.c.l.b16 %v8241
        %v8274 = vpack.c.b16 %v8259, %v8258
        %v8275 = vpack.c.b16 %v8261, %v8260
        %v8276 = vpack.c.b16 %v8263, %v8262
        %v8277 = vpack.c.b16 %v8265, %v8264
        %v8278 = vpack.c.b16 %v8267, %v8266
        %v8279 = vpack.c.b16 %v8269, %v8268
        %v8280 = vpack.c.b16 %v8271, %v8270
        %v8281 = vpack.c.b16 %v8273, %v8272
        %8290 = vmatprep.subr.bf16.mxu0 0
        %8291 = vmatpush1.bf16.msra.mxu0 %v8281
        %8292 = vmatprep.subr.bf16.mxu0 0
        %8293 = vmatpush1.bf16.msra.mxu0 %v8280
        %8294 = vmatprep.subr.bf16.mxu0 0
        %8295 = vmatpush1.bf16.msra.mxu0 %v8279
        %8296 = vmatprep.subr.bf16.mxu0 0
        %8297 = vmatpush1.bf16.msra.mxu0 %v8278
        %8298 = vmatprep.subr.bf16.mxu0 0
        %8299 = vmatpush1.bf16.msra.mxu0 %v8277
        %8300 = vmatprep.subr.bf16.mxu0 0
        %8301 = vmatpush1.bf16.msra.mxu0 %v8276
        %8302 = vmatprep.subr.bf16.mxu0 0
        %8303 = vmatpush1.bf16.msra.mxu0 %v8275
        %8304 = vmatprep.subr.bf16.mxu0 0
        %8305 = vmatpush1.bf16.msra.mxu0 %v8274
        %8306 = vmatprep.subr.bf16.mxu0 0
        %8307 = vmatpush2.bf16.msra.mxu0 0
        %8308 = vmatprep.subr.bf16.mxu0 0
        %8309 = vmatpush2.bf16.msra.mxu0 0
        %8310 = vmatprep.subr.bf16.mxu0 0
        %8311 = vmatpush2.bf16.msra.mxu0 0
        %8312 = vmatprep.subr.bf16.mxu0 0
        %8313 = vmatpush2.bf16.msra.mxu0 0
        %8314 = vmatprep.subr.bf16.mxu0 0
        %8315 = vmatpush2.bf16.msra.mxu0 0
        %8316 = vmatprep.subr.bf16.mxu0 0
        %8317 = vmatpush2.bf16.msra.mxu0 0
        %8318 = vmatprep.subr.bf16.mxu0 0
        %8319 = vmatpush2.bf16.msra.mxu0 0
        %8320 = vmatprep.subr.bf16.mxu0 0
        %8321 = vmatpush2.bf16.msra.mxu0 0
        %8322 = vmatprep.mubr.bf16.mxu0 0
        %8323 = vmatmul.mubr.bf16.gmra.mxu0 %v8224
        %v8324 = vpop.f32.mrf.mxu0
        %v8325 = vadd.f32 0.0, %v8324
        %v8326 = vpop.f32.mrf.mxu0
        %v8327 = vpop.f32.mrf.mxu0
        %v8328 = vpop.f32.mrf.mxu0
        %8329 = vdwg.mxu0
        %v8330 = vadd.f32 %v8223, %v8325
        %v8331 = vpack.c.bf16 %v7258, %v7258
        %s8332 = scalar_lea.vmem %s5, 640
        %v8333 = vld [vmem:[%s8332] sm:$0xf]
        %v8334 = vld [vmem:[%s8332 + $0x4] sm:$0xf]
        %v8335 = vld [vmem:[%s8332 + $0x8] sm:$0xf]
        %v8336 = vld [vmem:[%s8332 + $0xc] sm:$0xf]
        %v8337 = vld [vmem:[%s8332 + $0x10] sm:$0xf]
        %v8338 = vld [vmem:[%s8332 + $0x14] sm:$0xf]
        %v8339 = vld [vmem:[%s8332 + $0x18] sm:$0xf]
        %v8340 = vld [vmem:[%s8332 + $0x1c] sm:$0xf]
        %v8341 = vld [vmem:[%s8332 + $0x20] sm:$0xf]
        %v8342 = vld [vmem:[%s8332 + $0x24] sm:$0xf]
        %v8343 = vld [vmem:[%s8332 + $0x28] sm:$0xf]
        %v8344 = vld [vmem:[%s8332 + $0x2c] sm:$0xf]
        %v8345 = vld [vmem:[%s8332 + $0x30] sm:$0xf]
        %v8346 = vld [vmem:[%s8332 + $0x34] sm:$0xf]
        %v8347 = vld [vmem:[%s8332 + $0x38] sm:$0xf]
        %v8348 = vld [vmem:[%s8332 + $0x3c] sm:$0xf]
        %v8365 = vunpack.c.l.b16 %v8333
        %v8366 = vunpack.c.l.b16 %v8334
        %v8367 = vunpack.c.l.b16 %v8335
        %v8368 = vunpack.c.l.b16 %v8336
        %v8369 = vunpack.c.l.b16 %v8337
        %v8370 = vunpack.c.l.b16 %v8338
        %v8371 = vunpack.c.l.b16 %v8339
        %v8372 = vunpack.c.l.b16 %v8340
        %v8373 = vunpack.c.l.b16 %v8341
        %v8374 = vunpack.c.l.b16 %v8342
        %v8375 = vunpack.c.l.b16 %v8343
        %v8376 = vunpack.c.l.b16 %v8344
        %v8377 = vunpack.c.l.b16 %v8345
        %v8378 = vunpack.c.l.b16 %v8346
        %v8379 = vunpack.c.l.b16 %v8347
        %v8380 = vunpack.c.l.b16 %v8348
        %v8381 = vpack.c.b16 %v8366, %v8365
        %v8382 = vpack.c.b16 %v8368, %v8367
        %v8383 = vpack.c.b16 %v8370, %v8369
        %v8384 = vpack.c.b16 %v8372, %v8371
        %v8385 = vpack.c.b16 %v8374, %v8373
        %v8386 = vpack.c.b16 %v8376, %v8375
        %v8387 = vpack.c.b16 %v8378, %v8377
        %v8388 = vpack.c.b16 %v8380, %v8379
        %8397 = vmatprep.subr.bf16.mxu0 0
        %8398 = vmatpush1.bf16.msra.mxu0 %v8388
        %8399 = vmatprep.subr.bf16.mxu0 0
        %8400 = vmatpush1.bf16.msra.mxu0 %v8387
        %8401 = vmatprep.subr.bf16.mxu0 0
        %8402 = vmatpush1.bf16.msra.mxu0 %v8386
        %8403 = vmatprep.subr.bf16.mxu0 0
        %8404 = vmatpush1.bf16.msra.mxu0 %v8385
        %8405 = vmatprep.subr.bf16.mxu0 0
        %8406 = vmatpush1.bf16.msra.mxu0 %v8384
        %8407 = vmatprep.subr.bf16.mxu0 0
        %8408 = vmatpush1.bf16.msra.mxu0 %v8383
        %8409 = vmatprep.subr.bf16.mxu0 0
        %8410 = vmatpush1.bf16.msra.mxu0 %v8382
        %8411 = vmatprep.subr.bf16.mxu0 0
        %8412 = vmatpush1.bf16.msra.mxu0 %v8381
        %8413 = vmatprep.subr.bf16.mxu0 0
        %8414 = vmatpush2.bf16.msra.mxu0 0
        %8415 = vmatprep.subr.bf16.mxu0 0
        %8416 = vmatpush2.bf16.msra.mxu0 0
        %8417 = vmatprep.subr.bf16.mxu0 0
        %8418 = vmatpush2.bf16.msra.mxu0 0
        %8419 = vmatprep.subr.bf16.mxu0 0
        %8420 = vmatpush2.bf16.msra.mxu0 0
        %8421 = vmatprep.subr.bf16.mxu0 0
        %8422 = vmatpush2.bf16.msra.mxu0 0
        %8423 = vmatprep.subr.bf16.mxu0 0
        %8424 = vmatpush2.bf16.msra.mxu0 0
        %8425 = vmatprep.subr.bf16.mxu0 0
        %8426 = vmatpush2.bf16.msra.mxu0 0
        %8427 = vmatprep.subr.bf16.mxu0 0
        %8428 = vmatpush2.bf16.msra.mxu0 0
        %8429 = vmatprep.mubr.bf16.mxu0 0
        %8430 = vmatmul.mubr.bf16.gmra.mxu0 %v8331
        %v8431 = vpop.f32.mrf.mxu0
        %v8432 = vadd.f32 0.0, %v8431
        %v8433 = vpop.f32.mrf.mxu0
        %v8434 = vpop.f32.mrf.mxu0
        %v8435 = vpop.f32.mrf.mxu0
        %8436 = vdwg.mxu0
        %v8437 = vadd.f32 %v8330, %v8432
        %v8438 = vpack.c.bf16 %v7259, %v7259
        %s8439 = scalar_lea.vmem %s5, 704
        %v8440 = vld [vmem:[%s8439] sm:$0xf]
        %v8441 = vld [vmem:[%s8439 + $0x4] sm:$0xf]
        %v8442 = vld [vmem:[%s8439 + $0x8] sm:$0xf]
        %v8443 = vld [vmem:[%s8439 + $0xc] sm:$0xf]
        %v8444 = vld [vmem:[%s8439 + $0x10] sm:$0xf]
        %v8445 = vld [vmem:[%s8439 + $0x14] sm:$0xf]
        %v8446 = vld [vmem:[%s8439 + $0x18] sm:$0xf]
        %v8447 = vld [vmem:[%s8439 + $0x1c] sm:$0xf]
        %v8448 = vld [vmem:[%s8439 + $0x20] sm:$0xf]
        %v8449 = vld [vmem:[%s8439 + $0x24] sm:$0xf]
        %v8450 = vld [vmem:[%s8439 + $0x28] sm:$0xf]
        %v8451 = vld [vmem:[%s8439 + $0x2c] sm:$0xf]
        %v8452 = vld [vmem:[%s8439 + $0x30] sm:$0xf]
        %v8453 = vld [vmem:[%s8439 + $0x34] sm:$0xf]
        %v8454 = vld [vmem:[%s8439 + $0x38] sm:$0xf]
        %v8455 = vld [vmem:[%s8439 + $0x3c] sm:$0xf]
        %v8472 = vunpack.c.l.b16 %v8440
        %v8473 = vunpack.c.l.b16 %v8441
        %v8474 = vunpack.c.l.b16 %v8442
        %v8475 = vunpack.c.l.b16 %v8443
        %v8476 = vunpack.c.l.b16 %v8444
        %v8477 = vunpack.c.l.b16 %v8445
        %v8478 = vunpack.c.l.b16 %v8446
        %v8479 = vunpack.c.l.b16 %v8447
        %v8480 = vunpack.c.l.b16 %v8448
        %v8481 = vunpack.c.l.b16 %v8449
        %v8482 = vunpack.c.l.b16 %v8450
        %v8483 = vunpack.c.l.b16 %v8451
        %v8484 = vunpack.c.l.b16 %v8452
        %v8485 = vunpack.c.l.b16 %v8453
        %v8486 = vunpack.c.l.b16 %v8454
        %v8487 = vunpack.c.l.b16 %v8455
        %v8488 = vpack.c.b16 %v8473, %v8472
        %v8489 = vpack.c.b16 %v8475, %v8474
        %v8490 = vpack.c.b16 %v8477, %v8476
        %v8491 = vpack.c.b16 %v8479, %v8478
        %v8492 = vpack.c.b16 %v8481, %v8480
        %v8493 = vpack.c.b16 %v8483, %v8482
        %v8494 = vpack.c.b16 %v8485, %v8484
        %v8495 = vpack.c.b16 %v8487, %v8486
        %8504 = vmatprep.subr.bf16.mxu0 0
        %8505 = vmatpush1.bf16.msra.mxu0 %v8495
        %8506 = vmatprep.subr.bf16.mxu0 0
        %8507 = vmatpush1.bf16.msra.mxu0 %v8494
        %8508 = vmatprep.subr.bf16.mxu0 0
        %8509 = vmatpush1.bf16.msra.mxu0 %v8493
        %8510 = vmatprep.subr.bf16.mxu0 0
        %8511 = vmatpush1.bf16.msra.mxu0 %v8492
        %8512 = vmatprep.subr.bf16.mxu0 0
        %8513 = vmatpush1.bf16.msra.mxu0 %v8491
        %8514 = vmatprep.subr.bf16.mxu0 0
        %8515 = vmatpush1.bf16.msra.mxu0 %v8490
        %8516 = vmatprep.subr.bf16.mxu0 0
        %8517 = vmatpush1.bf16.msra.mxu0 %v8489
        %8518 = vmatprep.subr.bf16.mxu0 0
        %8519 = vmatpush1.bf16.msra.mxu0 %v8488
        %8520 = vmatprep.subr.bf16.mxu0 0
        %8521 = vmatpush2.bf16.msra.mxu0 0
        %8522 = vmatprep.subr.bf16.mxu0 0
        %8523 = vmatpush2.bf16.msra.mxu0 0
        %8524 = vmatprep.subr.bf16.mxu0 0
        %8525 = vmatpush2.bf16.msra.mxu0 0
        %8526 = vmatprep.subr.bf16.mxu0 0
        %8527 = vmatpush2.bf16.msra.mxu0 0
        %8528 = vmatprep.subr.bf16.mxu0 0
        %8529 = vmatpush2.bf16.msra.mxu0 0
        %8530 = vmatprep.subr.bf16.mxu0 0
        %8531 = vmatpush2.bf16.msra.mxu0 0
        %8532 = vmatprep.subr.bf16.mxu0 0
        %8533 = vmatpush2.bf16.msra.mxu0 0
        %8534 = vmatprep.subr.bf16.mxu0 0
        %8535 = vmatpush2.bf16.msra.mxu0 0
        %8536 = vmatprep.mubr.bf16.mxu0 0
        %8537 = vmatmul.mubr.bf16.gmra.mxu0 %v8438
        %v8538 = vpop.f32.mrf.mxu0
        %v8539 = vadd.f32 0.0, %v8538
        %v8540 = vpop.f32.mrf.mxu0
        %v8541 = vpop.f32.mrf.mxu0
        %v8542 = vpop.f32.mrf.mxu0
        %8543 = vdwg.mxu0
        %v8544 = vadd.f32 %v8437, %v8539
        %v8545 = vpack.c.bf16 %v7260, %v7260
        %s8546 = scalar_lea.vmem %s5, 768
        %v8547 = vld [vmem:[%s8546] sm:$0xf]
        %v8548 = vld [vmem:[%s8546 + $0x4] sm:$0xf]
        %v8549 = vld [vmem:[%s8546 + $0x8] sm:$0xf]
        %v8550 = vld [vmem:[%s8546 + $0xc] sm:$0xf]
        %v8551 = vld [vmem:[%s8546 + $0x10] sm:$0xf]
        %v8552 = vld [vmem:[%s8546 + $0x14] sm:$0xf]
        %v8553 = vld [vmem:[%s8546 + $0x18] sm:$0xf]
        %v8554 = vld [vmem:[%s8546 + $0x1c] sm:$0xf]
        %v8555 = vld [vmem:[%s8546 + $0x20] sm:$0xf]
        %v8556 = vld [vmem:[%s8546 + $0x24] sm:$0xf]
        %v8557 = vld [vmem:[%s8546 + $0x28] sm:$0xf]
        %v8558 = vld [vmem:[%s8546 + $0x2c] sm:$0xf]
        %v8559 = vld [vmem:[%s8546 + $0x30] sm:$0xf]
        %v8560 = vld [vmem:[%s8546 + $0x34] sm:$0xf]
        %v8561 = vld [vmem:[%s8546 + $0x38] sm:$0xf]
        %v8562 = vld [vmem:[%s8546 + $0x3c] sm:$0xf]
        %v8579 = vunpack.c.l.b16 %v8547
        %v8580 = vunpack.c.l.b16 %v8548
        %v8581 = vunpack.c.l.b16 %v8549
        %v8582 = vunpack.c.l.b16 %v8550
        %v8583 = vunpack.c.l.b16 %v8551
        %v8584 = vunpack.c.l.b16 %v8552
        %v8585 = vunpack.c.l.b16 %v8553
        %v8586 = vunpack.c.l.b16 %v8554
        %v8587 = vunpack.c.l.b16 %v8555
        %v8588 = vunpack.c.l.b16 %v8556
        %v8589 = vunpack.c.l.b16 %v8557
        %v8590 = vunpack.c.l.b16 %v8558
        %v8591 = vunpack.c.l.b16 %v8559
        %v8592 = vunpack.c.l.b16 %v8560
        %v8593 = vunpack.c.l.b16 %v8561
        %v8594 = vunpack.c.l.b16 %v8562
        %v8595 = vpack.c.b16 %v8580, %v8579
        %v8596 = vpack.c.b16 %v8582, %v8581
        %v8597 = vpack.c.b16 %v8584, %v8583
        %v8598 = vpack.c.b16 %v8586, %v8585
        %v8599 = vpack.c.b16 %v8588, %v8587
        %v8600 = vpack.c.b16 %v8590, %v8589
        %v8601 = vpack.c.b16 %v8592, %v8591
        %v8602 = vpack.c.b16 %v8594, %v8593
        %8611 = vmatprep.subr.bf16.mxu0 0
        %8612 = vmatpush1.bf16.msra.mxu0 %v8602
        %8613 = vmatprep.subr.bf16.mxu0 0
        %8614 = vmatpush1.bf16.msra.mxu0 %v8601
        %8615 = vmatprep.subr.bf16.mxu0 0
        %8616 = vmatpush1.bf16.msra.mxu0 %v8600
        %8617 = vmatprep.subr.bf16.mxu0 0
        %8618 = vmatpush1.bf16.msra.mxu0 %v8599
        %8619 = vmatprep.subr.bf16.mxu0 0
        %8620 = vmatpush1.bf16.msra.mxu0 %v8598
        %8621 = vmatprep.subr.bf16.mxu0 0
        %8622 = vmatpush1.bf16.msra.mxu0 %v8597
        %8623 = vmatprep.subr.bf16.mxu0 0
        %8624 = vmatpush1.bf16.msra.mxu0 %v8596
        %8625 = vmatprep.subr.bf16.mxu0 0
        %8626 = vmatpush1.bf16.msra.mxu0 %v8595
        %8627 = vmatprep.subr.bf16.mxu0 0
        %8628 = vmatpush2.bf16.msra.mxu0 0
        %8629 = vmatprep.subr.bf16.mxu0 0
        %8630 = vmatpush2.bf16.msra.mxu0 0
        %8631 = vmatprep.subr.bf16.mxu0 0
        %8632 = vmatpush2.bf16.msra.mxu0 0
        %8633 = vmatprep.subr.bf16.mxu0 0
        %8634 = vmatpush2.bf16.msra.mxu0 0
        %8635 = vmatprep.subr.bf16.mxu0 0
        %8636 = vmatpush2.bf16.msra.mxu0 0
        %8637 = vmatprep.subr.bf16.mxu0 0
        %8638 = vmatpush2.bf16.msra.mxu0 0
        %8639 = vmatprep.subr.bf16.mxu0 0
        %8640 = vmatpush2.bf16.msra.mxu0 0
        %8641 = vmatprep.subr.bf16.mxu0 0
        %8642 = vmatpush2.bf16.msra.mxu0 0
        %8643 = vmatprep.mubr.bf16.mxu0 0
        %8644 = vmatmul.mubr.bf16.gmra.mxu0 %v8545
        %v8645 = vpop.f32.mrf.mxu0
        %v8646 = vadd.f32 0.0, %v8645
        %v8647 = vpop.f32.mrf.mxu0
        %v8648 = vpop.f32.mrf.mxu0
        %v8649 = vpop.f32.mrf.mxu0
        %8650 = vdwg.mxu0
        %v8651 = vadd.f32 %v8544, %v8646
        %v8652 = vpack.c.bf16 %v7261, %v7261
        %s8653 = scalar_lea.vmem %s5, 832
        %v8654 = vld [vmem:[%s8653] sm:$0xf]
        %v8655 = vld [vmem:[%s8653 + $0x4] sm:$0xf]
        %v8656 = vld [vmem:[%s8653 + $0x8] sm:$0xf]
        %v8657 = vld [vmem:[%s8653 + $0xc] sm:$0xf]
        %v8658 = vld [vmem:[%s8653 + $0x10] sm:$0xf]
        %v8659 = vld [vmem:[%s8653 + $0x14] sm:$0xf]
        %v8660 = vld [vmem:[%s8653 + $0x18] sm:$0xf]
        %v8661 = vld [vmem:[%s8653 + $0x1c] sm:$0xf]
        %v8662 = vld [vmem:[%s8653 + $0x20] sm:$0xf]
        %v8663 = vld [vmem:[%s8653 + $0x24] sm:$0xf]
        %v8664 = vld [vmem:[%s8653 + $0x28] sm:$0xf]
        %v8665 = vld [vmem:[%s8653 + $0x2c] sm:$0xf]
        %v8666 = vld [vmem:[%s8653 + $0x30] sm:$0xf]
        %v8667 = vld [vmem:[%s8653 + $0x34] sm:$0xf]
        %v8668 = vld [vmem:[%s8653 + $0x38] sm:$0xf]
        %v8669 = vld [vmem:[%s8653 + $0x3c] sm:$0xf]
        %v8686 = vunpack.c.l.b16 %v8654
        %v8687 = vunpack.c.l.b16 %v8655
        %v8688 = vunpack.c.l.b16 %v8656
        %v8689 = vunpack.c.l.b16 %v8657
        %v8690 = vunpack.c.l.b16 %v8658
        %v8691 = vunpack.c.l.b16 %v8659
        %v8692 = vunpack.c.l.b16 %v8660
        %v8693 = vunpack.c.l.b16 %v8661
        %v8694 = vunpack.c.l.b16 %v8662
        %v8695 = vunpack.c.l.b16 %v8663
        %v8696 = vunpack.c.l.b16 %v8664
        %v8697 = vunpack.c.l.b16 %v8665
        %v8698 = vunpack.c.l.b16 %v8666
        %v8699 = vunpack.c.l.b16 %v8667
        %v8700 = vunpack.c.l.b16 %v8668
        %v8701 = vunpack.c.l.b16 %v8669
        %v8702 = vpack.c.b16 %v8687, %v8686
        %v8703 = vpack.c.b16 %v8689, %v8688
        %v8704 = vpack.c.b16 %v8691, %v8690
        %v8705 = vpack.c.b16 %v8693, %v8692
        %v8706 = vpack.c.b16 %v8695, %v8694
        %v8707 = vpack.c.b16 %v8697, %v8696
        %v8708 = vpack.c.b16 %v8699, %v8698
        %v8709 = vpack.c.b16 %v8701, %v8700
        %8718 = vmatprep.subr.bf16.mxu0 0
        %8719 = vmatpush1.bf16.msra.mxu0 %v8709
        %8720 = vmatprep.subr.bf16.mxu0 0
        %8721 = vmatpush1.bf16.msra.mxu0 %v8708
        %8722 = vmatprep.subr.bf16.mxu0 0
        %8723 = vmatpush1.bf16.msra.mxu0 %v8707
        %8724 = vmatprep.subr.bf16.mxu0 0
        %8725 = vmatpush1.bf16.msra.mxu0 %v8706
        %8726 = vmatprep.subr.bf16.mxu0 0
        %8727 = vmatpush1.bf16.msra.mxu0 %v8705
        %8728 = vmatprep.subr.bf16.mxu0 0
        %8729 = vmatpush1.bf16.msra.mxu0 %v8704
        %8730 = vmatprep.subr.bf16.mxu0 0
        %8731 = vmatpush1.bf16.msra.mxu0 %v8703
        %8732 = vmatprep.subr.bf16.mxu0 0
        %8733 = vmatpush1.bf16.msra.mxu0 %v8702
        %8734 = vmatprep.subr.bf16.mxu0 0
        %8735 = vmatpush2.bf16.msra.mxu0 0
        %8736 = vmatprep.subr.bf16.mxu0 0
        %8737 = vmatpush2.bf16.msra.mxu0 0
        %8738 = vmatprep.subr.bf16.mxu0 0
        %8739 = vmatpush2.bf16.msra.mxu0 0
        %8740 = vmatprep.subr.bf16.mxu0 0
        %8741 = vmatpush2.bf16.msra.mxu0 0
        %8742 = vmatprep.subr.bf16.mxu0 0
        %8743 = vmatpush2.bf16.msra.mxu0 0
        %8744 = vmatprep.subr.bf16.mxu0 0
        %8745 = vmatpush2.bf16.msra.mxu0 0
        %8746 = vmatprep.subr.bf16.mxu0 0
        %8747 = vmatpush2.bf16.msra.mxu0 0
        %8748 = vmatprep.subr.bf16.mxu0 0
        %8749 = vmatpush2.bf16.msra.mxu0 0
        %8750 = vmatprep.mubr.bf16.mxu0 0
        %8751 = vmatmul.mubr.bf16.gmra.mxu0 %v8652
        %v8752 = vpop.f32.mrf.mxu0
        %v8753 = vadd.f32 0.0, %v8752
        %v8754 = vpop.f32.mrf.mxu0
        %v8755 = vpop.f32.mrf.mxu0
        %v8756 = vpop.f32.mrf.mxu0
        %8757 = vdwg.mxu0
        %v8758 = vadd.f32 %v8651, %v8753
        %v8759 = vpack.c.bf16 %v7262, %v7262
        %s8760 = scalar_lea.vmem %s5, 896
        %v8761 = vld [vmem:[%s8760] sm:$0xf]
        %v8762 = vld [vmem:[%s8760 + $0x4] sm:$0xf]
        %v8763 = vld [vmem:[%s8760 + $0x8] sm:$0xf]
        %v8764 = vld [vmem:[%s8760 + $0xc] sm:$0xf]
        %v8765 = vld [vmem:[%s8760 + $0x10] sm:$0xf]
        %v8766 = vld [vmem:[%s8760 + $0x14] sm:$0xf]
        %v8767 = vld [vmem:[%s8760 + $0x18] sm:$0xf]
        %v8768 = vld [vmem:[%s8760 + $0x1c] sm:$0xf]
        %v8769 = vld [vmem:[%s8760 + $0x20] sm:$0xf]
        %v8770 = vld [vmem:[%s8760 + $0x24] sm:$0xf]
        %v8771 = vld [vmem:[%s8760 + $0x28] sm:$0xf]
        %v8772 = vld [vmem:[%s8760 + $0x2c] sm:$0xf]
        %v8773 = vld [vmem:[%s8760 + $0x30] sm:$0xf]
        %v8774 = vld [vmem:[%s8760 + $0x34] sm:$0xf]
        %v8775 = vld [vmem:[%s8760 + $0x38] sm:$0xf]
        %v8776 = vld [vmem:[%s8760 + $0x3c] sm:$0xf]
        %v8793 = vunpack.c.l.b16 %v8761
        %v8794 = vunpack.c.l.b16 %v8762
        %v8795 = vunpack.c.l.b16 %v8763
        %v8796 = vunpack.c.l.b16 %v8764
        %v8797 = vunpack.c.l.b16 %v8765
        %v8798 = vunpack.c.l.b16 %v8766
        %v8799 = vunpack.c.l.b16 %v8767
        %v8800 = vunpack.c.l.b16 %v8768
        %v8801 = vunpack.c.l.b16 %v8769
        %v8802 = vunpack.c.l.b16 %v8770
        %v8803 = vunpack.c.l.b16 %v8771
        %v8804 = vunpack.c.l.b16 %v8772
        %v8805 = vunpack.c.l.b16 %v8773
        %v8806 = vunpack.c.l.b16 %v8774
        %v8807 = vunpack.c.l.b16 %v8775
        %v8808 = vunpack.c.l.b16 %v8776
        %v8809 = vpack.c.b16 %v8794, %v8793
        %v8810 = vpack.c.b16 %v8796, %v8795
        %v8811 = vpack.c.b16 %v8798, %v8797
        %v8812 = vpack.c.b16 %v8800, %v8799
        %v8813 = vpack.c.b16 %v8802, %v8801
        %v8814 = vpack.c.b16 %v8804, %v8803
        %v8815 = vpack.c.b16 %v8806, %v8805
        %v8816 = vpack.c.b16 %v8808, %v8807
        %8825 = vmatprep.subr.bf16.mxu0 0
        %8826 = vmatpush1.bf16.msra.mxu0 %v8816
        %8827 = vmatprep.subr.bf16.mxu0 0
        %8828 = vmatpush1.bf16.msra.mxu0 %v8815
        %8829 = vmatprep.subr.bf16.mxu0 0
        %8830 = vmatpush1.bf16.msra.mxu0 %v8814
        %8831 = vmatprep.subr.bf16.mxu0 0
        %8832 = vmatpush1.bf16.msra.mxu0 %v8813
        %8833 = vmatprep.subr.bf16.mxu0 0
        %8834 = vmatpush1.bf16.msra.mxu0 %v8812
        %8835 = vmatprep.subr.bf16.mxu0 0
        %8836 = vmatpush1.bf16.msra.mxu0 %v8811
        %8837 = vmatprep.subr.bf16.mxu0 0
        %8838 = vmatpush1.bf16.msra.mxu0 %v8810
        %8839 = vmatprep.subr.bf16.mxu0 0
        %8840 = vmatpush1.bf16.msra.mxu0 %v8809
        %8841 = vmatprep.subr.bf16.mxu0 0
        %8842 = vmatpush2.bf16.msra.mxu0 0
        %8843 = vmatprep.subr.bf16.mxu0 0
        %8844 = vmatpush2.bf16.msra.mxu0 0
        %8845 = vmatprep.subr.bf16.mxu0 0
        %8846 = vmatpush2.bf16.msra.mxu0 0
        %8847 = vmatprep.subr.bf16.mxu0 0
        %8848 = vmatpush2.bf16.msra.mxu0 0
        %8849 = vmatprep.subr.bf16.mxu0 0
        %8850 = vmatpush2.bf16.msra.mxu0 0
        %8851 = vmatprep.subr.bf16.mxu0 0
        %8852 = vmatpush2.bf16.msra.mxu0 0
        %8853 = vmatprep.subr.bf16.mxu0 0
        %8854 = vmatpush2.bf16.msra.mxu0 0
        %8855 = vmatprep.subr.bf16.mxu0 0
        %8856 = vmatpush2.bf16.msra.mxu0 0
        %8857 = vmatprep.mubr.bf16.mxu0 0
        %8858 = vmatmul.mubr.bf16.gmra.mxu0 %v8759
        %v8859 = vpop.f32.mrf.mxu0
        %v8860 = vadd.f32 0.0, %v8859
        %v8861 = vpop.f32.mrf.mxu0
        %v8862 = vpop.f32.mrf.mxu0
        %v8863 = vpop.f32.mrf.mxu0
        %8864 = vdwg.mxu0
        %v8865 = vadd.f32 %v8758, %v8860
        %v8866 = vpack.c.bf16 %v7263, %v7263
        %s8867 = scalar_lea.vmem %s5, 960
        %v8868 = vld [vmem:[%s8867] sm:$0xf]
        %v8869 = vld [vmem:[%s8867 + $0x4] sm:$0xf]
        %v8870 = vld [vmem:[%s8867 + $0x8] sm:$0xf]
        %v8871 = vld [vmem:[%s8867 + $0xc] sm:$0xf]
        %v8872 = vld [vmem:[%s8867 + $0x10] sm:$0xf]
        %v8873 = vld [vmem:[%s8867 + $0x14] sm:$0xf]
        %v8874 = vld [vmem:[%s8867 + $0x18] sm:$0xf]
        %v8875 = vld [vmem:[%s8867 + $0x1c] sm:$0xf]
        %v8876 = vld [vmem:[%s8867 + $0x20] sm:$0xf]
        %v8877 = vld [vmem:[%s8867 + $0x24] sm:$0xf]
        %v8878 = vld [vmem:[%s8867 + $0x28] sm:$0xf]
        %v8879 = vld [vmem:[%s8867 + $0x2c] sm:$0xf]
        %v8880 = vld [vmem:[%s8867 + $0x30] sm:$0xf]
        %v8881 = vld [vmem:[%s8867 + $0x34] sm:$0xf]
        %v8882 = vld [vmem:[%s8867 + $0x38] sm:$0xf]
        %v8883 = vld [vmem:[%s8867 + $0x3c] sm:$0xf]
        %v8900 = vunpack.c.l.b16 %v8868
        %v8901 = vunpack.c.l.b16 %v8869
        %v8902 = vunpack.c.l.b16 %v8870
        %v8903 = vunpack.c.l.b16 %v8871
        %v8904 = vunpack.c.l.b16 %v8872
        %v8905 = vunpack.c.l.b16 %v8873
        %v8906 = vunpack.c.l.b16 %v8874
        %v8907 = vunpack.c.l.b16 %v8875
        %v8908 = vunpack.c.l.b16 %v8876
        %v8909 = vunpack.c.l.b16 %v8877
        %v8910 = vunpack.c.l.b16 %v8878
        %v8911 = vunpack.c.l.b16 %v8879
        %v8912 = vunpack.c.l.b16 %v8880
        %v8913 = vunpack.c.l.b16 %v8881
        %v8914 = vunpack.c.l.b16 %v8882
        %v8915 = vunpack.c.l.b16 %v8883
        %v8916 = vpack.c.b16 %v8901, %v8900
        %v8917 = vpack.c.b16 %v8903, %v8902
        %v8918 = vpack.c.b16 %v8905, %v8904
        %v8919 = vpack.c.b16 %v8907, %v8906
        %v8920 = vpack.c.b16 %v8909, %v8908
        %v8921 = vpack.c.b16 %v8911, %v8910
        %v8922 = vpack.c.b16 %v8913, %v8912
        %v8923 = vpack.c.b16 %v8915, %v8914
        %8932 = vmatprep.subr.bf16.mxu0 0
        %8933 = vmatpush1.bf16.msra.mxu0 %v8923
        %8934 = vmatprep.subr.bf16.mxu0 0
        %8935 = vmatpush1.bf16.msra.mxu0 %v8922
        %8936 = vmatprep.subr.bf16.mxu0 0
        %8937 = vmatpush1.bf16.msra.mxu0 %v8921
        %8938 = vmatprep.subr.bf16.mxu0 0
        %8939 = vmatpush1.bf16.msra.mxu0 %v8920
        %8940 = vmatprep.subr.bf16.mxu0 0
        %8941 = vmatpush1.bf16.msra.mxu0 %v8919
        %8942 = vmatprep.subr.bf16.mxu0 0
        %8943 = vmatpush1.bf16.msra.mxu0 %v8918
        %8944 = vmatprep.subr.bf16.mxu0 0
        %8945 = vmatpush1.bf16.msra.mxu0 %v8917
        %8946 = vmatprep.subr.bf16.mxu0 0
        %8947 = vmatpush1.bf16.msra.mxu0 %v8916
        %8948 = vmatprep.subr.bf16.mxu0 0
        %8949 = vmatpush2.bf16.msra.mxu0 0
        %8950 = vmatprep.subr.bf16.mxu0 0
        %8951 = vmatpush2.bf16.msra.mxu0 0
        %8952 = vmatprep.subr.bf16.mxu0 0
        %8953 = vmatpush2.bf16.msra.mxu0 0
        %8954 = vmatprep.subr.bf16.mxu0 0
        %8955 = vmatpush2.bf16.msra.mxu0 0
        %8956 = vmatprep.subr.bf16.mxu0 0
        %8957 = vmatpush2.bf16.msra.mxu0 0
        %8958 = vmatprep.subr.bf16.mxu0 0
        %8959 = vmatpush2.bf16.msra.mxu0 0
        %8960 = vmatprep.subr.bf16.mxu0 0
        %8961 = vmatpush2.bf16.msra.mxu0 0
        %8962 = vmatprep.subr.bf16.mxu0 0
        %8963 = vmatpush2.bf16.msra.mxu0 0
        %8964 = vmatprep.mubr.bf16.mxu0 0
        %8965 = vmatmul.mubr.bf16.gmra.mxu0 %v8866
        %v8966 = vpop.f32.mrf.mxu0
        %v8967 = vadd.f32 0.0, %v8966
        %v8968 = vpop.f32.mrf.mxu0
        %v8969 = vpop.f32.mrf.mxu0
        %v8970 = vpop.f32.mrf.mxu0
        %8971 = vdwg.mxu0
        %v8972 = vadd.f32 %v8865, %v8967
        %v8973 = vld [vmem:[%s6] sm:$0x1]
        %v8974 = vadd.f32 %v8972, %v8973
        %8975 = vst [vmem:[%s285] sm:$0x1] %v8974
        %s8976 = sand.u32 %s182, 1
        %s8977 = scalar_lea.sflag [#allocation6], %s8976
        %s8978 = sand.u32 %s182, 1
        %s8979 = scalar_lea.vmem [#allocation7], %s8978
        // Predicated region
        $region53: #{_maml_forward.1} parent=47 // pred_check
          %p8980 = pneg %p192
        $region54: #{_maml_forward.1} parent=47 // pred_check_branch
          %8982 = sbr.rel (%p8980) target = $region56
        $region55: #{_maml_forward.1} parent=47 // pred_region
          %s8984 = ssub.s32 16, 16
          %8985 = vsyncadd %s8977, %s8984
          %s8986 = smul.addr %s22, 16
          %s8987 = scalar_lea.hbm %s7, %s8986
          %s8989 = sshll.u32 %s8979, 4
          %s8990 = int_to_ptr.vmem [resolvable:$true] %s8989
          %8992 = dma.vmem_to_hbm [thread:$0]  %s8990, 16, %s8987, %s8977
        $region56: #{_maml_forward.1} parent=47 // pred_fallthru
          _
      $region48: #{_maml_forward.1} parent=5 // pred_fallthru
        _
      %p8993 = scmp.le.s32.totalorder 2, %s17
      // Predicated region
      $region57: #{_maml_forward.1} parent=5 // pred_check
        %p8994 = pneg %p8993
      $region58: #{_maml_forward.1} parent=5 // pred_check_branch
        %8996 = sbr.rel (%p8994) target = $region60
      $region59: #{_maml_forward.1} parent=5 // pred_region
        %s8997 = ssub.s32 %s17, 2
        // Predicated region
        $region61: #{_maml_forward.1} parent=59 // pred_check
          %p8998 = pneg %p198
        $region62: #{_maml_forward.1} parent=59 // pred_check_branch
          %9000 = sbr.rel (%p8998) target = $region64
        $region63: #{_maml_forward.1} parent=59 // pred_region
          %s9001 = sand.u32 %s183, 1
          %s9002 = scalar_lea.sflag [#allocation6], %s9001
          %s9003 = sand.u32 %s183, 1
          %s9004 = scalar_lea.vmem [#allocation7], %s9003
          %9005 = dma.done %s9002, 16
        $region64: #{_maml_forward.1} parent=59 // pred_fallthru
          _
      $region60: #{_maml_forward.1} parent=5 // pred_fallthru
        _
    $region6: #{_maml_forward.1} parent=1 // loop_footer
      %s21 = sadd.s32 1, %s17
    $region7: #{_maml_forward.1} parent=1 // loop_footer_branch
      %16 = sbr.rel target = $region3
    $region8: #{_maml_forward.1} parent=1 // loop_exit
      _
    %9006 = vsyncpa [#allocation5], 1
    %s9007 = scalar_lea.sflag [#allocation5], 1
    %9008 = vsyncpa %s9007, 1
    %9009 = vsyncpa [#allocation6], 1
    %s9010 = scalar_lea.sflag [#allocation6], 1
    %9011 = vsyncpa %s9010, 1

</llo_original>
